<compile_context>
chip_gen: v7x
topology: tpu7x:2x2x1
jax: 0.10.0
libtpu: 0.0.40
codegen_flags: <defaults>
</compile_context>

<pallas_src>
import functools

import jax
import jax.numpy as jnp
from jax.experimental import pallas as pl
from jax.experimental.pallas import tpu as pltpu


def _round_up(x, m):
    return ((x + m - 1) // m) * m


COR_CH = 96       # convc1 output channels
FLO1_CH = 64      # convf1 output channels
FLO2_CH = 32      # convf2 output channels
OUT_CH = 81       # final conv output channels (module: 82 - 1)
FLOW_LANE = 81    # lane carrying the raw-flow pass-through
CAT_CH = 128      # cor(96) | flo2(32) merged K for the final conv
OUT_PAD = 128     # lane-dense padded output width


# ----------------------------------------------------------------------------
# Fused Pallas kernel
# ----------------------------------------------------------------------------
def _encoder_kernel(corr_ref, fcols_ref, flow_ref,
                    wc1_ref, bc1_ref, wf1_ref, bf1_ref, wf2_ref, bf2_ref,
                    wcv_ref, bcv_ref,
                    o_ref,
                    pf1_ref, pcf_ref,
                    *, H, W, R0, BUF):
    HW = H * W
    f32 = jnp.float32

    # W-boundary masks and the flow one-hot lane, generated in-kernel.
    wcol = jax.lax.broadcasted_iota(jnp.int32, (HW, 1), 0) % W
    mask_l = (wcol != 0).astype(f32)            # zero where w == 0
    mask_r = (wcol != W - 1).astype(f32)        # zero where w == W - 1

    def stage(pad_ref, val):
        # Zero halo rows (every step: scratch is per-core & uninitialized under
        # megacore sharding), then write the image rows at [R0, R0+HW).
        c = pad_ref.shape[1]
        pad_ref[0:R0, :] = jnp.zeros((R0, c), pad_ref.dtype)
        pad_ref[R0 + HW:BUF, :] = jnp.zeros((BUF - R0 - HW, c), pad_ref.dtype)
        pad_ref[R0:R0 + HW, :] = val.astype(pad_ref.dtype)

    def conv3x3(pad_ref, w_ref):
        # 3x3 conv (pad=1) == 9 shifted matmuls on the flattened, H-padded
        # staging buffer.  kw==0 / kw==2 taps are tree-summed and masked ONCE
        # (2 mask multiplies per conv instead of 6); no zeros-init accumulator.
        cin = pad_ref.shape[1]

        def tap(kh, kw):
            t = kh * 3 + kw
            start = R0 - (W + 1) + kh * W + kw
            x = pad_ref[start:start + HW, :]               # (HW, cin) bf16
            wt = w_ref[t * cin:(t + 1) * cin, :]           # (cin, cout) bf16
            return jnp.dot(x, wt, preferred_element_type=f32)

        left = tap(0, 0) + tap(1, 0) + tap(2, 0)
        mid = tap(0, 1) + tap(1, 1) + tap(2, 1)
        right = tap(0, 2) + tap(1, 2) + tap(2, 2)
        return left * mask_l + mid + right * mask_r

    # ---- convc1: 1x1 conv on corr + ReLU -> lanes [0:96) of a 128-wide value.
    #      (Weight columns [96:128) are zero, so those lanes ReLU to exactly 0.)
    #      corr stays f32 here: K=28 is cheap and avoids a wrapper-side cast.
    cor = jnp.dot(corr_ref[0], wc1_ref[...], preferred_element_type=f32)
    cor = jnp.maximum(cor + bc1_ref[...], 0.0)                       # (HW, 128)

    # ---- convf1: 7x7 conv on 1-channel flow (pre-im2col'ed bf16, K=49) + ReLU.
    flo = jnp.dot(fcols_ref[0], wf1_ref[...], preferred_element_type=f32)
    flo = jnp.maximum(flo + bf1_ref[...], 0.0)                       # (HW, 64)

    # ---- convf2: 3x3 conv 64 -> 32 + ReLU, output placed in lanes [96:128).
    stage(pf1_ref, flo)
    flo2 = jnp.maximum(conv3x3(pf1_ref, wf2_ref) + bf2_ref[...], 0.0)  # (HW,128)

    # ---- final conv: ONE merged K=128 (cor | flo2) 3x3 conv -> 128 dense lanes.
    #      cor occupies lanes [0:96) and flo2 [96:128), so a single dense add
    #      builds the "concatenated" operand (no lane concat / partial stores).
    stage(pcf_ref, cor + flo2)
    out = jnp.maximum(conv3x3(pcf_ref, wcv_ref) + bcv_ref[...], 0.0)   # (HW,128)

    # ---- raw-flow pass-through (exact f32) into lane 81; lanes 82..127 stay 0.
    lane = jax.lax.broadcasted_iota(jnp.int32, (1, OUT_PAD), 1)
    onehot = (lane == FLOW_LANE).astype(f32)
    out = out + flow_ref[0] * onehot

    o_ref[0] = out.astype(o_ref.dtype)


# ----------------------------------------------------------------------------
# Wrapper
# ----------------------------------------------------------------------------
def _im2col(x, ksize, pad):
    # x: (N, H, W, C) -> (N, H*W, ksize*ksize*C); tap-major, channel-minor.
    N, H, W, C = x.shape
    xp = jnp.pad(x, ((0, 0), (pad, pad), (pad, pad), (0, 0)))
    cols = []
    for kh in range(ksize):
        for kw in range(ksize):
            cols.append(xp[:, kh:kh + H, kw:kw + W, :].reshape(N, H * W, C))
    return jnp.concatenate(cols, axis=-1)


def small_motion_encoder(params, flow, corr):
    """flow: (N, H, W, 1) f32, corr: (N, H, W, Cp) f32 (NHWC). Returns (N, H, W, 82)."""
    N, H, W, _ = flow.shape
    Cp = corr.shape[-1]
    HW = H * W
    bf16 = jnp.bfloat16

    # Flattened H-padded staging geometry (image rows live at [R0, R0+HW)).
    # R0 >= W+1 guarantees kh=0 taps land in the zeroed top halo; BUF covers kh=2.
    R0 = _round_up(W + 1, 16)
    BUF = _round_up(R0 + HW + W + 1, 16)

    (wc1, bc1) = params["convc1"]      # (1, 1, Cp, 96)
    (wf1, bf1) = params["convf1"]      # (7, 7, 1, 64)
    (wf2, bf2) = params["convf2"]      # (3, 3, 64, 32)
    (wcv, bcv) = params["conv"]        # (3, 3, 128, 81)

    # Lane-dense packing: cor -> lanes [0:96), flo2 -> [96:128), out padded to 128.
    wc1m = jnp.pad(wc1.reshape(Cp, COR_CH), ((0, 0), (0, CAT_CH - COR_CH)))   # f32
    bc1m = jnp.pad(bc1, (0, CAT_CH - COR_CH)).reshape(1, CAT_CH)
    wf1m = wf1.reshape(7 * 7, FLO1_CH).astype(bf16)
    bf1m = bf1.reshape(1, FLO1_CH)
    wf2m = jnp.pad(wf2.reshape(9 * FLO1_CH, FLO2_CH),
                   ((0, 0), (COR_CH, 0))).astype(bf16)                        # cols 96..127
    bf2m = jnp.pad(bf2, (COR_CH, 0)).reshape(1, CAT_CH)
    wcvm = jnp.pad(wcv, ((0, 0), (0, 0), (0, 0), (0, OUT_PAD - OUT_CH))
                   ).reshape(9 * CAT_CH, OUT_PAD).astype(bf16)                # merged K=128
    bcvm = jnp.pad(bcv, (0, OUT_PAD - OUT_CH)).reshape(1, OUT_PAD)

    # Activations: corr stays f32 (no wrapper cast); flow im2col shipped bf16;
    # the exact f32 raw flow rides along separately for the pass-through lane.
    corr2 = corr.reshape(N, HW, Cp)
    fcols = _im2col(flow, 7, 3).astype(bf16)               # (N, HW, 49) bf16
    flow2 = flow.reshape(N, HW, 1)                         # (N, HW, 1)  f32

    kern = functools.partial(_encoder_kernel, H=H, W=W, R0=R0, BUF=BUF)
    out = pl.pallas_call(
        kern,
        out_shape=jax.ShapeDtypeStruct((N, HW, OUT_PAD), jnp.float32),
        grid=(N,),
        in_specs=[
            pl.BlockSpec((1, HW, Cp), lambda n: (n, 0, 0)),
            pl.BlockSpec((1, HW, 49), lambda n: (n, 0, 0)),
            pl.BlockSpec((1, HW, 1), lambda n: (n, 0, 0)),
            pl.BlockSpec((Cp, CAT_CH), lambda n: (0, 0)),
            pl.BlockSpec((1, CAT_CH), lambda n: (0, 0)),
            pl.BlockSpec((49, FLO1_CH), lambda n: (0, 0)),
            pl.BlockSpec((1, FLO1_CH), lambda n: (0, 0)),
            pl.BlockSpec((9 * FLO1_CH, CAT_CH), lambda n: (0, 0)),
            pl.BlockSpec((1, CAT_CH), lambda n: (0, 0)),
            pl.BlockSpec((9 * CAT_CH, OUT_PAD), lambda n: (0, 0)),
            pl.BlockSpec((1, OUT_PAD), lambda n: (0, 0)),
        ],
        out_specs=pl.BlockSpec((1, HW, OUT_PAD), lambda n: (n, 0, 0)),
        scratch_shapes=[
            pltpu.VMEM((BUF, FLO1_CH), bf16),   # padded convf1 output
            pltpu.VMEM((BUF, CAT_CH), bf16),    # padded cor|flo2 (merged K=128)
        ],
        compiler_params=pltpu.CompilerParams(
            dimension_semantics=("parallel",),
            vmem_limit_bytes=64 * 1024 * 1024),
    )(corr2, fcols, flow2, wc1m, bc1m, wf1m, bf1m, wf2m, bf2m, wcvm, bcvm)

    # TODO(synk): a fused downstream consumer should take the 128-lane padded
    # slab directly (lanes [82:128) are zero) to avoid this slice pass.
    return out[:, :, :OUT_CH + 1].reshape(N, H, W, OUT_CH + 1)


# ----------------------------------------------------------------------------
# Pure-JAX reference (f32) for a correctness check
# ----------------------------------------------------------------------------
def _reference_forward(params, flow, corr):
    def conv(x, wb, pad):
        w, b = wb
        y = jax.lax.conv_general_dilated(
            x, w, (1, 1), [(pad, pad), (pad, pad)],
            dimension_numbers=("NHWC", "HWIO", "NHWC"))
        return y + b
    relu = lambda t: jnp.maximum(t, 0.0)
    cor = relu(conv(corr, params["convc1"], 0))
    flo = relu(conv(flow, params["convf1"], 3))
    flo = relu(conv(flo, params["convf2"], 1))
    cor_flo = jnp.concatenate([cor, flo], axis=-1)
    out = relu(conv(cor_flo, params["conv"], 1))
    return jnp.concatenate([out, flow], axis=-1)


# ----------------------------------------------------------------------------
# Deterministic parameter init (PyTorch-style uniform, HWIO layout)
# ----------------------------------------------------------------------------
def _init_conv(key, ksize, cin, cout):
    kw, kb = jax.random.split(key)
    scale = float(cin * ksize * ksize) ** -0.5
    w = jax.random.uniform(kw, (ksize, ksize, cin, cout), jnp.float32, -scale, scale)
    b = jax.random.uniform(kb, (cout,), jnp.float32, -scale, scale)
    return (w, b)


def make_params(key, cor_planes):
    keys = jax.random.split(key, 4)
    return {
        "convc1": _init_conv(keys[0], 1, cor_planes, COR_CH),
        "convf1": _init_conv(keys[1], 7, 1, FLO1_CH),
        "convf2": _init_conv(keys[2], 3, FLO1_CH, FLO2_CH),
        "conv":   _init_conv(keys[3], 3, CAT_CH, OUT_CH),
    }


# ----------------------------------------------------------------------------
if __name__ == "__main__":
    key = jax.random.PRNGKey(0)
    k_corr, k_flow, k_params = jax.random.split(key, 3)

    N, H, W = 2, 16, 16
    corr_level, corr_radius = 4, 3
    cor_planes = corr_level * (2 * corr_radius + 1)   # 28

    # PyTorch-convention NCHW inputs
    corr_nchw = jax.random.normal(k_corr, (N, cor_planes, H, W), jnp.float32)
    flow_nchw = jax.random.normal(k_flow, (N, 1, H, W), jnp.float32)

    to_nhwc = lambda t: jnp.transpose(t, (0, 2, 3, 1))
    to_nchw = lambda t: jnp.transpose(t, (0, 3, 1, 2))

    params = make_params(k_params, cor_planes)
    flow_nhwc = to_nhwc(flow_nchw)
    corr_nhwc = to_nhwc(corr_nchw)

    fwd = jax.jit(small_motion_encoder)
    out_nchw = to_nchw(fwd(params, flow_nhwc, corr_nhwc))
    jax.block_until_ready(out_nchw)

    assert out_nchw.shape == (N, OUT_CH + 1, H, W), out_nchw.shape
    assert bool(jnp.all(jnp.isfinite(out_nchw)))

    # Numerical check vs f32 XLA reference (kernel stages bf16 operands -> loose tol).
    ref_nchw = to_nchw(_reference_forward(params, flow_nhwc, corr_nhwc))
    diff = float(jnp.max(jnp.abs(out_nchw - ref_nchw)))
    scale = float(jnp.max(jnp.abs(ref_nchw)))
    assert diff <= 0.05 * scale + 1e-3, (diff, scale)

    print("KERNEL_OK")
</pallas_src>

<mosaic_0001>
module attributes {stable_mosaic.version = 11 : i64} {
  func.func @_encoder_kernel(%arg0: i32, %arg1: memref<1x256x28xf32, #tpu.memory_space<vmem>>, %arg2: memref<1x256x49xbf16, #tpu.memory_space<vmem>>, %arg3: memref<1x256x1xf32, #tpu.memory_space<vmem>>, %arg4: memref<28x128xf32, #tpu.memory_space<vmem>>, %arg5: memref<1x128xf32, #tpu.memory_space<vmem>>, %arg6: memref<49x64xbf16, #tpu.memory_space<vmem>>, %arg7: memref<1x64xf32, #tpu.memory_space<vmem>>, %arg8: memref<576x128xbf16, #tpu.memory_space<vmem>>, %arg9: memref<1x128xf32, #tpu.memory_space<vmem>>, %arg10: memref<1152x128xbf16, #tpu.memory_space<vmem>>, %arg11: memref<1x128xf32, #tpu.memory_space<vmem>>, %arg12: memref<1x256x128xf32, #tpu.memory_space<vmem>>, %arg13: memref<320x64xbf16, #tpu.memory_space<vmem>>, %arg14: memref<320x128xbf16, #tpu.memory_space<vmem>>) attributes {dimension_semantics = [#tpu.dimension_semantics<parallel>], iteration_bounds = array<i64: 2>, scalar_prefetch = 0 : i64, scratch_operands = 2 : i64, tpu.core_type = #tpu.core_type<tc>, window_params = [{transform_indices = @transform_0, window_bounds = array<i64: 1, 256, 28>}, {transform_indices = @transform_1, window_bounds = array<i64: 1, 256, 49>}, {transform_indices = @transform_2, window_bounds = array<i64: 1, 256, 1>}, {pipeline_mode = #tpu.pipeline_mode<synchronous>, transform_indices = @transform_3, window_bounds = array<i64: 28, 128>}, {pipeline_mode = #tpu.pipeline_mode<synchronous>, transform_indices = @transform_4, window_bounds = array<i64: 1, 128>}, {pipeline_mode = #tpu.pipeline_mode<synchronous>, transform_indices = @transform_5, window_bounds = array<i64: 49, 64>}, {pipeline_mode = #tpu.pipeline_mode<synchronous>, transform_indices = @transform_6, window_bounds = array<i64: 1, 64>}, {pipeline_mode = #tpu.pipeline_mode<synchronous>, transform_indices = @transform_7, window_bounds = array<i64: 576, 128>}, {pipeline_mode = #tpu.pipeline_mode<synchronous>, transform_indices = @transform_8, window_bounds = array<i64: 1, 128>}, {pipeline_mode = #tpu.pipeline_mode<synchronous>, transform_indices = @transform_9, window_bounds = array<i64: 1152, 128>}, {pipeline_mode = #tpu.pipeline_mode<synchronous>, transform_indices = @transform_10, window_bounds = array<i64: 1, 128>}, {transform_indices = @transform_11, window_bounds = array<i64: 1, 256, 128>}]} {
    %0 = tpu.iota {dimensions = array<i32: 0>} : vector<256x1xi32>
    %c16_i32 = arith.constant 16 : i32
    %c0_i32 = arith.constant 0 : i32
    %1 = arith.cmpi eq, %c16_i32, %c0_i32 : i32
    %c1_i32 = arith.constant 1 : i32
    %2 = arith.select %1, %c1_i32, %c16_i32 : i32
    %3 = vector.broadcast %2 : i32 to vector<256x1xi32>
    %4 = arith.remsi %0, %3 : vector<256x1xi32>
    %c0_i32_0 = arith.constant 0 : i32
    %5 = vector.broadcast %c0_i32_0 : i32 to vector<256x1xi32>
    %6 = arith.cmpi ne, %4, %5 : vector<256x1xi32>
    %c0_i32_1 = arith.constant 0 : i32
    %7 = vector.broadcast %c0_i32_1 : i32 to vector<256x1xi32>
    %8 = arith.cmpi slt, %4, %7 : vector<256x1xi32>
    %c0_i32_2 = arith.constant 0 : i32
    %9 = arith.cmpi slt, %2, %c0_i32_2 : i32
    %10 = vector.broadcast %9 : i1 to vector<256x1xi1>
    %11 = vector.broadcast %10 : vector<256x1xi1> to vector<256x1xi1>
    %12 = arith.xori %8, %11 : vector<256x1xi1>
    %13 = arith.andi %12, %6 : vector<256x1xi1>
    %14 = vector.broadcast %2 : i32 to vector<256x1xi32>
    %15 = arith.addi %4, %14 : vector<256x1xi32>
    %16 = arith.select %13, %15, %4 : vector<256x1xi1>, vector<256x1xi32>
    %c0_i32_3 = arith.constant 0 : i32
    %17 = vector.broadcast %c0_i32_3 : i32 to vector<256x1xi32>
    %18 = arith.cmpi ne, %16, %17 : vector<256x1xi32>
    %19 = arith.extui %18 : vector<256x1xi1> to vector<256x1xi32>
    %20 = arith.sitofp %19 : vector<256x1xi32> to vector<256x1xf32>
    %c15_i32 = arith.constant 15 : i32
    %21 = vector.broadcast %c15_i32 : i32 to vector<256x1xi32>
    %22 = arith.cmpi ne, %16, %21 : vector<256x1xi32>
    %23 = arith.extui %22 : vector<256x1xi1> to vector<256x1xi32>
    %24 = arith.sitofp %23 : vector<256x1xi32> to vector<256x1xf32>
    %c0 = arith.constant 0 : index
    %c0_4 = arith.constant 0 : index
    %c0_5 = arith.constant 0 : index
    %25 = vector.load %arg1[%c0, %c0_4, %c0_5] : memref<1x256x28xf32, #tpu.memory_space<vmem>>, vector<1x256x28xf32>
    %26 = vector.shape_cast %25 : vector<1x256x28xf32> to vector<256x28xf32>
    %c0_6 = arith.constant 0 : index
    %c0_7 = arith.constant 0 : index
    %27 = vector.load %arg4[%c0_6, %c0_7] : memref<28x128xf32, #tpu.memory_space<vmem>>, vector<28x128xf32>
    %cst = arith.constant dense<0.000000e+00> : vector<256x128xf32>
    %28 = tpu.matmul %26, %27, %cst {dimension_numbers = #tpu.dot_dimension_numbers<[1], [0], [0], [1], [0, 0, 1, 1], [], []>} : vector<256x28xf32>, vector<28x128xf32>, vector<256x128xf32> -> vector<256x128xf32>
    %c0_8 = arith.constant 0 : index
    %c0_9 = arith.constant 0 : index
    %29 = vector.load %arg5[%c0_8, %c0_9] : memref<1x128xf32, #tpu.memory_space<vmem>>, vector<1x128xf32>
    %30 = vector.broadcast %29 : vector<1x128xf32> to vector<256x128xf32>
    %31 = arith.addf %28, %30 : vector<256x128xf32>
    %cst_10 = arith.constant 0.000000e+00 : f32
    %32 = vector.broadcast %cst_10 : f32 to vector<256x128xf32>
    %33 = arith.maximumf %31, %32 : vector<256x128xf32>
    %c0_11 = arith.constant 0 : index
    %c0_12 = arith.constant 0 : index
    %c0_13 = arith.constant 0 : index
    %34 = vector.load %arg2[%c0_11, %c0_12, %c0_13] : memref<1x256x49xbf16, #tpu.memory_space<vmem>>, vector<1x256x49xbf16>
    %35 = vector.shape_cast %34 : vector<1x256x49xbf16> to vector<256x49xbf16>
    %c0_14 = arith.constant 0 : index
    %c0_15 = arith.constant 0 : index
    %36 = vector.load %arg6[%c0_14, %c0_15] : memref<49x64xbf16, #tpu.memory_space<vmem>>, vector<49x64xbf16>
    %cst_16 = arith.constant dense<0.000000e+00> : vector<256x64xf32>
    %37 = tpu.matmul %35, %36, %cst_16 {dimension_numbers = #tpu.dot_dimension_numbers<[1], [0], [0], [1], [0, 0, 1, 1], [], []>} : vector<256x49xbf16>, vector<49x64xbf16>, vector<256x64xf32> -> vector<256x64xf32>
    %c0_17 = arith.constant 0 : index
    %c0_18 = arith.constant 0 : index
    %38 = vector.load %arg7[%c0_17, %c0_18] : memref<1x64xf32, #tpu.memory_space<vmem>>, vector<1x64xf32>
    %39 = vector.broadcast %38 : vector<1x64xf32> to vector<256x64xf32>
    %40 = arith.addf %37, %39 : vector<256x64xf32>
    %cst_19 = arith.constant 0.000000e+00 : f32
    %41 = vector.broadcast %cst_19 : f32 to vector<256x64xf32>
    %42 = arith.maximumf %40, %41 : vector<256x64xf32>
    %cst_20 = arith.constant 0.000000e+00 : bf16
    %43 = vector.broadcast %cst_20 : bf16 to vector<32x64xbf16>
    %c0_21 = arith.constant 0 : index
    %c0_22 = arith.constant 0 : index
    %44 = vector.load %arg13[%c0_21, %c0_22] : memref<320x64xbf16, #tpu.memory_space<vmem>>, vector<32x64xbf16>
    tpu.vector_store %arg13[%c0_21, %c0_22], %43 {strides = array<i32>} : memref<320x64xbf16, #tpu.memory_space<vmem>>, vector<32x64xbf16>,
    %cst_23 = arith.constant 0.000000e+00 : bf16
    %45 = vector.broadcast %cst_23 : bf16 to vector<32x64xbf16>
    %c288 = arith.constant 288 : index
    %c0_24 = arith.constant 0 : index
    %46 = vector.load %arg13[%c288, %c0_24] : memref<320x64xbf16, #tpu.memory_space<vmem>>, vector<32x64xbf16>
    tpu.vector_store %arg13[%c288, %c0_24], %45 {strides = array<i32>} : memref<320x64xbf16, #tpu.memory_space<vmem>>, vector<32x64xbf16>,
    %47 = arith.truncf %42 : vector<256x64xf32> to vector<256x64xbf16>
    %c32 = arith.constant 32 : index
    %c0_25 = arith.constant 0 : index
    %48 = vector.load %arg13[%c32, %c0_25] : memref<320x64xbf16, #tpu.memory_space<vmem>>, vector<256x64xbf16>
    tpu.vector_store %arg13[%c32, %c0_25], %47 {strides = array<i32>} : memref<320x64xbf16, #tpu.memory_space<vmem>>, vector<256x64xbf16>,
    %c15 = arith.constant 15 : index
    %c0_26 = arith.constant 0 : index
    %49 = vector.load %arg13[%c15, %c0_26] : memref<320x64xbf16, #tpu.memory_space<vmem>>, vector<256x64xbf16>
    %c0_27 = arith.constant 0 : index
    %c0_28 = arith.constant 0 : index
    %50 = vector.load %arg8[%c0_27, %c0_28] : memref<576x128xbf16, #tpu.memory_space<vmem>>, vector<64x128xbf16>
    %cst_29 = arith.constant dense<0.000000e+00> : vector<256x128xf32>
    %51 = tpu.matmul %49, %50, %cst_29 {dimension_numbers = #tpu.dot_dimension_numbers<[1], [0], [0], [1], [0, 0, 1, 1], [], []>} : vector<256x64xbf16>, vector<64x128xbf16>, vector<256x128xf32> -> vector<256x128xf32>
    %c31 = arith.constant 31 : index
    %c0_30 = arith.constant 0 : index
    %52 = vector.load %arg13[%c31, %c0_30] : memref<320x64xbf16, #tpu.memory_space<vmem>>, vector<256x64xbf16>
    %c192 = arith.constant 192 : index
    %c0_31 = arith.constant 0 : index
    %53 = vector.load %arg8[%c192, %c0_31] : memref<576x128xbf16, #tpu.memory_space<vmem>>, vector<64x128xbf16>
    %cst_32 = arith.constant dense<0.000000e+00> : vector<256x128xf32>
    %54 = tpu.matmul %52, %53, %cst_32 {dimension_numbers = #tpu.dot_dimension_numbers<[1], [0], [0], [1], [0, 0, 1, 1], [], []>} : vector<256x64xbf16>, vector<64x128xbf16>, vector<256x128xf32> -> vector<256x128xf32>
    %55 = arith.addf %51, %54 : vector<256x128xf32>
    %c47 = arith.constant 47 : index
    %c0_33 = arith.constant 0 : index
    %56 = vector.load %arg13[%c47, %c0_33] : memref<320x64xbf16, #tpu.memory_space<vmem>>, vector<256x64xbf16>
    %c384 = arith.constant 384 : index
    %c0_34 = arith.constant 0 : index
    %57 = vector.load %arg8[%c384, %c0_34] : memref<576x128xbf16, #tpu.memory_space<vmem>>, vector<64x128xbf16>
    %cst_35 = arith.constant dense<0.000000e+00> : vector<256x128xf32>
    %58 = tpu.matmul %56, %57, %cst_35 {dimension_numbers = #tpu.dot_dimension_numbers<[1], [0], [0], [1], [0, 0, 1, 1], [], []>} : vector<256x64xbf16>, vector<64x128xbf16>, vector<256x128xf32> -> vector<256x128xf32>
    %59 = arith.addf %55, %58 : vector<256x128xf32>
    %c16 = arith.constant 16 : index
    %c0_36 = arith.constant 0 : index
    %60 = vector.load %arg13[%c16, %c0_36] : memref<320x64xbf16, #tpu.memory_space<vmem>>, vector<256x64xbf16>
    %c64 = arith.constant 64 : index
    %c0_37 = arith.constant 0 : index
    %61 = vector.load %arg8[%c64, %c0_37] : memref<576x128xbf16, #tpu.memory_space<vmem>>, vector<64x128xbf16>
    %cst_38 = arith.constant dense<0.000000e+00> : vector<256x128xf32>
    %62 = tpu.matmul %60, %61, %cst_38 {dimension_numbers = #tpu.dot_dimension_numbers<[1], [0], [0], [1], [0, 0, 1, 1], [], []>} : vector<256x64xbf16>, vector<64x128xbf16>, vector<256x128xf32> -> vector<256x128xf32>
    %c32_39 = arith.constant 32 : index
    %c0_40 = arith.constant 0 : index
    %63 = vector.load %arg13[%c32_39, %c0_40] : memref<320x64xbf16, #tpu.memory_space<vmem>>, vector<256x64xbf16>
    %c256 = arith.constant 256 : index
    %c0_41 = arith.constant 0 : index
    %64 = vector.load %arg8[%c256, %c0_41] : memref<576x128xbf16, #tpu.memory_space<vmem>>, vector<64x128xbf16>
    %cst_42 = arith.constant dense<0.000000e+00> : vector<256x128xf32>
    %65 = tpu.matmul %63, %64, %cst_42 {dimension_numbers = #tpu.dot_dimension_numbers<[1], [0], [0], [1], [0, 0, 1, 1], [], []>} : vector<256x64xbf16>, vector<64x128xbf16>, vector<256x128xf32> -> vector<256x128xf32>
    %66 = arith.addf %62, %65 : vector<256x128xf32>
    %c48 = arith.constant 48 : index
    %c0_43 = arith.constant 0 : index
    %67 = vector.load %arg13[%c48, %c0_43] : memref<320x64xbf16, #tpu.memory_space<vmem>>, vector<256x64xbf16>
    %c448 = arith.constant 448 : index
    %c0_44 = arith.constant 0 : index
    %68 = vector.load %arg8[%c448, %c0_44] : memref<576x128xbf16, #tpu.memory_space<vmem>>, vector<64x128xbf16>
    %cst_45 = arith.constant dense<0.000000e+00> : vector<256x128xf32>
    %69 = tpu.matmul %67, %68, %cst_45 {dimension_numbers = #tpu.dot_dimension_numbers<[1], [0], [0], [1], [0, 0, 1, 1], [], []>} : vector<256x64xbf16>, vector<64x128xbf16>, vector<256x128xf32> -> vector<256x128xf32>
    %70 = arith.addf %66, %69 : vector<256x128xf32>
    %c17 = arith.constant 17 : index
    %c0_46 = arith.constant 0 : index
    %71 = vector.load %arg13[%c17, %c0_46] : memref<320x64xbf16, #tpu.memory_space<vmem>>, vector<256x64xbf16>
    %c128 = arith.constant 128 : index
    %c0_47 = arith.constant 0 : index
    %72 = vector.load %arg8[%c128, %c0_47] : memref<576x128xbf16, #tpu.memory_space<vmem>>, vector<64x128xbf16>
    %cst_48 = arith.constant dense<0.000000e+00> : vector<256x128xf32>
    %73 = tpu.matmul %71, %72, %cst_48 {dimension_numbers = #tpu.dot_dimension_numbers<[1], [0], [0], [1], [0, 0, 1, 1], [], []>} : vector<256x64xbf16>, vector<64x128xbf16>, vector<256x128xf32> -> vector<256x128xf32>
    %c33 = arith.constant 33 : index
    %c0_49 = arith.constant 0 : index
    %74 = vector.load %arg13[%c33, %c0_49] : memref<320x64xbf16, #tpu.memory_space<vmem>>, vector<256x64xbf16>
    %c320 = arith.constant 320 : index
    %c0_50 = arith.constant 0 : index
    %75 = vector.load %arg8[%c320, %c0_50] : memref<576x128xbf16, #tpu.memory_space<vmem>>, vector<64x128xbf16>
    %cst_51 = arith.constant dense<0.000000e+00> : vector<256x128xf32>
    %76 = tpu.matmul %74, %75, %cst_51 {dimension_numbers = #tpu.dot_dimension_numbers<[1], [0], [0], [1], [0, 0, 1, 1], [], []>} : vector<256x64xbf16>, vector<64x128xbf16>, vector<256x128xf32> -> vector<256x128xf32>
    %77 = arith.addf %73, %76 : vector<256x128xf32>
    %c49 = arith.constant 49 : index
    %c0_52 = arith.constant 0 : index
    %78 = vector.load %arg13[%c49, %c0_52] : memref<320x64xbf16, #tpu.memory_space<vmem>>, vector<256x64xbf16>
    %c512 = arith.constant 512 : index
    %c0_53 = arith.constant 0 : index
    %79 = vector.load %arg8[%c512, %c0_53] : memref<576x128xbf16, #tpu.memory_space<vmem>>, vector<64x128xbf16>
    %cst_54 = arith.constant dense<0.000000e+00> : vector<256x128xf32>
    %80 = tpu.matmul %78, %79, %cst_54 {dimension_numbers = #tpu.dot_dimension_numbers<[1], [0], [0], [1], [0, 0, 1, 1], [], []>} : vector<256x64xbf16>, vector<64x128xbf16>, vector<256x128xf32> -> vector<256x128xf32>
    %81 = arith.addf %77, %80 : vector<256x128xf32>
    %82 = vector.broadcast %20 : vector<256x1xf32> to vector<256x128xf32>
    %83 = arith.mulf %59, %82 : vector<256x128xf32>
    %84 = arith.addf %83, %70 : vector<256x128xf32>
    %85 = vector.broadcast %24 : vector<256x1xf32> to vector<256x128xf32>
    %86 = arith.mulf %81, %85 : vector<256x128xf32>
    %87 = arith.addf %84, %86 : vector<256x128xf32>
    %c0_55 = arith.constant 0 : index
    %c0_56 = arith.constant 0 : index
    %88 = vector.load %arg9[%c0_55, %c0_56] : memref<1x128xf32, #tpu.memory_space<vmem>>, vector<1x128xf32>
    %89 = vector.broadcast %88 : vector<1x128xf32> to vector<256x128xf32>
    %90 = arith.addf %87, %89 : vector<256x128xf32>
    %cst_57 = arith.constant 0.000000e+00 : f32
    %91 = vector.broadcast %cst_57 : f32 to vector<256x128xf32>
    %92 = arith.maximumf %90, %91 : vector<256x128xf32>
    %93 = arith.addf %33, %92 : vector<256x128xf32>
    %cst_58 = arith.constant 0.000000e+00 : bf16
    %94 = vector.broadcast %cst_58 : bf16 to vector<32x128xbf16>
    %c0_59 = arith.constant 0 : index
    %c0_60 = arith.constant 0 : index
    %95 = vector.load %arg14[%c0_59, %c0_60] : memref<320x128xbf16, #tpu.memory_space<vmem>>, vector<32x128xbf16>
    tpu.vector_store %arg14[%c0_59, %c0_60], %94 {strides = array<i32>} : memref<320x128xbf16, #tpu.memory_space<vmem>>, vector<32x128xbf16>,
    %cst_61 = arith.constant 0.000000e+00 : bf16
    %96 = vector.broadcast %cst_61 : bf16 to vector<32x128xbf16>
    %c288_62 = arith.constant 288 : index
    %c0_63 = arith.constant 0 : index
    %97 = vector.load %arg14[%c288_62, %c0_63] : memref<320x128xbf16, #tpu.memory_space<vmem>>, vector<32x128xbf16>
    tpu.vector_store %arg14[%c288_62, %c0_63], %96 {strides = array<i32>} : memref<320x128xbf16, #tpu.memory_space<vmem>>, vector<32x128xbf16>,
    %98 = arith.truncf %93 : vector<256x128xf32> to vector<256x128xbf16>
    %c32_64 = arith.constant 32 : index
    %c0_65 = arith.constant 0 : index
    %99 = vector.load %arg14[%c32_64, %c0_65] : memref<320x128xbf16, #tpu.memory_space<vmem>>, vector<256x128xbf16>
    tpu.vector_store %arg14[%c32_64, %c0_65], %98 {strides = array<i32>} : memref<320x128xbf16, #tpu.memory_space<vmem>>, vector<256x128xbf16>,
    %c15_66 = arith.constant 15 : index
    %c0_67 = arith.constant 0 : index
    %100 = vector.load %arg14[%c15_66, %c0_67] : memref<320x128xbf16, #tpu.memory_space<vmem>>, vector<256x128xbf16>
    %c0_68 = arith.constant 0 : index
    %c0_69 = arith.constant 0 : index
    %101 = vector.load %arg10[%c0_68, %c0_69] : memref<1152x128xbf16, #tpu.memory_space<vmem>>, vector<128x128xbf16>
    %cst_70 = arith.constant dense<0.000000e+00> : vector<256x128xf32>
    %102 = tpu.matmul %100, %101, %cst_70 {dimension_numbers = #tpu.dot_dimension_numbers<[1], [0], [0], [1], [0, 0, 1, 1], [], []>} : vector<256x128xbf16>, vector<128x128xbf16>, vector<256x128xf32> -> vector<256x128xf32>
    %c31_71 = arith.constant 31 : index
    %c0_72 = arith.constant 0 : index
    %103 = vector.load %arg14[%c31_71, %c0_72] : memref<320x128xbf16, #tpu.memory_space<vmem>>, vector<256x128xbf16>
    %c384_73 = arith.constant 384 : index
    %c0_74 = arith.constant 0 : index
    %104 = vector.load %arg10[%c384_73, %c0_74] : memref<1152x128xbf16, #tpu.memory_space<vmem>>, vector<128x128xbf16>
    %cst_75 = arith.constant dense<0.000000e+00> : vector<256x128xf32>
    %105 = tpu.matmul %103, %104, %cst_75 {dimension_numbers = #tpu.dot_dimension_numbers<[1], [0], [0], [1], [0, 0, 1, 1], [], []>} : vector<256x128xbf16>, vector<128x128xbf16>, vector<256x128xf32> -> vector<256x128xf32>
    %106 = arith.addf %102, %105 : vector<256x128xf32>
    %c47_76 = arith.constant 47 : index
    %c0_77 = arith.constant 0 : index
    %107 = vector.load %arg14[%c47_76, %c0_77] : memref<320x128xbf16, #tpu.memory_space<vmem>>, vector<256x128xbf16>
    %c768 = arith.constant 768 : index
    %c0_78 = arith.constant 0 : index
    %108 = vector.load %arg10[%c768, %c0_78] : memref<1152x128xbf16, #tpu.memory_space<vmem>>, vector<128x128xbf16>
    %cst_79 = arith.constant dense<0.000000e+00> : vector<256x128xf32>
    %109 = tpu.matmul %107, %108, %cst_79 {dimension_numbers = #tpu.dot_dimension_numbers<[1], [0], [0], [1], [0, 0, 1, 1], [], []>} : vector<256x128xbf16>, vector<128x128xbf16>, vector<256x128xf32> -> vector<256x128xf32>
    %110 = arith.addf %106, %109 : vector<256x128xf32>
    %c16_80 = arith.constant 16 : index
    %c0_81 = arith.constant 0 : index
    %111 = vector.load %arg14[%c16_80, %c0_81] : memref<320x128xbf16, #tpu.memory_space<vmem>>, vector<256x128xbf16>
    %c128_82 = arith.constant 128 : index
    %c0_83 = arith.constant 0 : index
    %112 = vector.load %arg10[%c128_82, %c0_83] : memref<1152x128xbf16, #tpu.memory_space<vmem>>, vector<128x128xbf16>
    %cst_84 = arith.constant dense<0.000000e+00> : vector<256x128xf32>
    %113 = tpu.matmul %111, %112, %cst_84 {dimension_numbers = #tpu.dot_dimension_numbers<[1], [0], [0], [1], [0, 0, 1, 1], [], []>} : vector<256x128xbf16>, vector<128x128xbf16>, vector<256x128xf32> -> vector<256x128xf32>
    %c32_85 = arith.constant 32 : index
    %c0_86 = arith.constant 0 : index
    %114 = vector.load %arg14[%c32_85, %c0_86] : memref<320x128xbf16, #tpu.memory_space<vmem>>, vector<256x128xbf16>
    %c512_87 = arith.constant 512 : index
    %c0_88 = arith.constant 0 : index
    %115 = vector.load %arg10[%c512_87, %c0_88] : memref<1152x128xbf16, #tpu.memory_space<vmem>>, vector<128x128xbf16>
    %cst_89 = arith.constant dense<0.000000e+00> : vector<256x128xf32>
    %116 = tpu.matmul %114, %115, %cst_89 {dimension_numbers = #tpu.dot_dimension_numbers<[1], [0], [0], [1], [0, 0, 1, 1], [], []>} : vector<256x128xbf16>, vector<128x128xbf16>, vector<256x128xf32> -> vector<256x128xf32>
    %117 = arith.addf %113, %116 : vector<256x128xf32>
    %c48_90 = arith.constant 48 : index
    %c0_91 = arith.constant 0 : index
    %118 = vector.load %arg14[%c48_90, %c0_91] : memref<320x128xbf16, #tpu.memory_space<vmem>>, vector<256x128xbf16>
    %c896 = arith.constant 896 : index
    %c0_92 = arith.constant 0 : index
    %119 = vector.load %arg10[%c896, %c0_92] : memref<1152x128xbf16, #tpu.memory_space<vmem>>, vector<128x128xbf16>
    %cst_93 = arith.constant dense<0.000000e+00> : vector<256x128xf32>
    %120 = tpu.matmul %118, %119, %cst_93 {dimension_numbers = #tpu.dot_dimension_numbers<[1], [0], [0], [1], [0, 0, 1, 1], [], []>} : vector<256x128xbf16>, vector<128x128xbf16>, vector<256x128xf32> -> vector<256x128xf32>
    %121 = arith.addf %117, %120 : vector<256x128xf32>
    %c17_94 = arith.constant 17 : index
    %c0_95 = arith.constant 0 : index
    %122 = vector.load %arg14[%c17_94, %c0_95] : memref<320x128xbf16, #tpu.memory_space<vmem>>, vector<256x128xbf16>
    %c256_96 = arith.constant 256 : index
    %c0_97 = arith.constant 0 : index
    %123 = vector.load %arg10[%c256_96, %c0_97] : memref<1152x128xbf16, #tpu.memory_space<vmem>>, vector<128x128xbf16>
    %cst_98 = arith.constant dense<0.000000e+00> : vector<256x128xf32>
    %124 = tpu.matmul %122, %123, %cst_98 {dimension_numbers = #tpu.dot_dimension_numbers<[1], [0], [0], [1], [0, 0, 1, 1], [], []>} : vector<256x128xbf16>, vector<128x128xbf16>, vector<256x128xf32> -> vector<256x128xf32>
    %c33_99 = arith.constant 33 : index
    %c0_100 = arith.constant 0 : index
    %125 = vector.load %arg14[%c33_99, %c0_100] : memref<320x128xbf16, #tpu.memory_space<vmem>>, vector<256x128xbf16>
    %c640 = arith.constant 640 : index
    %c0_101 = arith.constant 0 : index
    %126 = vector.load %arg10[%c640, %c0_101] : memref<1152x128xbf16, #tpu.memory_space<vmem>>, vector<128x128xbf16>
    %cst_102 = arith.constant dense<0.000000e+00> : vector<256x128xf32>
    %127 = tpu.matmul %125, %126, %cst_102 {dimension_numbers = #tpu.dot_dimension_numbers<[1], [0], [0], [1], [0, 0, 1, 1], [], []>} : vector<256x128xbf16>, vector<128x128xbf16>, vector<256x128xf32> -> vector<256x128xf32>
    %128 = arith.addf %124, %127 : vector<256x128xf32>
    %c49_103 = arith.constant 49 : index
    %c0_104 = arith.constant 0 : index
    %129 = vector.load %arg14[%c49_103, %c0_104] : memref<320x128xbf16, #tpu.memory_space<vmem>>, vector<256x128xbf16>
    %c1024 = arith.constant 1024 : index
    %c0_105 = arith.constant 0 : index
    %130 = vector.load %arg10[%c1024, %c0_105] : memref<1152x128xbf16, #tpu.memory_space<vmem>>, vector<128x128xbf16>
    %cst_106 = arith.constant dense<0.000000e+00> : vector<256x128xf32>
    %131 = tpu.matmul %129, %130, %cst_106 {dimension_numbers = #tpu.dot_dimension_numbers<[1], [0], [0], [1], [0, 0, 1, 1], [], []>} : vector<256x128xbf16>, vector<128x128xbf16>, vector<256x128xf32> -> vector<256x128xf32>
    %132 = arith.addf %128, %131 : vector<256x128xf32>
    %133 = vector.broadcast %20 : vector<256x1xf32> to vector<256x128xf32>
    %134 = arith.mulf %110, %133 : vector<256x128xf32>
    %135 = arith.addf %134, %121 : vector<256x128xf32>
    %136 = vector.broadcast %24 : vector<256x1xf32> to vector<256x128xf32>
    %137 = arith.mulf %132, %136 : vector<256x128xf32>
    %138 = arith.addf %135, %137 : vector<256x128xf32>
    %c0_107 = arith.constant 0 : index
    %c0_108 = arith.constant 0 : index
    %139 = vector.load %arg11[%c0_107, %c0_108] : memref<1x128xf32, #tpu.memory_space<vmem>>, vector<1x128xf32>
    %140 = vector.broadcast %139 : vector<1x128xf32> to vector<256x128xf32>
    %141 = arith.addf %138, %140 : vector<256x128xf32>
    %cst_109 = arith.constant 0.000000e+00 : f32
    %142 = vector.broadcast %cst_109 : f32 to vector<256x128xf32>
    %143 = arith.maximumf %141, %142 : vector<256x128xf32>
    %144 = tpu.iota {dimensions = array<i32: 1>} : vector<1x128xi32>
    %c81_i32 = arith.constant 81 : i32
    %145 = vector.broadcast %c81_i32 : i32 to vector<1x128xi32>
    %146 = arith.cmpi eq, %144, %145 : vector<1x128xi32>
    %147 = arith.extui %146 : vector<1x128xi1> to vector<1x128xi32>
    %148 = arith.sitofp %147 : vector<1x128xi32> to vector<1x128xf32>
    %c0_110 = arith.constant 0 : index
    %c0_111 = arith.constant 0 : index
    %c0_112 = arith.constant 0 : index
    %149 = vector.load %arg3[%c0_110, %c0_111, %c0_112] : memref<1x256x1xf32, #tpu.memory_space<vmem>>, vector<1x256x1xf32>
    %150 = vector.shape_cast %149 : vector<1x256x1xf32> to vector<256x1xf32>
    %151 = vector.broadcast %150 : vector<256x1xf32> to vector<256x128xf32>
    %152 = vector.broadcast %148 : vector<1x128xf32> to vector<256x128xf32>
    %153 = arith.mulf %151, %152 : vector<256x128xf32>
    %154 = arith.addf %143, %153 : vector<256x128xf32>
    %c0_113 = arith.constant 0 : index
    %c0_114 = arith.constant 0 : index
    %c0_115 = arith.constant 0 : index
    %155 = vector.load %arg12[%c0_113, %c0_114, %c0_115] : memref<1x256x128xf32, #tpu.memory_space<vmem>>, vector<1x256x128xf32>
    %156 = vector.shape_cast %155 : vector<1x256x128xf32> to vector<256x128xf32>
    %157 = vector.shape_cast %154 : vector<256x128xf32> to vector<1x256x128xf32>
    tpu.vector_store %arg12[%c0_113, %c0_114, %c0_115], %157 {strides = array<i32>} : memref<1x256x128xf32, #tpu.memory_space<vmem>>, vector<1x256x128xf32>,
    return
  }
  func.func @transform_0(%arg0: i32) -> (i32, i32, i32) {
    %c0_i32 = arith.constant 0 : i32
    %c0_i32_0 = arith.constant 0 : i32
    %c0_i32_1 = arith.constant 0 : i32
    return %arg0, %c0_i32, %c0_i32_0 : i32, i32, i32
  }
  func.func @transform_1(%arg0: i32) -> (i32, i32, i32) {
    %c0_i32 = arith.constant 0 : i32
    %c0_i32_0 = arith.constant 0 : i32
    %c0_i32_1 = arith.constant 0 : i32
    return %arg0, %c0_i32, %c0_i32_0 : i32, i32, i32
  }
  func.func @transform_2(%arg0: i32) -> (i32, i32, i32) {
    %c0_i32 = arith.constant 0 : i32
    %c0_i32_0 = arith.constant 0 : i32
    %c0_i32_1 = arith.constant 0 : i32
    return %arg0, %c0_i32, %c0_i32_0 : i32, i32, i32
  }
  func.func @transform_3(%arg0: i32) -> (i32, i32) {
    %c0_i32 = arith.constant 0 : i32
    %c0_i32_0 = arith.constant 0 : i32
    %c0_i32_1 = arith.constant 0 : i32
    return %c0_i32, %c0_i32_0 : i32, i32
  }
  func.func @transform_4(%arg0: i32) -> (i32, i32) {
    %c0_i32 = arith.constant 0 : i32
    %c0_i32_0 = arith.constant 0 : i32
    %c0_i32_1 = arith.constant 0 : i32
    return %c0_i32, %c0_i32_0 : i32, i32
  }
  func.func @transform_5(%arg0: i32) -> (i32, i32) {
    %c0_i32 = arith.constant 0 : i32
    %c0_i32_0 = arith.constant 0 : i32
    %c0_i32_1 = arith.constant 0 : i32
    return %c0_i32, %c0_i32_0 : i32, i32
  }
  func.func @transform_6(%arg0: i32) -> (i32, i32) {
    %c0_i32 = arith.constant 0 : i32
    %c0_i32_0 = arith.constant 0 : i32
    %c0_i32_1 = arith.constant 0 : i32
    return %c0_i32, %c0_i32_0 : i32, i32
  }
  func.func @transform_7(%arg0: i32) -> (i32, i32) {
    %c0_i32 = arith.constant 0 : i32
    %c0_i32_0 = arith.constant 0 : i32
    %c0_i32_1 = arith.constant 0 : i32
    return %c0_i32, %c0_i32_0 : i32, i32
  }
  func.func @transform_8(%arg0: i32) -> (i32, i32) {
    %c0_i32 = arith.constant 0 : i32
    %c0_i32_0 = arith.constant 0 : i32
    %c0_i32_1 = arith.constant 0 : i32
    return %c0_i32, %c0_i32_0 : i32, i32
  }
  func.func @transform_9(%arg0: i32) -> (i32, i32) {
    %c0_i32 = arith.constant 0 : i32
    %c0_i32_0 = arith.constant 0 : i32
    %c0_i32_1 = arith.constant 0 : i32
    return %c0_i32, %c0_i32_0 : i32, i32
  }
  func.func @transform_10(%arg0: i32) -> (i32, i32) {
    %c0_i32 = arith.constant 0 : i32
    %c0_i32_0 = arith.constant 0 : i32
    %c0_i32_1 = arith.constant 0 : i32
    return %c0_i32, %c0_i32_0 : i32, i32
  }
  func.func @transform_11(%arg0: i32) -> (i32, i32, i32) {
    %c0_i32 = arith.constant 0 : i32
    %c0_i32_0 = arith.constant 0 : i32
    %c0_i32_1 = arith.constant 0 : i32
    return %arg0, %c0_i32, %c0_i32_0 : i32, i32, i32
  }
}

</mosaic_0001>

<llo_original>
// kernel: small_motion_encoder.1
$region0: #{small_motion_encoder.1}
  #allocation0 [shape = 'u32[]', space=smem, size = 0x4, offset = 0x4, fixed_abs, tag = 'smem constant byte address 0x4 - core index']
  #allocation1 [shape = 'u32[144,128]{1,0:T(1,128)}', space=vmem, size = 0x12000, scoped, tag = 'internal scratch']
  #allocation2 [shape = 'bf16[320,64]{1,0:T(16,128)(2,1)}', space=vmem, size = 0x14000, scoped, tag = 'scratch operand']
  #allocation3 [shape = 'bf16[320,128]{1,0:T(16,128)(2,1)}', space=vmem, size = 0x14000, scoped, tag = 'scratch operand']
  %s0 = inlined_call_operand.hbm [shape: f32[2,256,28], index: 0, kind: input, shape index: {}]
  %s1 = inlined_call_operand.hbm [shape: bf16[2,256,49], index: 1, kind: input, shape index: {}]
  %s2 = inlined_call_operand.hbm [shape: f32[2,256,1], index: 2, kind: input, shape index: {}]
  %s3 = inlined_call_operand.hbm [shape: f32[28,128], index: 3, kind: input, shape index: {}]
  %s4 = inlined_call_operand.hbm [shape: f32[1,128], index: 4, kind: input, shape index: {}]
  %s5 = inlined_call_operand.hbm [shape: bf16[49,64], index: 5, kind: input, shape index: {}]
  %s6 = inlined_call_operand.hbm [shape: f32[1,64], index: 6, kind: input, shape index: {}]
  %s7 = inlined_call_operand.hbm [shape: bf16[576,128], index: 7, kind: input, shape index: {}]
  %s8 = inlined_call_operand.hbm [shape: f32[1,128], index: 8, kind: input, shape index: {}]
  %s9 = inlined_call_operand.hbm [shape: bf16[1152,128], index: 9, kind: input, shape index: {}]
  %s10 = inlined_call_operand.hbm [shape: f32[1,128], index: 10, kind: input, shape index: {}]
  %s11 = inlined_call_operand.hbm [shape: f32[2,256,128], index: 11, kind: output, shape index: {}]
  %s12 = sld [smem:[#allocation0]]
  $region121: #{small_motion_encoder.1} parent=0
    _
  %s14 = ssub.s32 1, %s12
  %s15 = scalar_select 0, %s14, %s12
  $region1: #{small_motion_encoder.1} parent=0
    #allocation4 [shape = 'u8[262144]{0}', space=vmem, size = 0x40000, scoped, tag = 'input window, operand 0']
    #allocation5 [shape = 's32[2]{0}', space=sflag, size = 0x8, scoped, tag = 'scoped memory for small_motion_encoder.1']
    #allocation6 [shape = 's32[2]{0}', space=sflag, size = 0x8, scoped, tag = 'scoped memory for small_motion_encoder.1']
    #allocation7 [shape = 'u8[131072]{0}', space=vmem, size = 0x20000, scoped, tag = 'input window, operand 1']
    #allocation8 [shape = 's32[2]{0}', space=sflag, size = 0x8, scoped, tag = 'scoped memory for small_motion_encoder.1']
    #allocation9 [shape = 'u8[262144]{0}', space=vmem, size = 0x40000, scoped, tag = 'input window, operand 2']
    #allocation10 [shape = 'u8[16384]{0}', space=vmem, size = 0x4000, scoped, tag = 'input window, operand 3, single buffered']
    #allocation11 [shape = 's32[1]{0}', space=sflag, size = 0x4, scoped, tag = 'scoped memory for small_motion_encoder.1']
    #allocation12 [shape = 'u8[512]{0}', space=vmem, size = 0x400, scoped, tag = 'input window, operand 4, single buffered']
    #allocation13 [shape = 'u8[14336]{0}', space=vmem, size = 0x3800, scoped, tag = 'input window, operand 5, single buffered']
    #allocation14 [shape = 's32[1]{0}', space=sflag, size = 0x4, scoped, tag = 'scoped memory for small_motion_encoder.1']
    #allocation15 [shape = 'u8[512]{0}', space=vmem, size = 0x400, scoped, tag = 'input window, operand 6, single buffered']
    #allocation16 [shape = 'u8[147456]{0}', space=vmem, size = 0x24000, scoped, tag = 'input window, operand 7, single buffered']
    #allocation17 [shape = 's32[1]{0}', space=sflag, size = 0x4, scoped, tag = 'scoped memory for small_motion_encoder.1']
    #allocation18 [shape = 'u8[512]{0}', space=vmem, size = 0x400, scoped, tag = 'input window, operand 8, single buffered']
    #allocation19 [shape = 'u8[294912]{0}', space=vmem, size = 0x48000, scoped, tag = 'input window, operand 9, single buffered']
    #allocation20 [shape = 's32[1]{0}', space=sflag, size = 0x4, scoped, tag = 'scoped memory for small_motion_encoder.1']
    #allocation21 [shape = 'u8[512]{0}', space=vmem, size = 0x400, scoped, tag = 'input window, operand 10, single buffered']
    #allocation22 [shape = 'u8[262144]{0}', space=vmem, size = 0x40000, scoped, tag = 'output window, operand 0']
    %16 = vsyncpa [#allocation5], 0
    %s17 = scalar_lea.sflag [#allocation5], 1
    %18 = vsyncpa %s17, 0
    %19 = vsyncpa [#allocation8], 0
    %s20 = scalar_lea.sflag [#allocation8], 1
    %21 = vsyncpa %s20, 0
    %22 = vsyncpa [#allocation11], 0
    %23 = vsyncpa [#allocation14], 0
    %24 = vsyncpa [#allocation17], 0
    %25 = vsyncpa [#allocation20], 0
    %26 = vsyncpa [#allocation6], 0
    %s27 = scalar_lea.sflag [#allocation6], 1
    %28 = vsyncpa %s27, 0
    loop: start=0, step=1, limit=4
    $region2: #{small_motion_encoder.1} parent=1 // loop_pre_header
      _
    $region3: #{small_motion_encoder.1} parent=1 // loop_header
      %s30 = sphi 0, %s34
      %p31 = scmp.ge.s32.totalorder %s30, 4
      %s40 = sphi 0, %s42
      %s43 = sphi 0, %s40
      %s44 = sphi 0, %s43
      %s60 = sphi 0, %s44
      %s66 = sphi 0, %s68
      %s69 = sphi 0, %s66
      %s70 = sphi 0, %s69
      %s86 = sphi 0, %s70
      %s92 = sphi 0, %s94
      %s95 = sphi 0, %s92
      %s96 = sphi 0, %s95
      %s112 = sphi 0, %s96
      %s116 = sphi 0, %s116
      %s118 = sphi 0, %s116
      %s119 = sphi 0, %s118
      %s133 = sphi 0, %s119
      %s137 = sphi 0, %s137
      %s139 = sphi 0, %s137
      %s140 = sphi 0, %s139
      %s154 = sphi 0, %s140
      %s158 = sphi 0, %s158
      %s160 = sphi 0, %s158
      %s161 = sphi 0, %s160
      %s175 = sphi 0, %s161
      %s179 = sphi 0, %s179
      %s181 = sphi 0, %s179
      %s182 = sphi 0, %s181
      %s196 = sphi 0, %s182
      %s200 = sphi 0, %s200
      %s202 = sphi 0, %s200
      %s203 = sphi 0, %s202
      %s217 = sphi 0, %s203
      %s221 = sphi 0, %s221
      %s223 = sphi 0, %s221
      %s224 = sphi 0, %s223
      %s238 = sphi 0, %s224
      %s242 = sphi 0, %s242
      %s244 = sphi 0, %s242
      %s245 = sphi 0, %s244
      %s259 = sphi 0, %s245
      %s263 = sphi 0, %s263
      %s265 = sphi 0, %s263
      %s266 = sphi 0, %s265
      %s280 = sphi 0, %s266
      %s286 = sphi 0, %s288
      %s289 = sphi 0, %s286
      %s290 = sphi 0, %s289
      %s306 = sphi 0, %s290
    $region4: #{small_motion_encoder.1} parent=1 // loop_header_branch
      %33 = sbr.rel (%p31) target = $region8
    $region5: #{small_motion_encoder.1} parent=1 // loop_body
      %s35 = ssub.s32 %s30, 1
      %s36 = ssub.s32 %s30, 2
      %s37 = sadd.s32 %s30, 1
      %s38 = ssub.s32 %s30, %s37
      %p39 = scmp.eq.s32.totalorder %s38, 0
      %s41 = sadd.s32 %s40, 1
      %s42 = scalar_select %p39, %s40, %s41
      %p45 = pneg %p39
      %p46 = scmp.eq.s32.totalorder %s30, 1
      %p47 = por %p45, %p46
      %p48 = scmp.ne.s32.totalorder %s40, %s43
      %p49 = scmp.eq.s32.totalorder %s30, 0
      %p50 = por %p48, %p49
      %p51 = scmp.ne.s32.totalorder %s40, %s43
      %p52 = scmp.eq.s32.totalorder %s35, 1
      %p53 = por %p51, %p52
      %p54 = scmp.ne.s32.totalorder %s43, %s44
      %p55 = scmp.eq.s32.totalorder %s35, 0
      %p56 = por %p54, %p55
      %p57 = scmp.ne.s32.totalorder %s43, %s44
      %p58 = scmp.eq.s32.totalorder %s36, 1
      %p59 = por %p57, %p58
      %p61 = scmp.ne.s32.totalorder %s44, %s60
      %p62 = scmp.eq.s32.totalorder %s36, 0
      %p63 = por %p61, %p62
      %s64 = ssub.s32 %s30, %s37
      %p65 = scmp.eq.s32.totalorder %s64, 0
      %s67 = sadd.s32 %s66, 1
      %s68 = scalar_select %p65, %s66, %s67
      %p71 = pneg %p65
      %p72 = scmp.eq.s32.totalorder %s30, 1
      %p73 = por %p71, %p72
      %p74 = scmp.ne.s32.totalorder %s66, %s69
      %p75 = scmp.eq.s32.totalorder %s30, 0
      %p76 = por %p74, %p75
      %p77 = scmp.ne.s32.totalorder %s66, %s69
      %p78 = scmp.eq.s32.totalorder %s35, 1
      %p79 = por %p77, %p78
      %p80 = scmp.ne.s32.totalorder %s69, %s70
      %p81 = scmp.eq.s32.totalorder %s35, 0
      %p82 = por %p80, %p81
      %p83 = scmp.ne.s32.totalorder %s69, %s70
      %p84 = scmp.eq.s32.totalorder %s36, 1
      %p85 = por %p83, %p84
      %p87 = scmp.ne.s32.totalorder %s70, %s86
      %p88 = scmp.eq.s32.totalorder %s36, 0
      %p89 = por %p87, %p88
      %s90 = ssub.s32 %s30, %s37
      %p91 = scmp.eq.s32.totalorder %s90, 0
      %s93 = sadd.s32 %s92, 1
      %s94 = scalar_select %p91, %s92, %s93
      %p97 = pneg %p91
      %p98 = scmp.eq.s32.totalorder %s30, 1
      %p99 = por %p97, %p98
      %p100 = scmp.ne.s32.totalorder %s92, %s95
      %p101 = scmp.eq.s32.totalorder %s30, 0
      %p102 = por %p100, %p101
      %p103 = scmp.ne.s32.totalorder %s92, %s95
      %p104 = scmp.eq.s32.totalorder %s35, 1
      %p105 = por %p103, %p104
      %p106 = scmp.ne.s32.totalorder %s95, %s96
      %p107 = scmp.eq.s32.totalorder %s35, 0
      %p108 = por %p106, %p107
      %p109 = scmp.ne.s32.totalorder %s95, %s96
      %p110 = scmp.eq.s32.totalorder %s36, 1
      %p111 = por %p109, %p110
      %p113 = scmp.ne.s32.totalorder %s96, %s112
      %p114 = scmp.eq.s32.totalorder %s36, 0
      %p115 = por %p113, %p114
      %s117 = sadd.s32 %s116, 1
      %p120 = scmp.eq.s32.totalorder %s30, 1
      %p121 = scmp.ne.s32.totalorder %s116, %s118
      %p122 = scmp.eq.s32.totalorder %s30, 0
      %p123 = por %p121, %p122
      %p124 = scmp.ne.s32.totalorder %s116, %s118
      %p125 = scmp.eq.s32.totalorder %s35, 1
      %p126 = por %p124, %p125
      %p127 = scmp.ne.s32.totalorder %s118, %s119
      %p128 = scmp.eq.s32.totalorder %s35, 0
      %p129 = por %p127, %p128
      %p130 = scmp.ne.s32.totalorder %s118, %s119
      %p131 = scmp.eq.s32.totalorder %s36, 1
      %p132 = por %p130, %p131
      %p134 = scmp.ne.s32.totalorder %s119, %s133
      %p135 = scmp.eq.s32.totalorder %s36, 0
      %p136 = por %p134, %p135
      %s138 = sadd.s32 %s137, 1
      %p141 = scmp.eq.s32.totalorder %s30, 1
      %p142 = scmp.ne.s32.totalorder %s137, %s139
      %p143 = scmp.eq.s32.totalorder %s30, 0
      %p144 = por %p142, %p143
      %p145 = scmp.ne.s32.totalorder %s137, %s139
      %p146 = scmp.eq.s32.totalorder %s35, 1
      %p147 = por %p145, %p146
      %p148 = scmp.ne.s32.totalorder %s139, %s140
      %p149 = scmp.eq.s32.totalorder %s35, 0
      %p150 = por %p148, %p149
      %p151 = scmp.ne.s32.totalorder %s139, %s140
      %p152 = scmp.eq.s32.totalorder %s36, 1
      %p153 = por %p151, %p152
      %p155 = scmp.ne.s32.totalorder %s140, %s154
      %p156 = scmp.eq.s32.totalorder %s36, 0
      %p157 = por %p155, %p156
      %s159 = sadd.s32 %s158, 1
      %p162 = scmp.eq.s32.totalorder %s30, 1
      %p163 = scmp.ne.s32.totalorder %s158, %s160
      %p164 = scmp.eq.s32.totalorder %s30, 0
      %p165 = por %p163, %p164
      %p166 = scmp.ne.s32.totalorder %s158, %s160
      %p167 = scmp.eq.s32.totalorder %s35, 1
      %p168 = por %p166, %p167
      %p169 = scmp.ne.s32.totalorder %s160, %s161
      %p170 = scmp.eq.s32.totalorder %s35, 0
      %p171 = por %p169, %p170
      %p172 = scmp.ne.s32.totalorder %s160, %s161
      %p173 = scmp.eq.s32.totalorder %s36, 1
      %p174 = por %p172, %p173
      %p176 = scmp.ne.s32.totalorder %s161, %s175
      %p177 = scmp.eq.s32.totalorder %s36, 0
      %p178 = por %p176, %p177
      %s180 = sadd.s32 %s179, 1
      %p183 = scmp.eq.s32.totalorder %s30, 1
      %p184 = scmp.ne.s32.totalorder %s179, %s181
      %p185 = scmp.eq.s32.totalorder %s30, 0
      %p186 = por %p184, %p185
      %p187 = scmp.ne.s32.totalorder %s179, %s181
      %p188 = scmp.eq.s32.totalorder %s35, 1
      %p189 = por %p187, %p188
      %p190 = scmp.ne.s32.totalorder %s181, %s182
      %p191 = scmp.eq.s32.totalorder %s35, 0
      %p192 = por %p190, %p191
      %p193 = scmp.ne.s32.totalorder %s181, %s182
      %p194 = scmp.eq.s32.totalorder %s36, 1
      %p195 = por %p193, %p194
      %p197 = scmp.ne.s32.totalorder %s182, %s196
      %p198 = scmp.eq.s32.totalorder %s36, 0
      %p199 = por %p197, %p198
      %s201 = sadd.s32 %s200, 1
      %p204 = scmp.eq.s32.totalorder %s30, 1
      %p205 = scmp.ne.s32.totalorder %s200, %s202
      %p206 = scmp.eq.s32.totalorder %s30, 0
      %p207 = por %p205, %p206
      %p208 = scmp.ne.s32.totalorder %s200, %s202
      %p209 = scmp.eq.s32.totalorder %s35, 1
      %p210 = por %p208, %p209
      %p211 = scmp.ne.s32.totalorder %s202, %s203
      %p212 = scmp.eq.s32.totalorder %s35, 0
      %p213 = por %p211, %p212
      %p214 = scmp.ne.s32.totalorder %s202, %s203
      %p215 = scmp.eq.s32.totalorder %s36, 1
      %p216 = por %p214, %p215
      %p218 = scmp.ne.s32.totalorder %s203, %s217
      %p219 = scmp.eq.s32.totalorder %s36, 0
      %p220 = por %p218, %p219
      %s222 = sadd.s32 %s221, 1
      %p225 = scmp.eq.s32.totalorder %s30, 1
      %p226 = scmp.ne.s32.totalorder %s221, %s223
      %p227 = scmp.eq.s32.totalorder %s30, 0
      %p228 = por %p226, %p227
      %p229 = scmp.ne.s32.totalorder %s221, %s223
      %p230 = scmp.eq.s32.totalorder %s35, 1
      %p231 = por %p229, %p230
      %p232 = scmp.ne.s32.totalorder %s223, %s224
      %p233 = scmp.eq.s32.totalorder %s35, 0
      %p234 = por %p232, %p233
      %p235 = scmp.ne.s32.totalorder %s223, %s224
      %p236 = scmp.eq.s32.totalorder %s36, 1
      %p237 = por %p235, %p236
      %p239 = scmp.ne.s32.totalorder %s224, %s238
      %p240 = scmp.eq.s32.totalorder %s36, 0
      %p241 = por %p239, %p240
      %s243 = sadd.s32 %s242, 1
      %p246 = scmp.eq.s32.totalorder %s30, 1
      %p247 = scmp.ne.s32.totalorder %s242, %s244
      %p248 = scmp.eq.s32.totalorder %s30, 0
      %p249 = por %p247, %p248
      %p250 = scmp.ne.s32.totalorder %s242, %s244
      %p251 = scmp.eq.s32.totalorder %s35, 1
      %p252 = por %p250, %p251
      %p253 = scmp.ne.s32.totalorder %s244, %s245
      %p254 = scmp.eq.s32.totalorder %s35, 0
      %p255 = por %p253, %p254
      %p256 = scmp.ne.s32.totalorder %s244, %s245
      %p257 = scmp.eq.s32.totalorder %s36, 1
      %p258 = por %p256, %p257
      %p260 = scmp.ne.s32.totalorder %s245, %s259
      %p261 = scmp.eq.s32.totalorder %s36, 0
      %p262 = por %p260, %p261
      %s264 = sadd.s32 %s263, 1
      %p267 = scmp.eq.s32.totalorder %s30, 1
      %p268 = scmp.ne.s32.totalorder %s263, %s265
      %p269 = scmp.eq.s32.totalorder %s30, 0
      %p270 = por %p268, %p269
      %p271 = scmp.ne.s32.totalorder %s263, %s265
      %p272 = scmp.eq.s32.totalorder %s35, 1
      %p273 = por %p271, %p272
      %p274 = scmp.ne.s32.totalorder %s265, %s266
      %p275 = scmp.eq.s32.totalorder %s35, 0
      %p276 = por %p274, %p275
      %p277 = scmp.ne.s32.totalorder %s265, %s266
      %p278 = scmp.eq.s32.totalorder %s36, 1
      %p279 = por %p277, %p278
      %p281 = scmp.ne.s32.totalorder %s266, %s280
      %p282 = scmp.eq.s32.totalorder %s36, 0
      %p283 = por %p281, %p282
      %s284 = ssub.s32 %s30, %s37
      %p285 = scmp.eq.s32.totalorder %s284, 0
      %s287 = sadd.s32 %s286, 1
      %s288 = scalar_select %p285, %s286, %s287
      %p291 = pneg %p285
      %p292 = scmp.eq.s32.totalorder %s30, 1
      %p293 = por %p291, %p292
      %p294 = scmp.ne.s32.totalorder %s286, %s289
      %p295 = scmp.eq.s32.totalorder %s30, 0
      %p296 = por %p294, %p295
      %p297 = scmp.ne.s32.totalorder %s286, %s289
      %p298 = scmp.eq.s32.totalorder %s35, 1
      %p299 = por %p297, %p298
      %p300 = scmp.ne.s32.totalorder %s289, %s290
      %p301 = scmp.eq.s32.totalorder %s35, 0
      %p302 = por %p300, %p301
      %p303 = scmp.ne.s32.totalorder %s289, %s290
      %p304 = scmp.eq.s32.totalorder %s36, 1
      %p305 = por %p303, %p304
      %p307 = scmp.ne.s32.totalorder %s290, %s306
      %p308 = scmp.eq.s32.totalorder %s36, 0
      %p309 = por %p307, %p308
      %p310 = scmp.le.s32.totalorder 1, %s30
      %p311 = scmp.lt.s32.totalorder %s30, 3
      %p312 = pnand %p310, %p311
      %p313 = pneg %p312
      // Predicated region
      $region9: #{small_motion_encoder.1} parent=5 // pred_check
        _
      $region10: #{small_motion_encoder.1} parent=5 // pred_check_branch
        %315 = sbr.rel (%p312) target = $region12
      $region11: #{small_motion_encoder.1} parent=5 // pred_region
        %s316 = ssub.s32 %s30, 1
        // Predicated region
        $region13: #{small_motion_encoder.1} parent=11 // pred_check
          %p317 = pneg %p129
        $region14: #{small_motion_encoder.1} parent=11 // pred_check_branch
          %319 = sbr.rel (%p317) target = $region16
        $region15: #{small_motion_encoder.1} parent=11 // pred_region
          %s321 = ssub.s32 512, 512
          %322 = vsyncadd [#allocation11], %s321
          %s323 = sshll.u32 [#allocation10], 4
          %s324 = int_to_ptr.vmem [resolvable:$true] %s323
          %329 = dma.hbm_to_vmem [thread:$0]  %s3, 512, %s324, [#allocation11], 128, 128, 8
        $region16: #{small_motion_encoder.1} parent=11 // pred_fallthru
          _
        // Predicated region
        $region17: #{small_motion_encoder.1} parent=11 // pred_check
          %p330 = pneg %p150
        $region18: #{small_motion_encoder.1} parent=11 // pred_check_branch
          %332 = sbr.rel (%p330) target = $region20
        $region19: #{small_motion_encoder.1} parent=11 // pred_region
          %s334 = ssub.s32 16, 16
          %335 = vsyncadd [#allocation11], %s334
          %s337 = sshll.u32 [#allocation12], 4
          %s338 = int_to_ptr.vmem [resolvable:$true] %s337
          %340 = dma.hbm_to_vmem [thread:$0]  %s4, 16, %s338, [#allocation11]
        $region20: #{small_motion_encoder.1} parent=11 // pred_fallthru
          _
        // Predicated region
        $region21: #{small_motion_encoder.1} parent=11 // pred_check
          %p341 = pneg %p171
        $region22: #{small_motion_encoder.1} parent=11 // pred_check_branch
          %343 = sbr.rel (%p341) target = $region24
        $region23: #{small_motion_encoder.1} parent=11 // pred_region
          %s345 = ssub.s32 448, 448
          %346 = vsyncadd [#allocation14], %s345
          %s347 = sshll.u32 [#allocation13], 4
          %s348 = int_to_ptr.vmem [resolvable:$true] %s347
          %353 = dma.hbm_to_vmem [thread:$0]  %s5, 448, %s348, [#allocation14], 64, 64, 4
        $region24: #{small_motion_encoder.1} parent=11 // pred_fallthru
          _
        // Predicated region
        $region25: #{small_motion_encoder.1} parent=11 // pred_check
          %p354 = pneg %p192
        $region26: #{small_motion_encoder.1} parent=11 // pred_check_branch
          %356 = sbr.rel (%p354) target = $region28
        $region27: #{small_motion_encoder.1} parent=11 // pred_region
          %s358 = ssub.s32 16, 16
          %359 = vsyncadd [#allocation14], %s358
          %s361 = sshll.u32 [#allocation15], 4
          %s362 = int_to_ptr.vmem [resolvable:$true] %s361
          %364 = dma.hbm_to_vmem [thread:$0]  %s6, 16, %s362, [#allocation14]
        $region28: #{small_motion_encoder.1} parent=11 // pred_fallthru
          _
        // Predicated region
        $region29: #{small_motion_encoder.1} parent=11 // pred_check
          %p365 = pneg %p213
        $region30: #{small_motion_encoder.1} parent=11 // pred_check_branch
          %367 = sbr.rel (%p365) target = $region32
        $region31: #{small_motion_encoder.1} parent=11 // pred_region
          %s369 = ssub.s32 4608, 4608
          %370 = vsyncadd [#allocation17], %s369
          %s371 = sshll.u32 [#allocation16], 4
          %s372 = int_to_ptr.vmem [resolvable:$true] %s371
          %377 = dma.hbm_to_vmem [thread:$0]  %s7, 4608, %s372, [#allocation17], 64, 64, 4
        $region32: #{small_motion_encoder.1} parent=11 // pred_fallthru
          _
        // Predicated region
        $region33: #{small_motion_encoder.1} parent=11 // pred_check
          %p378 = pneg %p234
        $region34: #{small_motion_encoder.1} parent=11 // pred_check_branch
          %380 = sbr.rel (%p378) target = $region36
        $region35: #{small_motion_encoder.1} parent=11 // pred_region
          %s382 = ssub.s32 16, 16
          %383 = vsyncadd [#allocation17], %s382
          %s385 = sshll.u32 [#allocation18], 4
          %s386 = int_to_ptr.vmem [resolvable:$true] %s385
          %388 = dma.hbm_to_vmem [thread:$0]  %s8, 16, %s386, [#allocation17]
        $region36: #{small_motion_encoder.1} parent=11 // pred_fallthru
          _
        // Predicated region
        $region37: #{small_motion_encoder.1} parent=11 // pred_check
          %p389 = pneg %p255
        $region38: #{small_motion_encoder.1} parent=11 // pred_check_branch
          %391 = sbr.rel (%p389) target = $region40
        $region39: #{small_motion_encoder.1} parent=11 // pred_region
          %s393 = ssub.s32 9216, 9216
          %394 = vsyncadd [#allocation20], %s393
          %s395 = sshll.u32 [#allocation19], 4
          %s396 = int_to_ptr.vmem [resolvable:$true] %s395
          %401 = dma.hbm_to_vmem [thread:$0]  %s9, 9216, %s396, [#allocation20], 64, 64, 4
        $region40: #{small_motion_encoder.1} parent=11 // pred_fallthru
          _
        // Predicated region
        $region41: #{small_motion_encoder.1} parent=11 // pred_check
          %p402 = pneg %p276
        $region42: #{small_motion_encoder.1} parent=11 // pred_check_branch
          %404 = sbr.rel (%p402) target = $region44
        $region43: #{small_motion_encoder.1} parent=11 // pred_region
          %s406 = ssub.s32 16, 16
          %407 = vsyncadd [#allocation20], %s406
          %s409 = sshll.u32 [#allocation21], 4
          %s410 = int_to_ptr.vmem [resolvable:$true] %s409
          %412 = dma.hbm_to_vmem [thread:$0]  %s10, 16, %s410, [#allocation20]
        $region44: #{small_motion_encoder.1} parent=11 // pred_fallthru
          _
      $region12: #{small_motion_encoder.1} parent=5 // pred_fallthru
        _
      %p413 = scmp.lt.s32.totalorder %s30, 2
      // Predicated region
      $region45: #{small_motion_encoder.1} parent=5 // pred_check
        %p414 = pneg %p413
      $region46: #{small_motion_encoder.1} parent=5 // pred_check_branch
        %416 = sbr.rel (%p414) target = $region48
      $region47: #{small_motion_encoder.1} parent=5 // pred_region
        // Predicated region
        $region49: #{small_motion_encoder.1} parent=47 // pred_check
          %p417 = pneg %p50
        $region50: #{small_motion_encoder.1} parent=47 // pred_check_branch
          %419 = sbr.rel (%p417) target = $region52
        $region51: #{small_motion_encoder.1} parent=47 // pred_region
          %s420 = sand.u32 %s40, 1
          %s421 = scalar_lea.sflag [#allocation5], %s420
          %s422 = sand.u32 %s40, 1
          %s423 = smul.addr %s422, 256
          %s424 = scalar_lea.vmem [#allocation4], %s423
          %s426 = ssub.s32 4096, 4096
          %427 = vsyncadd %s421, %s426
          %s428 = smul.addr %s30, 32
          %s429 = smul.addr %s428, 128
          %s430 = scalar_lea.hbm %s0, %s429
          %s431 = sshll.u32 %s424, 4
          %s432 = int_to_ptr.vmem [resolvable:$true] %s431
          %437 = dma.hbm_to_vmem [thread:$0]  %s430, 4096, %s432, %s421, 128, 128, 8
        $region52: #{small_motion_encoder.1} parent=47 // pred_fallthru
          _
        // Predicated region
        $region53: #{small_motion_encoder.1} parent=47 // pred_check
          %p438 = pneg %p76
        $region54: #{small_motion_encoder.1} parent=47 // pred_check_branch
          %440 = sbr.rel (%p438) target = $region56
        $region55: #{small_motion_encoder.1} parent=47 // pred_region
          %s441 = sand.u32 %s30, 1
          %s442 = scalar_lea.sflag [#allocation8], %s441
          %s443 = sand.u32 %s66, 1
          %s444 = smul.addr %s443, 128
          %s445 = scalar_lea.vmem [#allocation7], %s444
          %s447 = ssub.s32 2048, 2048
          %448 = vsyncadd %s442, %s447
          %s449 = smul.addr %s30, 32
          %s450 = smul.addr %s449, 64
          %s451 = scalar_lea.hbm %s1, %s450
          %s452 = sshll.u32 %s445, 4
          %s453 = int_to_ptr.vmem [resolvable:$true] %s452
          %458 = dma.hbm_to_vmem [thread:$0]  %s451, 2048, %s453, %s442, 64, 64, 4
        $region56: #{small_motion_encoder.1} parent=47 // pred_fallthru
          _
        // Predicated region
        $region57: #{small_motion_encoder.1} parent=47 // pred_check
          %p459 = pneg %p102
        $region58: #{small_motion_encoder.1} parent=47 // pred_check_branch
          %461 = sbr.rel (%p459) target = $region60
        $region59: #{small_motion_encoder.1} parent=47 // pred_region
          %s462 = sand.u32 %s30, 1
          %s463 = scalar_lea.sflag [#allocation8], %s462
          %s464 = sand.u32 %s92, 1
          %s465 = smul.addr %s464, 256
          %s466 = scalar_lea.vmem [#allocation9], %s465
          %s468 = ssub.s32 4096, 4096
          %469 = vsyncadd %s463, %s468
          %s470 = smul.addr %s30, 32
          %s471 = smul.addr %s470, 128
          %s472 = scalar_lea.hbm %s2, %s471
          %s473 = sshll.u32 %s466, 4
          %s474 = int_to_ptr.vmem [resolvable:$true] %s473
          %479 = dma.hbm_to_vmem [thread:$0]  %s472, 4096, %s474, %s463, 128, 128, 8
        $region60: #{small_motion_encoder.1} parent=47 // pred_fallthru
          _
      $region48: #{small_motion_encoder.1} parent=5 // pred_fallthru
        _
      %p480 = scmp.le.s32.totalorder 1, %s30
      %p481 = scmp.lt.s32.totalorder %s30, 3
      %p482 = pnand %p480, %p481
      %p483 = pneg %p482
      // Predicated region
      $region61: #{small_motion_encoder.1} parent=5 // pred_check
        _
      $region62: #{small_motion_encoder.1} parent=5 // pred_check_branch
        %485 = sbr.rel (%p482) target = $region64
      $region63: #{small_motion_encoder.1} parent=5 // pred_region
        %s486 = ssub.s32 %s30, 1
        %s487 = sand.u32 %s43, 1
        %s488 = scalar_lea.sflag [#allocation5], %s487
        %s489 = sand.u32 %s43, 1
        %s490 = smul.addr %s489, 256
        %s491 = scalar_lea.vmem [#allocation4], %s490
        // Predicated region
        $region65: #{small_motion_encoder.1} parent=63 // pred_check
          %p492 = pneg %p56
        $region66: #{small_motion_encoder.1} parent=63 // pred_check_branch
          %494 = sbr.rel (%p492) target = $region68
        $region67: #{small_motion_encoder.1} parent=63 // pred_region
          %495 = dma.done %s488, 4096
        $region68: #{small_motion_encoder.1} parent=63 // pred_fallthru
          _
        %s496 = sand.u32 %s35, 1
        %s497 = scalar_lea.sflag [#allocation8], %s496
        %s498 = sand.u32 %s69, 1
        %s499 = smul.addr %s498, 128
        %s500 = scalar_lea.vmem [#allocation7], %s499
        // Predicated region
        $region69: #{small_motion_encoder.1} parent=63 // pred_check
          %p501 = pneg %p82
        $region70: #{small_motion_encoder.1} parent=63 // pred_check_branch
          %503 = sbr.rel (%p501) target = $region72
        $region71: #{small_motion_encoder.1} parent=63 // pred_region
          %504 = dma.done %s497, 2048
        $region72: #{small_motion_encoder.1} parent=63 // pred_fallthru
          _
        %s505 = sand.u32 %s35, 1
        %s506 = scalar_lea.sflag [#allocation8], %s505
        %s507 = sand.u32 %s95, 1
        %s508 = smul.addr %s507, 256
        %s509 = scalar_lea.vmem [#allocation9], %s508
        // Predicated region
        $region73: #{small_motion_encoder.1} parent=63 // pred_check
          %p510 = pneg %p108
        $region74: #{small_motion_encoder.1} parent=63 // pred_check_branch
          %512 = sbr.rel (%p510) target = $region76
        $region75: #{small_motion_encoder.1} parent=63 // pred_region
          %513 = dma.done %s506, 4096
        $region76: #{small_motion_encoder.1} parent=63 // pred_fallthru
          _
        // Predicated region
        $region77: #{small_motion_encoder.1} parent=63 // pred_check
          %p514 = pneg %p129
        $region78: #{small_motion_encoder.1} parent=63 // pred_check_branch
          %516 = sbr.rel (%p514) target = $region80
        $region79: #{small_motion_encoder.1} parent=63 // pred_region
          %517 = dma.done [#allocation11], 512
        $region80: #{small_motion_encoder.1} parent=63 // pred_fallthru
          _
        // Predicated region
        $region81: #{small_motion_encoder.1} parent=63 // pred_check
          %p518 = pneg %p150
        $region82: #{small_motion_encoder.1} parent=63 // pred_check_branch
          %520 = sbr.rel (%p518) target = $region84
        $region83: #{small_motion_encoder.1} parent=63 // pred_region
          %521 = dma.done [#allocation11], 16
        $region84: #{small_motion_encoder.1} parent=63 // pred_fallthru
          _
        // Predicated region
        $region85: #{small_motion_encoder.1} parent=63 // pred_check
          %p522 = pneg %p171
        $region86: #{small_motion_encoder.1} parent=63 // pred_check_branch
          %524 = sbr.rel (%p522) target = $region88
        $region87: #{small_motion_encoder.1} parent=63 // pred_region
          %525 = dma.done [#allocation14], 448
        $region88: #{small_motion_encoder.1} parent=63 // pred_fallthru
          _
        // Predicated region
        $region89: #{small_motion_encoder.1} parent=63 // pred_check
          %p526 = pneg %p192
        $region90: #{small_motion_encoder.1} parent=63 // pred_check_branch
          %528 = sbr.rel (%p526) target = $region92
        $region91: #{small_motion_encoder.1} parent=63 // pred_region
          %529 = dma.done [#allocation14], 16
        $region92: #{small_motion_encoder.1} parent=63 // pred_fallthru
          _
        // Predicated region
        $region93: #{small_motion_encoder.1} parent=63 // pred_check
          %p530 = pneg %p213
        $region94: #{small_motion_encoder.1} parent=63 // pred_check_branch
          %532 = sbr.rel (%p530) target = $region96
        $region95: #{small_motion_encoder.1} parent=63 // pred_region
          %533 = dma.done [#allocation17], 4608
        $region96: #{small_motion_encoder.1} parent=63 // pred_fallthru
          _
        // Predicated region
        $region97: #{small_motion_encoder.1} parent=63 // pred_check
          %p534 = pneg %p234
        $region98: #{small_motion_encoder.1} parent=63 // pred_check_branch
          %536 = sbr.rel (%p534) target = $region100
        $region99: #{small_motion_encoder.1} parent=63 // pred_region
          %537 = dma.done [#allocation17], 16
        $region100: #{small_motion_encoder.1} parent=63 // pred_fallthru
          _
        // Predicated region
        $region101: #{small_motion_encoder.1} parent=63 // pred_check
          %p538 = pneg %p255
        $region102: #{small_motion_encoder.1} parent=63 // pred_check_branch
          %540 = sbr.rel (%p538) target = $region104
        $region103: #{small_motion_encoder.1} parent=63 // pred_region
          %541 = dma.done [#allocation20], 9216
        $region104: #{small_motion_encoder.1} parent=63 // pred_fallthru
          _
        // Predicated region
        $region105: #{small_motion_encoder.1} parent=63 // pred_check
          %p542 = pneg %p276
        $region106: #{small_motion_encoder.1} parent=63 // pred_check_branch
          %544 = sbr.rel (%p542) target = $region108
        $region107: #{small_motion_encoder.1} parent=63 // pred_region
          %545 = dma.done [#allocation20], 16
        $region108: #{small_motion_encoder.1} parent=63 // pred_fallthru
          _
        %s546 = sand.u32 %s43, 1
        %s547 = scalar_lea.sflag [#allocation5], %s546
        %s548 = sand.u32 %s43, 1
        %s549 = smul.addr %s548, 256
        %s550 = scalar_lea.vmem [#allocation4], %s549
        %p551 = pneg %p56
        %p552 = pneg %p53
        %s553 = sand.u32 %s35, 1
        %s554 = scalar_lea.sflag [#allocation8], %s553
        %s555 = sand.u32 %s69, 1
        %s556 = smul.addr %s555, 128
        %s557 = scalar_lea.vmem [#allocation7], %s556
        %p558 = pneg %p82
        %p559 = pneg %p79
        %s560 = sand.u32 %s35, 1
        %s561 = scalar_lea.sflag [#allocation8], %s560
        %s562 = sand.u32 %s95, 1
        %s563 = smul.addr %s562, 256
        %s564 = scalar_lea.vmem [#allocation9], %s563
        %p565 = pneg %p108
        %p566 = pneg %p105
        %p567 = pneg %p129
        %p568 = pneg %p126
        %p569 = pneg %p150
        %p570 = pneg %p147
        %p571 = pneg %p171
        %p572 = pneg %p168
        %p573 = pneg %p192
        %p574 = pneg %p189
        %p575 = pneg %p213
        %p576 = pneg %p210
        %p577 = pneg %p234
        %p578 = pneg %p231
        %p579 = pneg %p255
        %p580 = pneg %p252
        %p581 = pneg %p276
        %p582 = pneg %p273
        %p583 = pneg %p302
        %p584 = pneg %p299
        %s585 = sand.u32 %s289, 1
        %s586 = scalar_lea.sflag [#allocation6], %s585
        %s587 = sand.u32 %s289, 1
        %s588 = smul.addr %s587, 256
        %s589 = scalar_lea.vmem [#allocation22], %s588
        %v591 = vlaneseq
        %v592 = vshrl.u32 %v591, 7
        %v593 = vadd.s32 %v592, 8
        %v594 = vadd.s32 %v592, 16
        %v595 = vadd.s32 %v592, 24
        %v596 = vadd.s32 %v592, 32
        %v597 = vadd.s32 %v592, 40
        %v598 = vadd.s32 %v592, 48
        %v599 = vadd.s32 %v592, 56
        %v600 = vadd.s32 %v592, 64
        %v601 = vadd.s32 %v592, 72
        %v602 = vadd.s32 %v592, 80
        %v603 = vadd.s32 %v592, 88
        %v604 = vadd.s32 %v592, 96
        %v605 = vadd.s32 %v592, 104
        %v606 = vadd.s32 %v592, 112
        %v607 = vadd.s32 %v592, 120
        %v608 = vadd.s32 %v592, 128
        %v609 = vadd.s32 %v592, 136
        %v610 = vadd.s32 %v592, 144
        %v611 = vadd.s32 %v592, 152
        %v612 = vadd.s32 %v592, 160
        %v613 = vadd.s32 %v592, 168
        %v614 = vadd.s32 %v592, 176
        %v615 = vadd.s32 %v592, 184
        %v616 = vadd.s32 %v592, 192
        %v617 = vadd.s32 %v592, 200
        %v618 = vadd.s32 %v592, 208
        %v619 = vadd.s32 %v592, 216
        %v620 = vadd.s32 %v592, 224
        %v621 = vadd.s32 %v592, 232
        %v622 = vadd.s32 %v592, 240
        %v623 = vadd.s32 %v592, 248
        %vm624 = vcmp.lt.s32.totalorder %v592, 0
        %v625 = vsub.s32 0, %v592
        %v626 = vsel %vm624, %v625, %v592
        %v627 = vshrl.u32 %v626, 4
        %v628 = vand.u32 %v626, 15
        %v629 = vsub.s32 0, %v628
        %v630 = vsel %vm624, %v629, %v628
        %vm631 = vcmp.lt.s32.totalorder %v593, 0
        %v632 = vsub.s32 0, %v593
        %v633 = vsel %vm631, %v632, %v593
        %v634 = vshrl.u32 %v633, 4
        %v635 = vand.u32 %v633, 15
        %v636 = vsub.s32 0, %v635
        %v637 = vsel %vm631, %v636, %v635
        %vm638 = vcmp.lt.s32.totalorder %v594, 0
        %v639 = vsub.s32 0, %v594
        %v640 = vsel %vm638, %v639, %v594
        %v641 = vshrl.u32 %v640, 4
        %v642 = vand.u32 %v640, 15
        %v643 = vsub.s32 0, %v642
        %v644 = vsel %vm638, %v643, %v642
        %vm645 = vcmp.lt.s32.totalorder %v595, 0
        %v646 = vsub.s32 0, %v595
        %v647 = vsel %vm645, %v646, %v595
        %v648 = vshrl.u32 %v647, 4
        %v649 = vand.u32 %v647, 15
        %v650 = vsub.s32 0, %v649
        %v651 = vsel %vm645, %v650, %v649
        %vm652 = vcmp.lt.s32.totalorder %v596, 0
        %v653 = vsub.s32 0, %v596
        %v654 = vsel %vm652, %v653, %v596
        %v655 = vshrl.u32 %v654, 4
        %v656 = vand.u32 %v654, 15
        %v657 = vsub.s32 0, %v656
        %v658 = vsel %vm652, %v657, %v656
        %vm659 = vcmp.lt.s32.totalorder %v597, 0
        %v660 = vsub.s32 0, %v597
        %v661 = vsel %vm659, %v660, %v597
        %v662 = vshrl.u32 %v661, 4
        %v663 = vand.u32 %v661, 15
        %v664 = vsub.s32 0, %v663
        %v665 = vsel %vm659, %v664, %v663
        %vm666 = vcmp.lt.s32.totalorder %v598, 0
        %v667 = vsub.s32 0, %v598
        %v668 = vsel %vm666, %v667, %v598
        %v669 = vshrl.u32 %v668, 4
        %v670 = vand.u32 %v668, 15
        %v671 = vsub.s32 0, %v670
        %v672 = vsel %vm666, %v671, %v670
        %vm673 = vcmp.lt.s32.totalorder %v599, 0
        %v674 = vsub.s32 0, %v599
        %v675 = vsel %vm673, %v674, %v599
        %v676 = vshrl.u32 %v675, 4
        %v677 = vand.u32 %v675, 15
        %v678 = vsub.s32 0, %v677
        %v679 = vsel %vm673, %v678, %v677
        %vm680 = vcmp.lt.s32.totalorder %v600, 0
        %v681 = vsub.s32 0, %v600
        %v682 = vsel %vm680, %v681, %v600
        %v683 = vshrl.u32 %v682, 4
        %v684 = vand.u32 %v682, 15
        %v685 = vsub.s32 0, %v684
        %v686 = vsel %vm680, %v685, %v684
        %vm687 = vcmp.lt.s32.totalorder %v601, 0
        %v688 = vsub.s32 0, %v601
        %v689 = vsel %vm687, %v688, %v601
        %v690 = vshrl.u32 %v689, 4
        %v691 = vand.u32 %v689, 15
        %v692 = vsub.s32 0, %v691
        %v693 = vsel %vm687, %v692, %v691
        %vm694 = vcmp.lt.s32.totalorder %v602, 0
        %v695 = vsub.s32 0, %v602
        %v696 = vsel %vm694, %v695, %v602
        %v697 = vshrl.u32 %v696, 4
        %v698 = vand.u32 %v696, 15
        %v699 = vsub.s32 0, %v698
        %v700 = vsel %vm694, %v699, %v698
        %vm701 = vcmp.lt.s32.totalorder %v603, 0
        %v702 = vsub.s32 0, %v603
        %v703 = vsel %vm701, %v702, %v603
        %v704 = vshrl.u32 %v703, 4
        %v705 = vand.u32 %v703, 15
        %v706 = vsub.s32 0, %v705
        %v707 = vsel %vm701, %v706, %v705
        %vm708 = vcmp.lt.s32.totalorder %v604, 0
        %v709 = vsub.s32 0, %v604
        %v710 = vsel %vm708, %v709, %v604
        %v711 = vshrl.u32 %v710, 4
        %v712 = vand.u32 %v710, 15
        %v713 = vsub.s32 0, %v712
        %v714 = vsel %vm708, %v713, %v712
        %vm715 = vcmp.lt.s32.totalorder %v605, 0
        %v716 = vsub.s32 0, %v605
        %v717 = vsel %vm715, %v716, %v605
        %v718 = vshrl.u32 %v717, 4
        %v719 = vand.u32 %v717, 15
        %v720 = vsub.s32 0, %v719
        %v721 = vsel %vm715, %v720, %v719
        %vm722 = vcmp.lt.s32.totalorder %v606, 0
        %v723 = vsub.s32 0, %v606
        %v724 = vsel %vm722, %v723, %v606
        %v725 = vshrl.u32 %v724, 4
        %v726 = vand.u32 %v724, 15
        %v727 = vsub.s32 0, %v726
        %v728 = vsel %vm722, %v727, %v726
        %vm729 = vcmp.lt.s32.totalorder %v607, 0
        %v730 = vsub.s32 0, %v607
        %v731 = vsel %vm729, %v730, %v607
        %v732 = vshrl.u32 %v731, 4
        %v733 = vand.u32 %v731, 15
        %v734 = vsub.s32 0, %v733
        %v735 = vsel %vm729, %v734, %v733
        %vm736 = vcmp.lt.s32.totalorder %v608, 0
        %v737 = vsub.s32 0, %v608
        %v738 = vsel %vm736, %v737, %v608
        %v739 = vshrl.u32 %v738, 4
        %v740 = vand.u32 %v738, 15
        %v741 = vsub.s32 0, %v740
        %v742 = vsel %vm736, %v741, %v740
        %vm743 = vcmp.lt.s32.totalorder %v609, 0
        %v744 = vsub.s32 0, %v609
        %v745 = vsel %vm743, %v744, %v609
        %v746 = vshrl.u32 %v745, 4
        %v747 = vand.u32 %v745, 15
        %v748 = vsub.s32 0, %v747
        %v749 = vsel %vm743, %v748, %v747
        %vm750 = vcmp.lt.s32.totalorder %v610, 0
        %v751 = vsub.s32 0, %v610
        %v752 = vsel %vm750, %v751, %v610
        %v753 = vshrl.u32 %v752, 4
        %v754 = vand.u32 %v752, 15
        %v755 = vsub.s32 0, %v754
        %v756 = vsel %vm750, %v755, %v754
        %vm757 = vcmp.lt.s32.totalorder %v611, 0
        %v758 = vsub.s32 0, %v611
        %v759 = vsel %vm757, %v758, %v611
        %v760 = vshrl.u32 %v759, 4
        %v761 = vand.u32 %v759, 15
        %v762 = vsub.s32 0, %v761
        %v763 = vsel %vm757, %v762, %v761
        %vm764 = vcmp.lt.s32.totalorder %v612, 0
        %v765 = vsub.s32 0, %v612
        %v766 = vsel %vm764, %v765, %v612
        %v767 = vshrl.u32 %v766, 4
        %v768 = vand.u32 %v766, 15
        %v769 = vsub.s32 0, %v768
        %v770 = vsel %vm764, %v769, %v768
        %vm771 = vcmp.lt.s32.totalorder %v613, 0
        %v772 = vsub.s32 0, %v613
        %v773 = vsel %vm771, %v772, %v613
        %v774 = vshrl.u32 %v773, 4
        %v775 = vand.u32 %v773, 15
        %v776 = vsub.s32 0, %v775
        %v777 = vsel %vm771, %v776, %v775
        %vm778 = vcmp.lt.s32.totalorder %v614, 0
        %v779 = vsub.s32 0, %v614
        %v780 = vsel %vm778, %v779, %v614
        %v781 = vshrl.u32 %v780, 4
        %v782 = vand.u32 %v780, 15
        %v783 = vsub.s32 0, %v782
        %v784 = vsel %vm778, %v783, %v782
        %vm785 = vcmp.lt.s32.totalorder %v615, 0
        %v786 = vsub.s32 0, %v615
        %v787 = vsel %vm785, %v786, %v615
        %v788 = vshrl.u32 %v787, 4
        %v789 = vand.u32 %v787, 15
        %v790 = vsub.s32 0, %v789
        %v791 = vsel %vm785, %v790, %v789
        %vm792 = vcmp.lt.s32.totalorder %v616, 0
        %v793 = vsub.s32 0, %v616
        %v794 = vsel %vm792, %v793, %v616
        %v795 = vshrl.u32 %v794, 4
        %v796 = vand.u32 %v794, 15
        %v797 = vsub.s32 0, %v796
        %v798 = vsel %vm792, %v797, %v796
        %vm799 = vcmp.lt.s32.totalorder %v617, 0
        %v800 = vsub.s32 0, %v617
        %v801 = vsel %vm799, %v800, %v617
        %v802 = vshrl.u32 %v801, 4
        %v803 = vand.u32 %v801, 15
        %v804 = vsub.s32 0, %v803
        %v805 = vsel %vm799, %v804, %v803
        %vm806 = vcmp.lt.s32.totalorder %v618, 0
        %v807 = vsub.s32 0, %v618
        %v808 = vsel %vm806, %v807, %v618
        %v809 = vshrl.u32 %v808, 4
        %v810 = vand.u32 %v808, 15
        %v811 = vsub.s32 0, %v810
        %v812 = vsel %vm806, %v811, %v810
        %vm813 = vcmp.lt.s32.totalorder %v619, 0
        %v814 = vsub.s32 0, %v619
        %v815 = vsel %vm813, %v814, %v619
        %v816 = vshrl.u32 %v815, 4
        %v817 = vand.u32 %v815, 15
        %v818 = vsub.s32 0, %v817
        %v819 = vsel %vm813, %v818, %v817
        %vm820 = vcmp.lt.s32.totalorder %v620, 0
        %v821 = vsub.s32 0, %v620
        %v822 = vsel %vm820, %v821, %v620
        %v823 = vshrl.u32 %v822, 4
        %v824 = vand.u32 %v822, 15
        %v825 = vsub.s32 0, %v824
        %v826 = vsel %vm820, %v825, %v824
        %vm827 = vcmp.lt.s32.totalorder %v621, 0
        %v828 = vsub.s32 0, %v621
        %v829 = vsel %vm827, %v828, %v621
        %v830 = vshrl.u32 %v829, 4
        %v831 = vand.u32 %v829, 15
        %v832 = vsub.s32 0, %v831
        %v833 = vsel %vm827, %v832, %v831
        %vm834 = vcmp.lt.s32.totalorder %v622, 0
        %v835 = vsub.s32 0, %v622
        %v836 = vsel %vm834, %v835, %v622
        %v837 = vshrl.u32 %v836, 4
        %v838 = vand.u32 %v836, 15
        %v839 = vsub.s32 0, %v838
        %v840 = vsel %vm834, %v839, %v838
        %vm841 = vcmp.lt.s32.totalorder %v623, 0
        %v842 = vsub.s32 0, %v623
        %v843 = vsel %vm841, %v842, %v623
        %v844 = vshrl.u32 %v843, 4
        %v845 = vand.u32 %v843, 15
        %v846 = vsub.s32 0, %v845
        %v847 = vsel %vm841, %v846, %v845
        %vm848 = vcmp.ne.s32.totalorder %v630, 0
        %vm849 = vcmp.ne.s32.totalorder %v637, 0
        %vm850 = vcmp.ne.s32.totalorder %v644, 0
        %vm851 = vcmp.ne.s32.totalorder %v651, 0
        %vm852 = vcmp.ne.s32.totalorder %v658, 0
        %vm853 = vcmp.ne.s32.totalorder %v665, 0
        %vm854 = vcmp.ne.s32.totalorder %v672, 0
        %vm855 = vcmp.ne.s32.totalorder %v679, 0
        %vm856 = vcmp.ne.s32.totalorder %v686, 0
        %vm857 = vcmp.ne.s32.totalorder %v693, 0
        %vm858 = vcmp.ne.s32.totalorder %v700, 0
        %vm859 = vcmp.ne.s32.totalorder %v707, 0
        %vm860 = vcmp.ne.s32.totalorder %v714, 0
        %vm861 = vcmp.ne.s32.totalorder %v721, 0
        %vm862 = vcmp.ne.s32.totalorder %v728, 0
        %vm863 = vcmp.ne.s32.totalorder %v735, 0
        %vm864 = vcmp.ne.s32.totalorder %v742, 0
        %vm865 = vcmp.ne.s32.totalorder %v749, 0
        %vm866 = vcmp.ne.s32.totalorder %v756, 0
        %vm867 = vcmp.ne.s32.totalorder %v763, 0
        %vm868 = vcmp.ne.s32.totalorder %v770, 0
        %vm869 = vcmp.ne.s32.totalorder %v777, 0
        %vm870 = vcmp.ne.s32.totalorder %v784, 0
        %vm871 = vcmp.ne.s32.totalorder %v791, 0
        %vm872 = vcmp.ne.s32.totalorder %v798, 0
        %vm873 = vcmp.ne.s32.totalorder %v805, 0
        %vm874 = vcmp.ne.s32.totalorder %v812, 0
        %vm875 = vcmp.ne.s32.totalorder %v819, 0
        %vm876 = vcmp.ne.s32.totalorder %v826, 0
        %vm877 = vcmp.ne.s32.totalorder %v833, 0
        %vm878 = vcmp.ne.s32.totalorder %v840, 0
        %vm879 = vcmp.ne.s32.totalorder %v847, 0
        %vm880 = vcmp.lt.s32.totalorder %v630, 0
        %vm881 = vcmp.lt.s32.totalorder %v637, 0
        %vm882 = vcmp.lt.s32.totalorder %v644, 0
        %vm883 = vcmp.lt.s32.totalorder %v651, 0
        %vm884 = vcmp.lt.s32.totalorder %v658, 0
        %vm885 = vcmp.lt.s32.totalorder %v665, 0
        %vm886 = vcmp.lt.s32.totalorder %v672, 0
        %vm887 = vcmp.lt.s32.totalorder %v679, 0
        %vm888 = vcmp.lt.s32.totalorder %v686, 0
        %vm889 = vcmp.lt.s32.totalorder %v693, 0
        %vm890 = vcmp.lt.s32.totalorder %v700, 0
        %vm891 = vcmp.lt.s32.totalorder %v707, 0
        %vm892 = vcmp.lt.s32.totalorder %v714, 0
        %vm893 = vcmp.lt.s32.totalorder %v721, 0
        %vm894 = vcmp.lt.s32.totalorder %v728, 0
        %vm895 = vcmp.lt.s32.totalorder %v735, 0
        %vm896 = vcmp.lt.s32.totalorder %v742, 0
        %vm897 = vcmp.lt.s32.totalorder %v749, 0
        %vm898 = vcmp.lt.s32.totalorder %v756, 0
        %vm899 = vcmp.lt.s32.totalorder %v763, 0
        %vm900 = vcmp.lt.s32.totalorder %v770, 0
        %vm901 = vcmp.lt.s32.totalorder %v777, 0
        %vm902 = vcmp.lt.s32.totalorder %v784, 0
        %vm903 = vcmp.lt.s32.totalorder %v791, 0
        %vm904 = vcmp.lt.s32.totalorder %v798, 0
        %vm905 = vcmp.lt.s32.totalorder %v805, 0
        %vm906 = vcmp.lt.s32.totalorder %v812, 0
        %vm907 = vcmp.lt.s32.totalorder %v819, 0
        %vm908 = vcmp.lt.s32.totalorder %v826, 0
        %vm909 = vcmp.lt.s32.totalorder %v833, 0
        %vm910 = vcmp.lt.s32.totalorder %v840, 0
        %vm911 = vcmp.lt.s32.totalorder %v847, 0
        %vm912 = vmand %vm880, %vm848
        %vm913 = vmand %vm881, %vm849
        %vm914 = vmand %vm882, %vm850
        %vm915 = vmand %vm883, %vm851
        %vm916 = vmand %vm884, %vm852
        %vm917 = vmand %vm885, %vm853
        %vm918 = vmand %vm886, %vm854
        %vm919 = vmand %vm887, %vm855
        %vm920 = vmand %vm888, %vm856
        %vm921 = vmand %vm889, %vm857
        %vm922 = vmand %vm890, %vm858
        %vm923 = vmand %vm891, %vm859
        %vm924 = vmand %vm892, %vm860
        %vm925 = vmand %vm893, %vm861
        %vm926 = vmand %vm894, %vm862
        %vm927 = vmand %vm895, %vm863
        %vm928 = vmand %vm896, %vm864
        %vm929 = vmand %vm897, %vm865
        %vm930 = vmand %vm898, %vm866
        %vm931 = vmand %vm899, %vm867
        %vm932 = vmand %vm900, %vm868
        %vm933 = vmand %vm901, %vm869
        %vm934 = vmand %vm902, %vm870
        %vm935 = vmand %vm903, %vm871
        %vm936 = vmand %vm904, %vm872
        %vm937 = vmand %vm905, %vm873
        %vm938 = vmand %vm906, %vm874
        %vm939 = vmand %vm907, %vm875
        %vm940 = vmand %vm908, %vm876
        %vm941 = vmand %vm909, %vm877
        %vm942 = vmand %vm910, %vm878
        %vm943 = vmand %vm911, %vm879
        %v944 = vadd.s32 %v630, 16
        %v945 = vadd.s32 %v637, 16
        %v946 = vadd.s32 %v644, 16
        %v947 = vadd.s32 %v651, 16
        %v948 = vadd.s32 %v658, 16
        %v949 = vadd.s32 %v665, 16
        %v950 = vadd.s32 %v672, 16
        %v951 = vadd.s32 %v679, 16
        %v952 = vadd.s32 %v686, 16
        %v953 = vadd.s32 %v693, 16
        %v954 = vadd.s32 %v700, 16
        %v955 = vadd.s32 %v707, 16
        %v956 = vadd.s32 %v714, 16
        %v957 = vadd.s32 %v721, 16
        %v958 = vadd.s32 %v728, 16
        %v959 = vadd.s32 %v735, 16
        %v960 = vadd.s32 %v742, 16
        %v961 = vadd.s32 %v749, 16
        %v962 = vadd.s32 %v756, 16
        %v963 = vadd.s32 %v763, 16
        %v964 = vadd.s32 %v770, 16
        %v965 = vadd.s32 %v777, 16
        %v966 = vadd.s32 %v784, 16
        %v967 = vadd.s32 %v791, 16
        %v968 = vadd.s32 %v798, 16
        %v969 = vadd.s32 %v805, 16
        %v970 = vadd.s32 %v812, 16
        %v971 = vadd.s32 %v819, 16
        %v972 = vadd.s32 %v826, 16
        %v973 = vadd.s32 %v833, 16
        %v974 = vadd.s32 %v840, 16
        %v975 = vadd.s32 %v847, 16
        %v976 = vsel %vm912, %v944, %v630
        %v977 = vsel %vm913, %v945, %v637
        %v978 = vsel %vm914, %v946, %v644
        %v979 = vsel %vm915, %v947, %v651
        %v980 = vsel %vm916, %v948, %v658
        %v981 = vsel %vm917, %v949, %v665
        %v982 = vsel %vm918, %v950, %v672
        %v983 = vsel %vm919, %v951, %v679
        %v984 = vsel %vm920, %v952, %v686
        %v985 = vsel %vm921, %v953, %v693
        %v986 = vsel %vm922, %v954, %v700
        %v987 = vsel %vm923, %v955, %v707
        %v988 = vsel %vm924, %v956, %v714
        %v989 = vsel %vm925, %v957, %v721
        %v990 = vsel %vm926, %v958, %v728
        %v991 = vsel %vm927, %v959, %v735
        %v992 = vsel %vm928, %v960, %v742
        %v993 = vsel %vm929, %v961, %v749
        %v994 = vsel %vm930, %v962, %v756
        %v995 = vsel %vm931, %v963, %v763
        %v996 = vsel %vm932, %v964, %v770
        %v997 = vsel %vm933, %v965, %v777
        %v998 = vsel %vm934, %v966, %v784
        %v999 = vsel %vm935, %v967, %v791
        %v1000 = vsel %vm936, %v968, %v798
        %v1001 = vsel %vm937, %v969, %v805
        %v1002 = vsel %vm938, %v970, %v812
        %v1003 = vsel %vm939, %v971, %v819
        %v1004 = vsel %vm940, %v972, %v826
        %v1005 = vsel %vm941, %v973, %v833
        %v1006 = vsel %vm942, %v974, %v840
        %v1007 = vsel %vm943, %v975, %v847
        %vm1008 = vcmp.ne.s32.totalorder %v976, 0
        %vm1009 = vcmp.ne.s32.totalorder %v977, 0
        %vm1010 = vcmp.ne.s32.totalorder %v978, 0
        %vm1011 = vcmp.ne.s32.totalorder %v979, 0
        %vm1012 = vcmp.ne.s32.totalorder %v980, 0
        %vm1013 = vcmp.ne.s32.totalorder %v981, 0
        %vm1014 = vcmp.ne.s32.totalorder %v982, 0
        %vm1015 = vcmp.ne.s32.totalorder %v983, 0
        %vm1016 = vcmp.ne.s32.totalorder %v984, 0
        %vm1017 = vcmp.ne.s32.totalorder %v985, 0
        %vm1018 = vcmp.ne.s32.totalorder %v986, 0
        %vm1019 = vcmp.ne.s32.totalorder %v987, 0
        %vm1020 = vcmp.ne.s32.totalorder %v988, 0
        %vm1021 = vcmp.ne.s32.totalorder %v989, 0
        %vm1022 = vcmp.ne.s32.totalorder %v990, 0
        %vm1023 = vcmp.ne.s32.totalorder %v991, 0
        %vm1024 = vcmp.ne.s32.totalorder %v992, 0
        %vm1025 = vcmp.ne.s32.totalorder %v993, 0
        %vm1026 = vcmp.ne.s32.totalorder %v994, 0
        %vm1027 = vcmp.ne.s32.totalorder %v995, 0
        %vm1028 = vcmp.ne.s32.totalorder %v996, 0
        %vm1029 = vcmp.ne.s32.totalorder %v997, 0
        %vm1030 = vcmp.ne.s32.totalorder %v998, 0
        %vm1031 = vcmp.ne.s32.totalorder %v999, 0
        %vm1032 = vcmp.ne.s32.totalorder %v1000, 0
        %vm1033 = vcmp.ne.s32.totalorder %v1001, 0
        %vm1034 = vcmp.ne.s32.totalorder %v1002, 0
        %vm1035 = vcmp.ne.s32.totalorder %v1003, 0
        %vm1036 = vcmp.ne.s32.totalorder %v1004, 0
        %vm1037 = vcmp.ne.s32.totalorder %v1005, 0
        %vm1038 = vcmp.ne.s32.totalorder %v1006, 0
        %vm1039 = vcmp.ne.s32.totalorder %v1007, 0
        %v1040 = vsel %vm1008, 1, 0
        %v1041 = vsel %vm1009, 1, 0
        %v1042 = vsel %vm1010, 1, 0
        %v1043 = vsel %vm1011, 1, 0
        %v1044 = vsel %vm1012, 1, 0
        %v1045 = vsel %vm1013, 1, 0
        %v1046 = vsel %vm1014, 1, 0
        %v1047 = vsel %vm1015, 1, 0
        %v1048 = vsel %vm1016, 1, 0
        %v1049 = vsel %vm1017, 1, 0
        %v1050 = vsel %vm1018, 1, 0
        %v1051 = vsel %vm1019, 1, 0
        %v1052 = vsel %vm1020, 1, 0
        %v1053 = vsel %vm1021, 1, 0
        %v1054 = vsel %vm1022, 1, 0
        %v1055 = vsel %vm1023, 1, 0
        %v1056 = vsel %vm1024, 1, 0
        %v1057 = vsel %vm1025, 1, 0
        %v1058 = vsel %vm1026, 1, 0
        %v1059 = vsel %vm1027, 1, 0
        %v1060 = vsel %vm1028, 1, 0
        %v1061 = vsel %vm1029, 1, 0
        %v1062 = vsel %vm1030, 1, 0
        %v1063 = vsel %vm1031, 1, 0
        %v1064 = vsel %vm1032, 1, 0
        %v1065 = vsel %vm1033, 1, 0
        %v1066 = vsel %vm1034, 1, 0
        %v1067 = vsel %vm1035, 1, 0
        %v1068 = vsel %vm1036, 1, 0
        %v1069 = vsel %vm1037, 1, 0
        %v1070 = vsel %vm1038, 1, 0
        %v1071 = vsel %vm1039, 1, 0
        %v1072 = vcvt.s32.f32 %v1040
        %v1073 = vcvt.s32.f32 %v1041
        %v1074 = vcvt.s32.f32 %v1042
        %v1075 = vcvt.s32.f32 %v1043
        %v1076 = vcvt.s32.f32 %v1044
        %v1077 = vcvt.s32.f32 %v1045
        %v1078 = vcvt.s32.f32 %v1046
        %v1079 = vcvt.s32.f32 %v1047
        %v1080 = vcvt.s32.f32 %v1048
        %v1081 = vcvt.s32.f32 %v1049
        %v1082 = vcvt.s32.f32 %v1050
        %v1083 = vcvt.s32.f32 %v1051
        %v1084 = vcvt.s32.f32 %v1052
        %v1085 = vcvt.s32.f32 %v1053
        %v1086 = vcvt.s32.f32 %v1054
        %v1087 = vcvt.s32.f32 %v1055
        %v1088 = vcvt.s32.f32 %v1056
        %v1089 = vcvt.s32.f32 %v1057
        %v1090 = vcvt.s32.f32 %v1058
        %v1091 = vcvt.s32.f32 %v1059
        %v1092 = vcvt.s32.f32 %v1060
        %v1093 = vcvt.s32.f32 %v1061
        %v1094 = vcvt.s32.f32 %v1062
        %v1095 = vcvt.s32.f32 %v1063
        %v1096 = vcvt.s32.f32 %v1064
        %v1097 = vcvt.s32.f32 %v1065
        %v1098 = vcvt.s32.f32 %v1066
        %v1099 = vcvt.s32.f32 %v1067
        %v1100 = vcvt.s32.f32 %v1068
        %v1101 = vcvt.s32.f32 %v1069
        %v1102 = vcvt.s32.f32 %v1070
        %v1103 = vcvt.s32.f32 %v1071
        %vm1104 = vcmp.ne.s32.totalorder %v976, 15
        %vm1105 = vcmp.ne.s32.totalorder %v977, 15
        %vm1106 = vcmp.ne.s32.totalorder %v978, 15
        %vm1107 = vcmp.ne.s32.totalorder %v979, 15
        %vm1108 = vcmp.ne.s32.totalorder %v980, 15
        %vm1109 = vcmp.ne.s32.totalorder %v981, 15
        %vm1110 = vcmp.ne.s32.totalorder %v982, 15
        %vm1111 = vcmp.ne.s32.totalorder %v983, 15
        %vm1112 = vcmp.ne.s32.totalorder %v984, 15
        %vm1113 = vcmp.ne.s32.totalorder %v985, 15
        %vm1114 = vcmp.ne.s32.totalorder %v986, 15
        %vm1115 = vcmp.ne.s32.totalorder %v987, 15
        %vm1116 = vcmp.ne.s32.totalorder %v988, 15
        %vm1117 = vcmp.ne.s32.totalorder %v989, 15
        %vm1118 = vcmp.ne.s32.totalorder %v990, 15
        %vm1119 = vcmp.ne.s32.totalorder %v991, 15
        %vm1120 = vcmp.ne.s32.totalorder %v992, 15
        %vm1121 = vcmp.ne.s32.totalorder %v993, 15
        %vm1122 = vcmp.ne.s32.totalorder %v994, 15
        %vm1123 = vcmp.ne.s32.totalorder %v995, 15
        %vm1124 = vcmp.ne.s32.totalorder %v996, 15
        %vm1125 = vcmp.ne.s32.totalorder %v997, 15
        %vm1126 = vcmp.ne.s32.totalorder %v998, 15
        %vm1127 = vcmp.ne.s32.totalorder %v999, 15
        %vm1128 = vcmp.ne.s32.totalorder %v1000, 15
        %vm1129 = vcmp.ne.s32.totalorder %v1001, 15
        %vm1130 = vcmp.ne.s32.totalorder %v1002, 15
        %vm1131 = vcmp.ne.s32.totalorder %v1003, 15
        %vm1132 = vcmp.ne.s32.totalorder %v1004, 15
        %vm1133 = vcmp.ne.s32.totalorder %v1005, 15
        %vm1134 = vcmp.ne.s32.totalorder %v1006, 15
        %vm1135 = vcmp.ne.s32.totalorder %v1007, 15
        %v1136 = vsel %vm1104, 1, 0
        %v1137 = vsel %vm1105, 1, 0
        %v1138 = vsel %vm1106, 1, 0
        %v1139 = vsel %vm1107, 1, 0
        %v1140 = vsel %vm1108, 1, 0
        %v1141 = vsel %vm1109, 1, 0
        %v1142 = vsel %vm1110, 1, 0
        %v1143 = vsel %vm1111, 1, 0
        %v1144 = vsel %vm1112, 1, 0
        %v1145 = vsel %vm1113, 1, 0
        %v1146 = vsel %vm1114, 1, 0
        %v1147 = vsel %vm1115, 1, 0
        %v1148 = vsel %vm1116, 1, 0
        %v1149 = vsel %vm1117, 1, 0
        %v1150 = vsel %vm1118, 1, 0
        %v1151 = vsel %vm1119, 1, 0
        %v1152 = vsel %vm1120, 1, 0
        %v1153 = vsel %vm1121, 1, 0
        %v1154 = vsel %vm1122, 1, 0
        %v1155 = vsel %vm1123, 1, 0
        %v1156 = vsel %vm1124, 1, 0
        %v1157 = vsel %vm1125, 1, 0
        %v1158 = vsel %vm1126, 1, 0
        %v1159 = vsel %vm1127, 1, 0
        %v1160 = vsel %vm1128, 1, 0
        %v1161 = vsel %vm1129, 1, 0
        %v1162 = vsel %vm1130, 1, 0
        %v1163 = vsel %vm1131, 1, 0
        %v1164 = vsel %vm1132, 1, 0
        %v1165 = vsel %vm1133, 1, 0
        %v1166 = vsel %vm1134, 1, 0
        %v1167 = vsel %vm1135, 1, 0
        %v1168 = vcvt.s32.f32 %v1136
        %v1169 = vcvt.s32.f32 %v1137
        %v1170 = vcvt.s32.f32 %v1138
        %v1171 = vcvt.s32.f32 %v1139
        %v1172 = vcvt.s32.f32 %v1140
        %v1173 = vcvt.s32.f32 %v1141
        %v1174 = vcvt.s32.f32 %v1142
        %v1175 = vcvt.s32.f32 %v1143
        %v1176 = vcvt.s32.f32 %v1144
        %v1177 = vcvt.s32.f32 %v1145
        %v1178 = vcvt.s32.f32 %v1146
        %v1179 = vcvt.s32.f32 %v1147
        %v1180 = vcvt.s32.f32 %v1148
        %v1181 = vcvt.s32.f32 %v1149
        %v1182 = vcvt.s32.f32 %v1150
        %v1183 = vcvt.s32.f32 %v1151
        %v1184 = vcvt.s32.f32 %v1152
        %v1185 = vcvt.s32.f32 %v1153
        %v1186 = vcvt.s32.f32 %v1154
        %v1187 = vcvt.s32.f32 %v1155
        %v1188 = vcvt.s32.f32 %v1156
        %v1189 = vcvt.s32.f32 %v1157
        %v1190 = vcvt.s32.f32 %v1158
        %v1191 = vcvt.s32.f32 %v1159
        %v1192 = vcvt.s32.f32 %v1160
        %v1193 = vcvt.s32.f32 %v1161
        %v1194 = vcvt.s32.f32 %v1162
        %v1195 = vcvt.s32.f32 %v1163
        %v1196 = vcvt.s32.f32 %v1164
        %v1197 = vcvt.s32.f32 %v1165
        %v1198 = vcvt.s32.f32 %v1166
        %v1199 = vcvt.s32.f32 %v1167
        %v1200 = vld [vmem:[%s491] sm:$0xff]
        %v1201 = vld [vmem:[%s491 + $0x8] sm:$0xff]
        %v1202 = vld [vmem:[%s491 + $0x10] sm:$0xff]
        %v1203 = vld [vmem:[%s491 + $0x18] sm:$0xff]
        %v1204 = vld [vmem:[%s491 + $0x20] sm:$0xff]
        %v1205 = vld [vmem:[%s491 + $0x28] sm:$0xff]
        %v1206 = vld [vmem:[%s491 + $0x30] sm:$0xff]
        %v1207 = vld [vmem:[%s491 + $0x38] sm:$0xff]
        %v1208 = vld [vmem:[%s491 + $0x40] sm:$0xff]
        %v1209 = vld [vmem:[%s491 + $0x48] sm:$0xff]
        %v1210 = vld [vmem:[%s491 + $0x50] sm:$0xff]
        %v1211 = vld [vmem:[%s491 + $0x58] sm:$0xff]
        %v1212 = vld [vmem:[%s491 + $0x60] sm:$0xff]
        %v1213 = vld [vmem:[%s491 + $0x68] sm:$0xff]
        %v1214 = vld [vmem:[%s491 + $0x70] sm:$0xff]
        %v1215 = vld [vmem:[%s491 + $0x78] sm:$0xff]
        %v1216 = vld [vmem:[%s491 + $0x80] sm:$0xff]
        %v1217 = vld [vmem:[%s491 + $0x88] sm:$0xff]
        %v1218 = vld [vmem:[%s491 + $0x90] sm:$0xff]
        %v1219 = vld [vmem:[%s491 + $0x98] sm:$0xff]
        %v1220 = vld [vmem:[%s491 + $0xa0] sm:$0xff]
        %v1221 = vld [vmem:[%s491 + $0xa8] sm:$0xff]
        %v1222 = vld [vmem:[%s491 + $0xb0] sm:$0xff]
        %v1223 = vld [vmem:[%s491 + $0xb8] sm:$0xff]
        %v1224 = vld [vmem:[%s491 + $0xc0] sm:$0xff]
        %v1225 = vld [vmem:[%s491 + $0xc8] sm:$0xff]
        %v1226 = vld [vmem:[%s491 + $0xd0] sm:$0xff]
        %v1227 = vld [vmem:[%s491 + $0xd8] sm:$0xff]
        %v1228 = vld [vmem:[%s491 + $0xe0] sm:$0xff]
        %v1229 = vld [vmem:[%s491 + $0xe8] sm:$0xff]
        %v1230 = vld [vmem:[%s491 + $0xf0] sm:$0xff]
        %v1231 = vld [vmem:[%s491 + $0xf8] sm:$0xff]
        %v1232 = vld [vmem:[#allocation10] sm:$0xff]
        %v1233 = vld [vmem:[#allocation10 + $0x8] sm:$0xff]
        %v1234 = vld [vmem:[#allocation10 + $0x10] sm:$0xff]
        %v1235 = vld [vmem:[#allocation10 + $0x18] sm:$0xf]
        %v1236 = vld [vmem:[#allocation12] sm:$0x1]
        %v1238 = vlaneseq
        %v1239 = vshrl.u32 %v1238, 7
        %v1240 = vsub.s32 0, %v1239
        %v1241 = vrot.slane %v1236, %v1240
        %vm1243 = vcmask 228352
        %v1245 = vsel %vm1243, %v1200, 0
        %v1248 = vsel %vm1243, %v1201, 0
        %v1251 = vsel %vm1243, %v1202, 0
        %v1254 = vsel %vm1243, %v1203, 0
        %v1257 = vsel %vm1243, %v1204, 0
        %v1260 = vsel %vm1243, %v1205, 0
        %v1263 = vsel %vm1243, %v1206, 0
        %v1266 = vsel %vm1243, %v1207, 0
        %v1269 = vsel %vm1243, %v1208, 0
        %v1272 = vsel %vm1243, %v1209, 0
        %v1275 = vsel %vm1243, %v1210, 0
        %v1278 = vsel %vm1243, %v1211, 0
        %v1281 = vsel %vm1243, %v1212, 0
        %v1284 = vsel %vm1243, %v1213, 0
        %v1287 = vsel %vm1243, %v1214, 0
        %v1290 = vsel %vm1243, %v1215, 0
        %v1293 = vsel %vm1243, %v1216, 0
        %v1296 = vsel %vm1243, %v1217, 0
        %v1299 = vsel %vm1243, %v1218, 0
        %v1302 = vsel %vm1243, %v1219, 0
        %v1305 = vsel %vm1243, %v1220, 0
        %v1308 = vsel %vm1243, %v1221, 0
        %v1311 = vsel %vm1243, %v1222, 0
        %v1314 = vsel %vm1243, %v1223, 0
        %v1317 = vsel %vm1243, %v1224, 0
        %v1320 = vsel %vm1243, %v1225, 0
        %v1323 = vsel %vm1243, %v1226, 0
        %v1326 = vsel %vm1243, %v1227, 0
        %v1329 = vsel %vm1243, %v1228, 0
        %v1332 = vsel %vm1243, %v1229, 0
        %v1335 = vsel %vm1243, %v1230, 0
        %v1338 = vsel %vm1243, %v1231, 0
        %vm1340 = vcmask 1043456
        %v1342 = vsel %vm1340, %v1235, 0
        %1344 = vmatprep.subr.mxu0 0.0
        %1345 = vmatpush1.msra.mxu0 %v1232
        %1346 = vmatprep.subr.mxu0 0.0
        %1347 = vmatpush1.msra.mxu0 %v1233
        %1348 = vmatprep.subr.mxu0 0.0
        %1349 = vmatpush1.msra.mxu0 %v1234
        %1350 = vmatprep.subr.mxu0 0.0
        %1351 = vmatpush1.msra.mxu0 %v1342
        %1352 = vmatprep.subr.mxu0 0.0
        %1353 = vmatpush1.msra.mxu0 0.0
        %1354 = vmatprep.subr.mxu0 0.0
        %1355 = vmatpush1.msra.mxu0 0.0
        %1356 = vmatprep.subr.mxu0 0.0
        %1357 = vmatpush1.msra.mxu0 0.0
        %1358 = vmatprep.subr.mxu0 0.0
        %1359 = vmatpush1.msra.mxu0 0.0
        %1360 = vmatprep.subr.mxu0 0.0
        %1361 = vmatpush1.msra.mxu0 0.0
        %1362 = vmatprep.subr.mxu0 0.0
        %1363 = vmatpush1.msra.mxu0 0.0
        %1364 = vmatprep.subr.mxu0 0.0
        %1365 = vmatpush1.msra.mxu0 0.0
        %1366 = vmatprep.subr.mxu0 0.0
        %1367 = vmatpush1.msra.mxu0 0.0
        %1368 = vmatprep.subr.mxu0 0.0
        %1369 = vmatpush1.msra.mxu0 0.0
        %1370 = vmatprep.subr.mxu0 0.0
        %1371 = vmatpush1.msra.mxu0 0.0
        %1372 = vmatprep.subr.mxu0 0.0
        %1373 = vmatpush1.msra.mxu0 0.0
        %1374 = vmatprep.subr.mxu0 0.0
        %1375 = vmatpush1.msra.mxu0 0.0
        %1376 = vmatprep.subr.mxu0 0.0
        %1377 = vmatpush1.msra.mxu0 0.0
        %1378 = vmatprep.subr.mxu0 0.0
        %1379 = vmatpush1.msra.mxu0 0.0
        %1380 = vmatprep.subr.mxu0 0.0
        %1381 = vmatpush1.msra.mxu0 0.0
        %1382 = vmatprep.subr.mxu0 0.0
        %1383 = vmatpush1.msra.mxu0 0.0
        %1384 = vmatprep.subr.mxu0 0.0
        %1385 = vmatpush1.msra.mxu0 0.0
        %1386 = vmatprep.subr.mxu0 0.0
        %1387 = vmatpush1.msra.mxu0 0.0
        %1388 = vmatprep.subr.mxu0 0.0
        %1389 = vmatpush1.msra.mxu0 0.0
        %1390 = vmatprep.subr.mxu0 0.0
        %1391 = vmatpush1.msra.mxu0 0.0
        %1392 = vmatprep.subr.mxu0 0.0
        %1393 = vmatpush1.msra.mxu0 0.0
        %1394 = vmatprep.subr.mxu0 0.0
        %1395 = vmatpush1.msra.mxu0 0.0
        %1396 = vmatprep.subr.mxu0 0.0
        %1397 = vmatpush1.msra.mxu0 0.0
        %1398 = vmatprep.subr.mxu0 0.0
        %1399 = vmatpush1.msra.mxu0 0.0
        %1400 = vmatprep.subr.mxu0 0.0
        %1401 = vmatpush1.msra.mxu0 0.0
        %1402 = vmatprep.subr.mxu0 0.0
        %1403 = vmatpush1.msra.mxu0 0.0
        %1404 = vmatprep.subr.mxu0 0.0
        %1405 = vmatpush1.msra.mxu0 0.0
        %1406 = vmatprep.subr.mxu0 0.0
        %1407 = vmatpush1.msra.mxu0 0.0
        %1408 = vmatprep.mubr.f32.mxu0 0.0
        %1409 = vmatmul.mubr.f32.gmra.mrb[0].mxu0 %v1245
        %v1410 = vpop.f32.mrb[0].mxu0
        %v1411 = vadd.f32 %v1241, %v1410
        %v1412 = vpop.f32.mrb[0].mxu0
        %1413 = vmatprep.mubr.f32.mxu0 0.0
        %1414 = vmatmul.mubr.f32.gmra.mrb[0].mxu0 %v1248
        %v1415 = vpop.f32.mrb[0].mxu0
        %v1416 = vadd.f32 %v1241, %v1415
        %v1417 = vpop.f32.mrb[0].mxu0
        %1418 = vmatprep.mubr.f32.mxu0 0.0
        %1419 = vmatmul.mubr.f32.gmra.mrb[0].mxu0 %v1251
        %v1420 = vpop.f32.mrb[0].mxu0
        %v1421 = vadd.f32 %v1241, %v1420
        %v1422 = vpop.f32.mrb[0].mxu0
        %1423 = vmatprep.mubr.f32.mxu0 0.0
        %1424 = vmatmul.mubr.f32.gmra.mrb[0].mxu0 %v1254
        %v1425 = vpop.f32.mrb[0].mxu0
        %v1426 = vadd.f32 %v1241, %v1425
        %v1427 = vpop.f32.mrb[0].mxu0
        %1428 = vmatprep.mubr.f32.mxu0 0.0
        %1429 = vmatmul.mubr.f32.gmra.mrb[0].mxu0 %v1257
        %v1430 = vpop.f32.mrb[0].mxu0
        %v1431 = vadd.f32 %v1241, %v1430
        %v1432 = vpop.f32.mrb[0].mxu0
        %1433 = vmatprep.mubr.f32.mxu0 0.0
        %1434 = vmatmul.mubr.f32.gmra.mrb[0].mxu0 %v1260
        %v1435 = vpop.f32.mrb[0].mxu0
        %v1436 = vadd.f32 %v1241, %v1435
        %v1437 = vpop.f32.mrb[0].mxu0
        %1438 = vmatprep.mubr.f32.mxu0 0.0
        %1439 = vmatmul.mubr.f32.gmra.mrb[0].mxu0 %v1263
        %v1440 = vpop.f32.mrb[0].mxu0
        %v1441 = vadd.f32 %v1241, %v1440
        %v1442 = vpop.f32.mrb[0].mxu0
        %1443 = vmatprep.mubr.f32.mxu0 0.0
        %1444 = vmatmul.mubr.f32.gmra.mrb[0].mxu0 %v1266
        %v1445 = vpop.f32.mrb[0].mxu0
        %v1446 = vadd.f32 %v1241, %v1445
        %v1447 = vpop.f32.mrb[0].mxu0
        %1448 = vmatprep.mubr.f32.mxu0 0.0
        %1449 = vmatmul.mubr.f32.gmra.mrb[0].mxu0 %v1269
        %v1450 = vpop.f32.mrb[0].mxu0
        %v1451 = vadd.f32 %v1241, %v1450
        %v1452 = vpop.f32.mrb[0].mxu0
        %1453 = vmatprep.mubr.f32.mxu0 0.0
        %1454 = vmatmul.mubr.f32.gmra.mrb[0].mxu0 %v1272
        %v1455 = vpop.f32.mrb[0].mxu0
        %v1456 = vadd.f32 %v1241, %v1455
        %v1457 = vpop.f32.mrb[0].mxu0
        %1458 = vmatprep.mubr.f32.mxu0 0.0
        %1459 = vmatmul.mubr.f32.gmra.mrb[0].mxu0 %v1275
        %v1460 = vpop.f32.mrb[0].mxu0
        %v1461 = vadd.f32 %v1241, %v1460
        %v1462 = vpop.f32.mrb[0].mxu0
        %1463 = vmatprep.mubr.f32.mxu0 0.0
        %1464 = vmatmul.mubr.f32.gmra.mrb[0].mxu0 %v1278
        %v1465 = vpop.f32.mrb[0].mxu0
        %v1466 = vadd.f32 %v1241, %v1465
        %v1467 = vpop.f32.mrb[0].mxu0
        %1468 = vmatprep.mubr.f32.mxu0 0.0
        %1469 = vmatmul.mubr.f32.gmra.mrb[0].mxu0 %v1281
        %v1470 = vpop.f32.mrb[0].mxu0
        %v1471 = vadd.f32 %v1241, %v1470
        %v1472 = vpop.f32.mrb[0].mxu0
        %1473 = vmatprep.mubr.f32.mxu0 0.0
        %1474 = vmatmul.mubr.f32.gmra.mrb[0].mxu0 %v1284
        %v1475 = vpop.f32.mrb[0].mxu0
        %v1476 = vadd.f32 %v1241, %v1475
        %v1477 = vpop.f32.mrb[0].mxu0
        %1478 = vmatprep.mubr.f32.mxu0 0.0
        %1479 = vmatmul.mubr.f32.gmra.mrb[0].mxu0 %v1287
        %v1480 = vpop.f32.mrb[0].mxu0
        %v1481 = vadd.f32 %v1241, %v1480
        %v1482 = vpop.f32.mrb[0].mxu0
        %1483 = vmatprep.mubr.f32.mxu0 0.0
        %1484 = vmatmul.mubr.f32.gmra.mrb[0].mxu0 %v1290
        %v1485 = vpop.f32.mrb[0].mxu0
        %v1486 = vadd.f32 %v1241, %v1485
        %v1487 = vpop.f32.mrb[0].mxu0
        %1488 = vmatprep.mubr.f32.mxu0 0.0
        %1489 = vmatmul.mubr.f32.gmra.mrb[0].mxu0 %v1293
        %v1490 = vpop.f32.mrb[0].mxu0
        %v1491 = vadd.f32 %v1241, %v1490
        %v1492 = vpop.f32.mrb[0].mxu0
        %1493 = vmatprep.mubr.f32.mxu0 0.0
        %1494 = vmatmul.mubr.f32.gmra.mrb[0].mxu0 %v1296
        %v1495 = vpop.f32.mrb[0].mxu0
        %v1496 = vadd.f32 %v1241, %v1495
        %v1497 = vpop.f32.mrb[0].mxu0
        %1498 = vmatprep.mubr.f32.mxu0 0.0
        %1499 = vmatmul.mubr.f32.gmra.mrb[0].mxu0 %v1299
        %v1500 = vpop.f32.mrb[0].mxu0
        %v1501 = vadd.f32 %v1241, %v1500
        %v1502 = vpop.f32.mrb[0].mxu0
        %1503 = vmatprep.mubr.f32.mxu0 0.0
        %1504 = vmatmul.mubr.f32.gmra.mrb[0].mxu0 %v1302
        %v1505 = vpop.f32.mrb[0].mxu0
        %v1506 = vadd.f32 %v1241, %v1505
        %v1507 = vpop.f32.mrb[0].mxu0
        %1508 = vmatprep.mubr.f32.mxu0 0.0
        %1509 = vmatmul.mubr.f32.gmra.mrb[0].mxu0 %v1305
        %v1510 = vpop.f32.mrb[0].mxu0
        %v1511 = vadd.f32 %v1241, %v1510
        %v1512 = vpop.f32.mrb[0].mxu0
        %1513 = vmatprep.mubr.f32.mxu0 0.0
        %1514 = vmatmul.mubr.f32.gmra.mrb[0].mxu0 %v1308
        %v1515 = vpop.f32.mrb[0].mxu0
        %v1516 = vadd.f32 %v1241, %v1515
        %v1517 = vpop.f32.mrb[0].mxu0
        %1518 = vmatprep.mubr.f32.mxu0 0.0
        %1519 = vmatmul.mubr.f32.gmra.mrb[0].mxu0 %v1311
        %v1520 = vpop.f32.mrb[0].mxu0
        %v1521 = vadd.f32 %v1241, %v1520
        %v1522 = vpop.f32.mrb[0].mxu0
        %1523 = vmatprep.mubr.f32.mxu0 0.0
        %1524 = vmatmul.mubr.f32.gmra.mrb[0].mxu0 %v1314
        %v1525 = vpop.f32.mrb[0].mxu0
        %v1526 = vadd.f32 %v1241, %v1525
        %v1527 = vpop.f32.mrb[0].mxu0
        %1528 = vmatprep.mubr.f32.mxu0 0.0
        %1529 = vmatmul.mubr.f32.gmra.mrb[0].mxu0 %v1317
        %v1530 = vpop.f32.mrb[0].mxu0
        %v1531 = vadd.f32 %v1241, %v1530
        %v1532 = vpop.f32.mrb[0].mxu0
        %1533 = vmatprep.mubr.f32.mxu0 0.0
        %1534 = vmatmul.mubr.f32.gmra.mrb[0].mxu0 %v1320
        %v1535 = vpop.f32.mrb[0].mxu0
        %v1536 = vadd.f32 %v1241, %v1535
        %v1537 = vpop.f32.mrb[0].mxu0
        %1538 = vmatprep.mubr.f32.mxu0 0.0
        %1539 = vmatmul.mubr.f32.gmra.mrb[0].mxu0 %v1323
        %v1540 = vpop.f32.mrb[0].mxu0
        %v1541 = vadd.f32 %v1241, %v1540
        %v1542 = vpop.f32.mrb[0].mxu0
        %1543 = vmatprep.mubr.f32.mxu0 0.0
        %1544 = vmatmul.mubr.f32.gmra.mrb[0].mxu0 %v1326
        %v1545 = vpop.f32.mrb[0].mxu0
        %v1546 = vadd.f32 %v1241, %v1545
        %v1547 = vpop.f32.mrb[0].mxu0
        %1548 = vmatprep.mubr.f32.mxu0 0.0
        %1549 = vmatmul.mubr.f32.gmra.mrb[0].mxu0 %v1329
        %v1550 = vpop.f32.mrb[0].mxu0
        %v1551 = vadd.f32 %v1241, %v1550
        %v1552 = vpop.f32.mrb[0].mxu0
        %1553 = vmatprep.mubr.f32.mxu0 0.0
        %1554 = vmatmul.mubr.f32.gmra.mrb[0].mxu0 %v1332
        %v1555 = vpop.f32.mrb[0].mxu0
        %v1556 = vadd.f32 %v1241, %v1555
        %v1557 = vpop.f32.mrb[0].mxu0
        %1558 = vmatprep.mubr.f32.mxu0 0.0
        %1559 = vmatmul.mubr.f32.gmra.mrb[0].mxu0 %v1335
        %v1560 = vpop.f32.mrb[0].mxu0
        %v1561 = vadd.f32 %v1241, %v1560
        %v1562 = vpop.f32.mrb[0].mxu0
        %1563 = vmatprep.mubr.f32.mxu0 0.0
        %1564 = vmatmul.mubr.f32.gmra.mrb[0].mxu0 %v1338
        %v1565 = vpop.f32.mrb[0].mxu0
        %v1566 = vadd.f32 %v1241, %v1565
        %v1567 = vpop.f32.mrb[0].mxu0
        %1568 = vdwg.mxu0
        %v1569 = vmax.f32 %v1411, 0.0
        %v1570 = vmax.f32 %v1416, 0.0
        %v1571 = vmax.f32 %v1421, 0.0
        %v1572 = vmax.f32 %v1426, 0.0
        %v1573 = vmax.f32 %v1431, 0.0
        %v1574 = vmax.f32 %v1436, 0.0
        %v1575 = vmax.f32 %v1441, 0.0
        %v1576 = vmax.f32 %v1446, 0.0
        %v1577 = vmax.f32 %v1451, 0.0
        %v1578 = vmax.f32 %v1456, 0.0
        %v1579 = vmax.f32 %v1461, 0.0
        %v1580 = vmax.f32 %v1466, 0.0
        %v1581 = vmax.f32 %v1471, 0.0
        %v1582 = vmax.f32 %v1476, 0.0
        %v1583 = vmax.f32 %v1481, 0.0
        %v1584 = vmax.f32 %v1486, 0.0
        %v1585 = vmax.f32 %v1491, 0.0
        %v1586 = vmax.f32 %v1496, 0.0
        %v1587 = vmax.f32 %v1501, 0.0
        %v1588 = vmax.f32 %v1506, 0.0
        %v1589 = vmax.f32 %v1511, 0.0
        %v1590 = vmax.f32 %v1516, 0.0
        %v1591 = vmax.f32 %v1521, 0.0
        %v1592 = vmax.f32 %v1526, 0.0
        %v1593 = vmax.f32 %v1531, 0.0
        %v1594 = vmax.f32 %v1536, 0.0
        %v1595 = vmax.f32 %v1541, 0.0
        %v1596 = vmax.f32 %v1546, 0.0
        %v1597 = vmax.f32 %v1551, 0.0
        %v1598 = vmax.f32 %v1556, 0.0
        %v1599 = vmax.f32 %v1561, 0.0
        %v1600 = vmax.f32 %v1566, 0.0
        %v1601 = vld [vmem:[%s500] sm:$0xf]
        %v1602 = vld [vmem:[%s500 + $0x4] sm:$0xf]
        %v1603 = vld [vmem:[%s500 + $0x8] sm:$0xf]
        %v1604 = vld [vmem:[%s500 + $0xc] sm:$0xf]
        %v1605 = vld [vmem:[%s500 + $0x10] sm:$0xf]
        %v1606 = vld [vmem:[%s500 + $0x14] sm:$0xf]
        %v1607 = vld [vmem:[%s500 + $0x18] sm:$0xf]
        %v1608 = vld [vmem:[%s500 + $0x1c] sm:$0xf]
        %v1609 = vld [vmem:[%s500 + $0x20] sm:$0xf]
        %v1610 = vld [vmem:[%s500 + $0x24] sm:$0xf]
        %v1611 = vld [vmem:[%s500 + $0x28] sm:$0xf]
        %v1612 = vld [vmem:[%s500 + $0x2c] sm:$0xf]
        %v1613 = vld [vmem:[%s500 + $0x30] sm:$0xf]
        %v1614 = vld [vmem:[%s500 + $0x34] sm:$0xf]
        %v1615 = vld [vmem:[%s500 + $0x38] sm:$0xf]
        %v1616 = vld [vmem:[%s500 + $0x3c] sm:$0xf]
        %v1617 = vld [vmem:[%s500 + $0x40] sm:$0xf]
        %v1618 = vld [vmem:[%s500 + $0x44] sm:$0xf]
        %v1619 = vld [vmem:[%s500 + $0x48] sm:$0xf]
        %v1620 = vld [vmem:[%s500 + $0x4c] sm:$0xf]
        %v1621 = vld [vmem:[%s500 + $0x50] sm:$0xf]
        %v1622 = vld [vmem:[%s500 + $0x54] sm:$0xf]
        %v1623 = vld [vmem:[%s500 + $0x58] sm:$0xf]
        %v1624 = vld [vmem:[%s500 + $0x5c] sm:$0xf]
        %v1625 = vld [vmem:[%s500 + $0x60] sm:$0xf]
        %v1626 = vld [vmem:[%s500 + $0x64] sm:$0xf]
        %v1627 = vld [vmem:[%s500 + $0x68] sm:$0xf]
        %v1628 = vld [vmem:[%s500 + $0x6c] sm:$0xf]
        %v1629 = vld [vmem:[%s500 + $0x70] sm:$0xf]
        %v1630 = vld [vmem:[%s500 + $0x74] sm:$0xf]
        %v1631 = vld [vmem:[%s500 + $0x78] sm:$0xf]
        %v1632 = vld [vmem:[%s500 + $0x7c] sm:$0xf]
        %v1633 = vld [vmem:[#allocation13] sm:$0xf]
        %v1634 = vld [vmem:[#allocation13 + $0x4] sm:$0xf]
        %v1635 = vld [vmem:[#allocation13 + $0x8] sm:$0xf]
        %v1636 = vld [vmem:[#allocation13 + $0xc] sm:$0xf]
        %v1637 = vld [vmem:[#allocation13 + $0x10] sm:$0xf]
        %v1638 = vld [vmem:[#allocation13 + $0x14] sm:$0xf]
        %v1639 = vld [vmem:[#allocation13 + $0x18] sm:$0x1]
        %v1640 = vld [vmem:[#allocation15] sm:$0x1]
        %v1642 = vlaneseq
        %v1643 = vshrl.u32 %v1642, 7
        %v1644 = vsub.s32 0, %v1643
        %v1645 = vrot.slane %v1640, %v1644
        %v1679 = vunpack.c.l.b16 %v1601
        %v1680 = vunpack.c.l.b16 %v1602
        %v1681 = vunpack.c.l.b16 %v1603
        %v1682 = vunpack.c.l.b16 %v1604
        %v1683 = vunpack.c.l.b16 %v1605
        %v1684 = vunpack.c.l.b16 %v1606
        %v1685 = vunpack.c.l.b16 %v1607
        %v1686 = vunpack.c.l.b16 %v1608
        %v1687 = vunpack.c.l.b16 %v1609
        %v1688 = vunpack.c.l.b16 %v1610
        %v1689 = vunpack.c.l.b16 %v1611
        %v1690 = vunpack.c.l.b16 %v1612
        %v1691 = vunpack.c.l.b16 %v1613
        %v1692 = vunpack.c.l.b16 %v1614
        %v1693 = vunpack.c.l.b16 %v1615
        %v1694 = vunpack.c.l.b16 %v1616
        %v1695 = vunpack.c.l.b16 %v1617
        %v1696 = vunpack.c.l.b16 %v1618
        %v1697 = vunpack.c.l.b16 %v1619
        %v1698 = vunpack.c.l.b16 %v1620
        %v1699 = vunpack.c.l.b16 %v1621
        %v1700 = vunpack.c.l.b16 %v1622
        %v1701 = vunpack.c.l.b16 %v1623
        %v1702 = vunpack.c.l.b16 %v1624
        %v1703 = vunpack.c.l.b16 %v1625
        %v1704 = vunpack.c.l.b16 %v1626
        %v1705 = vunpack.c.l.b16 %v1627
        %v1706 = vunpack.c.l.b16 %v1628
        %v1707 = vunpack.c.l.b16 %v1629
        %v1708 = vunpack.c.l.b16 %v1630
        %v1709 = vunpack.c.l.b16 %v1631
        %v1710 = vunpack.c.l.b16 %v1632
        %v1711 = vpack.c.b16 %v1680, %v1679
        %v1712 = vpack.c.b16 %v1682, %v1681
        %v1713 = vpack.c.b16 %v1684, %v1683
        %v1714 = vpack.c.b16 %v1686, %v1685
        %v1715 = vpack.c.b16 %v1688, %v1687
        %v1716 = vpack.c.b16 %v1690, %v1689
        %v1717 = vpack.c.b16 %v1692, %v1691
        %v1718 = vpack.c.b16 %v1694, %v1693
        %v1719 = vpack.c.b16 %v1696, %v1695
        %v1720 = vpack.c.b16 %v1698, %v1697
        %v1721 = vpack.c.b16 %v1700, %v1699
        %v1722 = vpack.c.b16 %v1702, %v1701
        %v1723 = vpack.c.b16 %v1704, %v1703
        %v1724 = vpack.c.b16 %v1706, %v1705
        %v1725 = vpack.c.b16 %v1708, %v1707
        %v1726 = vpack.c.b16 %v1710, %v1709
        %v1734 = vunpack.c.l.b16 %v1633
        %v1735 = vunpack.c.l.b16 %v1634
        %v1736 = vunpack.c.l.b16 %v1635
        %v1737 = vunpack.c.l.b16 %v1636
        %v1738 = vunpack.c.l.b16 %v1637
        %v1739 = vunpack.c.l.b16 %v1638
        %v1740 = vunpack.c.l.b16 %v1639
        %v1741 = vpack.c.b16 %v1735, %v1734
        %v1742 = vpack.c.b16 %v1737, %v1736
        %v1743 = vpack.c.b16 %v1739, %v1738
        %v1744 = vpack.c.b16 %v1740, %v1740
        %vm1748 = vcmask 400384
        %v1750 = vsel %vm1748, %v1711, 0
        %v1753 = vsel %vm1748, %v1712, 0
        %v1756 = vsel %vm1748, %v1713, 0
        %v1759 = vsel %vm1748, %v1714, 0
        %v1762 = vsel %vm1748, %v1715, 0
        %v1765 = vsel %vm1748, %v1716, 0
        %v1768 = vsel %vm1748, %v1717, 0
        %v1771 = vsel %vm1748, %v1718, 0
        %v1774 = vsel %vm1748, %v1719, 0
        %v1777 = vsel %vm1748, %v1720, 0
        %v1780 = vsel %vm1748, %v1721, 0
        %v1783 = vsel %vm1748, %v1722, 0
        %v1786 = vsel %vm1748, %v1723, 0
        %v1789 = vsel %vm1748, %v1724, 0
        %v1792 = vsel %vm1748, %v1725, 0
        %v1795 = vsel %vm1748, %v1726, 0
        %vm1797 = vcmask 1040384
        %v1798 = vsel 0, 4294967295, 65535
        %v1799 = vsel %vm1797, %v1798, 0
        %v1801 = vand.u32 %v1744, %v1799
        %1803 = vmatprep.subr.bf16.mxu0 0
        %1804 = vmatpush1.bf16.msra.mxu0 %v1741
        %1805 = vmatprep.subr.bf16.mxu0 0
        %1806 = vmatpush1.bf16.msra.mxu0 %v1742
        %1807 = vmatprep.subr.bf16.mxu0 0
        %1808 = vmatpush1.bf16.msra.mxu0 %v1743
        %1809 = vmatprep.subr.bf16.mxu0 0
        %1810 = vmatpush1.bf16.msra.mxu0 %v1801
        %1811 = vmatprep.subr.bf16.mxu0 0
        %1812 = vmatpush1.bf16.msra.mxu0 0
        %1813 = vmatprep.subr.bf16.mxu0 0
        %1814 = vmatpush1.bf16.msra.mxu0 0
        %1815 = vmatprep.subr.bf16.mxu0 0
        %1816 = vmatpush1.bf16.msra.mxu0 0
        %1817 = vmatprep.subr.bf16.mxu0 0
        %1818 = vmatpush1.bf16.msra.mxu0 0
        %1819 = vmatprep.subr.bf16.mxu0 0
        %1820 = vmatpush1.bf16.msra.mxu0 0
        %1821 = vmatprep.subr.bf16.mxu0 0
        %1822 = vmatpush1.bf16.msra.mxu0 0
        %1823 = vmatprep.subr.bf16.mxu0 0
        %1824 = vmatpush1.bf16.msra.mxu0 0
        %1825 = vmatprep.subr.bf16.mxu0 0
        %1826 = vmatpush1.bf16.msra.mxu0 0
        %1827 = vmatprep.subr.bf16.mxu0 0
        %1828 = vmatpush1.bf16.msra.mxu0 0
        %1829 = vmatprep.subr.bf16.mxu0 0
        %1830 = vmatpush1.bf16.msra.mxu0 0
        %1831 = vmatprep.subr.bf16.mxu0 0
        %1832 = vmatpush1.bf16.msra.mxu0 0
        %1833 = vmatprep.subr.bf16.mxu0 0
        %1834 = vmatpush1.bf16.msra.mxu0 0
        %1835 = vmatprep.mubr.bf16.mxu0 0
        %1836 = vmatmul.mubr.bf16.gmra.mrb[0].mxu0 %v1750
        %v1837 = vpop.f32.mrb[0].mxu0
        %v1838 = vadd.f32 %v1645, %v1837
        %v1839 = vpop.f32.mrb[0].mxu0
        %v1840 = vpop.f32.mrb[0].mxu0
        %v1841 = vadd.f32 %v1645, %v1840
        %v1842 = vpop.f32.mrb[0].mxu0
        %1843 = vmatprep.mubr.bf16.mxu0 0
        %1844 = vmatmul.mubr.bf16.gmra.mrb[0].mxu0 %v1753
        %v1845 = vpop.f32.mrb[0].mxu0
        %v1846 = vadd.f32 %v1645, %v1845
        %v1847 = vpop.f32.mrb[0].mxu0
        %v1848 = vpop.f32.mrb[0].mxu0
        %v1849 = vadd.f32 %v1645, %v1848
        %v1850 = vpop.f32.mrb[0].mxu0
        %1851 = vmatprep.mubr.bf16.mxu0 0
        %1852 = vmatmul.mubr.bf16.gmra.mrb[0].mxu0 %v1756
        %v1853 = vpop.f32.mrb[0].mxu0
        %v1854 = vadd.f32 %v1645, %v1853
        %v1855 = vpop.f32.mrb[0].mxu0
        %v1856 = vpop.f32.mrb[0].mxu0
        %v1857 = vadd.f32 %v1645, %v1856
        %v1858 = vpop.f32.mrb[0].mxu0
        %1859 = vmatprep.mubr.bf16.mxu0 0
        %1860 = vmatmul.mubr.bf16.gmra.mrb[0].mxu0 %v1759
        %v1861 = vpop.f32.mrb[0].mxu0
        %v1862 = vadd.f32 %v1645, %v1861
        %v1863 = vpop.f32.mrb[0].mxu0
        %v1864 = vpop.f32.mrb[0].mxu0
        %v1865 = vadd.f32 %v1645, %v1864
        %v1866 = vpop.f32.mrb[0].mxu0
        %1867 = vmatprep.mubr.bf16.mxu0 0
        %1868 = vmatmul.mubr.bf16.gmra.mrb[0].mxu0 %v1762
        %v1869 = vpop.f32.mrb[0].mxu0
        %v1870 = vadd.f32 %v1645, %v1869
        %v1871 = vpop.f32.mrb[0].mxu0
        %v1872 = vpop.f32.mrb[0].mxu0
        %v1873 = vadd.f32 %v1645, %v1872
        %v1874 = vpop.f32.mrb[0].mxu0
        %1875 = vmatprep.mubr.bf16.mxu0 0
        %1876 = vmatmul.mubr.bf16.gmra.mrb[0].mxu0 %v1765
        %v1877 = vpop.f32.mrb[0].mxu0
        %v1878 = vadd.f32 %v1645, %v1877
        %v1879 = vpop.f32.mrb[0].mxu0
        %v1880 = vpop.f32.mrb[0].mxu0
        %v1881 = vadd.f32 %v1645, %v1880
        %v1882 = vpop.f32.mrb[0].mxu0
        %1883 = vmatprep.mubr.bf16.mxu0 0
        %1884 = vmatmul.mubr.bf16.gmra.mrb[0].mxu0 %v1768
        %v1885 = vpop.f32.mrb[0].mxu0
        %v1886 = vadd.f32 %v1645, %v1885
        %v1887 = vpop.f32.mrb[0].mxu0
        %v1888 = vpop.f32.mrb[0].mxu0
        %v1889 = vadd.f32 %v1645, %v1888
        %v1890 = vpop.f32.mrb[0].mxu0
        %1891 = vmatprep.mubr.bf16.mxu0 0
        %1892 = vmatmul.mubr.bf16.gmra.mrb[0].mxu0 %v1771
        %v1893 = vpop.f32.mrb[0].mxu0
        %v1894 = vadd.f32 %v1645, %v1893
        %v1895 = vpop.f32.mrb[0].mxu0
        %v1896 = vpop.f32.mrb[0].mxu0
        %v1897 = vadd.f32 %v1645, %v1896
        %v1898 = vpop.f32.mrb[0].mxu0
        %1899 = vmatprep.mubr.bf16.mxu0 0
        %1900 = vmatmul.mubr.bf16.gmra.mrb[0].mxu0 %v1774
        %v1901 = vpop.f32.mrb[0].mxu0
        %v1902 = vadd.f32 %v1645, %v1901
        %v1903 = vpop.f32.mrb[0].mxu0
        %v1904 = vpop.f32.mrb[0].mxu0
        %v1905 = vadd.f32 %v1645, %v1904
        %v1906 = vpop.f32.mrb[0].mxu0
        %1907 = vmatprep.mubr.bf16.mxu0 0
        %1908 = vmatmul.mubr.bf16.gmra.mrb[0].mxu0 %v1777
        %v1909 = vpop.f32.mrb[0].mxu0
        %v1910 = vadd.f32 %v1645, %v1909
        %v1911 = vpop.f32.mrb[0].mxu0
        %v1912 = vpop.f32.mrb[0].mxu0
        %v1913 = vadd.f32 %v1645, %v1912
        %v1914 = vpop.f32.mrb[0].mxu0
        %1915 = vmatprep.mubr.bf16.mxu0 0
        %1916 = vmatmul.mubr.bf16.gmra.mrb[0].mxu0 %v1780
        %v1917 = vpop.f32.mrb[0].mxu0
        %v1918 = vadd.f32 %v1645, %v1917
        %v1919 = vpop.f32.mrb[0].mxu0
        %v1920 = vpop.f32.mrb[0].mxu0
        %v1921 = vadd.f32 %v1645, %v1920
        %v1922 = vpop.f32.mrb[0].mxu0
        %1923 = vmatprep.mubr.bf16.mxu0 0
        %1924 = vmatmul.mubr.bf16.gmra.mrb[0].mxu0 %v1783
        %v1925 = vpop.f32.mrb[0].mxu0
        %v1926 = vadd.f32 %v1645, %v1925
        %v1927 = vpop.f32.mrb[0].mxu0
        %v1928 = vpop.f32.mrb[0].mxu0
        %v1929 = vadd.f32 %v1645, %v1928
        %v1930 = vpop.f32.mrb[0].mxu0
        %1931 = vmatprep.mubr.bf16.mxu0 0
        %1932 = vmatmul.mubr.bf16.gmra.mrb[0].mxu0 %v1786
        %v1933 = vpop.f32.mrb[0].mxu0
        %v1934 = vadd.f32 %v1645, %v1933
        %v1935 = vpop.f32.mrb[0].mxu0
        %v1936 = vpop.f32.mrb[0].mxu0
        %v1937 = vadd.f32 %v1645, %v1936
        %v1938 = vpop.f32.mrb[0].mxu0
        %1939 = vmatprep.mubr.bf16.mxu0 0
        %1940 = vmatmul.mubr.bf16.gmra.mrb[0].mxu0 %v1789
        %v1941 = vpop.f32.mrb[0].mxu0
        %v1942 = vadd.f32 %v1645, %v1941
        %v1943 = vpop.f32.mrb[0].mxu0
        %v1944 = vpop.f32.mrb[0].mxu0
        %v1945 = vadd.f32 %v1645, %v1944
        %v1946 = vpop.f32.mrb[0].mxu0
        %1947 = vmatprep.mubr.bf16.mxu0 0
        %1948 = vmatmul.mubr.bf16.gmra.mrb[0].mxu0 %v1792
        %v1949 = vpop.f32.mrb[0].mxu0
        %v1950 = vadd.f32 %v1645, %v1949
        %v1951 = vpop.f32.mrb[0].mxu0
        %v1952 = vpop.f32.mrb[0].mxu0
        %v1953 = vadd.f32 %v1645, %v1952
        %v1954 = vpop.f32.mrb[0].mxu0
        %1955 = vmatprep.mubr.bf16.mxu0 0
        %1956 = vmatmul.mubr.bf16.gmra.mrb[0].mxu0 %v1795
        %v1957 = vpop.f32.mrb[0].mxu0
        %v1958 = vadd.f32 %v1645, %v1957
        %v1959 = vpop.f32.mrb[0].mxu0
        %v1960 = vpop.f32.mrb[0].mxu0
        %v1961 = vadd.f32 %v1645, %v1960
        %v1962 = vpop.f32.mrb[0].mxu0
        %1963 = vdwg.mxu0
        %v1964 = vmax.f32 %v1838, 0.0
        %v1965 = vmax.f32 %v1841, 0.0
        %v1966 = vmax.f32 %v1846, 0.0
        %v1967 = vmax.f32 %v1849, 0.0
        %v1968 = vmax.f32 %v1854, 0.0
        %v1969 = vmax.f32 %v1857, 0.0
        %v1970 = vmax.f32 %v1862, 0.0
        %v1971 = vmax.f32 %v1865, 0.0
        %v1972 = vmax.f32 %v1870, 0.0
        %v1973 = vmax.f32 %v1873, 0.0
        %v1974 = vmax.f32 %v1878, 0.0
        %v1975 = vmax.f32 %v1881, 0.0
        %v1976 = vmax.f32 %v1886, 0.0
        %v1977 = vmax.f32 %v1889, 0.0
        %v1978 = vmax.f32 %v1894, 0.0
        %v1979 = vmax.f32 %v1897, 0.0
        %v1980 = vmax.f32 %v1902, 0.0
        %v1981 = vmax.f32 %v1905, 0.0
        %v1982 = vmax.f32 %v1910, 0.0
        %v1983 = vmax.f32 %v1913, 0.0
        %v1984 = vmax.f32 %v1918, 0.0
        %v1985 = vmax.f32 %v1921, 0.0
        %v1986 = vmax.f32 %v1926, 0.0
        %v1987 = vmax.f32 %v1929, 0.0
        %v1988 = vmax.f32 %v1934, 0.0
        %v1989 = vmax.f32 %v1937, 0.0
        %v1990 = vmax.f32 %v1942, 0.0
        %v1991 = vmax.f32 %v1945, 0.0
        %v1992 = vmax.f32 %v1950, 0.0
        %v1993 = vmax.f32 %v1953, 0.0
        %v1994 = vmax.f32 %v1958, 0.0
        %v1995 = vmax.f32 %v1961, 0.0
        %vm1996 = vcmask 523264
        %1997 = vst.msk [vmem:[#allocation2] sm:$0xff] %vm1996, 0
        %1998 = vst.msk [vmem:[#allocation2 + $0x8] sm:$0xff] %vm1996, 0
        %1999 = vst.msk [vmem:[#allocation2 + $0x90] sm:$0xff] %vm1996, 0
        %2000 = vst.msk [vmem:[#allocation2 + $0x98] sm:$0xff] %vm1996, 0
        %v2001 = vpack.c.bf16 %v1965, %v1964
        %v2002 = vpack.c.bf16 %v1967, %v1966
        %v2003 = vpack.c.bf16 %v1969, %v1968
        %v2004 = vpack.c.bf16 %v1971, %v1970
        %v2005 = vpack.c.bf16 %v1973, %v1972
        %v2006 = vpack.c.bf16 %v1975, %v1974
        %v2007 = vpack.c.bf16 %v1977, %v1976
        %v2008 = vpack.c.bf16 %v1979, %v1978
        %v2009 = vpack.c.bf16 %v1981, %v1980
        %v2010 = vpack.c.bf16 %v1983, %v1982
        %v2011 = vpack.c.bf16 %v1985, %v1984
        %v2012 = vpack.c.bf16 %v1987, %v1986
        %v2013 = vpack.c.bf16 %v1989, %v1988
        %v2014 = vpack.c.bf16 %v1991, %v1990
        %v2015 = vpack.c.bf16 %v1993, %v1992
        %v2016 = vpack.c.bf16 %v1995, %v1994
        %2017 = vst.msk [vmem:[#allocation2 + $0x10] sm:$0xff] %vm1996, %v2001
        %2018 = vst.msk [vmem:[#allocation2 + $0x18] sm:$0xff] %vm1996, %v2002
        %2019 = vst.msk [vmem:[#allocation2 + $0x20] sm:$0xff] %vm1996, %v2003
        %2020 = vst.msk [vmem:[#allocation2 + $0x28] sm:$0xff] %vm1996, %v2004
        %2021 = vst.msk [vmem:[#allocation2 + $0x30] sm:$0xff] %vm1996, %v2005
        %2022 = vst.msk [vmem:[#allocation2 + $0x38] sm:$0xff] %vm1996, %v2006
        %2023 = vst.msk [vmem:[#allocation2 + $0x40] sm:$0xff] %vm1996, %v2007
        %2024 = vst.msk [vmem:[#allocation2 + $0x48] sm:$0xff] %vm1996, %v2008
        %2025 = vst.msk [vmem:[#allocation2 + $0x50] sm:$0xff] %vm1996, %v2009
        %2026 = vst.msk [vmem:[#allocation2 + $0x58] sm:$0xff] %vm1996, %v2010
        %2027 = vst.msk [vmem:[#allocation2 + $0x60] sm:$0xff] %vm1996, %v2011
        %2028 = vst.msk [vmem:[#allocation2 + $0x68] sm:$0xff] %vm1996, %v2012
        %2029 = vst.msk [vmem:[#allocation2 + $0x70] sm:$0xff] %vm1996, %v2013
        %2030 = vst.msk [vmem:[#allocation2 + $0x78] sm:$0xff] %vm1996, %v2014
        %2031 = vst.msk [vmem:[#allocation2 + $0x80] sm:$0xff] %vm1996, %v2015
        %2032 = vst.msk [vmem:[#allocation2 + $0x88] sm:$0xff] %vm1996, %v2016
        %v2033 = vld [vmem:[#allocation2] sm:$0x80]
        %v2034 = vld [vmem:[#allocation2 + $0x8] sm:$0xff]
        %v2035 = vld [vmem:[#allocation2 + $0x10] sm:$0xff]
        %v2036 = vld [vmem:[#allocation2 + $0x18] sm:$0xff]
        %v2037 = vld [vmem:[#allocation2 + $0x20] sm:$0xff]
        %v2038 = vld [vmem:[#allocation2 + $0x28] sm:$0xff]
        %v2039 = vld [vmem:[#allocation2 + $0x30] sm:$0xff]
        %v2040 = vld [vmem:[#allocation2 + $0x38] sm:$0xff]
        %v2041 = vld [vmem:[#allocation2 + $0x40] sm:$0xff]
        %v2042 = vld [vmem:[#allocation2 + $0x48] sm:$0xff]
        %v2043 = vld [vmem:[#allocation2 + $0x50] sm:$0xff]
        %v2044 = vld [vmem:[#allocation2 + $0x58] sm:$0xff]
        %v2045 = vld [vmem:[#allocation2 + $0x60] sm:$0xff]
        %v2046 = vld [vmem:[#allocation2 + $0x68] sm:$0xff]
        %v2047 = vld [vmem:[#allocation2 + $0x70] sm:$0xff]
        %v2048 = vld [vmem:[#allocation2 + $0x78] sm:$0xff]
        %v2049 = vld [vmem:[#allocation2 + $0x80] sm:$0xff]
        %v2050 = vld [vmem:[#allocation16] sm:$0xf]
        %v2051 = vld [vmem:[#allocation16 + $0x4] sm:$0xf]
        %v2052 = vld [vmem:[#allocation16 + $0x8] sm:$0xf]
        %v2053 = vld [vmem:[#allocation16 + $0xc] sm:$0xf]
        %v2054 = vld [vmem:[#allocation16 + $0x10] sm:$0xf]
        %v2055 = vld [vmem:[#allocation16 + $0x14] sm:$0xf]
        %v2056 = vld [vmem:[#allocation16 + $0x18] sm:$0xf]
        %v2057 = vld [vmem:[#allocation16 + $0x1c] sm:$0xf]
        %v2058 = vld [vmem:[#allocation2 + $0x8] sm:$0x80]
        %v2059 = vld [vmem:[#allocation2 + $0x88] sm:$0xff]
        %v2060 = vld [vmem:[#allocation16 + $0x60] sm:$0xf]
        %v2061 = vld [vmem:[#allocation16 + $0x64] sm:$0xf]
        %v2062 = vld [vmem:[#allocation16 + $0x68] sm:$0xf]
        %v2063 = vld [vmem:[#allocation16 + $0x6c] sm:$0xf]
        %v2064 = vld [vmem:[#allocation16 + $0x70] sm:$0xf]
        %v2065 = vld [vmem:[#allocation16 + $0x74] sm:$0xf]
        %v2066 = vld [vmem:[#allocation16 + $0x78] sm:$0xf]
        %v2067 = vld [vmem:[#allocation16 + $0x7c] sm:$0xf]
        %vm2068 = vsmask.f32 256
        %v2070 = vshrl.u32 %v2058, 16
        %v2072 = vrot.slane %v2070, 7
        %v2074 = vshrl.u32 %v2035, 16
        %v2076 = vrot.slane %v2074, 7
        %v2077 = vshll.u32 %v2035, 16
        %v2079 = vor.u32 %v2076, %v2077
        %v2080 = vsel %vm2068, %v2072, %v2079
        %v2082 = vshrl.u32 %v2036, 16
        %v2084 = vrot.slane %v2082, 7
        %v2085 = vshll.u32 %v2036, 16
        %v2087 = vor.u32 %v2084, %v2085
        %v2088 = vsel %vm2068, %v2076, %v2087
        %v2090 = vshrl.u32 %v2037, 16
        %v2092 = vrot.slane %v2090, 7
        %v2093 = vshll.u32 %v2037, 16
        %v2095 = vor.u32 %v2092, %v2093
        %v2096 = vsel %vm2068, %v2084, %v2095
        %v2098 = vshrl.u32 %v2038, 16
        %v2100 = vrot.slane %v2098, 7
        %v2101 = vshll.u32 %v2038, 16
        %v2103 = vor.u32 %v2100, %v2101
        %v2104 = vsel %vm2068, %v2092, %v2103
        %v2106 = vshrl.u32 %v2039, 16
        %v2108 = vrot.slane %v2106, 7
        %v2109 = vshll.u32 %v2039, 16
        %v2111 = vor.u32 %v2108, %v2109
        %v2112 = vsel %vm2068, %v2100, %v2111
        %v2114 = vshrl.u32 %v2040, 16
        %v2116 = vrot.slane %v2114, 7
        %v2117 = vshll.u32 %v2040, 16
        %v2119 = vor.u32 %v2116, %v2117
        %v2120 = vsel %vm2068, %v2108, %v2119
        %v2122 = vshrl.u32 %v2041, 16
        %v2124 = vrot.slane %v2122, 7
        %v2125 = vshll.u32 %v2041, 16
        %v2127 = vor.u32 %v2124, %v2125
        %v2128 = vsel %vm2068, %v2116, %v2127
        %v2130 = vshrl.u32 %v2042, 16
        %v2132 = vrot.slane %v2130, 7
        %v2133 = vshll.u32 %v2042, 16
        %v2135 = vor.u32 %v2132, %v2133
        %v2136 = vsel %vm2068, %v2124, %v2135
        %v2138 = vshrl.u32 %v2043, 16
        %v2140 = vrot.slane %v2138, 7
        %v2141 = vshll.u32 %v2043, 16
        %v2143 = vor.u32 %v2140, %v2141
        %v2144 = vsel %vm2068, %v2132, %v2143
        %v2146 = vshrl.u32 %v2044, 16
        %v2148 = vrot.slane %v2146, 7
        %v2149 = vshll.u32 %v2044, 16
        %v2151 = vor.u32 %v2148, %v2149
        %v2152 = vsel %vm2068, %v2140, %v2151
        %v2154 = vshrl.u32 %v2045, 16
        %v2156 = vrot.slane %v2154, 7
        %v2157 = vshll.u32 %v2045, 16
        %v2159 = vor.u32 %v2156, %v2157
        %v2160 = vsel %vm2068, %v2148, %v2159
        %v2162 = vshrl.u32 %v2046, 16
        %v2164 = vrot.slane %v2162, 7
        %v2165 = vshll.u32 %v2046, 16
        %v2167 = vor.u32 %v2164, %v2165
        %v2168 = vsel %vm2068, %v2156, %v2167
        %v2170 = vshrl.u32 %v2047, 16
        %v2172 = vrot.slane %v2170, 7
        %v2173 = vshll.u32 %v2047, 16
        %v2175 = vor.u32 %v2172, %v2173
        %v2176 = vsel %vm2068, %v2164, %v2175
        %v2178 = vshrl.u32 %v2048, 16
        %v2180 = vrot.slane %v2178, 7
        %v2181 = vshll.u32 %v2048, 16
        %v2183 = vor.u32 %v2180, %v2181
        %v2184 = vsel %vm2068, %v2172, %v2183
        %v2186 = vshrl.u32 %v2049, 16
        %v2188 = vrot.slane %v2186, 7
        %v2189 = vshll.u32 %v2049, 16
        %v2191 = vor.u32 %v2188, %v2189
        %v2192 = vsel %vm2068, %v2180, %v2191
        %v2194 = vshrl.u32 %v2059, 16
        %v2196 = vrot.slane %v2194, 7
        %v2197 = vshll.u32 %v2059, 16
        %v2199 = vor.u32 %v2196, %v2197
        %v2200 = vsel %vm2068, %v2188, %v2199
        %v2209 = vunpack.c.l.b16 %v2060
        %v2210 = vunpack.c.l.b16 %v2061
        %v2211 = vunpack.c.l.b16 %v2062
        %v2212 = vunpack.c.l.b16 %v2063
        %v2213 = vunpack.c.l.b16 %v2064
        %v2214 = vunpack.c.l.b16 %v2065
        %v2215 = vunpack.c.l.b16 %v2066
        %v2216 = vunpack.c.l.b16 %v2067
        %v2217 = vpack.c.b16 %v2210, %v2209
        %v2218 = vpack.c.b16 %v2212, %v2211
        %v2219 = vpack.c.b16 %v2214, %v2213
        %v2220 = vpack.c.b16 %v2216, %v2215
        %v2226 = vsel %vm1996, %v2080, 0
        %v2229 = vsel %vm1996, %v2088, 0
        %v2232 = vsel %vm1996, %v2096, 0
        %v2235 = vsel %vm1996, %v2104, 0
        %v2238 = vsel %vm1996, %v2112, 0
        %v2241 = vsel %vm1996, %v2120, 0
        %v2244 = vsel %vm1996, %v2128, 0
        %v2247 = vsel %vm1996, %v2136, 0
        %v2250 = vsel %vm1996, %v2144, 0
        %v2253 = vsel %vm1996, %v2152, 0
        %v2256 = vsel %vm1996, %v2160, 0
        %v2259 = vsel %vm1996, %v2168, 0
        %v2262 = vsel %vm1996, %v2176, 0
        %v2265 = vsel %vm1996, %v2184, 0
        %v2268 = vsel %vm1996, %v2192, 0
        %v2271 = vsel %vm1996, %v2200, 0
        %2273 = vmatprep.subr.bf16.mxu0 0
        %2274 = vmatpush1.bf16.msra.mxu0 %v2217
        %2275 = vmatprep.subr.bf16.mxu0 0
        %2276 = vmatpush1.bf16.msra.mxu0 %v2218
        %2277 = vmatprep.subr.bf16.mxu0 0
        %2278 = vmatpush1.bf16.msra.mxu0 %v2219
        %2279 = vmatprep.subr.bf16.mxu0 0
        %2280 = vmatpush1.bf16.msra.mxu0 %v2220
        %2281 = vmatprep.subr.bf16.mxu0 0
        %2282 = vmatpush1.bf16.msra.mxu0 0
        %2283 = vmatprep.subr.bf16.mxu0 0
        %2284 = vmatpush1.bf16.msra.mxu0 0
        %2285 = vmatprep.subr.bf16.mxu0 0
        %2286 = vmatpush1.bf16.msra.mxu0 0
        %2287 = vmatprep.subr.bf16.mxu0 0
        %2288 = vmatpush1.bf16.msra.mxu0 0
        %2289 = vmatprep.subr.bf16.mxu0 0
        %2290 = vmatpush1.bf16.msra.mxu0 0
        %2291 = vmatprep.subr.bf16.mxu0 0
        %2292 = vmatpush1.bf16.msra.mxu0 0
        %2293 = vmatprep.subr.bf16.mxu0 0
        %2294 = vmatpush1.bf16.msra.mxu0 0
        %2295 = vmatprep.subr.bf16.mxu0 0
        %2296 = vmatpush1.bf16.msra.mxu0 0
        %2297 = vmatprep.subr.bf16.mxu0 0
        %2298 = vmatpush1.bf16.msra.mxu0 0
        %2299 = vmatprep.subr.bf16.mxu0 0
        %2300 = vmatpush1.bf16.msra.mxu0 0
        %2301 = vmatprep.subr.bf16.mxu0 0
        %2302 = vmatpush1.bf16.msra.mxu0 0
        %2303 = vmatprep.subr.bf16.mxu0 0
        %2304 = vmatpush1.bf16.msra.mxu0 0
        %2305 = vmatprep.mubr.bf16.mxu0 0
        %2306 = vmatmul.mubr.bf16.gmra.mrb[0].mxu0 %v2226
        %v2307 = vpop.f32.mrb[0].mxu0
        %v2308 = vadd.f32 0.0, %v2307
        %v2309 = vpop.f32.mrb[0].mxu0
        %v2310 = vpop.f32.mrb[0].mxu0
        %v2311 = vadd.f32 0.0, %v2310
        %v2312 = vpop.f32.mrb[0].mxu0
        %2313 = vmatprep.mubr.bf16.mxu0 0
        %2314 = vmatmul.mubr.bf16.gmra.mrb[0].mxu0 %v2229
        %v2315 = vpop.f32.mrb[0].mxu0
        %v2316 = vadd.f32 0.0, %v2315
        %v2317 = vpop.f32.mrb[0].mxu0
        %v2318 = vpop.f32.mrb[0].mxu0
        %v2319 = vadd.f32 0.0, %v2318
        %v2320 = vpop.f32.mrb[0].mxu0
        %2321 = vmatprep.mubr.bf16.mxu0 0
        %2322 = vmatmul.mubr.bf16.gmra.mrb[0].mxu0 %v2232
        %v2323 = vpop.f32.mrb[0].mxu0
        %v2324 = vadd.f32 0.0, %v2323
        %v2325 = vpop.f32.mrb[0].mxu0
        %v2326 = vpop.f32.mrb[0].mxu0
        %v2327 = vadd.f32 0.0, %v2326
        %v2328 = vpop.f32.mrb[0].mxu0
        %2329 = vmatprep.mubr.bf16.mxu0 0
        %2330 = vmatmul.mubr.bf16.gmra.mrb[0].mxu0 %v2235
        %v2331 = vpop.f32.mrb[0].mxu0
        %v2332 = vadd.f32 0.0, %v2331
        %v2333 = vpop.f32.mrb[0].mxu0
        %v2334 = vpop.f32.mrb[0].mxu0
        %v2335 = vadd.f32 0.0, %v2334
        %v2336 = vpop.f32.mrb[0].mxu0
        %2337 = vmatprep.mubr.bf16.mxu0 0
        %2338 = vmatmul.mubr.bf16.gmra.mrb[0].mxu0 %v2238
        %v2339 = vpop.f32.mrb[0].mxu0
        %v2340 = vadd.f32 0.0, %v2339
        %v2341 = vpop.f32.mrb[0].mxu0
        %v2342 = vpop.f32.mrb[0].mxu0
        %v2343 = vadd.f32 0.0, %v2342
        %v2344 = vpop.f32.mrb[0].mxu0
        %2345 = vmatprep.mubr.bf16.mxu0 0
        %2346 = vmatmul.mubr.bf16.gmra.mrb[0].mxu0 %v2241
        %v2347 = vpop.f32.mrb[0].mxu0
        %v2348 = vadd.f32 0.0, %v2347
        %v2349 = vpop.f32.mrb[0].mxu0
        %v2350 = vpop.f32.mrb[0].mxu0
        %v2351 = vadd.f32 0.0, %v2350
        %v2352 = vpop.f32.mrb[0].mxu0
        %2353 = vmatprep.mubr.bf16.mxu0 0
        %2354 = vmatmul.mubr.bf16.gmra.mrb[0].mxu0 %v2244
        %v2355 = vpop.f32.mrb[0].mxu0
        %v2356 = vadd.f32 0.0, %v2355
        %v2357 = vpop.f32.mrb[0].mxu0
        %v2358 = vpop.f32.mrb[0].mxu0
        %v2359 = vadd.f32 0.0, %v2358
        %v2360 = vpop.f32.mrb[0].mxu0
        %2361 = vmatprep.mubr.bf16.mxu0 0
        %2362 = vmatmul.mubr.bf16.gmra.mrb[0].mxu0 %v2247
        %v2363 = vpop.f32.mrb[0].mxu0
        %v2364 = vadd.f32 0.0, %v2363
        %v2365 = vpop.f32.mrb[0].mxu0
        %v2366 = vpop.f32.mrb[0].mxu0
        %v2367 = vadd.f32 0.0, %v2366
        %v2368 = vpop.f32.mrb[0].mxu0
        %2369 = vmatprep.mubr.bf16.mxu0 0
        %2370 = vmatmul.mubr.bf16.gmra.mrb[0].mxu0 %v2250
        %v2371 = vpop.f32.mrb[0].mxu0
        %v2372 = vadd.f32 0.0, %v2371
        %v2373 = vpop.f32.mrb[0].mxu0
        %v2374 = vpop.f32.mrb[0].mxu0
        %v2375 = vadd.f32 0.0, %v2374
        %v2376 = vpop.f32.mrb[0].mxu0
        %2377 = vmatprep.mubr.bf16.mxu0 0
        %2378 = vmatmul.mubr.bf16.gmra.mrb[0].mxu0 %v2253
        %v2379 = vpop.f32.mrb[0].mxu0
        %v2380 = vadd.f32 0.0, %v2379
        %v2381 = vpop.f32.mrb[0].mxu0
        %v2382 = vpop.f32.mrb[0].mxu0
        %v2383 = vadd.f32 0.0, %v2382
        %v2384 = vpop.f32.mrb[0].mxu0
        %2385 = vmatprep.mubr.bf16.mxu0 0
        %2386 = vmatmul.mubr.bf16.gmra.mrb[0].mxu0 %v2256
        %v2387 = vpop.f32.mrb[0].mxu0
        %v2388 = vadd.f32 0.0, %v2387
        %v2389 = vpop.f32.mrb[0].mxu0
        %v2390 = vpop.f32.mrb[0].mxu0
        %v2391 = vadd.f32 0.0, %v2390
        %v2392 = vpop.f32.mrb[0].mxu0
        %2393 = vmatprep.mubr.bf16.mxu0 0
        %2394 = vmatmul.mubr.bf16.gmra.mrb[0].mxu0 %v2259
        %v2395 = vpop.f32.mrb[0].mxu0
        %v2396 = vadd.f32 0.0, %v2395
        %v2397 = vpop.f32.mrb[0].mxu0
        %v2398 = vpop.f32.mrb[0].mxu0
        %v2399 = vadd.f32 0.0, %v2398
        %v2400 = vpop.f32.mrb[0].mxu0
        %2401 = vmatprep.mubr.bf16.mxu0 0
        %2402 = vmatmul.mubr.bf16.gmra.mrb[0].mxu0 %v2262
        %v2403 = vpop.f32.mrb[0].mxu0
        %v2404 = vadd.f32 0.0, %v2403
        %v2405 = vpop.f32.mrb[0].mxu0
        %v2406 = vpop.f32.mrb[0].mxu0
        %v2407 = vadd.f32 0.0, %v2406
        %v2408 = vpop.f32.mrb[0].mxu0
        %2409 = vmatprep.mubr.bf16.mxu0 0
        %2410 = vmatmul.mubr.bf16.gmra.mrb[0].mxu0 %v2265
        %v2411 = vpop.f32.mrb[0].mxu0
        %v2412 = vadd.f32 0.0, %v2411
        %v2413 = vpop.f32.mrb[0].mxu0
        %v2414 = vpop.f32.mrb[0].mxu0
        %v2415 = vadd.f32 0.0, %v2414
        %v2416 = vpop.f32.mrb[0].mxu0
        %2417 = vmatprep.mubr.bf16.mxu0 0
        %2418 = vmatmul.mubr.bf16.gmra.mrb[0].mxu0 %v2268
        %v2419 = vpop.f32.mrb[0].mxu0
        %v2420 = vadd.f32 0.0, %v2419
        %v2421 = vpop.f32.mrb[0].mxu0
        %v2422 = vpop.f32.mrb[0].mxu0
        %v2423 = vadd.f32 0.0, %v2422
        %v2424 = vpop.f32.mrb[0].mxu0
        %2425 = vmatprep.mubr.bf16.mxu0 0
        %2426 = vmatmul.mubr.bf16.gmra.mrb[0].mxu0 %v2271
        %v2427 = vpop.f32.mrb[0].mxu0
        %v2428 = vadd.f32 0.0, %v2427
        %v2429 = vpop.f32.mrb[0].mxu0
        %v2430 = vpop.f32.mrb[0].mxu0
        %v2431 = vadd.f32 0.0, %v2430
        %v2432 = vpop.f32.mrb[0].mxu0
        %2433 = vdwg.mxu0
        %v2435 = vshrl.u32 %v2033, 16
        %v2437 = vrot.slane %v2435, 7
        %v2439 = vshrl.u32 %v2034, 16
        %v2441 = vrot.slane %v2439, 7
        %v2442 = vshll.u32 %v2034, 16
        %v2444 = vor.u32 %v2441, %v2442
        %v2445 = vsel %vm2068, %v2437, %v2444
        %v2446 = vsel %vm2068, %v2441, %v2079
        %v2455 = vunpack.c.l.b16 %v2050
        %v2456 = vunpack.c.l.b16 %v2051
        %v2457 = vunpack.c.l.b16 %v2052
        %v2458 = vunpack.c.l.b16 %v2053
        %v2459 = vunpack.c.l.b16 %v2054
        %v2460 = vunpack.c.l.b16 %v2055
        %v2461 = vunpack.c.l.b16 %v2056
        %v2462 = vunpack.c.l.b16 %v2057
        %v2463 = vpack.c.b16 %v2456, %v2455
        %v2464 = vpack.c.b16 %v2458, %v2457
        %v2465 = vpack.c.b16 %v2460, %v2459
        %v2466 = vpack.c.b16 %v2462, %v2461
        %v2472 = vsel %vm1996, %v2445, 0
        %v2475 = vsel %vm1996, %v2446, 0
        %2477 = vmatprep.subr.bf16.mxu0 0
        %2478 = vmatpush1.bf16.msra.mxu0 %v2463
        %2479 = vmatprep.subr.bf16.mxu0 0
        %2480 = vmatpush1.bf16.msra.mxu0 %v2464
        %2481 = vmatprep.subr.bf16.mxu0 0
        %2482 = vmatpush1.bf16.msra.mxu0 %v2465
        %2483 = vmatprep.subr.bf16.mxu0 0
        %2484 = vmatpush1.bf16.msra.mxu0 %v2466
        %2485 = vmatprep.subr.bf16.mxu0 0
        %2486 = vmatpush1.bf16.msra.mxu0 0
        %2487 = vmatprep.subr.bf16.mxu0 0
        %2488 = vmatpush1.bf16.msra.mxu0 0
        %2489 = vmatprep.subr.bf16.mxu0 0
        %2490 = vmatpush1.bf16.msra.mxu0 0
        %2491 = vmatprep.subr.bf16.mxu0 0
        %2492 = vmatpush1.bf16.msra.mxu0 0
        %2493 = vmatprep.subr.bf16.mxu0 0
        %2494 = vmatpush1.bf16.msra.mxu0 0
        %2495 = vmatprep.subr.bf16.mxu0 0
        %2496 = vmatpush1.bf16.msra.mxu0 0
        %2497 = vmatprep.subr.bf16.mxu0 0
        %2498 = vmatpush1.bf16.msra.mxu0 0
        %2499 = vmatprep.subr.bf16.mxu0 0
        %2500 = vmatpush1.bf16.msra.mxu0 0
        %2501 = vmatprep.subr.bf16.mxu0 0
        %2502 = vmatpush1.bf16.msra.mxu0 0
        %2503 = vmatprep.subr.bf16.mxu0 0
        %2504 = vmatpush1.bf16.msra.mxu0 0
        %2505 = vmatprep.subr.bf16.mxu0 0
        %2506 = vmatpush1.bf16.msra.mxu0 0
        %2507 = vmatprep.subr.bf16.mxu0 0
        %2508 = vmatpush1.bf16.msra.mxu0 0
        %2509 = vmatprep.mubr.bf16.mxu0 0
        %2510 = vmatmul.mubr.bf16.gmra.mrb[0].mxu0 %v2472
        %v2511 = vpop.f32.mrb[0].mxu0
        %v2512 = vadd.f32 %v2308, %v2511
        %v2513 = vpop.f32.mrb[0].mxu0
        %v2514 = vpop.f32.mrb[0].mxu0
        %v2515 = vadd.f32 %v2311, %v2514
        %v2516 = vpop.f32.mrb[0].mxu0
        %2517 = vmatprep.mubr.bf16.mxu0 0
        %2518 = vmatmul.mubr.bf16.gmra.mrb[0].mxu0 %v2475
        %v2519 = vpop.f32.mrb[0].mxu0
        %v2520 = vadd.f32 %v2316, %v2519
        %v2521 = vpop.f32.mrb[0].mxu0
        %v2522 = vpop.f32.mrb[0].mxu0
        %v2523 = vadd.f32 %v2319, %v2522
        %v2524 = vpop.f32.mrb[0].mxu0
        %2525 = vmatprep.mubr.bf16.mxu0 0
        %2526 = vmatmul.mubr.bf16.gmra.mrb[0].mxu0 %v2229
        %v2527 = vpop.f32.mrb[0].mxu0
        %v2528 = vadd.f32 %v2324, %v2527
        %v2529 = vpop.f32.mrb[0].mxu0
        %v2530 = vpop.f32.mrb[0].mxu0
        %v2531 = vadd.f32 %v2327, %v2530
        %v2532 = vpop.f32.mrb[0].mxu0
        %2533 = vmatprep.mubr.bf16.mxu0 0
        %2534 = vmatmul.mubr.bf16.gmra.mrb[0].mxu0 %v2232
        %v2535 = vpop.f32.mrb[0].mxu0
        %v2536 = vadd.f32 %v2332, %v2535
        %v2537 = vpop.f32.mrb[0].mxu0
        %v2538 = vpop.f32.mrb[0].mxu0
        %v2539 = vadd.f32 %v2335, %v2538
        %v2540 = vpop.f32.mrb[0].mxu0
        %2541 = vmatprep.mubr.bf16.mxu0 0
        %2542 = vmatmul.mubr.bf16.gmra.mrb[0].mxu0 %v2235
        %v2543 = vpop.f32.mrb[0].mxu0
        %v2544 = vadd.f32 %v2340, %v2543
        %v2545 = vpop.f32.mrb[0].mxu0
        %v2546 = vpop.f32.mrb[0].mxu0
        %v2547 = vadd.f32 %v2343, %v2546
        %v2548 = vpop.f32.mrb[0].mxu0
        %2549 = vmatprep.mubr.bf16.mxu0 0
        %2550 = vmatmul.mubr.bf16.gmra.mrb[0].mxu0 %v2238
        %v2551 = vpop.f32.mrb[0].mxu0
        %v2552 = vadd.f32 %v2348, %v2551
        %v2553 = vpop.f32.mrb[0].mxu0
        %v2554 = vpop.f32.mrb[0].mxu0
        %v2555 = vadd.f32 %v2351, %v2554
        %v2556 = vpop.f32.mrb[0].mxu0
        %2557 = vmatprep.mubr.bf16.mxu0 0
        %2558 = vmatmul.mubr.bf16.gmra.mrb[0].mxu0 %v2241
        %v2559 = vpop.f32.mrb[0].mxu0
        %v2560 = vadd.f32 %v2356, %v2559
        %v2561 = vpop.f32.mrb[0].mxu0
        %v2562 = vpop.f32.mrb[0].mxu0
        %v2563 = vadd.f32 %v2359, %v2562
        %v2564 = vpop.f32.mrb[0].mxu0
        %2565 = vmatprep.mubr.bf16.mxu0 0
        %2566 = vmatmul.mubr.bf16.gmra.mrb[0].mxu0 %v2244
        %v2567 = vpop.f32.mrb[0].mxu0
        %v2568 = vadd.f32 %v2364, %v2567
        %v2569 = vpop.f32.mrb[0].mxu0
        %v2570 = vpop.f32.mrb[0].mxu0
        %v2571 = vadd.f32 %v2367, %v2570
        %v2572 = vpop.f32.mrb[0].mxu0
        %2573 = vmatprep.mubr.bf16.mxu0 0
        %2574 = vmatmul.mubr.bf16.gmra.mrb[0].mxu0 %v2247
        %v2575 = vpop.f32.mrb[0].mxu0
        %v2576 = vadd.f32 %v2372, %v2575
        %v2577 = vpop.f32.mrb[0].mxu0
        %v2578 = vpop.f32.mrb[0].mxu0
        %v2579 = vadd.f32 %v2375, %v2578
        %v2580 = vpop.f32.mrb[0].mxu0
        %2581 = vmatprep.mubr.bf16.mxu0 0
        %2582 = vmatmul.mubr.bf16.gmra.mrb[0].mxu0 %v2250
        %v2583 = vpop.f32.mrb[0].mxu0
        %v2584 = vadd.f32 %v2380, %v2583
        %v2585 = vpop.f32.mrb[0].mxu0
        %v2586 = vpop.f32.mrb[0].mxu0
        %v2587 = vadd.f32 %v2383, %v2586
        %v2588 = vpop.f32.mrb[0].mxu0
        %2589 = vmatprep.mubr.bf16.mxu0 0
        %2590 = vmatmul.mubr.bf16.gmra.mrb[0].mxu0 %v2253
        %v2591 = vpop.f32.mrb[0].mxu0
        %v2592 = vadd.f32 %v2388, %v2591
        %v2593 = vpop.f32.mrb[0].mxu0
        %v2594 = vpop.f32.mrb[0].mxu0
        %v2595 = vadd.f32 %v2391, %v2594
        %v2596 = vpop.f32.mrb[0].mxu0
        %2597 = vmatprep.mubr.bf16.mxu0 0
        %2598 = vmatmul.mubr.bf16.gmra.mrb[0].mxu0 %v2256
        %v2599 = vpop.f32.mrb[0].mxu0
        %v2600 = vadd.f32 %v2396, %v2599
        %v2601 = vpop.f32.mrb[0].mxu0
        %v2602 = vpop.f32.mrb[0].mxu0
        %v2603 = vadd.f32 %v2399, %v2602
        %v2604 = vpop.f32.mrb[0].mxu0
        %2605 = vmatprep.mubr.bf16.mxu0 0
        %2606 = vmatmul.mubr.bf16.gmra.mrb[0].mxu0 %v2259
        %v2607 = vpop.f32.mrb[0].mxu0
        %v2608 = vadd.f32 %v2404, %v2607
        %v2609 = vpop.f32.mrb[0].mxu0
        %v2610 = vpop.f32.mrb[0].mxu0
        %v2611 = vadd.f32 %v2407, %v2610
        %v2612 = vpop.f32.mrb[0].mxu0
        %2613 = vmatprep.mubr.bf16.mxu0 0
        %2614 = vmatmul.mubr.bf16.gmra.mrb[0].mxu0 %v2262
        %v2615 = vpop.f32.mrb[0].mxu0
        %v2616 = vadd.f32 %v2412, %v2615
        %v2617 = vpop.f32.mrb[0].mxu0
        %v2618 = vpop.f32.mrb[0].mxu0
        %v2619 = vadd.f32 %v2415, %v2618
        %v2620 = vpop.f32.mrb[0].mxu0
        %2621 = vmatprep.mubr.bf16.mxu0 0
        %2622 = vmatmul.mubr.bf16.gmra.mrb[0].mxu0 %v2265
        %v2623 = vpop.f32.mrb[0].mxu0
        %v2624 = vadd.f32 %v2420, %v2623
        %v2625 = vpop.f32.mrb[0].mxu0
        %v2626 = vpop.f32.mrb[0].mxu0
        %v2627 = vadd.f32 %v2423, %v2626
        %v2628 = vpop.f32.mrb[0].mxu0
        %2629 = vmatprep.mubr.bf16.mxu0 0
        %2630 = vmatmul.mubr.bf16.gmra.mrb[0].mxu0 %v2268
        %v2631 = vpop.f32.mrb[0].mxu0
        %v2632 = vadd.f32 %v2428, %v2631
        %v2633 = vpop.f32.mrb[0].mxu0
        %v2634 = vpop.f32.mrb[0].mxu0
        %v2635 = vadd.f32 %v2431, %v2634
        %v2636 = vpop.f32.mrb[0].mxu0
        %2637 = vdwg.mxu0
        %v2638 = vld [vmem:[#allocation2 + $0x10] sm:$0x80]
        %v2639 = vld [vmem:[#allocation2 + $0x18] sm:$0xff]
        %v2640 = vld [vmem:[#allocation2 + $0x20] sm:$0xff]
        %v2641 = vld [vmem:[#allocation2 + $0x28] sm:$0xff]
        %v2642 = vld [vmem:[#allocation2 + $0x30] sm:$0xff]
        %v2643 = vld [vmem:[#allocation2 + $0x38] sm:$0xff]
        %v2644 = vld [vmem:[#allocation2 + $0x40] sm:$0xff]
        %v2645 = vld [vmem:[#allocation2 + $0x48] sm:$0xff]
        %v2646 = vld [vmem:[#allocation2 + $0x50] sm:$0xff]
        %v2647 = vld [vmem:[#allocation2 + $0x58] sm:$0xff]
        %v2648 = vld [vmem:[#allocation2 + $0x60] sm:$0xff]
        %v2649 = vld [vmem:[#allocation2 + $0x68] sm:$0xff]
        %v2650 = vld [vmem:[#allocation2 + $0x70] sm:$0xff]
        %v2651 = vld [vmem:[#allocation2 + $0x78] sm:$0xff]
        %v2652 = vld [vmem:[#allocation2 + $0x80] sm:$0xff]
        %v2653 = vld [vmem:[#allocation2 + $0x88] sm:$0xff]
        %v2654 = vld [vmem:[#allocation2 + $0x90] sm:$0xff]
        %v2655 = vld [vmem:[#allocation16 + $0xc0] sm:$0xf]
        %v2656 = vld [vmem:[#allocation16 + $0xc4] sm:$0xf]
        %v2657 = vld [vmem:[#allocation16 + $0xc8] sm:$0xf]
        %v2658 = vld [vmem:[#allocation16 + $0xcc] sm:$0xf]
        %v2659 = vld [vmem:[#allocation16 + $0xd0] sm:$0xf]
        %v2660 = vld [vmem:[#allocation16 + $0xd4] sm:$0xf]
        %v2661 = vld [vmem:[#allocation16 + $0xd8] sm:$0xf]
        %v2662 = vld [vmem:[#allocation16 + $0xdc] sm:$0xf]
        %v2664 = vshrl.u32 %v2638, 16
        %v2666 = vrot.slane %v2664, 7
        %v2668 = vshrl.u32 %v2639, 16
        %v2670 = vrot.slane %v2668, 7
        %v2671 = vshll.u32 %v2639, 16
        %v2673 = vor.u32 %v2670, %v2671
        %v2674 = vsel %vm2068, %v2666, %v2673
        %v2676 = vshrl.u32 %v2640, 16
        %v2678 = vrot.slane %v2676, 7
        %v2679 = vshll.u32 %v2640, 16
        %v2681 = vor.u32 %v2678, %v2679
        %v2682 = vsel %vm2068, %v2670, %v2681
        %v2684 = vshrl.u32 %v2641, 16
        %v2686 = vrot.slane %v2684, 7
        %v2687 = vshll.u32 %v2641, 16
        %v2689 = vor.u32 %v2686, %v2687
        %v2690 = vsel %vm2068, %v2678, %v2689
        %v2692 = vshrl.u32 %v2642, 16
        %v2694 = vrot.slane %v2692, 7
        %v2695 = vshll.u32 %v2642, 16
        %v2697 = vor.u32 %v2694, %v2695
        %v2698 = vsel %vm2068, %v2686, %v2697
        %v2700 = vshrl.u32 %v2643, 16
        %v2702 = vrot.slane %v2700, 7
        %v2703 = vshll.u32 %v2643, 16
        %v2705 = vor.u32 %v2702, %v2703
        %v2706 = vsel %vm2068, %v2694, %v2705
        %v2708 = vshrl.u32 %v2644, 16
        %v2710 = vrot.slane %v2708, 7
        %v2711 = vshll.u32 %v2644, 16
        %v2713 = vor.u32 %v2710, %v2711
        %v2714 = vsel %vm2068, %v2702, %v2713
        %v2716 = vshrl.u32 %v2645, 16
        %v2718 = vrot.slane %v2716, 7
        %v2719 = vshll.u32 %v2645, 16
        %v2721 = vor.u32 %v2718, %v2719
        %v2722 = vsel %vm2068, %v2710, %v2721
        %v2724 = vshrl.u32 %v2646, 16
        %v2726 = vrot.slane %v2724, 7
        %v2727 = vshll.u32 %v2646, 16
        %v2729 = vor.u32 %v2726, %v2727
        %v2730 = vsel %vm2068, %v2718, %v2729
        %v2732 = vshrl.u32 %v2647, 16
        %v2734 = vrot.slane %v2732, 7
        %v2735 = vshll.u32 %v2647, 16
        %v2737 = vor.u32 %v2734, %v2735
        %v2738 = vsel %vm2068, %v2726, %v2737
        %v2740 = vshrl.u32 %v2648, 16
        %v2742 = vrot.slane %v2740, 7
        %v2743 = vshll.u32 %v2648, 16
        %v2745 = vor.u32 %v2742, %v2743
        %v2746 = vsel %vm2068, %v2734, %v2745
        %v2748 = vshrl.u32 %v2649, 16
        %v2750 = vrot.slane %v2748, 7
        %v2751 = vshll.u32 %v2649, 16
        %v2753 = vor.u32 %v2750, %v2751
        %v2754 = vsel %vm2068, %v2742, %v2753
        %v2756 = vshrl.u32 %v2650, 16
        %v2758 = vrot.slane %v2756, 7
        %v2759 = vshll.u32 %v2650, 16
        %v2761 = vor.u32 %v2758, %v2759
        %v2762 = vsel %vm2068, %v2750, %v2761
        %v2764 = vshrl.u32 %v2651, 16
        %v2766 = vrot.slane %v2764, 7
        %v2767 = vshll.u32 %v2651, 16
        %v2769 = vor.u32 %v2766, %v2767
        %v2770 = vsel %vm2068, %v2758, %v2769
        %v2772 = vshrl.u32 %v2652, 16
        %v2774 = vrot.slane %v2772, 7
        %v2775 = vshll.u32 %v2652, 16
        %v2777 = vor.u32 %v2774, %v2775
        %v2778 = vsel %vm2068, %v2766, %v2777
        %v2780 = vshrl.u32 %v2653, 16
        %v2782 = vrot.slane %v2780, 7
        %v2783 = vshll.u32 %v2653, 16
        %v2785 = vor.u32 %v2782, %v2783
        %v2786 = vsel %vm2068, %v2774, %v2785
        %v2788 = vshrl.u32 %v2654, 16
        %v2790 = vrot.slane %v2788, 7
        %v2791 = vshll.u32 %v2654, 16
        %v2793 = vor.u32 %v2790, %v2791
        %v2794 = vsel %vm2068, %v2782, %v2793
        %v2803 = vunpack.c.l.b16 %v2655
        %v2804 = vunpack.c.l.b16 %v2656
        %v2805 = vunpack.c.l.b16 %v2657
        %v2806 = vunpack.c.l.b16 %v2658
        %v2807 = vunpack.c.l.b16 %v2659
        %v2808 = vunpack.c.l.b16 %v2660
        %v2809 = vunpack.c.l.b16 %v2661
        %v2810 = vunpack.c.l.b16 %v2662
        %v2811 = vpack.c.b16 %v2804, %v2803
        %v2812 = vpack.c.b16 %v2806, %v2805
        %v2813 = vpack.c.b16 %v2808, %v2807
        %v2814 = vpack.c.b16 %v2810, %v2809
        %v2820 = vsel %vm1996, %v2674, 0
        %v2823 = vsel %vm1996, %v2682, 0
        %v2826 = vsel %vm1996, %v2690, 0
        %v2829 = vsel %vm1996, %v2698, 0
        %v2832 = vsel %vm1996, %v2706, 0
        %v2835 = vsel %vm1996, %v2714, 0
        %v2838 = vsel %vm1996, %v2722, 0
        %v2841 = vsel %vm1996, %v2730, 0
        %v2844 = vsel %vm1996, %v2738, 0
        %v2847 = vsel %vm1996, %v2746, 0
        %v2850 = vsel %vm1996, %v2754, 0
        %v2853 = vsel %vm1996, %v2762, 0
        %v2856 = vsel %vm1996, %v2770, 0
        %v2859 = vsel %vm1996, %v2778, 0
        %v2862 = vsel %vm1996, %v2786, 0
        %v2865 = vsel %vm1996, %v2794, 0
        %2867 = vmatprep.subr.bf16.mxu0 0
        %2868 = vmatpush1.bf16.msra.mxu0 %v2811
        %2869 = vmatprep.subr.bf16.mxu0 0
        %2870 = vmatpush1.bf16.msra.mxu0 %v2812
        %2871 = vmatprep.subr.bf16.mxu0 0
        %2872 = vmatpush1.bf16.msra.mxu0 %v2813
        %2873 = vmatprep.subr.bf16.mxu0 0
        %2874 = vmatpush1.bf16.msra.mxu0 %v2814
        %2875 = vmatprep.subr.bf16.mxu0 0
        %2876 = vmatpush1.bf16.msra.mxu0 0
        %2877 = vmatprep.subr.bf16.mxu0 0
        %2878 = vmatpush1.bf16.msra.mxu0 0
        %2879 = vmatprep.subr.bf16.mxu0 0
        %2880 = vmatpush1.bf16.msra.mxu0 0
        %2881 = vmatprep.subr.bf16.mxu0 0
        %2882 = vmatpush1.bf16.msra.mxu0 0
        %2883 = vmatprep.subr.bf16.mxu0 0
        %2884 = vmatpush1.bf16.msra.mxu0 0
        %2885 = vmatprep.subr.bf16.mxu0 0
        %2886 = vmatpush1.bf16.msra.mxu0 0
        %2887 = vmatprep.subr.bf16.mxu0 0
        %2888 = vmatpush1.bf16.msra.mxu0 0
        %2889 = vmatprep.subr.bf16.mxu0 0
        %2890 = vmatpush1.bf16.msra.mxu0 0
        %2891 = vmatprep.subr.bf16.mxu0 0
        %2892 = vmatpush1.bf16.msra.mxu0 0
        %2893 = vmatprep.subr.bf16.mxu0 0
        %2894 = vmatpush1.bf16.msra.mxu0 0
        %2895 = vmatprep.subr.bf16.mxu0 0
        %2896 = vmatpush1.bf16.msra.mxu0 0
        %2897 = vmatprep.subr.bf16.mxu0 0
        %2898 = vmatpush1.bf16.msra.mxu0 0
        %2899 = vmatprep.mubr.bf16.mxu0 0
        %2900 = vmatmul.mubr.bf16.gmra.mrb[0].mxu0 %v2820
        %v2901 = vpop.f32.mrb[0].mxu0
        %v2902 = vadd.f32 0.0, %v2901
        %v2903 = vpop.f32.mrb[0].mxu0
        %v2904 = vpop.f32.mrb[0].mxu0
        %v2905 = vadd.f32 0.0, %v2904
        %v2906 = vpop.f32.mrb[0].mxu0
        %2907 = vmatprep.mubr.bf16.mxu0 0
        %2908 = vmatmul.mubr.bf16.gmra.mrb[0].mxu0 %v2823
        %v2909 = vpop.f32.mrb[0].mxu0
        %v2910 = vadd.f32 0.0, %v2909
        %v2911 = vpop.f32.mrb[0].mxu0
        %v2912 = vpop.f32.mrb[0].mxu0
        %v2913 = vadd.f32 0.0, %v2912
        %v2914 = vpop.f32.mrb[0].mxu0
        %2915 = vmatprep.mubr.bf16.mxu0 0
        %2916 = vmatmul.mubr.bf16.gmra.mrb[0].mxu0 %v2826
        %v2917 = vpop.f32.mrb[0].mxu0
        %v2918 = vadd.f32 0.0, %v2917
        %v2919 = vpop.f32.mrb[0].mxu0
        %v2920 = vpop.f32.mrb[0].mxu0
        %v2921 = vadd.f32 0.0, %v2920
        %v2922 = vpop.f32.mrb[0].mxu0
        %2923 = vmatprep.mubr.bf16.mxu0 0
        %2924 = vmatmul.mubr.bf16.gmra.mrb[0].mxu0 %v2829
        %v2925 = vpop.f32.mrb[0].mxu0
        %v2926 = vadd.f32 0.0, %v2925
        %v2927 = vpop.f32.mrb[0].mxu0
        %v2928 = vpop.f32.mrb[0].mxu0
        %v2929 = vadd.f32 0.0, %v2928
        %v2930 = vpop.f32.mrb[0].mxu0
        %2931 = vmatprep.mubr.bf16.mxu0 0
        %2932 = vmatmul.mubr.bf16.gmra.mrb[0].mxu0 %v2832
        %v2933 = vpop.f32.mrb[0].mxu0
        %v2934 = vadd.f32 0.0, %v2933
        %v2935 = vpop.f32.mrb[0].mxu0
        %v2936 = vpop.f32.mrb[0].mxu0
        %v2937 = vadd.f32 0.0, %v2936
        %v2938 = vpop.f32.mrb[0].mxu0
        %2939 = vmatprep.mubr.bf16.mxu0 0
        %2940 = vmatmul.mubr.bf16.gmra.mrb[0].mxu0 %v2835
        %v2941 = vpop.f32.mrb[0].mxu0
        %v2942 = vadd.f32 0.0, %v2941
        %v2943 = vpop.f32.mrb[0].mxu0
        %v2944 = vpop.f32.mrb[0].mxu0
        %v2945 = vadd.f32 0.0, %v2944
        %v2946 = vpop.f32.mrb[0].mxu0
        %2947 = vmatprep.mubr.bf16.mxu0 0
        %2948 = vmatmul.mubr.bf16.gmra.mrb[0].mxu0 %v2838
        %v2949 = vpop.f32.mrb[0].mxu0
        %v2950 = vadd.f32 0.0, %v2949
        %v2951 = vpop.f32.mrb[0].mxu0
        %v2952 = vpop.f32.mrb[0].mxu0
        %v2953 = vadd.f32 0.0, %v2952
        %v2954 = vpop.f32.mrb[0].mxu0
        %2955 = vmatprep.mubr.bf16.mxu0 0
        %2956 = vmatmul.mubr.bf16.gmra.mrb[0].mxu0 %v2841
        %v2957 = vpop.f32.mrb[0].mxu0
        %v2958 = vadd.f32 0.0, %v2957
        %v2959 = vpop.f32.mrb[0].mxu0
        %v2960 = vpop.f32.mrb[0].mxu0
        %v2961 = vadd.f32 0.0, %v2960
        %v2962 = vpop.f32.mrb[0].mxu0
        %2963 = vmatprep.mubr.bf16.mxu0 0
        %2964 = vmatmul.mubr.bf16.gmra.mrb[0].mxu0 %v2844
        %v2965 = vpop.f32.mrb[0].mxu0
        %v2966 = vadd.f32 0.0, %v2965
        %v2967 = vpop.f32.mrb[0].mxu0
        %v2968 = vpop.f32.mrb[0].mxu0
        %v2969 = vadd.f32 0.0, %v2968
        %v2970 = vpop.f32.mrb[0].mxu0
        %2971 = vmatprep.mubr.bf16.mxu0 0
        %2972 = vmatmul.mubr.bf16.gmra.mrb[0].mxu0 %v2847
        %v2973 = vpop.f32.mrb[0].mxu0
        %v2974 = vadd.f32 0.0, %v2973
        %v2975 = vpop.f32.mrb[0].mxu0
        %v2976 = vpop.f32.mrb[0].mxu0
        %v2977 = vadd.f32 0.0, %v2976
        %v2978 = vpop.f32.mrb[0].mxu0
        %2979 = vmatprep.mubr.bf16.mxu0 0
        %2980 = vmatmul.mubr.bf16.gmra.mrb[0].mxu0 %v2850
        %v2981 = vpop.f32.mrb[0].mxu0
        %v2982 = vadd.f32 0.0, %v2981
        %v2983 = vpop.f32.mrb[0].mxu0
        %v2984 = vpop.f32.mrb[0].mxu0
        %v2985 = vadd.f32 0.0, %v2984
        %v2986 = vpop.f32.mrb[0].mxu0
        %2987 = vmatprep.mubr.bf16.mxu0 0
        %2988 = vmatmul.mubr.bf16.gmra.mrb[0].mxu0 %v2853
        %v2989 = vpop.f32.mrb[0].mxu0
        %v2990 = vadd.f32 0.0, %v2989
        %v2991 = vpop.f32.mrb[0].mxu0
        %v2992 = vpop.f32.mrb[0].mxu0
        %v2993 = vadd.f32 0.0, %v2992
        %v2994 = vpop.f32.mrb[0].mxu0
        %2995 = vmatprep.mubr.bf16.mxu0 0
        %2996 = vmatmul.mubr.bf16.gmra.mrb[0].mxu0 %v2856
        %v2997 = vpop.f32.mrb[0].mxu0
        %v2998 = vadd.f32 0.0, %v2997
        %v2999 = vpop.f32.mrb[0].mxu0
        %v3000 = vpop.f32.mrb[0].mxu0
        %v3001 = vadd.f32 0.0, %v3000
        %v3002 = vpop.f32.mrb[0].mxu0
        %3003 = vmatprep.mubr.bf16.mxu0 0
        %3004 = vmatmul.mubr.bf16.gmra.mrb[0].mxu0 %v2859
        %v3005 = vpop.f32.mrb[0].mxu0
        %v3006 = vadd.f32 0.0, %v3005
        %v3007 = vpop.f32.mrb[0].mxu0
        %v3008 = vpop.f32.mrb[0].mxu0
        %v3009 = vadd.f32 0.0, %v3008
        %v3010 = vpop.f32.mrb[0].mxu0
        %3011 = vmatprep.mubr.bf16.mxu0 0
        %3012 = vmatmul.mubr.bf16.gmra.mrb[0].mxu0 %v2862
        %v3013 = vpop.f32.mrb[0].mxu0
        %v3014 = vadd.f32 0.0, %v3013
        %v3015 = vpop.f32.mrb[0].mxu0
        %v3016 = vpop.f32.mrb[0].mxu0
        %v3017 = vadd.f32 0.0, %v3016
        %v3018 = vpop.f32.mrb[0].mxu0
        %3019 = vmatprep.mubr.bf16.mxu0 0
        %3020 = vmatmul.mubr.bf16.gmra.mrb[0].mxu0 %v2865
        %v3021 = vpop.f32.mrb[0].mxu0
        %v3022 = vadd.f32 0.0, %v3021
        %v3023 = vpop.f32.mrb[0].mxu0
        %v3024 = vpop.f32.mrb[0].mxu0
        %v3025 = vadd.f32 0.0, %v3024
        %v3026 = vpop.f32.mrb[0].mxu0
        %3027 = vdwg.mxu0
        %v3028 = vadd.f32 %v2512, %v2902
        %v3029 = vadd.f32 %v2515, %v2905
        %v3030 = vadd.f32 %v2520, %v2910
        %v3031 = vadd.f32 %v2523, %v2913
        %v3032 = vadd.f32 %v2528, %v2918
        %v3033 = vadd.f32 %v2531, %v2921
        %v3034 = vadd.f32 %v2536, %v2926
        %v3035 = vadd.f32 %v2539, %v2929
        %v3036 = vadd.f32 %v2544, %v2934
        %v3037 = vadd.f32 %v2547, %v2937
        %v3038 = vadd.f32 %v2552, %v2942
        %v3039 = vadd.f32 %v2555, %v2945
        %v3040 = vadd.f32 %v2560, %v2950
        %v3041 = vadd.f32 %v2563, %v2953
        %v3042 = vadd.f32 %v2568, %v2958
        %v3043 = vadd.f32 %v2571, %v2961
        %v3044 = vadd.f32 %v2576, %v2966
        %v3045 = vadd.f32 %v2579, %v2969
        %v3046 = vadd.f32 %v2584, %v2974
        %v3047 = vadd.f32 %v2587, %v2977
        %v3048 = vadd.f32 %v2592, %v2982
        %v3049 = vadd.f32 %v2595, %v2985
        %v3050 = vadd.f32 %v2600, %v2990
        %v3051 = vadd.f32 %v2603, %v2993
        %v3052 = vadd.f32 %v2608, %v2998
        %v3053 = vadd.f32 %v2611, %v3001
        %v3054 = vadd.f32 %v2616, %v3006
        %v3055 = vadd.f32 %v2619, %v3009
        %v3056 = vadd.f32 %v2624, %v3014
        %v3057 = vadd.f32 %v2627, %v3017
        %v3058 = vadd.f32 %v2632, %v3022
        %v3059 = vadd.f32 %v2635, %v3025
        %v3060 = vld [vmem:[#allocation16 + $0x20] sm:$0xf]
        %v3061 = vld [vmem:[#allocation16 + $0x24] sm:$0xf]
        %v3062 = vld [vmem:[#allocation16 + $0x28] sm:$0xf]
        %v3063 = vld [vmem:[#allocation16 + $0x2c] sm:$0xf]
        %v3064 = vld [vmem:[#allocation16 + $0x30] sm:$0xf]
        %v3065 = vld [vmem:[#allocation16 + $0x34] sm:$0xf]
        %v3066 = vld [vmem:[#allocation16 + $0x38] sm:$0xf]
        %v3067 = vld [vmem:[#allocation16 + $0x3c] sm:$0xf]
        %v3068 = vld [vmem:[#allocation16 + $0x80] sm:$0xf]
        %v3069 = vld [vmem:[#allocation16 + $0x84] sm:$0xf]
        %v3070 = vld [vmem:[#allocation16 + $0x88] sm:$0xf]
        %v3071 = vld [vmem:[#allocation16 + $0x8c] sm:$0xf]
        %v3072 = vld [vmem:[#allocation16 + $0x90] sm:$0xf]
        %v3073 = vld [vmem:[#allocation16 + $0x94] sm:$0xf]
        %v3074 = vld [vmem:[#allocation16 + $0x98] sm:$0xf]
        %v3075 = vld [vmem:[#allocation16 + $0x9c] sm:$0xf]
        %v3084 = vunpack.c.l.b16 %v3068
        %v3085 = vunpack.c.l.b16 %v3069
        %v3086 = vunpack.c.l.b16 %v3070
        %v3087 = vunpack.c.l.b16 %v3071
        %v3088 = vunpack.c.l.b16 %v3072
        %v3089 = vunpack.c.l.b16 %v3073
        %v3090 = vunpack.c.l.b16 %v3074
        %v3091 = vunpack.c.l.b16 %v3075
        %v3092 = vpack.c.b16 %v3085, %v3084
        %v3093 = vpack.c.b16 %v3087, %v3086
        %v3094 = vpack.c.b16 %v3089, %v3088
        %v3095 = vpack.c.b16 %v3091, %v3090
        %v3100 = vsel %vm1996, %v2035, 0
        %v3102 = vsel %vm1996, %v2036, 0
        %v3104 = vsel %vm1996, %v2037, 0
        %v3106 = vsel %vm1996, %v2038, 0
        %v3108 = vsel %vm1996, %v2039, 0
        %v3110 = vsel %vm1996, %v2040, 0
        %v3112 = vsel %vm1996, %v2041, 0
        %v3114 = vsel %vm1996, %v2042, 0
        %v3116 = vsel %vm1996, %v2043, 0
        %v3118 = vsel %vm1996, %v2044, 0
        %v3120 = vsel %vm1996, %v2045, 0
        %v3122 = vsel %vm1996, %v2046, 0
        %v3124 = vsel %vm1996, %v2047, 0
        %v3126 = vsel %vm1996, %v2048, 0
        %v3128 = vsel %vm1996, %v2049, 0
        %v3130 = vsel %vm1996, %v2059, 0
        %3132 = vmatprep.subr.bf16.mxu0 0
        %3133 = vmatpush1.bf16.msra.mxu0 %v3092
        %3134 = vmatprep.subr.bf16.mxu0 0
        %3135 = vmatpush1.bf16.msra.mxu0 %v3093
        %3136 = vmatprep.subr.bf16.mxu0 0
        %3137 = vmatpush1.bf16.msra.mxu0 %v3094
        %3138 = vmatprep.subr.bf16.mxu0 0
        %3139 = vmatpush1.bf16.msra.mxu0 %v3095
        %3140 = vmatprep.subr.bf16.mxu0 0
        %3141 = vmatpush1.bf16.msra.mxu0 0
        %3142 = vmatprep.subr.bf16.mxu0 0
        %3143 = vmatpush1.bf16.msra.mxu0 0
        %3144 = vmatprep.subr.bf16.mxu0 0
        %3145 = vmatpush1.bf16.msra.mxu0 0
        %3146 = vmatprep.subr.bf16.mxu0 0
        %3147 = vmatpush1.bf16.msra.mxu0 0
        %3148 = vmatprep.subr.bf16.mxu0 0
        %3149 = vmatpush1.bf16.msra.mxu0 0
        %3150 = vmatprep.subr.bf16.mxu0 0
        %3151 = vmatpush1.bf16.msra.mxu0 0
        %3152 = vmatprep.subr.bf16.mxu0 0
        %3153 = vmatpush1.bf16.msra.mxu0 0
        %3154 = vmatprep.subr.bf16.mxu0 0
        %3155 = vmatpush1.bf16.msra.mxu0 0
        %3156 = vmatprep.subr.bf16.mxu0 0
        %3157 = vmatpush1.bf16.msra.mxu0 0
        %3158 = vmatprep.subr.bf16.mxu0 0
        %3159 = vmatpush1.bf16.msra.mxu0 0
        %3160 = vmatprep.subr.bf16.mxu0 0
        %3161 = vmatpush1.bf16.msra.mxu0 0
        %3162 = vmatprep.subr.bf16.mxu0 0
        %3163 = vmatpush1.bf16.msra.mxu0 0
        %3164 = vmatprep.mubr.bf16.mxu0 0
        %3165 = vmatmul.mubr.bf16.gmra.mrb[0].mxu0 %v3100
        %v3166 = vpop.f32.mrb[0].mxu0
        %v3167 = vadd.f32 0.0, %v3166
        %v3168 = vpop.f32.mrb[0].mxu0
        %v3169 = vpop.f32.mrb[0].mxu0
        %v3170 = vadd.f32 0.0, %v3169
        %v3171 = vpop.f32.mrb[0].mxu0
        %3172 = vmatprep.mubr.bf16.mxu0 0
        %3173 = vmatmul.mubr.bf16.gmra.mrb[0].mxu0 %v3102
        %v3174 = vpop.f32.mrb[0].mxu0
        %v3175 = vadd.f32 0.0, %v3174
        %v3176 = vpop.f32.mrb[0].mxu0
        %v3177 = vpop.f32.mrb[0].mxu0
        %v3178 = vadd.f32 0.0, %v3177
        %v3179 = vpop.f32.mrb[0].mxu0
        %3180 = vmatprep.mubr.bf16.mxu0 0
        %3181 = vmatmul.mubr.bf16.gmra.mrb[0].mxu0 %v3104
        %v3182 = vpop.f32.mrb[0].mxu0
        %v3183 = vadd.f32 0.0, %v3182
        %v3184 = vpop.f32.mrb[0].mxu0
        %v3185 = vpop.f32.mrb[0].mxu0
        %v3186 = vadd.f32 0.0, %v3185
        %v3187 = vpop.f32.mrb[0].mxu0
        %3188 = vmatprep.mubr.bf16.mxu0 0
        %3189 = vmatmul.mubr.bf16.gmra.mrb[0].mxu0 %v3106
        %v3190 = vpop.f32.mrb[0].mxu0
        %v3191 = vadd.f32 0.0, %v3190
        %v3192 = vpop.f32.mrb[0].mxu0
        %v3193 = vpop.f32.mrb[0].mxu0
        %v3194 = vadd.f32 0.0, %v3193
        %v3195 = vpop.f32.mrb[0].mxu0
        %3196 = vmatprep.mubr.bf16.mxu0 0
        %3197 = vmatmul.mubr.bf16.gmra.mrb[0].mxu0 %v3108
        %v3198 = vpop.f32.mrb[0].mxu0
        %v3199 = vadd.f32 0.0, %v3198
        %v3200 = vpop.f32.mrb[0].mxu0
        %v3201 = vpop.f32.mrb[0].mxu0
        %v3202 = vadd.f32 0.0, %v3201
        %v3203 = vpop.f32.mrb[0].mxu0
        %3204 = vmatprep.mubr.bf16.mxu0 0
        %3205 = vmatmul.mubr.bf16.gmra.mrb[0].mxu0 %v3110
        %v3206 = vpop.f32.mrb[0].mxu0
        %v3207 = vadd.f32 0.0, %v3206
        %v3208 = vpop.f32.mrb[0].mxu0
        %v3209 = vpop.f32.mrb[0].mxu0
        %v3210 = vadd.f32 0.0, %v3209
        %v3211 = vpop.f32.mrb[0].mxu0
        %3212 = vmatprep.mubr.bf16.mxu0 0
        %3213 = vmatmul.mubr.bf16.gmra.mrb[0].mxu0 %v3112
        %v3214 = vpop.f32.mrb[0].mxu0
        %v3215 = vadd.f32 0.0, %v3214
        %v3216 = vpop.f32.mrb[0].mxu0
        %v3217 = vpop.f32.mrb[0].mxu0
        %v3218 = vadd.f32 0.0, %v3217
        %v3219 = vpop.f32.mrb[0].mxu0
        %3220 = vmatprep.mubr.bf16.mxu0 0
        %3221 = vmatmul.mubr.bf16.gmra.mrb[0].mxu0 %v3114
        %v3222 = vpop.f32.mrb[0].mxu0
        %v3223 = vadd.f32 0.0, %v3222
        %v3224 = vpop.f32.mrb[0].mxu0
        %v3225 = vpop.f32.mrb[0].mxu0
        %v3226 = vadd.f32 0.0, %v3225
        %v3227 = vpop.f32.mrb[0].mxu0
        %3228 = vmatprep.mubr.bf16.mxu0 0
        %3229 = vmatmul.mubr.bf16.gmra.mrb[0].mxu0 %v3116
        %v3230 = vpop.f32.mrb[0].mxu0
        %v3231 = vadd.f32 0.0, %v3230
        %v3232 = vpop.f32.mrb[0].mxu0
        %v3233 = vpop.f32.mrb[0].mxu0
        %v3234 = vadd.f32 0.0, %v3233
        %v3235 = vpop.f32.mrb[0].mxu0
        %3236 = vmatprep.mubr.bf16.mxu0 0
        %3237 = vmatmul.mubr.bf16.gmra.mrb[0].mxu0 %v3118
        %v3238 = vpop.f32.mrb[0].mxu0
        %v3239 = vadd.f32 0.0, %v3238
        %v3240 = vpop.f32.mrb[0].mxu0
        %v3241 = vpop.f32.mrb[0].mxu0
        %v3242 = vadd.f32 0.0, %v3241
        %v3243 = vpop.f32.mrb[0].mxu0
        %3244 = vmatprep.mubr.bf16.mxu0 0
        %3245 = vmatmul.mubr.bf16.gmra.mrb[0].mxu0 %v3120
        %v3246 = vpop.f32.mrb[0].mxu0
        %v3247 = vadd.f32 0.0, %v3246
        %v3248 = vpop.f32.mrb[0].mxu0
        %v3249 = vpop.f32.mrb[0].mxu0
        %v3250 = vadd.f32 0.0, %v3249
        %v3251 = vpop.f32.mrb[0].mxu0
        %3252 = vmatprep.mubr.bf16.mxu0 0
        %3253 = vmatmul.mubr.bf16.gmra.mrb[0].mxu0 %v3122
        %v3254 = vpop.f32.mrb[0].mxu0
        %v3255 = vadd.f32 0.0, %v3254
        %v3256 = vpop.f32.mrb[0].mxu0
        %v3257 = vpop.f32.mrb[0].mxu0
        %v3258 = vadd.f32 0.0, %v3257
        %v3259 = vpop.f32.mrb[0].mxu0
        %3260 = vmatprep.mubr.bf16.mxu0 0
        %3261 = vmatmul.mubr.bf16.gmra.mrb[0].mxu0 %v3124
        %v3262 = vpop.f32.mrb[0].mxu0
        %v3263 = vadd.f32 0.0, %v3262
        %v3264 = vpop.f32.mrb[0].mxu0
        %v3265 = vpop.f32.mrb[0].mxu0
        %v3266 = vadd.f32 0.0, %v3265
        %v3267 = vpop.f32.mrb[0].mxu0
        %3268 = vmatprep.mubr.bf16.mxu0 0
        %3269 = vmatmul.mubr.bf16.gmra.mrb[0].mxu0 %v3126
        %v3270 = vpop.f32.mrb[0].mxu0
        %v3271 = vadd.f32 0.0, %v3270
        %v3272 = vpop.f32.mrb[0].mxu0
        %v3273 = vpop.f32.mrb[0].mxu0
        %v3274 = vadd.f32 0.0, %v3273
        %v3275 = vpop.f32.mrb[0].mxu0
        %3276 = vmatprep.mubr.bf16.mxu0 0
        %3277 = vmatmul.mubr.bf16.gmra.mrb[0].mxu0 %v3128
        %v3278 = vpop.f32.mrb[0].mxu0
        %v3279 = vadd.f32 0.0, %v3278
        %v3280 = vpop.f32.mrb[0].mxu0
        %v3281 = vpop.f32.mrb[0].mxu0
        %v3282 = vadd.f32 0.0, %v3281
        %v3283 = vpop.f32.mrb[0].mxu0
        %3284 = vmatprep.mubr.bf16.mxu0 0
        %3285 = vmatmul.mubr.bf16.gmra.mrb[0].mxu0 %v3130
        %v3286 = vpop.f32.mrb[0].mxu0
        %v3287 = vadd.f32 0.0, %v3286
        %v3288 = vpop.f32.mrb[0].mxu0
        %v3289 = vpop.f32.mrb[0].mxu0
        %v3290 = vadd.f32 0.0, %v3289
        %v3291 = vpop.f32.mrb[0].mxu0
        %3292 = vdwg.mxu0
        %v3301 = vunpack.c.l.b16 %v3060
        %v3302 = vunpack.c.l.b16 %v3061
        %v3303 = vunpack.c.l.b16 %v3062
        %v3304 = vunpack.c.l.b16 %v3063
        %v3305 = vunpack.c.l.b16 %v3064
        %v3306 = vunpack.c.l.b16 %v3065
        %v3307 = vunpack.c.l.b16 %v3066
        %v3308 = vunpack.c.l.b16 %v3067
        %v3309 = vpack.c.b16 %v3302, %v3301
        %v3310 = vpack.c.b16 %v3304, %v3303
        %v3311 = vpack.c.b16 %v3306, %v3305
        %v3312 = vpack.c.b16 %v3308, %v3307
        %v3317 = vsel %vm1996, %v2034, 0
        %3319 = vmatprep.subr.bf16.mxu0 0
        %3320 = vmatpush1.bf16.msra.mxu0 %v3309
        %3321 = vmatprep.subr.bf16.mxu0 0
        %3322 = vmatpush1.bf16.msra.mxu0 %v3310
        %3323 = vmatprep.subr.bf16.mxu0 0
        %3324 = vmatpush1.bf16.msra.mxu0 %v3311
        %3325 = vmatprep.subr.bf16.mxu0 0
        %3326 = vmatpush1.bf16.msra.mxu0 %v3312
        %3327 = vmatprep.subr.bf16.mxu0 0
        %3328 = vmatpush1.bf16.msra.mxu0 0
        %3329 = vmatprep.subr.bf16.mxu0 0
        %3330 = vmatpush1.bf16.msra.mxu0 0
        %3331 = vmatprep.subr.bf16.mxu0 0
        %3332 = vmatpush1.bf16.msra.mxu0 0
        %3333 = vmatprep.subr.bf16.mxu0 0
        %3334 = vmatpush1.bf16.msra.mxu0 0
        %3335 = vmatprep.subr.bf16.mxu0 0
        %3336 = vmatpush1.bf16.msra.mxu0 0
        %3337 = vmatprep.subr.bf16.mxu0 0
        %3338 = vmatpush1.bf16.msra.mxu0 0
        %3339 = vmatprep.subr.bf16.mxu0 0
        %3340 = vmatpush1.bf16.msra.mxu0 0
        %3341 = vmatprep.subr.bf16.mxu0 0
        %3342 = vmatpush1.bf16.msra.mxu0 0
        %3343 = vmatprep.subr.bf16.mxu0 0
        %3344 = vmatpush1.bf16.msra.mxu0 0
        %3345 = vmatprep.subr.bf16.mxu0 0
        %3346 = vmatpush1.bf16.msra.mxu0 0
        %3347 = vmatprep.subr.bf16.mxu0 0
        %3348 = vmatpush1.bf16.msra.mxu0 0
        %3349 = vmatprep.subr.bf16.mxu0 0
        %3350 = vmatpush1.bf16.msra.mxu0 0
        %3351 = vmatprep.mubr.bf16.mxu0 0
        %3352 = vmatmul.mubr.bf16.gmra.mrb[0].mxu0 %v3317
        %v3353 = vpop.f32.mrb[0].mxu0
        %v3354 = vadd.f32 %v3167, %v3353
        %v3355 = vpop.f32.mrb[0].mxu0
        %v3356 = vpop.f32.mrb[0].mxu0
        %v3357 = vadd.f32 %v3170, %v3356
        %v3358 = vpop.f32.mrb[0].mxu0
        %3359 = vmatprep.mubr.bf16.mxu0 0
        %3360 = vmatmul.mubr.bf16.gmra.mrb[0].mxu0 %v3100
        %v3361 = vpop.f32.mrb[0].mxu0
        %v3362 = vadd.f32 %v3175, %v3361
        %v3363 = vpop.f32.mrb[0].mxu0
        %v3364 = vpop.f32.mrb[0].mxu0
        %v3365 = vadd.f32 %v3178, %v3364
        %v3366 = vpop.f32.mrb[0].mxu0
        %3367 = vmatprep.mubr.bf16.mxu0 0
        %3368 = vmatmul.mubr.bf16.gmra.mrb[0].mxu0 %v3102
        %v3369 = vpop.f32.mrb[0].mxu0
        %v3370 = vadd.f32 %v3183, %v3369
        %v3371 = vpop.f32.mrb[0].mxu0
        %v3372 = vpop.f32.mrb[0].mxu0
        %v3373 = vadd.f32 %v3186, %v3372
        %v3374 = vpop.f32.mrb[0].mxu0
        %3375 = vmatprep.mubr.bf16.mxu0 0
        %3376 = vmatmul.mubr.bf16.gmra.mrb[0].mxu0 %v3104
        %v3377 = vpop.f32.mrb[0].mxu0
        %v3378 = vadd.f32 %v3191, %v3377
        %v3379 = vpop.f32.mrb[0].mxu0
        %v3380 = vpop.f32.mrb[0].mxu0
        %v3381 = vadd.f32 %v3194, %v3380
        %v3382 = vpop.f32.mrb[0].mxu0
        %3383 = vmatprep.mubr.bf16.mxu0 0
        %3384 = vmatmul.mubr.bf16.gmra.mrb[0].mxu0 %v3106
        %v3385 = vpop.f32.mrb[0].mxu0
        %v3386 = vadd.f32 %v3199, %v3385
        %v3387 = vpop.f32.mrb[0].mxu0
        %v3388 = vpop.f32.mrb[0].mxu0
        %v3389 = vadd.f32 %v3202, %v3388
        %v3390 = vpop.f32.mrb[0].mxu0
        %3391 = vmatprep.mubr.bf16.mxu0 0
        %3392 = vmatmul.mubr.bf16.gmra.mrb[0].mxu0 %v3108
        %v3393 = vpop.f32.mrb[0].mxu0
        %v3394 = vadd.f32 %v3207, %v3393
        %v3395 = vpop.f32.mrb[0].mxu0
        %v3396 = vpop.f32.mrb[0].mxu0
        %v3397 = vadd.f32 %v3210, %v3396
        %v3398 = vpop.f32.mrb[0].mxu0
        %3399 = vmatprep.mubr.bf16.mxu0 0
        %3400 = vmatmul.mubr.bf16.gmra.mrb[0].mxu0 %v3110
        %v3401 = vpop.f32.mrb[0].mxu0
        %v3402 = vadd.f32 %v3215, %v3401
        %v3403 = vpop.f32.mrb[0].mxu0
        %v3404 = vpop.f32.mrb[0].mxu0
        %v3405 = vadd.f32 %v3218, %v3404
        %v3406 = vpop.f32.mrb[0].mxu0
        %3407 = vmatprep.mubr.bf16.mxu0 0
        %3408 = vmatmul.mubr.bf16.gmra.mrb[0].mxu0 %v3112
        %v3409 = vpop.f32.mrb[0].mxu0
        %v3410 = vadd.f32 %v3223, %v3409
        %v3411 = vpop.f32.mrb[0].mxu0
        %v3412 = vpop.f32.mrb[0].mxu0
        %v3413 = vadd.f32 %v3226, %v3412
        %v3414 = vpop.f32.mrb[0].mxu0
        %3415 = vmatprep.mubr.bf16.mxu0 0
        %3416 = vmatmul.mubr.bf16.gmra.mrb[0].mxu0 %v3114
        %v3417 = vpop.f32.mrb[0].mxu0
        %v3418 = vadd.f32 %v3231, %v3417
        %v3419 = vpop.f32.mrb[0].mxu0
        %v3420 = vpop.f32.mrb[0].mxu0
        %v3421 = vadd.f32 %v3234, %v3420
        %v3422 = vpop.f32.mrb[0].mxu0
        %3423 = vmatprep.mubr.bf16.mxu0 0
        %3424 = vmatmul.mubr.bf16.gmra.mrb[0].mxu0 %v3116
        %v3425 = vpop.f32.mrb[0].mxu0
        %v3426 = vadd.f32 %v3239, %v3425
        %v3427 = vpop.f32.mrb[0].mxu0
        %v3428 = vpop.f32.mrb[0].mxu0
        %v3429 = vadd.f32 %v3242, %v3428
        %v3430 = vpop.f32.mrb[0].mxu0
        %3431 = vmatprep.mubr.bf16.mxu0 0
        %3432 = vmatmul.mubr.bf16.gmra.mrb[0].mxu0 %v3118
        %v3433 = vpop.f32.mrb[0].mxu0
        %v3434 = vadd.f32 %v3247, %v3433
        %v3435 = vpop.f32.mrb[0].mxu0
        %v3436 = vpop.f32.mrb[0].mxu0
        %v3437 = vadd.f32 %v3250, %v3436
        %v3438 = vpop.f32.mrb[0].mxu0
        %3439 = vmatprep.mubr.bf16.mxu0 0
        %3440 = vmatmul.mubr.bf16.gmra.mrb[0].mxu0 %v3120
        %v3441 = vpop.f32.mrb[0].mxu0
        %v3442 = vadd.f32 %v3255, %v3441
        %v3443 = vpop.f32.mrb[0].mxu0
        %v3444 = vpop.f32.mrb[0].mxu0
        %v3445 = vadd.f32 %v3258, %v3444
        %v3446 = vpop.f32.mrb[0].mxu0
        %3447 = vmatprep.mubr.bf16.mxu0 0
        %3448 = vmatmul.mubr.bf16.gmra.mrb[0].mxu0 %v3122
        %v3449 = vpop.f32.mrb[0].mxu0
        %v3450 = vadd.f32 %v3263, %v3449
        %v3451 = vpop.f32.mrb[0].mxu0
        %v3452 = vpop.f32.mrb[0].mxu0
        %v3453 = vadd.f32 %v3266, %v3452
        %v3454 = vpop.f32.mrb[0].mxu0
        %3455 = vmatprep.mubr.bf16.mxu0 0
        %3456 = vmatmul.mubr.bf16.gmra.mrb[0].mxu0 %v3124
        %v3457 = vpop.f32.mrb[0].mxu0
        %v3458 = vadd.f32 %v3271, %v3457
        %v3459 = vpop.f32.mrb[0].mxu0
        %v3460 = vpop.f32.mrb[0].mxu0
        %v3461 = vadd.f32 %v3274, %v3460
        %v3462 = vpop.f32.mrb[0].mxu0
        %3463 = vmatprep.mubr.bf16.mxu0 0
        %3464 = vmatmul.mubr.bf16.gmra.mrb[0].mxu0 %v3126
        %v3465 = vpop.f32.mrb[0].mxu0
        %v3466 = vadd.f32 %v3279, %v3465
        %v3467 = vpop.f32.mrb[0].mxu0
        %v3468 = vpop.f32.mrb[0].mxu0
        %v3469 = vadd.f32 %v3282, %v3468
        %v3470 = vpop.f32.mrb[0].mxu0
        %3471 = vmatprep.mubr.bf16.mxu0 0
        %3472 = vmatmul.mubr.bf16.gmra.mrb[0].mxu0 %v3128
        %v3473 = vpop.f32.mrb[0].mxu0
        %v3474 = vadd.f32 %v3287, %v3473
        %v3475 = vpop.f32.mrb[0].mxu0
        %v3476 = vpop.f32.mrb[0].mxu0
        %v3477 = vadd.f32 %v3290, %v3476
        %v3478 = vpop.f32.mrb[0].mxu0
        %3479 = vdwg.mxu0
        %v3480 = vld [vmem:[#allocation16 + $0xe0] sm:$0xf]
        %v3481 = vld [vmem:[#allocation16 + $0xe4] sm:$0xf]
        %v3482 = vld [vmem:[#allocation16 + $0xe8] sm:$0xf]
        %v3483 = vld [vmem:[#allocation16 + $0xec] sm:$0xf]
        %v3484 = vld [vmem:[#allocation16 + $0xf0] sm:$0xf]
        %v3485 = vld [vmem:[#allocation16 + $0xf4] sm:$0xf]
        %v3486 = vld [vmem:[#allocation16 + $0xf8] sm:$0xf]
        %v3487 = vld [vmem:[#allocation16 + $0xfc] sm:$0xf]
        %v3496 = vunpack.c.l.b16 %v3480
        %v3497 = vunpack.c.l.b16 %v3481
        %v3498 = vunpack.c.l.b16 %v3482
        %v3499 = vunpack.c.l.b16 %v3483
        %v3500 = vunpack.c.l.b16 %v3484
        %v3501 = vunpack.c.l.b16 %v3485
        %v3502 = vunpack.c.l.b16 %v3486
        %v3503 = vunpack.c.l.b16 %v3487
        %v3504 = vpack.c.b16 %v3497, %v3496
        %v3505 = vpack.c.b16 %v3499, %v3498
        %v3506 = vpack.c.b16 %v3501, %v3500
        %v3507 = vpack.c.b16 %v3503, %v3502
        %v3512 = vsel %vm1996, %v2639, 0
        %v3514 = vsel %vm1996, %v2640, 0
        %v3516 = vsel %vm1996, %v2641, 0
        %v3518 = vsel %vm1996, %v2642, 0
        %v3520 = vsel %vm1996, %v2643, 0
        %v3522 = vsel %vm1996, %v2644, 0
        %v3524 = vsel %vm1996, %v2645, 0
        %v3526 = vsel %vm1996, %v2646, 0
        %v3528 = vsel %vm1996, %v2647, 0
        %v3530 = vsel %vm1996, %v2648, 0
        %v3532 = vsel %vm1996, %v2649, 0
        %v3534 = vsel %vm1996, %v2650, 0
        %v3536 = vsel %vm1996, %v2651, 0
        %v3538 = vsel %vm1996, %v2652, 0
        %v3540 = vsel %vm1996, %v2653, 0
        %v3542 = vsel %vm1996, %v2654, 0
        %3544 = vmatprep.subr.bf16.mxu0 0
        %3545 = vmatpush1.bf16.msra.mxu0 %v3504
        %3546 = vmatprep.subr.bf16.mxu0 0
        %3547 = vmatpush1.bf16.msra.mxu0 %v3505
        %3548 = vmatprep.subr.bf16.mxu0 0
        %3549 = vmatpush1.bf16.msra.mxu0 %v3506
        %3550 = vmatprep.subr.bf16.mxu0 0
        %3551 = vmatpush1.bf16.msra.mxu0 %v3507
        %3552 = vmatprep.subr.bf16.mxu0 0
        %3553 = vmatpush1.bf16.msra.mxu0 0
        %3554 = vmatprep.subr.bf16.mxu0 0
        %3555 = vmatpush1.bf16.msra.mxu0 0
        %3556 = vmatprep.subr.bf16.mxu0 0
        %3557 = vmatpush1.bf16.msra.mxu0 0
        %3558 = vmatprep.subr.bf16.mxu0 0
        %3559 = vmatpush1.bf16.msra.mxu0 0
        %3560 = vmatprep.subr.bf16.mxu0 0
        %3561 = vmatpush1.bf16.msra.mxu0 0
        %3562 = vmatprep.subr.bf16.mxu0 0
        %3563 = vmatpush1.bf16.msra.mxu0 0
        %3564 = vmatprep.subr.bf16.mxu0 0
        %3565 = vmatpush1.bf16.msra.mxu0 0
        %3566 = vmatprep.subr.bf16.mxu0 0
        %3567 = vmatpush1.bf16.msra.mxu0 0
        %3568 = vmatprep.subr.bf16.mxu0 0
        %3569 = vmatpush1.bf16.msra.mxu0 0
        %3570 = vmatprep.subr.bf16.mxu0 0
        %3571 = vmatpush1.bf16.msra.mxu0 0
        %3572 = vmatprep.subr.bf16.mxu0 0
        %3573 = vmatpush1.bf16.msra.mxu0 0
        %3574 = vmatprep.subr.bf16.mxu0 0
        %3575 = vmatpush1.bf16.msra.mxu0 0
        %3576 = vmatprep.mubr.bf16.mxu0 0
        %3577 = vmatmul.mubr.bf16.gmra.mrb[0].mxu0 %v3512
        %v3578 = vpop.f32.mrb[0].mxu0
        %v3579 = vadd.f32 0.0, %v3578
        %v3580 = vpop.f32.mrb[0].mxu0
        %v3581 = vpop.f32.mrb[0].mxu0
        %v3582 = vadd.f32 0.0, %v3581
        %v3583 = vpop.f32.mrb[0].mxu0
        %3584 = vmatprep.mubr.bf16.mxu0 0
        %3585 = vmatmul.mubr.bf16.gmra.mrb[0].mxu0 %v3514
        %v3586 = vpop.f32.mrb[0].mxu0
        %v3587 = vadd.f32 0.0, %v3586
        %v3588 = vpop.f32.mrb[0].mxu0
        %v3589 = vpop.f32.mrb[0].mxu0
        %v3590 = vadd.f32 0.0, %v3589
        %v3591 = vpop.f32.mrb[0].mxu0
        %3592 = vmatprep.mubr.bf16.mxu0 0
        %3593 = vmatmul.mubr.bf16.gmra.mrb[0].mxu0 %v3516
        %v3594 = vpop.f32.mrb[0].mxu0
        %v3595 = vadd.f32 0.0, %v3594
        %v3596 = vpop.f32.mrb[0].mxu0
        %v3597 = vpop.f32.mrb[0].mxu0
        %v3598 = vadd.f32 0.0, %v3597
        %v3599 = vpop.f32.mrb[0].mxu0
        %3600 = vmatprep.mubr.bf16.mxu0 0
        %3601 = vmatmul.mubr.bf16.gmra.mrb[0].mxu0 %v3518
        %v3602 = vpop.f32.mrb[0].mxu0
        %v3603 = vadd.f32 0.0, %v3602
        %v3604 = vpop.f32.mrb[0].mxu0
        %v3605 = vpop.f32.mrb[0].mxu0
        %v3606 = vadd.f32 0.0, %v3605
        %v3607 = vpop.f32.mrb[0].mxu0
        %3608 = vmatprep.mubr.bf16.mxu0 0
        %3609 = vmatmul.mubr.bf16.gmra.mrb[0].mxu0 %v3520
        %v3610 = vpop.f32.mrb[0].mxu0
        %v3611 = vadd.f32 0.0, %v3610
        %v3612 = vpop.f32.mrb[0].mxu0
        %v3613 = vpop.f32.mrb[0].mxu0
        %v3614 = vadd.f32 0.0, %v3613
        %v3615 = vpop.f32.mrb[0].mxu0
        %3616 = vmatprep.mubr.bf16.mxu0 0
        %3617 = vmatmul.mubr.bf16.gmra.mrb[0].mxu0 %v3522
        %v3618 = vpop.f32.mrb[0].mxu0
        %v3619 = vadd.f32 0.0, %v3618
        %v3620 = vpop.f32.mrb[0].mxu0
        %v3621 = vpop.f32.mrb[0].mxu0
        %v3622 = vadd.f32 0.0, %v3621
        %v3623 = vpop.f32.mrb[0].mxu0
        %3624 = vmatprep.mubr.bf16.mxu0 0
        %3625 = vmatmul.mubr.bf16.gmra.mrb[0].mxu0 %v3524
        %v3626 = vpop.f32.mrb[0].mxu0
        %v3627 = vadd.f32 0.0, %v3626
        %v3628 = vpop.f32.mrb[0].mxu0
        %v3629 = vpop.f32.mrb[0].mxu0
        %v3630 = vadd.f32 0.0, %v3629
        %v3631 = vpop.f32.mrb[0].mxu0
        %3632 = vmatprep.mubr.bf16.mxu0 0
        %3633 = vmatmul.mubr.bf16.gmra.mrb[0].mxu0 %v3526
        %v3634 = vpop.f32.mrb[0].mxu0
        %v3635 = vadd.f32 0.0, %v3634
        %v3636 = vpop.f32.mrb[0].mxu0
        %v3637 = vpop.f32.mrb[0].mxu0
        %v3638 = vadd.f32 0.0, %v3637
        %v3639 = vpop.f32.mrb[0].mxu0
        %3640 = vmatprep.mubr.bf16.mxu0 0
        %3641 = vmatmul.mubr.bf16.gmra.mrb[0].mxu0 %v3528
        %v3642 = vpop.f32.mrb[0].mxu0
        %v3643 = vadd.f32 0.0, %v3642
        %v3644 = vpop.f32.mrb[0].mxu0
        %v3645 = vpop.f32.mrb[0].mxu0
        %v3646 = vadd.f32 0.0, %v3645
        %v3647 = vpop.f32.mrb[0].mxu0
        %3648 = vmatprep.mubr.bf16.mxu0 0
        %3649 = vmatmul.mubr.bf16.gmra.mrb[0].mxu0 %v3530
        %v3650 = vpop.f32.mrb[0].mxu0
        %v3651 = vadd.f32 0.0, %v3650
        %v3652 = vpop.f32.mrb[0].mxu0
        %v3653 = vpop.f32.mrb[0].mxu0
        %v3654 = vadd.f32 0.0, %v3653
        %v3655 = vpop.f32.mrb[0].mxu0
        %3656 = vmatprep.mubr.bf16.mxu0 0
        %3657 = vmatmul.mubr.bf16.gmra.mrb[0].mxu0 %v3532
        %v3658 = vpop.f32.mrb[0].mxu0
        %v3659 = vadd.f32 0.0, %v3658
        %v3660 = vpop.f32.mrb[0].mxu0
        %v3661 = vpop.f32.mrb[0].mxu0
        %v3662 = vadd.f32 0.0, %v3661
        %v3663 = vpop.f32.mrb[0].mxu0
        %3664 = vmatprep.mubr.bf16.mxu0 0
        %3665 = vmatmul.mubr.bf16.gmra.mrb[0].mxu0 %v3534
        %v3666 = vpop.f32.mrb[0].mxu0
        %v3667 = vadd.f32 0.0, %v3666
        %v3668 = vpop.f32.mrb[0].mxu0
        %v3669 = vpop.f32.mrb[0].mxu0
        %v3670 = vadd.f32 0.0, %v3669
        %v3671 = vpop.f32.mrb[0].mxu0
        %3672 = vmatprep.mubr.bf16.mxu0 0
        %3673 = vmatmul.mubr.bf16.gmra.mrb[0].mxu0 %v3536
        %v3674 = vpop.f32.mrb[0].mxu0
        %v3675 = vadd.f32 0.0, %v3674
        %v3676 = vpop.f32.mrb[0].mxu0
        %v3677 = vpop.f32.mrb[0].mxu0
        %v3678 = vadd.f32 0.0, %v3677
        %v3679 = vpop.f32.mrb[0].mxu0
        %3680 = vmatprep.mubr.bf16.mxu0 0
        %3681 = vmatmul.mubr.bf16.gmra.mrb[0].mxu0 %v3538
        %v3682 = vpop.f32.mrb[0].mxu0
        %v3683 = vadd.f32 0.0, %v3682
        %v3684 = vpop.f32.mrb[0].mxu0
        %v3685 = vpop.f32.mrb[0].mxu0
        %v3686 = vadd.f32 0.0, %v3685
        %v3687 = vpop.f32.mrb[0].mxu0
        %3688 = vmatprep.mubr.bf16.mxu0 0
        %3689 = vmatmul.mubr.bf16.gmra.mrb[0].mxu0 %v3540
        %v3690 = vpop.f32.mrb[0].mxu0
        %v3691 = vadd.f32 0.0, %v3690
        %v3692 = vpop.f32.mrb[0].mxu0
        %v3693 = vpop.f32.mrb[0].mxu0
        %v3694 = vadd.f32 0.0, %v3693
        %v3695 = vpop.f32.mrb[0].mxu0
        %3696 = vmatprep.mubr.bf16.mxu0 0
        %3697 = vmatmul.mubr.bf16.gmra.mrb[0].mxu0 %v3542
        %v3698 = vpop.f32.mrb[0].mxu0
        %v3699 = vadd.f32 0.0, %v3698
        %v3700 = vpop.f32.mrb[0].mxu0
        %v3701 = vpop.f32.mrb[0].mxu0
        %v3702 = vadd.f32 0.0, %v3701
        %v3703 = vpop.f32.mrb[0].mxu0
        %3704 = vdwg.mxu0
        %v3705 = vadd.f32 %v3354, %v3579
        %v3706 = vadd.f32 %v3357, %v3582
        %v3707 = vadd.f32 %v3362, %v3587
        %v3708 = vadd.f32 %v3365, %v3590
        %v3709 = vadd.f32 %v3370, %v3595
        %v3710 = vadd.f32 %v3373, %v3598
        %v3711 = vadd.f32 %v3378, %v3603
        %v3712 = vadd.f32 %v3381, %v3606
        %v3713 = vadd.f32 %v3386, %v3611
        %v3714 = vadd.f32 %v3389, %v3614
        %v3715 = vadd.f32 %v3394, %v3619
        %v3716 = vadd.f32 %v3397, %v3622
        %v3717 = vadd.f32 %v3402, %v3627
        %v3718 = vadd.f32 %v3405, %v3630
        %v3719 = vadd.f32 %v3410, %v3635
        %v3720 = vadd.f32 %v3413, %v3638
        %v3721 = vadd.f32 %v3418, %v3643
        %v3722 = vadd.f32 %v3421, %v3646
        %v3723 = vadd.f32 %v3426, %v3651
        %v3724 = vadd.f32 %v3429, %v3654
        %v3725 = vadd.f32 %v3434, %v3659
        %v3726 = vadd.f32 %v3437, %v3662
        %v3727 = vadd.f32 %v3442, %v3667
        %v3728 = vadd.f32 %v3445, %v3670
        %v3729 = vadd.f32 %v3450, %v3675
        %v3730 = vadd.f32 %v3453, %v3678
        %v3731 = vadd.f32 %v3458, %v3683
        %v3732 = vadd.f32 %v3461, %v3686
        %v3733 = vadd.f32 %v3466, %v3691
        %v3734 = vadd.f32 %v3469, %v3694
        %v3735 = vadd.f32 %v3474, %v3699
        %v3736 = vadd.f32 %v3477, %v3702
        %v3737 = vld [vmem:[#allocation2 + $0x8] sm:$0xff]
        %v3738 = vld [vmem:[#allocation2 + $0x88] sm:$0x1]
        %v3739 = vld [vmem:[#allocation16 + $0x40] sm:$0xf]
        %v3740 = vld [vmem:[#allocation16 + $0x44] sm:$0xf]
        %v3741 = vld [vmem:[#allocation16 + $0x48] sm:$0xf]
        %v3742 = vld [vmem:[#allocation16 + $0x4c] sm:$0xf]
        %v3743 = vld [vmem:[#allocation16 + $0x50] sm:$0xf]
        %v3744 = vld [vmem:[#allocation16 + $0x54] sm:$0xf]
        %v3745 = vld [vmem:[#allocation16 + $0x58] sm:$0xf]
        %v3746 = vld [vmem:[#allocation16 + $0x5c] sm:$0xf]
        %v3747 = vld [vmem:[#allocation2 + $0x10] sm:$0xff]
        %v3748 = vld [vmem:[#allocation2 + $0x90] sm:$0x1]
        %v3749 = vld [vmem:[#allocation16 + $0xa0] sm:$0xf]
        %v3750 = vld [vmem:[#allocation16 + $0xa4] sm:$0xf]
        %v3751 = vld [vmem:[#allocation16 + $0xa8] sm:$0xf]
        %v3752 = vld [vmem:[#allocation16 + $0xac] sm:$0xf]
        %v3753 = vld [vmem:[#allocation16 + $0xb0] sm:$0xf]
        %v3754 = vld [vmem:[#allocation16 + $0xb4] sm:$0xf]
        %v3755 = vld [vmem:[#allocation16 + $0xb8] sm:$0xf]
        %v3756 = vld [vmem:[#allocation16 + $0xbc] sm:$0xf]
        %vm3757 = vsmask.f32 7424
        %v3759 = vshrl.u32 %v3747, 16
        %v3761 = vshll.u32 %v3747, 16
        %v3763 = vrot.slane %v3761, 1
        %v3764 = vor.u32 %v3759, %v3763
        %v3765 = vrot.slane %v2671, 1
        %v3766 = vsel %vm3757, %v3764, %v3765
        %v3767 = vor.u32 %v2668, %v3765
        %v3768 = vrot.slane %v2679, 1
        %v3769 = vsel %vm3757, %v3767, %v3768
        %v3770 = vor.u32 %v2676, %v3768
        %v3771 = vrot.slane %v2687, 1
        %v3772 = vsel %vm3757, %v3770, %v3771
        %v3773 = vor.u32 %v2684, %v3771
        %v3774 = vrot.slane %v2695, 1
        %v3775 = vsel %vm3757, %v3773, %v3774
        %v3776 = vor.u32 %v2692, %v3774
        %v3777 = vrot.slane %v2703, 1
        %v3778 = vsel %vm3757, %v3776, %v3777
        %v3779 = vor.u32 %v2700, %v3777
        %v3780 = vrot.slane %v2711, 1
        %v3781 = vsel %vm3757, %v3779, %v3780
        %v3782 = vor.u32 %v2708, %v3780
        %v3783 = vrot.slane %v2719, 1
        %v3784 = vsel %vm3757, %v3782, %v3783
        %v3785 = vor.u32 %v2716, %v3783
        %v3786 = vrot.slane %v2727, 1
        %v3787 = vsel %vm3757, %v3785, %v3786
        %v3788 = vor.u32 %v2724, %v3786
        %v3789 = vrot.slane %v2735, 1
        %v3790 = vsel %vm3757, %v3788, %v3789
        %v3791 = vor.u32 %v2732, %v3789
        %v3792 = vrot.slane %v2743, 1
        %v3793 = vsel %vm3757, %v3791, %v3792
        %v3794 = vor.u32 %v2740, %v3792
        %v3795 = vrot.slane %v2751, 1
        %v3796 = vsel %vm3757, %v3794, %v3795
        %v3797 = vor.u32 %v2748, %v3795
        %v3798 = vrot.slane %v2759, 1
        %v3799 = vsel %vm3757, %v3797, %v3798
        %v3800 = vor.u32 %v2756, %v3798
        %v3801 = vrot.slane %v2767, 1
        %v3802 = vsel %vm3757, %v3800, %v3801
        %v3803 = vor.u32 %v2764, %v3801
        %v3804 = vrot.slane %v2775, 1
        %v3805 = vsel %vm3757, %v3803, %v3804
        %v3806 = vor.u32 %v2772, %v3804
        %v3807 = vrot.slane %v2783, 1
        %v3808 = vsel %vm3757, %v3806, %v3807
        %v3809 = vor.u32 %v2780, %v3807
        %v3811 = vshll.u32 %v3748, 16
        %v3813 = vrot.slane %v3811, 1
        %v3814 = vsel %vm3757, %v3809, %v3813
        %v3823 = vunpack.c.l.b16 %v3749
        %v3824 = vunpack.c.l.b16 %v3750
        %v3825 = vunpack.c.l.b16 %v3751
        %v3826 = vunpack.c.l.b16 %v3752
        %v3827 = vunpack.c.l.b16 %v3753
        %v3828 = vunpack.c.l.b16 %v3754
        %v3829 = vunpack.c.l.b16 %v3755
        %v3830 = vunpack.c.l.b16 %v3756
        %v3831 = vpack.c.b16 %v3824, %v3823
        %v3832 = vpack.c.b16 %v3826, %v3825
        %v3833 = vpack.c.b16 %v3828, %v3827
        %v3834 = vpack.c.b16 %v3830, %v3829
        %v3840 = vsel %vm1996, %v3766, 0
        %v3843 = vsel %vm1996, %v3769, 0
        %v3846 = vsel %vm1996, %v3772, 0
        %v3849 = vsel %vm1996, %v3775, 0
        %v3852 = vsel %vm1996, %v3778, 0
        %v3855 = vsel %vm1996, %v3781, 0
        %v3858 = vsel %vm1996, %v3784, 0
        %v3861 = vsel %vm1996, %v3787, 0
        %v3864 = vsel %vm1996, %v3790, 0
        %v3867 = vsel %vm1996, %v3793, 0
        %v3870 = vsel %vm1996, %v3796, 0
        %v3873 = vsel %vm1996, %v3799, 0
        %v3876 = vsel %vm1996, %v3802, 0
        %v3879 = vsel %vm1996, %v3805, 0
        %v3882 = vsel %vm1996, %v3808, 0
        %v3885 = vsel %vm1996, %v3814, 0
        %3887 = vmatprep.subr.bf16.mxu0 0
        %3888 = vmatpush1.bf16.msra.mxu0 %v3831
        %3889 = vmatprep.subr.bf16.mxu0 0
        %3890 = vmatpush1.bf16.msra.mxu0 %v3832
        %3891 = vmatprep.subr.bf16.mxu0 0
        %3892 = vmatpush1.bf16.msra.mxu0 %v3833
        %3893 = vmatprep.subr.bf16.mxu0 0
        %3894 = vmatpush1.bf16.msra.mxu0 %v3834
        %3895 = vmatprep.subr.bf16.mxu0 0
        %3896 = vmatpush1.bf16.msra.mxu0 0
        %3897 = vmatprep.subr.bf16.mxu0 0
        %3898 = vmatpush1.bf16.msra.mxu0 0
        %3899 = vmatprep.subr.bf16.mxu0 0
        %3900 = vmatpush1.bf16.msra.mxu0 0
        %3901 = vmatprep.subr.bf16.mxu0 0
        %3902 = vmatpush1.bf16.msra.mxu0 0
        %3903 = vmatprep.subr.bf16.mxu0 0
        %3904 = vmatpush1.bf16.msra.mxu0 0
        %3905 = vmatprep.subr.bf16.mxu0 0
        %3906 = vmatpush1.bf16.msra.mxu0 0
        %3907 = vmatprep.subr.bf16.mxu0 0
        %3908 = vmatpush1.bf16.msra.mxu0 0
        %3909 = vmatprep.subr.bf16.mxu0 0
        %3910 = vmatpush1.bf16.msra.mxu0 0
        %3911 = vmatprep.subr.bf16.mxu0 0
        %3912 = vmatpush1.bf16.msra.mxu0 0
        %3913 = vmatprep.subr.bf16.mxu0 0
        %3914 = vmatpush1.bf16.msra.mxu0 0
        %3915 = vmatprep.subr.bf16.mxu0 0
        %3916 = vmatpush1.bf16.msra.mxu0 0
        %3917 = vmatprep.subr.bf16.mxu0 0
        %3918 = vmatpush1.bf16.msra.mxu0 0
        %3919 = vmatprep.mubr.bf16.mxu0 0
        %3920 = vmatmul.mubr.bf16.gmra.mrb[0].mxu0 %v3840
        %v3921 = vpop.f32.mrb[0].mxu0
        %v3922 = vadd.f32 0.0, %v3921
        %v3923 = vpop.f32.mrb[0].mxu0
        %v3924 = vpop.f32.mrb[0].mxu0
        %v3925 = vadd.f32 0.0, %v3924
        %v3926 = vpop.f32.mrb[0].mxu0
        %3927 = vmatprep.mubr.bf16.mxu0 0
        %3928 = vmatmul.mubr.bf16.gmra.mrb[0].mxu0 %v3843
        %v3929 = vpop.f32.mrb[0].mxu0
        %v3930 = vadd.f32 0.0, %v3929
        %v3931 = vpop.f32.mrb[0].mxu0
        %v3932 = vpop.f32.mrb[0].mxu0
        %v3933 = vadd.f32 0.0, %v3932
        %v3934 = vpop.f32.mrb[0].mxu0
        %3935 = vmatprep.mubr.bf16.mxu0 0
        %3936 = vmatmul.mubr.bf16.gmra.mrb[0].mxu0 %v3846
        %v3937 = vpop.f32.mrb[0].mxu0
        %v3938 = vadd.f32 0.0, %v3937
        %v3939 = vpop.f32.mrb[0].mxu0
        %v3940 = vpop.f32.mrb[0].mxu0
        %v3941 = vadd.f32 0.0, %v3940
        %v3942 = vpop.f32.mrb[0].mxu0
        %3943 = vmatprep.mubr.bf16.mxu0 0
        %3944 = vmatmul.mubr.bf16.gmra.mrb[0].mxu0 %v3849
        %v3945 = vpop.f32.mrb[0].mxu0
        %v3946 = vadd.f32 0.0, %v3945
        %v3947 = vpop.f32.mrb[0].mxu0
        %v3948 = vpop.f32.mrb[0].mxu0
        %v3949 = vadd.f32 0.0, %v3948
        %v3950 = vpop.f32.mrb[0].mxu0
        %3951 = vmatprep.mubr.bf16.mxu0 0
        %3952 = vmatmul.mubr.bf16.gmra.mrb[0].mxu0 %v3852
        %v3953 = vpop.f32.mrb[0].mxu0
        %v3954 = vadd.f32 0.0, %v3953
        %v3955 = vpop.f32.mrb[0].mxu0
        %v3956 = vpop.f32.mrb[0].mxu0
        %v3957 = vadd.f32 0.0, %v3956
        %v3958 = vpop.f32.mrb[0].mxu0
        %3959 = vmatprep.mubr.bf16.mxu0 0
        %3960 = vmatmul.mubr.bf16.gmra.mrb[0].mxu0 %v3855
        %v3961 = vpop.f32.mrb[0].mxu0
        %v3962 = vadd.f32 0.0, %v3961
        %v3963 = vpop.f32.mrb[0].mxu0
        %v3964 = vpop.f32.mrb[0].mxu0
        %v3965 = vadd.f32 0.0, %v3964
        %v3966 = vpop.f32.mrb[0].mxu0
        %3967 = vmatprep.mubr.bf16.mxu0 0
        %3968 = vmatmul.mubr.bf16.gmra.mrb[0].mxu0 %v3858
        %v3969 = vpop.f32.mrb[0].mxu0
        %v3970 = vadd.f32 0.0, %v3969
        %v3971 = vpop.f32.mrb[0].mxu0
        %v3972 = vpop.f32.mrb[0].mxu0
        %v3973 = vadd.f32 0.0, %v3972
        %v3974 = vpop.f32.mrb[0].mxu0
        %3975 = vmatprep.mubr.bf16.mxu0 0
        %3976 = vmatmul.mubr.bf16.gmra.mrb[0].mxu0 %v3861
        %v3977 = vpop.f32.mrb[0].mxu0
        %v3978 = vadd.f32 0.0, %v3977
        %v3979 = vpop.f32.mrb[0].mxu0
        %v3980 = vpop.f32.mrb[0].mxu0
        %v3981 = vadd.f32 0.0, %v3980
        %v3982 = vpop.f32.mrb[0].mxu0
        %3983 = vmatprep.mubr.bf16.mxu0 0
        %3984 = vmatmul.mubr.bf16.gmra.mrb[0].mxu0 %v3864
        %v3985 = vpop.f32.mrb[0].mxu0
        %v3986 = vadd.f32 0.0, %v3985
        %v3987 = vpop.f32.mrb[0].mxu0
        %v3988 = vpop.f32.mrb[0].mxu0
        %v3989 = vadd.f32 0.0, %v3988
        %v3990 = vpop.f32.mrb[0].mxu0
        %3991 = vmatprep.mubr.bf16.mxu0 0
        %3992 = vmatmul.mubr.bf16.gmra.mrb[0].mxu0 %v3867
        %v3993 = vpop.f32.mrb[0].mxu0
        %v3994 = vadd.f32 0.0, %v3993
        %v3995 = vpop.f32.mrb[0].mxu0
        %v3996 = vpop.f32.mrb[0].mxu0
        %v3997 = vadd.f32 0.0, %v3996
        %v3998 = vpop.f32.mrb[0].mxu0
        %3999 = vmatprep.mubr.bf16.mxu0 0
        %4000 = vmatmul.mubr.bf16.gmra.mrb[0].mxu0 %v3870
        %v4001 = vpop.f32.mrb[0].mxu0
        %v4002 = vadd.f32 0.0, %v4001
        %v4003 = vpop.f32.mrb[0].mxu0
        %v4004 = vpop.f32.mrb[0].mxu0
        %v4005 = vadd.f32 0.0, %v4004
        %v4006 = vpop.f32.mrb[0].mxu0
        %4007 = vmatprep.mubr.bf16.mxu0 0
        %4008 = vmatmul.mubr.bf16.gmra.mrb[0].mxu0 %v3873
        %v4009 = vpop.f32.mrb[0].mxu0
        %v4010 = vadd.f32 0.0, %v4009
        %v4011 = vpop.f32.mrb[0].mxu0
        %v4012 = vpop.f32.mrb[0].mxu0
        %v4013 = vadd.f32 0.0, %v4012
        %v4014 = vpop.f32.mrb[0].mxu0
        %4015 = vmatprep.mubr.bf16.mxu0 0
        %4016 = vmatmul.mubr.bf16.gmra.mrb[0].mxu0 %v3876
        %v4017 = vpop.f32.mrb[0].mxu0
        %v4018 = vadd.f32 0.0, %v4017
        %v4019 = vpop.f32.mrb[0].mxu0
        %v4020 = vpop.f32.mrb[0].mxu0
        %v4021 = vadd.f32 0.0, %v4020
        %v4022 = vpop.f32.mrb[0].mxu0
        %4023 = vmatprep.mubr.bf16.mxu0 0
        %4024 = vmatmul.mubr.bf16.gmra.mrb[0].mxu0 %v3879
        %v4025 = vpop.f32.mrb[0].mxu0
        %v4026 = vadd.f32 0.0, %v4025
        %v4027 = vpop.f32.mrb[0].mxu0
        %v4028 = vpop.f32.mrb[0].mxu0
        %v4029 = vadd.f32 0.0, %v4028
        %v4030 = vpop.f32.mrb[0].mxu0
        %4031 = vmatprep.mubr.bf16.mxu0 0
        %4032 = vmatmul.mubr.bf16.gmra.mrb[0].mxu0 %v3882
        %v4033 = vpop.f32.mrb[0].mxu0
        %v4034 = vadd.f32 0.0, %v4033
        %v4035 = vpop.f32.mrb[0].mxu0
        %v4036 = vpop.f32.mrb[0].mxu0
        %v4037 = vadd.f32 0.0, %v4036
        %v4038 = vpop.f32.mrb[0].mxu0
        %4039 = vmatprep.mubr.bf16.mxu0 0
        %4040 = vmatmul.mubr.bf16.gmra.mrb[0].mxu0 %v3885
        %v4041 = vpop.f32.mrb[0].mxu0
        %v4042 = vadd.f32 0.0, %v4041
        %v4043 = vpop.f32.mrb[0].mxu0
        %v4044 = vpop.f32.mrb[0].mxu0
        %v4045 = vadd.f32 0.0, %v4044
        %v4046 = vpop.f32.mrb[0].mxu0
        %4047 = vdwg.mxu0
        %v4049 = vshrl.u32 %v3737, 16
        %v4051 = vshll.u32 %v3737, 16
        %v4053 = vrot.slane %v4051, 1
        %v4054 = vor.u32 %v4049, %v4053
        %v4055 = vrot.slane %v2077, 1
        %v4056 = vsel %vm3757, %v4054, %v4055
        %v4057 = vor.u32 %v2074, %v4055
        %v4058 = vrot.slane %v2085, 1
        %v4059 = vsel %vm3757, %v4057, %v4058
        %v4060 = vor.u32 %v2082, %v4058
        %v4061 = vrot.slane %v2093, 1
        %v4062 = vsel %vm3757, %v4060, %v4061
        %v4063 = vor.u32 %v2090, %v4061
        %v4064 = vrot.slane %v2101, 1
        %v4065 = vsel %vm3757, %v4063, %v4064
        %v4066 = vor.u32 %v2098, %v4064
        %v4067 = vrot.slane %v2109, 1
        %v4068 = vsel %vm3757, %v4066, %v4067
        %v4069 = vor.u32 %v2106, %v4067
        %v4070 = vrot.slane %v2117, 1
        %v4071 = vsel %vm3757, %v4069, %v4070
        %v4072 = vor.u32 %v2114, %v4070
        %v4073 = vrot.slane %v2125, 1
        %v4074 = vsel %vm3757, %v4072, %v4073
        %v4075 = vor.u32 %v2122, %v4073
        %v4076 = vrot.slane %v2133, 1
        %v4077 = vsel %vm3757, %v4075, %v4076
        %v4078 = vor.u32 %v2130, %v4076
        %v4079 = vrot.slane %v2141, 1
        %v4080 = vsel %vm3757, %v4078, %v4079
        %v4081 = vor.u32 %v2138, %v4079
        %v4082 = vrot.slane %v2149, 1
        %v4083 = vsel %vm3757, %v4081, %v4082
        %v4084 = vor.u32 %v2146, %v4082
        %v4085 = vrot.slane %v2157, 1
        %v4086 = vsel %vm3757, %v4084, %v4085
        %v4087 = vor.u32 %v2154, %v4085
        %v4088 = vrot.slane %v2165, 1
        %v4089 = vsel %vm3757, %v4087, %v4088
        %v4090 = vor.u32 %v2162, %v4088
        %v4091 = vrot.slane %v2173, 1
        %v4092 = vsel %vm3757, %v4090, %v4091
        %v4093 = vor.u32 %v2170, %v4091
        %v4094 = vrot.slane %v2181, 1
        %v4095 = vsel %vm3757, %v4093, %v4094
        %v4096 = vor.u32 %v2178, %v4094
        %v4097 = vrot.slane %v2189, 1
        %v4098 = vsel %vm3757, %v4096, %v4097
        %v4099 = vor.u32 %v2186, %v4097
        %v4101 = vshll.u32 %v3738, 16
        %v4103 = vrot.slane %v4101, 1
        %v4104 = vsel %vm3757, %v4099, %v4103
        %v4113 = vunpack.c.l.b16 %v3739
        %v4114 = vunpack.c.l.b16 %v3740
        %v4115 = vunpack.c.l.b16 %v3741
        %v4116 = vunpack.c.l.b16 %v3742
        %v4117 = vunpack.c.l.b16 %v3743
        %v4118 = vunpack.c.l.b16 %v3744
        %v4119 = vunpack.c.l.b16 %v3745
        %v4120 = vunpack.c.l.b16 %v3746
        %v4121 = vpack.c.b16 %v4114, %v4113
        %v4122 = vpack.c.b16 %v4116, %v4115
        %v4123 = vpack.c.b16 %v4118, %v4117
        %v4124 = vpack.c.b16 %v4120, %v4119
        %v4130 = vsel %vm1996, %v4056, 0
        %v4133 = vsel %vm1996, %v4059, 0
        %v4136 = vsel %vm1996, %v4062, 0
        %v4139 = vsel %vm1996, %v4065, 0
        %v4142 = vsel %vm1996, %v4068, 0
        %v4145 = vsel %vm1996, %v4071, 0
        %v4148 = vsel %vm1996, %v4074, 0
        %v4151 = vsel %vm1996, %v4077, 0
        %v4154 = vsel %vm1996, %v4080, 0
        %v4157 = vsel %vm1996, %v4083, 0
        %v4160 = vsel %vm1996, %v4086, 0
        %v4163 = vsel %vm1996, %v4089, 0
        %v4166 = vsel %vm1996, %v4092, 0
        %v4169 = vsel %vm1996, %v4095, 0
        %v4172 = vsel %vm1996, %v4098, 0
        %v4175 = vsel %vm1996, %v4104, 0
        %4177 = vmatprep.subr.bf16.mxu0 0
        %4178 = vmatpush1.bf16.msra.mxu0 %v4121
        %4179 = vmatprep.subr.bf16.mxu0 0
        %4180 = vmatpush1.bf16.msra.mxu0 %v4122
        %4181 = vmatprep.subr.bf16.mxu0 0
        %4182 = vmatpush1.bf16.msra.mxu0 %v4123
        %4183 = vmatprep.subr.bf16.mxu0 0
        %4184 = vmatpush1.bf16.msra.mxu0 %v4124
        %4185 = vmatprep.subr.bf16.mxu0 0
        %4186 = vmatpush1.bf16.msra.mxu0 0
        %4187 = vmatprep.subr.bf16.mxu0 0
        %4188 = vmatpush1.bf16.msra.mxu0 0
        %4189 = vmatprep.subr.bf16.mxu0 0
        %4190 = vmatpush1.bf16.msra.mxu0 0
        %4191 = vmatprep.subr.bf16.mxu0 0
        %4192 = vmatpush1.bf16.msra.mxu0 0
        %4193 = vmatprep.subr.bf16.mxu0 0
        %4194 = vmatpush1.bf16.msra.mxu0 0
        %4195 = vmatprep.subr.bf16.mxu0 0
        %4196 = vmatpush1.bf16.msra.mxu0 0
        %4197 = vmatprep.subr.bf16.mxu0 0
        %4198 = vmatpush1.bf16.msra.mxu0 0
        %4199 = vmatprep.subr.bf16.mxu0 0
        %4200 = vmatpush1.bf16.msra.mxu0 0
        %4201 = vmatprep.subr.bf16.mxu0 0
        %4202 = vmatpush1.bf16.msra.mxu0 0
        %4203 = vmatprep.subr.bf16.mxu0 0
        %4204 = vmatpush1.bf16.msra.mxu0 0
        %4205 = vmatprep.subr.bf16.mxu0 0
        %4206 = vmatpush1.bf16.msra.mxu0 0
        %4207 = vmatprep.subr.bf16.mxu0 0
        %4208 = vmatpush1.bf16.msra.mxu0 0
        %4209 = vmatprep.mubr.bf16.mxu0 0
        %4210 = vmatmul.mubr.bf16.gmra.mrb[0].mxu0 %v4130
        %v4211 = vpop.f32.mrb[0].mxu0
        %v4212 = vadd.f32 %v3922, %v4211
        %v4213 = vpop.f32.mrb[0].mxu0
        %v4214 = vpop.f32.mrb[0].mxu0
        %v4215 = vadd.f32 %v3925, %v4214
        %v4216 = vpop.f32.mrb[0].mxu0
        %4217 = vmatprep.mubr.bf16.mxu0 0
        %4218 = vmatmul.mubr.bf16.gmra.mrb[0].mxu0 %v4133
        %v4219 = vpop.f32.mrb[0].mxu0
        %v4220 = vadd.f32 %v3930, %v4219
        %v4221 = vpop.f32.mrb[0].mxu0
        %v4222 = vpop.f32.mrb[0].mxu0
        %v4223 = vadd.f32 %v3933, %v4222
        %v4224 = vpop.f32.mrb[0].mxu0
        %4225 = vmatprep.mubr.bf16.mxu0 0
        %4226 = vmatmul.mubr.bf16.gmra.mrb[0].mxu0 %v4136
        %v4227 = vpop.f32.mrb[0].mxu0
        %v4228 = vadd.f32 %v3938, %v4227
        %v4229 = vpop.f32.mrb[0].mxu0
        %v4230 = vpop.f32.mrb[0].mxu0
        %v4231 = vadd.f32 %v3941, %v4230
        %v4232 = vpop.f32.mrb[0].mxu0
        %4233 = vmatprep.mubr.bf16.mxu0 0
        %4234 = vmatmul.mubr.bf16.gmra.mrb[0].mxu0 %v4139
        %v4235 = vpop.f32.mrb[0].mxu0
        %v4236 = vadd.f32 %v3946, %v4235
        %v4237 = vpop.f32.mrb[0].mxu0
        %v4238 = vpop.f32.mrb[0].mxu0
        %v4239 = vadd.f32 %v3949, %v4238
        %v4240 = vpop.f32.mrb[0].mxu0
        %4241 = vmatprep.mubr.bf16.mxu0 0
        %4242 = vmatmul.mubr.bf16.gmra.mrb[0].mxu0 %v4142
        %v4243 = vpop.f32.mrb[0].mxu0
        %v4244 = vadd.f32 %v3954, %v4243
        %v4245 = vpop.f32.mrb[0].mxu0
        %v4246 = vpop.f32.mrb[0].mxu0
        %v4247 = vadd.f32 %v3957, %v4246
        %v4248 = vpop.f32.mrb[0].mxu0
        %4249 = vmatprep.mubr.bf16.mxu0 0
        %4250 = vmatmul.mubr.bf16.gmra.mrb[0].mxu0 %v4145
        %v4251 = vpop.f32.mrb[0].mxu0
        %v4252 = vadd.f32 %v3962, %v4251
        %v4253 = vpop.f32.mrb[0].mxu0
        %v4254 = vpop.f32.mrb[0].mxu0
        %v4255 = vadd.f32 %v3965, %v4254
        %v4256 = vpop.f32.mrb[0].mxu0
        %4257 = vmatprep.mubr.bf16.mxu0 0
        %4258 = vmatmul.mubr.bf16.gmra.mrb[0].mxu0 %v4148
        %v4259 = vpop.f32.mrb[0].mxu0
        %v4260 = vadd.f32 %v3970, %v4259
        %v4261 = vpop.f32.mrb[0].mxu0
        %v4262 = vpop.f32.mrb[0].mxu0
        %v4263 = vadd.f32 %v3973, %v4262
        %v4264 = vpop.f32.mrb[0].mxu0
        %4265 = vmatprep.mubr.bf16.mxu0 0
        %4266 = vmatmul.mubr.bf16.gmra.mrb[0].mxu0 %v4151
        %v4267 = vpop.f32.mrb[0].mxu0
        %v4268 = vadd.f32 %v3978, %v4267
        %v4269 = vpop.f32.mrb[0].mxu0
        %v4270 = vpop.f32.mrb[0].mxu0
        %v4271 = vadd.f32 %v3981, %v4270
        %v4272 = vpop.f32.mrb[0].mxu0
        %4273 = vmatprep.mubr.bf16.mxu0 0
        %4274 = vmatmul.mubr.bf16.gmra.mrb[0].mxu0 %v4154
        %v4275 = vpop.f32.mrb[0].mxu0
        %v4276 = vadd.f32 %v3986, %v4275
        %v4277 = vpop.f32.mrb[0].mxu0
        %v4278 = vpop.f32.mrb[0].mxu0
        %v4279 = vadd.f32 %v3989, %v4278
        %v4280 = vpop.f32.mrb[0].mxu0
        %4281 = vmatprep.mubr.bf16.mxu0 0
        %4282 = vmatmul.mubr.bf16.gmra.mrb[0].mxu0 %v4157
        %v4283 = vpop.f32.mrb[0].mxu0
        %v4284 = vadd.f32 %v3994, %v4283
        %v4285 = vpop.f32.mrb[0].mxu0
        %v4286 = vpop.f32.mrb[0].mxu0
        %v4287 = vadd.f32 %v3997, %v4286
        %v4288 = vpop.f32.mrb[0].mxu0
        %4289 = vmatprep.mubr.bf16.mxu0 0
        %4290 = vmatmul.mubr.bf16.gmra.mrb[0].mxu0 %v4160
        %v4291 = vpop.f32.mrb[0].mxu0
        %v4292 = vadd.f32 %v4002, %v4291
        %v4293 = vpop.f32.mrb[0].mxu0
        %v4294 = vpop.f32.mrb[0].mxu0
        %v4295 = vadd.f32 %v4005, %v4294
        %v4296 = vpop.f32.mrb[0].mxu0
        %4297 = vmatprep.mubr.bf16.mxu0 0
        %4298 = vmatmul.mubr.bf16.gmra.mrb[0].mxu0 %v4163
        %v4299 = vpop.f32.mrb[0].mxu0
        %v4300 = vadd.f32 %v4010, %v4299
        %v4301 = vpop.f32.mrb[0].mxu0
        %v4302 = vpop.f32.mrb[0].mxu0
        %v4303 = vadd.f32 %v4013, %v4302
        %v4304 = vpop.f32.mrb[0].mxu0
        %4305 = vmatprep.mubr.bf16.mxu0 0
        %4306 = vmatmul.mubr.bf16.gmra.mrb[0].mxu0 %v4166
        %v4307 = vpop.f32.mrb[0].mxu0
        %v4308 = vadd.f32 %v4018, %v4307
        %v4309 = vpop.f32.mrb[0].mxu0
        %v4310 = vpop.f32.mrb[0].mxu0
        %v4311 = vadd.f32 %v4021, %v4310
        %v4312 = vpop.f32.mrb[0].mxu0
        %4313 = vmatprep.mubr.bf16.mxu0 0
        %4314 = vmatmul.mubr.bf16.gmra.mrb[0].mxu0 %v4169
        %v4315 = vpop.f32.mrb[0].mxu0
        %v4316 = vadd.f32 %v4026, %v4315
        %v4317 = vpop.f32.mrb[0].mxu0
        %v4318 = vpop.f32.mrb[0].mxu0
        %v4319 = vadd.f32 %v4029, %v4318
        %v4320 = vpop.f32.mrb[0].mxu0
        %4321 = vmatprep.mubr.bf16.mxu0 0
        %4322 = vmatmul.mubr.bf16.gmra.mrb[0].mxu0 %v4172
        %v4323 = vpop.f32.mrb[0].mxu0
        %v4324 = vadd.f32 %v4034, %v4323
        %v4325 = vpop.f32.mrb[0].mxu0
        %v4326 = vpop.f32.mrb[0].mxu0
        %v4327 = vadd.f32 %v4037, %v4326
        %v4328 = vpop.f32.mrb[0].mxu0
        %4329 = vmatprep.mubr.bf16.mxu0 0
        %4330 = vmatmul.mubr.bf16.gmra.mrb[0].mxu0 %v4175
        %v4331 = vpop.f32.mrb[0].mxu0
        %v4332 = vadd.f32 %v4042, %v4331
        %v4333 = vpop.f32.mrb[0].mxu0
        %v4334 = vpop.f32.mrb[0].mxu0
        %v4335 = vadd.f32 %v4045, %v4334
        %v4336 = vpop.f32.mrb[0].mxu0
        %4337 = vdwg.mxu0
        %v4338 = vld [vmem:[#allocation2 + $0x18] sm:$0xff]
        %v4339 = vld [vmem:[#allocation2 + $0x20] sm:$0xff]
        %v4340 = vld [vmem:[#allocation2 + $0x28] sm:$0xff]
        %v4341 = vld [vmem:[#allocation2 + $0x30] sm:$0xff]
        %v4342 = vld [vmem:[#allocation2 + $0x38] sm:$0xff]
        %v4343 = vld [vmem:[#allocation2 + $0x40] sm:$0xff]
        %v4344 = vld [vmem:[#allocation2 + $0x48] sm:$0xff]
        %v4345 = vld [vmem:[#allocation2 + $0x50] sm:$0xff]
        %v4346 = vld [vmem:[#allocation2 + $0x58] sm:$0xff]
        %v4347 = vld [vmem:[#allocation2 + $0x60] sm:$0xff]
        %v4348 = vld [vmem:[#allocation2 + $0x68] sm:$0xff]
        %v4349 = vld [vmem:[#allocation2 + $0x70] sm:$0xff]
        %v4350 = vld [vmem:[#allocation2 + $0x78] sm:$0xff]
        %v4351 = vld [vmem:[#allocation2 + $0x80] sm:$0xff]
        %v4352 = vld [vmem:[#allocation2 + $0x88] sm:$0xff]
        %v4353 = vld [vmem:[#allocation2 + $0x90] sm:$0xff]
        %v4354 = vld [vmem:[#allocation2 + $0x98] sm:$0x1]
        %v4355 = vld [vmem:[#allocation16 + $0x100] sm:$0xf]
        %v4356 = vld [vmem:[#allocation16 + $0x104] sm:$0xf]
        %v4357 = vld [vmem:[#allocation16 + $0x108] sm:$0xf]
        %v4358 = vld [vmem:[#allocation16 + $0x10c] sm:$0xf]
        %v4359 = vld [vmem:[#allocation16 + $0x110] sm:$0xf]
        %v4360 = vld [vmem:[#allocation16 + $0x114] sm:$0xf]
        %v4361 = vld [vmem:[#allocation16 + $0x118] sm:$0xf]
        %v4362 = vld [vmem:[#allocation16 + $0x11c] sm:$0xf]
        %v4364 = vshrl.u32 %v4338, 16
        %v4366 = vshll.u32 %v4338, 16
        %v4368 = vrot.slane %v4366, 1
        %v4369 = vor.u32 %v4364, %v4368
        %v4371 = vshll.u32 %v4339, 16
        %v4373 = vrot.slane %v4371, 1
        %v4374 = vsel %vm3757, %v4369, %v4373
        %v4375 = vshrl.u32 %v4339, 16
        %v4377 = vor.u32 %v4375, %v4373
        %v4379 = vshll.u32 %v4340, 16
        %v4381 = vrot.slane %v4379, 1
        %v4382 = vsel %vm3757, %v4377, %v4381
        %v4383 = vshrl.u32 %v4340, 16
        %v4385 = vor.u32 %v4383, %v4381
        %v4387 = vshll.u32 %v4341, 16
        %v4389 = vrot.slane %v4387, 1
        %v4390 = vsel %vm3757, %v4385, %v4389
        %v4391 = vshrl.u32 %v4341, 16
        %v4393 = vor.u32 %v4391, %v4389
        %v4395 = vshll.u32 %v4342, 16
        %v4397 = vrot.slane %v4395, 1
        %v4398 = vsel %vm3757, %v4393, %v4397
        %v4399 = vshrl.u32 %v4342, 16
        %v4401 = vor.u32 %v4399, %v4397
        %v4403 = vshll.u32 %v4343, 16
        %v4405 = vrot.slane %v4403, 1
        %v4406 = vsel %vm3757, %v4401, %v4405
        %v4407 = vshrl.u32 %v4343, 16
        %v4409 = vor.u32 %v4407, %v4405
        %v4411 = vshll.u32 %v4344, 16
        %v4413 = vrot.slane %v4411, 1
        %v4414 = vsel %vm3757, %v4409, %v4413
        %v4415 = vshrl.u32 %v4344, 16
        %v4417 = vor.u32 %v4415, %v4413
        %v4419 = vshll.u32 %v4345, 16
        %v4421 = vrot.slane %v4419, 1
        %v4422 = vsel %vm3757, %v4417, %v4421
        %v4423 = vshrl.u32 %v4345, 16
        %v4425 = vor.u32 %v4423, %v4421
        %v4427 = vshll.u32 %v4346, 16
        %v4429 = vrot.slane %v4427, 1
        %v4430 = vsel %vm3757, %v4425, %v4429
        %v4431 = vshrl.u32 %v4346, 16
        %v4433 = vor.u32 %v4431, %v4429
        %v4435 = vshll.u32 %v4347, 16
        %v4437 = vrot.slane %v4435, 1
        %v4438 = vsel %vm3757, %v4433, %v4437
        %v4439 = vshrl.u32 %v4347, 16
        %v4441 = vor.u32 %v4439, %v4437
        %v4443 = vshll.u32 %v4348, 16
        %v4445 = vrot.slane %v4443, 1
        %v4446 = vsel %vm3757, %v4441, %v4445
        %v4447 = vshrl.u32 %v4348, 16
        %v4449 = vor.u32 %v4447, %v4445
        %v4451 = vshll.u32 %v4349, 16
        %v4453 = vrot.slane %v4451, 1
        %v4454 = vsel %vm3757, %v4449, %v4453
        %v4455 = vshrl.u32 %v4349, 16
        %v4457 = vor.u32 %v4455, %v4453
        %v4459 = vshll.u32 %v4350, 16
        %v4461 = vrot.slane %v4459, 1
        %v4462 = vsel %vm3757, %v4457, %v4461
        %v4463 = vshrl.u32 %v4350, 16
        %v4465 = vor.u32 %v4463, %v4461
        %v4467 = vshll.u32 %v4351, 16
        %v4469 = vrot.slane %v4467, 1
        %v4470 = vsel %vm3757, %v4465, %v4469
        %v4471 = vshrl.u32 %v4351, 16
        %v4473 = vor.u32 %v4471, %v4469
        %v4475 = vshll.u32 %v4352, 16
        %v4477 = vrot.slane %v4475, 1
        %v4478 = vsel %vm3757, %v4473, %v4477
        %v4479 = vshrl.u32 %v4352, 16
        %v4481 = vor.u32 %v4479, %v4477
        %v4483 = vshll.u32 %v4353, 16
        %v4485 = vrot.slane %v4483, 1
        %v4486 = vsel %vm3757, %v4481, %v4485
        %v4487 = vshrl.u32 %v4353, 16
        %v4489 = vor.u32 %v4487, %v4485
        %v4491 = vshll.u32 %v4354, 16
        %v4493 = vrot.slane %v4491, 1
        %v4494 = vsel %vm3757, %v4489, %v4493
        %v4503 = vunpack.c.l.b16 %v4355
        %v4504 = vunpack.c.l.b16 %v4356
        %v4505 = vunpack.c.l.b16 %v4357
        %v4506 = vunpack.c.l.b16 %v4358
        %v4507 = vunpack.c.l.b16 %v4359
        %v4508 = vunpack.c.l.b16 %v4360
        %v4509 = vunpack.c.l.b16 %v4361
        %v4510 = vunpack.c.l.b16 %v4362
        %v4511 = vpack.c.b16 %v4504, %v4503
        %v4512 = vpack.c.b16 %v4506, %v4505
        %v4513 = vpack.c.b16 %v4508, %v4507
        %v4514 = vpack.c.b16 %v4510, %v4509
        %v4520 = vsel %vm1996, %v4374, 0
        %v4523 = vsel %vm1996, %v4382, 0
        %v4526 = vsel %vm1996, %v4390, 0
        %v4529 = vsel %vm1996, %v4398, 0
        %v4532 = vsel %vm1996, %v4406, 0
        %v4535 = vsel %vm1996, %v4414, 0
        %v4538 = vsel %vm1996, %v4422, 0
        %v4541 = vsel %vm1996, %v4430, 0
        %v4544 = vsel %vm1996, %v4438, 0
        %v4547 = vsel %vm1996, %v4446, 0
        %v4550 = vsel %vm1996, %v4454, 0
        %v4553 = vsel %vm1996, %v4462, 0
        %v4556 = vsel %vm1996, %v4470, 0
        %v4559 = vsel %vm1996, %v4478, 0
        %v4562 = vsel %vm1996, %v4486, 0
        %v4565 = vsel %vm1996, %v4494, 0
        %4567 = vmatprep.subr.bf16.mxu0 0
        %4568 = vmatpush1.bf16.msra.mxu0 %v4511
        %4569 = vmatprep.subr.bf16.mxu0 0
        %4570 = vmatpush1.bf16.msra.mxu0 %v4512
        %4571 = vmatprep.subr.bf16.mxu0 0
        %4572 = vmatpush1.bf16.msra.mxu0 %v4513
        %4573 = vmatprep.subr.bf16.mxu0 0
        %4574 = vmatpush1.bf16.msra.mxu0 %v4514
        %4575 = vmatprep.subr.bf16.mxu0 0
        %4576 = vmatpush1.bf16.msra.mxu0 0
        %4577 = vmatprep.subr.bf16.mxu0 0
        %4578 = vmatpush1.bf16.msra.mxu0 0
        %4579 = vmatprep.subr.bf16.mxu0 0
        %4580 = vmatpush1.bf16.msra.mxu0 0
        %4581 = vmatprep.subr.bf16.mxu0 0
        %4582 = vmatpush1.bf16.msra.mxu0 0
        %4583 = vmatprep.subr.bf16.mxu0 0
        %4584 = vmatpush1.bf16.msra.mxu0 0
        %4585 = vmatprep.subr.bf16.mxu0 0
        %4586 = vmatpush1.bf16.msra.mxu0 0
        %4587 = vmatprep.subr.bf16.mxu0 0
        %4588 = vmatpush1.bf16.msra.mxu0 0
        %4589 = vmatprep.subr.bf16.mxu0 0
        %4590 = vmatpush1.bf16.msra.mxu0 0
        %4591 = vmatprep.subr.bf16.mxu0 0
        %4592 = vmatpush1.bf16.msra.mxu0 0
        %4593 = vmatprep.subr.bf16.mxu0 0
        %4594 = vmatpush1.bf16.msra.mxu0 0
        %4595 = vmatprep.subr.bf16.mxu0 0
        %4596 = vmatpush1.bf16.msra.mxu0 0
        %4597 = vmatprep.subr.bf16.mxu0 0
        %4598 = vmatpush1.bf16.msra.mxu0 0
        %4599 = vmatprep.mubr.bf16.mxu0 0
        %4600 = vmatmul.mubr.bf16.gmra.mrb[0].mxu0 %v4520
        %v4601 = vpop.f32.mrb[0].mxu0
        %v4602 = vadd.f32 0.0, %v4601
        %v4603 = vpop.f32.mrb[0].mxu0
        %v4604 = vpop.f32.mrb[0].mxu0
        %v4605 = vadd.f32 0.0, %v4604
        %v4606 = vpop.f32.mrb[0].mxu0
        %4607 = vmatprep.mubr.bf16.mxu0 0
        %4608 = vmatmul.mubr.bf16.gmra.mrb[0].mxu0 %v4523
        %v4609 = vpop.f32.mrb[0].mxu0
        %v4610 = vadd.f32 0.0, %v4609
        %v4611 = vpop.f32.mrb[0].mxu0
        %v4612 = vpop.f32.mrb[0].mxu0
        %v4613 = vadd.f32 0.0, %v4612
        %v4614 = vpop.f32.mrb[0].mxu0
        %4615 = vmatprep.mubr.bf16.mxu0 0
        %4616 = vmatmul.mubr.bf16.gmra.mrb[0].mxu0 %v4526
        %v4617 = vpop.f32.mrb[0].mxu0
        %v4618 = vadd.f32 0.0, %v4617
        %v4619 = vpop.f32.mrb[0].mxu0
        %v4620 = vpop.f32.mrb[0].mxu0
        %v4621 = vadd.f32 0.0, %v4620
        %v4622 = vpop.f32.mrb[0].mxu0
        %4623 = vmatprep.mubr.bf16.mxu0 0
        %4624 = vmatmul.mubr.bf16.gmra.mrb[0].mxu0 %v4529
        %v4625 = vpop.f32.mrb[0].mxu0
        %v4626 = vadd.f32 0.0, %v4625
        %v4627 = vpop.f32.mrb[0].mxu0
        %v4628 = vpop.f32.mrb[0].mxu0
        %v4629 = vadd.f32 0.0, %v4628
        %v4630 = vpop.f32.mrb[0].mxu0
        %4631 = vmatprep.mubr.bf16.mxu0 0
        %4632 = vmatmul.mubr.bf16.gmra.mrb[0].mxu0 %v4532
        %v4633 = vpop.f32.mrb[0].mxu0
        %v4634 = vadd.f32 0.0, %v4633
        %v4635 = vpop.f32.mrb[0].mxu0
        %v4636 = vpop.f32.mrb[0].mxu0
        %v4637 = vadd.f32 0.0, %v4636
        %v4638 = vpop.f32.mrb[0].mxu0
        %4639 = vmatprep.mubr.bf16.mxu0 0
        %4640 = vmatmul.mubr.bf16.gmra.mrb[0].mxu0 %v4535
        %v4641 = vpop.f32.mrb[0].mxu0
        %v4642 = vadd.f32 0.0, %v4641
        %v4643 = vpop.f32.mrb[0].mxu0
        %v4644 = vpop.f32.mrb[0].mxu0
        %v4645 = vadd.f32 0.0, %v4644
        %v4646 = vpop.f32.mrb[0].mxu0
        %4647 = vmatprep.mubr.bf16.mxu0 0
        %4648 = vmatmul.mubr.bf16.gmra.mrb[0].mxu0 %v4538
        %v4649 = vpop.f32.mrb[0].mxu0
        %v4650 = vadd.f32 0.0, %v4649
        %v4651 = vpop.f32.mrb[0].mxu0
        %v4652 = vpop.f32.mrb[0].mxu0
        %v4653 = vadd.f32 0.0, %v4652
        %v4654 = vpop.f32.mrb[0].mxu0
        %4655 = vmatprep.mubr.bf16.mxu0 0
        %4656 = vmatmul.mubr.bf16.gmra.mrb[0].mxu0 %v4541
        %v4657 = vpop.f32.mrb[0].mxu0
        %v4658 = vadd.f32 0.0, %v4657
        %v4659 = vpop.f32.mrb[0].mxu0
        %v4660 = vpop.f32.mrb[0].mxu0
        %v4661 = vadd.f32 0.0, %v4660
        %v4662 = vpop.f32.mrb[0].mxu0
        %4663 = vmatprep.mubr.bf16.mxu0 0
        %4664 = vmatmul.mubr.bf16.gmra.mrb[0].mxu0 %v4544
        %v4665 = vpop.f32.mrb[0].mxu0
        %v4666 = vadd.f32 0.0, %v4665
        %v4667 = vpop.f32.mrb[0].mxu0
        %v4668 = vpop.f32.mrb[0].mxu0
        %v4669 = vadd.f32 0.0, %v4668
        %v4670 = vpop.f32.mrb[0].mxu0
        %4671 = vmatprep.mubr.bf16.mxu0 0
        %4672 = vmatmul.mubr.bf16.gmra.mrb[0].mxu0 %v4547
        %v4673 = vpop.f32.mrb[0].mxu0
        %v4674 = vadd.f32 0.0, %v4673
        %v4675 = vpop.f32.mrb[0].mxu0
        %v4676 = vpop.f32.mrb[0].mxu0
        %v4677 = vadd.f32 0.0, %v4676
        %v4678 = vpop.f32.mrb[0].mxu0
        %4679 = vmatprep.mubr.bf16.mxu0 0
        %4680 = vmatmul.mubr.bf16.gmra.mrb[0].mxu0 %v4550
        %v4681 = vpop.f32.mrb[0].mxu0
        %v4682 = vadd.f32 0.0, %v4681
        %v4683 = vpop.f32.mrb[0].mxu0
        %v4684 = vpop.f32.mrb[0].mxu0
        %v4685 = vadd.f32 0.0, %v4684
        %v4686 = vpop.f32.mrb[0].mxu0
        %4687 = vmatprep.mubr.bf16.mxu0 0
        %4688 = vmatmul.mubr.bf16.gmra.mrb[0].mxu0 %v4553
        %v4689 = vpop.f32.mrb[0].mxu0
        %v4690 = vadd.f32 0.0, %v4689
        %v4691 = vpop.f32.mrb[0].mxu0
        %v4692 = vpop.f32.mrb[0].mxu0
        %v4693 = vadd.f32 0.0, %v4692
        %v4694 = vpop.f32.mrb[0].mxu0
        %4695 = vmatprep.mubr.bf16.mxu0 0
        %4696 = vmatmul.mubr.bf16.gmra.mrb[0].mxu0 %v4556
        %v4697 = vpop.f32.mrb[0].mxu0
        %v4698 = vadd.f32 0.0, %v4697
        %v4699 = vpop.f32.mrb[0].mxu0
        %v4700 = vpop.f32.mrb[0].mxu0
        %v4701 = vadd.f32 0.0, %v4700
        %v4702 = vpop.f32.mrb[0].mxu0
        %4703 = vmatprep.mubr.bf16.mxu0 0
        %4704 = vmatmul.mubr.bf16.gmra.mrb[0].mxu0 %v4559
        %v4705 = vpop.f32.mrb[0].mxu0
        %v4706 = vadd.f32 0.0, %v4705
        %v4707 = vpop.f32.mrb[0].mxu0
        %v4708 = vpop.f32.mrb[0].mxu0
        %v4709 = vadd.f32 0.0, %v4708
        %v4710 = vpop.f32.mrb[0].mxu0
        %4711 = vmatprep.mubr.bf16.mxu0 0
        %4712 = vmatmul.mubr.bf16.gmra.mrb[0].mxu0 %v4562
        %v4713 = vpop.f32.mrb[0].mxu0
        %v4714 = vadd.f32 0.0, %v4713
        %v4715 = vpop.f32.mrb[0].mxu0
        %v4716 = vpop.f32.mrb[0].mxu0
        %v4717 = vadd.f32 0.0, %v4716
        %v4718 = vpop.f32.mrb[0].mxu0
        %4719 = vmatprep.mubr.bf16.mxu0 0
        %4720 = vmatmul.mubr.bf16.gmra.mrb[0].mxu0 %v4565
        %v4721 = vpop.f32.mrb[0].mxu0
        %v4722 = vadd.f32 0.0, %v4721
        %v4723 = vpop.f32.mrb[0].mxu0
        %v4724 = vpop.f32.mrb[0].mxu0
        %v4725 = vadd.f32 0.0, %v4724
        %v4726 = vpop.f32.mrb[0].mxu0
        %4727 = vdwg.mxu0
        %v4728 = vadd.f32 %v4212, %v4602
        %v4729 = vadd.f32 %v4215, %v4605
        %v4730 = vadd.f32 %v4220, %v4610
        %v4731 = vadd.f32 %v4223, %v4613
        %v4732 = vadd.f32 %v4228, %v4618
        %v4733 = vadd.f32 %v4231, %v4621
        %v4734 = vadd.f32 %v4236, %v4626
        %v4735 = vadd.f32 %v4239, %v4629
        %v4736 = vadd.f32 %v4244, %v4634
        %v4737 = vadd.f32 %v4247, %v4637
        %v4738 = vadd.f32 %v4252, %v4642
        %v4739 = vadd.f32 %v4255, %v4645
        %v4740 = vadd.f32 %v4260, %v4650
        %v4741 = vadd.f32 %v4263, %v4653
        %v4742 = vadd.f32 %v4268, %v4658
        %v4743 = vadd.f32 %v4271, %v4661
        %v4744 = vadd.f32 %v4276, %v4666
        %v4745 = vadd.f32 %v4279, %v4669
        %v4746 = vadd.f32 %v4284, %v4674
        %v4747 = vadd.f32 %v4287, %v4677
        %v4748 = vadd.f32 %v4292, %v4682
        %v4749 = vadd.f32 %v4295, %v4685
        %v4750 = vadd.f32 %v4300, %v4690
        %v4751 = vadd.f32 %v4303, %v4693
        %v4752 = vadd.f32 %v4308, %v4698
        %v4753 = vadd.f32 %v4311, %v4701
        %v4754 = vadd.f32 %v4316, %v4706
        %v4755 = vadd.f32 %v4319, %v4709
        %v4756 = vadd.f32 %v4324, %v4714
        %v4757 = vadd.f32 %v4327, %v4717
        %v4758 = vadd.f32 %v4332, %v4722
        %v4759 = vadd.f32 %v4335, %v4725
        %v4760 = vmul.f32 %v3028, %v1072
        %v4761 = vmul.f32 %v3029, %v1073
        %v4762 = vmul.f32 %v3030, %v1074
        %v4763 = vmul.f32 %v3031, %v1075
        %v4764 = vmul.f32 %v3032, %v1076
        %v4765 = vmul.f32 %v3033, %v1077
        %v4766 = vmul.f32 %v3034, %v1078
        %v4767 = vmul.f32 %v3035, %v1079
        %v4768 = vmul.f32 %v3036, %v1080
        %v4769 = vmul.f32 %v3037, %v1081
        %v4770 = vmul.f32 %v3038, %v1082
        %v4771 = vmul.f32 %v3039, %v1083
        %v4772 = vmul.f32 %v3040, %v1084
        %v4773 = vmul.f32 %v3041, %v1085
        %v4774 = vmul.f32 %v3042, %v1086
        %v4775 = vmul.f32 %v3043, %v1087
        %v4776 = vmul.f32 %v3044, %v1088
        %v4777 = vmul.f32 %v3045, %v1089
        %v4778 = vmul.f32 %v3046, %v1090
        %v4779 = vmul.f32 %v3047, %v1091
        %v4780 = vmul.f32 %v3048, %v1092
        %v4781 = vmul.f32 %v3049, %v1093
        %v4782 = vmul.f32 %v3050, %v1094
        %v4783 = vmul.f32 %v3051, %v1095
        %v4784 = vmul.f32 %v3052, %v1096
        %v4785 = vmul.f32 %v3053, %v1097
        %v4786 = vmul.f32 %v3054, %v1098
        %v4787 = vmul.f32 %v3055, %v1099
        %v4788 = vmul.f32 %v3056, %v1100
        %v4789 = vmul.f32 %v3057, %v1101
        %v4790 = vmul.f32 %v3058, %v1102
        %v4791 = vmul.f32 %v3059, %v1103
        %v4792 = vadd.f32 %v4760, %v3705
        %v4793 = vadd.f32 %v4761, %v3706
        %v4794 = vadd.f32 %v4762, %v3707
        %v4795 = vadd.f32 %v4763, %v3708
        %v4796 = vadd.f32 %v4764, %v3709
        %v4797 = vadd.f32 %v4765, %v3710
        %v4798 = vadd.f32 %v4766, %v3711
        %v4799 = vadd.f32 %v4767, %v3712
        %v4800 = vadd.f32 %v4768, %v3713
        %v4801 = vadd.f32 %v4769, %v3714
        %v4802 = vadd.f32 %v4770, %v3715
        %v4803 = vadd.f32 %v4771, %v3716
        %v4804 = vadd.f32 %v4772, %v3717
        %v4805 = vadd.f32 %v4773, %v3718
        %v4806 = vadd.f32 %v4774, %v3719
        %v4807 = vadd.f32 %v4775, %v3720
        %v4808 = vadd.f32 %v4776, %v3721
        %v4809 = vadd.f32 %v4777, %v3722
        %v4810 = vadd.f32 %v4778, %v3723
        %v4811 = vadd.f32 %v4779, %v3724
        %v4812 = vadd.f32 %v4780, %v3725
        %v4813 = vadd.f32 %v4781, %v3726
        %v4814 = vadd.f32 %v4782, %v3727
        %v4815 = vadd.f32 %v4783, %v3728
        %v4816 = vadd.f32 %v4784, %v3729
        %v4817 = vadd.f32 %v4785, %v3730
        %v4818 = vadd.f32 %v4786, %v3731
        %v4819 = vadd.f32 %v4787, %v3732
        %v4820 = vadd.f32 %v4788, %v3733
        %v4821 = vadd.f32 %v4789, %v3734
        %v4822 = vadd.f32 %v4790, %v3735
        %v4823 = vadd.f32 %v4791, %v3736
        %v4824 = vmul.f32 %v4728, %v1168
        %v4825 = vmul.f32 %v4729, %v1169
        %v4826 = vmul.f32 %v4730, %v1170
        %v4827 = vmul.f32 %v4731, %v1171
        %v4828 = vmul.f32 %v4732, %v1172
        %v4829 = vmul.f32 %v4733, %v1173
        %v4830 = vmul.f32 %v4734, %v1174
        %v4831 = vmul.f32 %v4735, %v1175
        %v4832 = vmul.f32 %v4736, %v1176
        %v4833 = vmul.f32 %v4737, %v1177
        %v4834 = vmul.f32 %v4738, %v1178
        %v4835 = vmul.f32 %v4739, %v1179
        %v4836 = vmul.f32 %v4740, %v1180
        %v4837 = vmul.f32 %v4741, %v1181
        %v4838 = vmul.f32 %v4742, %v1182
        %v4839 = vmul.f32 %v4743, %v1183
        %v4840 = vmul.f32 %v4744, %v1184
        %v4841 = vmul.f32 %v4745, %v1185
        %v4842 = vmul.f32 %v4746, %v1186
        %v4843 = vmul.f32 %v4747, %v1187
        %v4844 = vmul.f32 %v4748, %v1188
        %v4845 = vmul.f32 %v4749, %v1189
        %v4846 = vmul.f32 %v4750, %v1190
        %v4847 = vmul.f32 %v4751, %v1191
        %v4848 = vmul.f32 %v4752, %v1192
        %v4849 = vmul.f32 %v4753, %v1193
        %v4850 = vmul.f32 %v4754, %v1194
        %v4851 = vmul.f32 %v4755, %v1195
        %v4852 = vmul.f32 %v4756, %v1196
        %v4853 = vmul.f32 %v4757, %v1197
        %v4854 = vmul.f32 %v4758, %v1198
        %v4855 = vmul.f32 %v4759, %v1199
        %v4856 = vadd.f32 %v4792, %v4824
        %v4857 = vadd.f32 %v4793, %v4825
        %v4858 = vadd.f32 %v4794, %v4826
        %v4859 = vadd.f32 %v4795, %v4827
        %v4860 = vadd.f32 %v4796, %v4828
        %v4861 = vadd.f32 %v4797, %v4829
        %v4862 = vadd.f32 %v4798, %v4830
        %v4863 = vadd.f32 %v4799, %v4831
        %v4864 = vadd.f32 %v4800, %v4832
        %v4865 = vadd.f32 %v4801, %v4833
        %v4866 = vadd.f32 %v4802, %v4834
        %v4867 = vadd.f32 %v4803, %v4835
        %v4868 = vadd.f32 %v4804, %v4836
        %v4869 = vadd.f32 %v4805, %v4837
        %v4870 = vadd.f32 %v4806, %v4838
        %v4871 = vadd.f32 %v4807, %v4839
        %v4872 = vadd.f32 %v4808, %v4840
        %v4873 = vadd.f32 %v4809, %v4841
        %v4874 = vadd.f32 %v4810, %v4842
        %v4875 = vadd.f32 %v4811, %v4843
        %v4876 = vadd.f32 %v4812, %v4844
        %v4877 = vadd.f32 %v4813, %v4845
        %v4878 = vadd.f32 %v4814, %v4846
        %v4879 = vadd.f32 %v4815, %v4847
        %v4880 = vadd.f32 %v4816, %v4848
        %v4881 = vadd.f32 %v4817, %v4849
        %v4882 = vadd.f32 %v4818, %v4850
        %v4883 = vadd.f32 %v4819, %v4851
        %v4884 = vadd.f32 %v4820, %v4852
        %v4885 = vadd.f32 %v4821, %v4853
        %v4886 = vadd.f32 %v4822, %v4854
        %v4887 = vadd.f32 %v4823, %v4855
        %v4888 = vld [vmem:[#allocation18] sm:$0x1]
        %v4890 = vlaneseq
        %v4891 = vshrl.u32 %v4890, 7
        %v4892 = vsub.s32 0, %v4891
        %v4893 = vrot.slane %v4888, %v4892
        %v4895 = vadd.f32 %v4856, %v4893
        %v4896 = vadd.f32 %v4857, %v4893
        %v4897 = vadd.f32 %v4858, %v4893
        %v4898 = vadd.f32 %v4859, %v4893
        %v4899 = vadd.f32 %v4860, %v4893
        %v4900 = vadd.f32 %v4861, %v4893
        %v4901 = vadd.f32 %v4862, %v4893
        %v4902 = vadd.f32 %v4863, %v4893
        %v4903 = vadd.f32 %v4864, %v4893
        %v4904 = vadd.f32 %v4865, %v4893
        %v4905 = vadd.f32 %v4866, %v4893
        %v4906 = vadd.f32 %v4867, %v4893
        %v4907 = vadd.f32 %v4868, %v4893
        %v4908 = vadd.f32 %v4869, %v4893
        %v4909 = vadd.f32 %v4870, %v4893
        %v4910 = vadd.f32 %v4871, %v4893
        %v4911 = vadd.f32 %v4872, %v4893
        %v4912 = vadd.f32 %v4873, %v4893
        %v4913 = vadd.f32 %v4874, %v4893
        %v4914 = vadd.f32 %v4875, %v4893
        %v4915 = vadd.f32 %v4876, %v4893
        %v4916 = vadd.f32 %v4877, %v4893
        %v4917 = vadd.f32 %v4878, %v4893
        %v4918 = vadd.f32 %v4879, %v4893
        %v4919 = vadd.f32 %v4880, %v4893
        %v4920 = vadd.f32 %v4881, %v4893
        %v4921 = vadd.f32 %v4882, %v4893
        %v4922 = vadd.f32 %v4883, %v4893
        %v4923 = vadd.f32 %v4884, %v4893
        %v4924 = vadd.f32 %v4885, %v4893
        %v4925 = vadd.f32 %v4886, %v4893
        %v4926 = vadd.f32 %v4887, %v4893
        %v4927 = vmax.f32 %v4895, 0.0
        %v4928 = vmax.f32 %v4896, 0.0
        %v4929 = vmax.f32 %v4897, 0.0
        %v4930 = vmax.f32 %v4898, 0.0
        %v4931 = vmax.f32 %v4899, 0.0
        %v4932 = vmax.f32 %v4900, 0.0
        %v4933 = vmax.f32 %v4901, 0.0
        %v4934 = vmax.f32 %v4902, 0.0
        %v4935 = vmax.f32 %v4903, 0.0
        %v4936 = vmax.f32 %v4904, 0.0
        %v4937 = vmax.f32 %v4905, 0.0
        %v4938 = vmax.f32 %v4906, 0.0
        %v4939 = vmax.f32 %v4907, 0.0
        %v4940 = vmax.f32 %v4908, 0.0
        %v4941 = vmax.f32 %v4909, 0.0
        %v4942 = vmax.f32 %v4910, 0.0
        %v4943 = vmax.f32 %v4911, 0.0
        %v4944 = vmax.f32 %v4912, 0.0
        %v4945 = vmax.f32 %v4913, 0.0
        %v4946 = vmax.f32 %v4914, 0.0
        %v4947 = vmax.f32 %v4915, 0.0
        %v4948 = vmax.f32 %v4916, 0.0
        %v4949 = vmax.f32 %v4917, 0.0
        %v4950 = vmax.f32 %v4918, 0.0
        %v4951 = vmax.f32 %v4919, 0.0
        %v4952 = vmax.f32 %v4920, 0.0
        %v4953 = vmax.f32 %v4921, 0.0
        %v4954 = vmax.f32 %v4922, 0.0
        %v4955 = vmax.f32 %v4923, 0.0
        %v4956 = vmax.f32 %v4924, 0.0
        %v4957 = vmax.f32 %v4925, 0.0
        %v4958 = vmax.f32 %v4926, 0.0
        %v4959 = vadd.f32 %v1569, %v4927
        %v4960 = vadd.f32 %v1570, %v4928
        %v4961 = vadd.f32 %v1571, %v4929
        %v4962 = vadd.f32 %v1572, %v4930
        %v4963 = vadd.f32 %v1573, %v4931
        %v4964 = vadd.f32 %v1574, %v4932
        %v4965 = vadd.f32 %v1575, %v4933
        %v4966 = vadd.f32 %v1576, %v4934
        %v4967 = vadd.f32 %v1577, %v4935
        %v4968 = vadd.f32 %v1578, %v4936
        %v4969 = vadd.f32 %v1579, %v4937
        %v4970 = vadd.f32 %v1580, %v4938
        %v4971 = vadd.f32 %v1581, %v4939
        %v4972 = vadd.f32 %v1582, %v4940
        %v4973 = vadd.f32 %v1583, %v4941
        %v4974 = vadd.f32 %v1584, %v4942
        %v4975 = vadd.f32 %v1585, %v4943
        %v4976 = vadd.f32 %v1586, %v4944
        %v4977 = vadd.f32 %v1587, %v4945
        %v4978 = vadd.f32 %v1588, %v4946
        %v4979 = vadd.f32 %v1589, %v4947
        %v4980 = vadd.f32 %v1590, %v4948
        %v4981 = vadd.f32 %v1591, %v4949
        %v4982 = vadd.f32 %v1592, %v4950
        %v4983 = vadd.f32 %v1593, %v4951
        %v4984 = vadd.f32 %v1594, %v4952
        %v4985 = vadd.f32 %v1595, %v4953
        %v4986 = vadd.f32 %v1596, %v4954
        %v4987 = vadd.f32 %v1597, %v4955
        %v4988 = vadd.f32 %v1598, %v4956
        %v4989 = vadd.f32 %v1599, %v4957
        %v4990 = vadd.f32 %v1600, %v4958
        %4991 = vst [vmem:[#allocation3] sm:$0xff] 0
        %4992 = vst [vmem:[#allocation3 + $0x8] sm:$0xff] 0
        %4993 = vst [vmem:[#allocation3 + $0x90] sm:$0xff] 0
        %4994 = vst [vmem:[#allocation3 + $0x98] sm:$0xff] 0
        %v4995 = vpack.c.bf16 %v4960, %v4959
        %v4996 = vpack.c.bf16 %v4962, %v4961
        %v4997 = vpack.c.bf16 %v4964, %v4963
        %v4998 = vpack.c.bf16 %v4966, %v4965
        %v4999 = vpack.c.bf16 %v4968, %v4967
        %v5000 = vpack.c.bf16 %v4970, %v4969
        %v5001 = vpack.c.bf16 %v4972, %v4971
        %v5002 = vpack.c.bf16 %v4974, %v4973
        %v5003 = vpack.c.bf16 %v4976, %v4975
        %v5004 = vpack.c.bf16 %v4978, %v4977
        %v5005 = vpack.c.bf16 %v4980, %v4979
        %v5006 = vpack.c.bf16 %v4982, %v4981
        %v5007 = vpack.c.bf16 %v4984, %v4983
        %v5008 = vpack.c.bf16 %v4986, %v4985
        %v5009 = vpack.c.bf16 %v4988, %v4987
        %v5010 = vpack.c.bf16 %v4990, %v4989
        %5011 = vst [vmem:[#allocation3 + $0x10] sm:$0xff] %v4995
        %5012 = vst [vmem:[#allocation3 + $0x18] sm:$0xff] %v4996
        %5013 = vst [vmem:[#allocation3 + $0x20] sm:$0xff] %v4997
        %5014 = vst [vmem:[#allocation3 + $0x28] sm:$0xff] %v4998
        %5015 = vst [vmem:[#allocation3 + $0x30] sm:$0xff] %v4999
        %5016 = vst [vmem:[#allocation3 + $0x38] sm:$0xff] %v5000
        %5017 = vst [vmem:[#allocation3 + $0x40] sm:$0xff] %v5001
        %5018 = vst [vmem:[#allocation3 + $0x48] sm:$0xff] %v5002
        %5019 = vst [vmem:[#allocation3 + $0x50] sm:$0xff] %v5003
        %5020 = vst [vmem:[#allocation3 + $0x58] sm:$0xff] %v5004
        %5021 = vst [vmem:[#allocation3 + $0x60] sm:$0xff] %v5005
        %5022 = vst [vmem:[#allocation3 + $0x68] sm:$0xff] %v5006
        %5023 = vst [vmem:[#allocation3 + $0x70] sm:$0xff] %v5007
        %5024 = vst [vmem:[#allocation3 + $0x78] sm:$0xff] %v5008
        %5025 = vst [vmem:[#allocation3 + $0x80] sm:$0xff] %v5009
        %5026 = vst [vmem:[#allocation3 + $0x88] sm:$0xff] %v5010
        %v5027 = vld [vmem:[#allocation3] sm:$0x80]
        %v5028 = vld [vmem:[#allocation3 + $0x8] sm:$0xff]
        %v5029 = vld [vmem:[#allocation3 + $0x10] sm:$0xff]
        %v5030 = vld [vmem:[#allocation3 + $0x18] sm:$0xff]
        %v5031 = vld [vmem:[#allocation3 + $0x20] sm:$0xff]
        %v5032 = vld [vmem:[#allocation3 + $0x28] sm:$0xff]
        %v5033 = vld [vmem:[#allocation3 + $0x30] sm:$0xff]
        %v5034 = vld [vmem:[#allocation3 + $0x38] sm:$0xff]
        %v5035 = vld [vmem:[#allocation3 + $0x40] sm:$0xff]
        %v5036 = vld [vmem:[#allocation3 + $0x48] sm:$0xff]
        %v5037 = vld [vmem:[#allocation3 + $0x50] sm:$0xff]
        %v5038 = vld [vmem:[#allocation3 + $0x58] sm:$0xff]
        %v5039 = vld [vmem:[#allocation3 + $0x60] sm:$0xff]
        %v5040 = vld [vmem:[#allocation3 + $0x68] sm:$0xff]
        %v5041 = vld [vmem:[#allocation3 + $0x70] sm:$0xff]
        %v5042 = vld [vmem:[#allocation3 + $0x78] sm:$0xff]
        %v5043 = vld [vmem:[#allocation3 + $0x80] sm:$0xff]
        %v5044 = vld [vmem:[#allocation19] sm:$0xf]
        %v5045 = vld [vmem:[#allocation19 + $0x4] sm:$0xf]
        %v5046 = vld [vmem:[#allocation19 + $0x8] sm:$0xf]
        %v5047 = vld [vmem:[#allocation19 + $0xc] sm:$0xf]
        %v5048 = vld [vmem:[#allocation19 + $0x10] sm:$0xf]
        %v5049 = vld [vmem:[#allocation19 + $0x14] sm:$0xf]
        %v5050 = vld [vmem:[#allocation19 + $0x18] sm:$0xf]
        %v5051 = vld [vmem:[#allocation19 + $0x1c] sm:$0xf]
        %v5052 = vld [vmem:[#allocation19 + $0x20] sm:$0xf]
        %v5053 = vld [vmem:[#allocation19 + $0x24] sm:$0xf]
        %v5054 = vld [vmem:[#allocation19 + $0x28] sm:$0xf]
        %v5055 = vld [vmem:[#allocation19 + $0x2c] sm:$0xf]
        %v5056 = vld [vmem:[#allocation19 + $0x30] sm:$0xf]
        %v5057 = vld [vmem:[#allocation19 + $0x34] sm:$0xf]
        %v5058 = vld [vmem:[#allocation19 + $0x38] sm:$0xf]
        %v5059 = vld [vmem:[#allocation19 + $0x3c] sm:$0xf]
        %v5060 = vld [vmem:[#allocation3 + $0x8] sm:$0x80]
        %v5061 = vld [vmem:[#allocation3 + $0x88] sm:$0xff]
        %v5062 = vld [vmem:[#allocation19 + $0xc0] sm:$0xf]
        %v5063 = vld [vmem:[#allocation19 + $0xc4] sm:$0xf]
        %v5064 = vld [vmem:[#allocation19 + $0xc8] sm:$0xf]
        %v5065 = vld [vmem:[#allocation19 + $0xcc] sm:$0xf]
        %v5066 = vld [vmem:[#allocation19 + $0xd0] sm:$0xf]
        %v5067 = vld [vmem:[#allocation19 + $0xd4] sm:$0xf]
        %v5068 = vld [vmem:[#allocation19 + $0xd8] sm:$0xf]
        %v5069 = vld [vmem:[#allocation19 + $0xdc] sm:$0xf]
        %v5070 = vld [vmem:[#allocation19 + $0xe0] sm:$0xf]
        %v5071 = vld [vmem:[#allocation19 + $0xe4] sm:$0xf]
        %v5072 = vld [vmem:[#allocation19 + $0xe8] sm:$0xf]
        %v5073 = vld [vmem:[#allocation19 + $0xec] sm:$0xf]
        %v5074 = vld [vmem:[#allocation19 + $0xf0] sm:$0xf]
        %v5075 = vld [vmem:[#allocation19 + $0xf4] sm:$0xf]
        %v5076 = vld [vmem:[#allocation19 + $0xf8] sm:$0xf]
        %v5077 = vld [vmem:[#allocation19 + $0xfc] sm:$0xf]
        %v5079 = vshrl.u32 %v5060, 16
        %v5081 = vrot.slane %v5079, 7
        %v5083 = vshrl.u32 %v5029, 16
        %v5085 = vrot.slane %v5083, 7
        %v5086 = vshll.u32 %v5029, 16
        %v5088 = vor.u32 %v5085, %v5086
        %v5089 = vsel %vm2068, %v5081, %v5088
        %v5091 = vshrl.u32 %v5030, 16
        %v5093 = vrot.slane %v5091, 7
        %v5094 = vshll.u32 %v5030, 16
        %v5096 = vor.u32 %v5093, %v5094
        %v5097 = vsel %vm2068, %v5085, %v5096
        %v5099 = vshrl.u32 %v5031, 16
        %v5101 = vrot.slane %v5099, 7
        %v5102 = vshll.u32 %v5031, 16
        %v5104 = vor.u32 %v5101, %v5102
        %v5105 = vsel %vm2068, %v5093, %v5104
        %v5107 = vshrl.u32 %v5032, 16
        %v5109 = vrot.slane %v5107, 7
        %v5110 = vshll.u32 %v5032, 16
        %v5112 = vor.u32 %v5109, %v5110
        %v5113 = vsel %vm2068, %v5101, %v5112
        %v5115 = vshrl.u32 %v5033, 16
        %v5117 = vrot.slane %v5115, 7
        %v5118 = vshll.u32 %v5033, 16
        %v5120 = vor.u32 %v5117, %v5118
        %v5121 = vsel %vm2068, %v5109, %v5120
        %v5123 = vshrl.u32 %v5034, 16
        %v5125 = vrot.slane %v5123, 7
        %v5126 = vshll.u32 %v5034, 16
        %v5128 = vor.u32 %v5125, %v5126
        %v5129 = vsel %vm2068, %v5117, %v5128
        %v5131 = vshrl.u32 %v5035, 16
        %v5133 = vrot.slane %v5131, 7
        %v5134 = vshll.u32 %v5035, 16
        %v5136 = vor.u32 %v5133, %v5134
        %v5137 = vsel %vm2068, %v5125, %v5136
        %v5139 = vshrl.u32 %v5036, 16
        %v5141 = vrot.slane %v5139, 7
        %v5142 = vshll.u32 %v5036, 16
        %v5144 = vor.u32 %v5141, %v5142
        %v5145 = vsel %vm2068, %v5133, %v5144
        %v5147 = vshrl.u32 %v5037, 16
        %v5149 = vrot.slane %v5147, 7
        %v5150 = vshll.u32 %v5037, 16
        %v5152 = vor.u32 %v5149, %v5150
        %v5153 = vsel %vm2068, %v5141, %v5152
        %v5155 = vshrl.u32 %v5038, 16
        %v5157 = vrot.slane %v5155, 7
        %v5158 = vshll.u32 %v5038, 16
        %v5160 = vor.u32 %v5157, %v5158
        %v5161 = vsel %vm2068, %v5149, %v5160
        %v5163 = vshrl.u32 %v5039, 16
        %v5165 = vrot.slane %v5163, 7
        %v5166 = vshll.u32 %v5039, 16
        %v5168 = vor.u32 %v5165, %v5166
        %v5169 = vsel %vm2068, %v5157, %v5168
        %v5171 = vshrl.u32 %v5040, 16
        %v5173 = vrot.slane %v5171, 7
        %v5174 = vshll.u32 %v5040, 16
        %v5176 = vor.u32 %v5173, %v5174
        %v5177 = vsel %vm2068, %v5165, %v5176
        %v5179 = vshrl.u32 %v5041, 16
        %v5181 = vrot.slane %v5179, 7
        %v5182 = vshll.u32 %v5041, 16
        %v5184 = vor.u32 %v5181, %v5182
        %v5185 = vsel %vm2068, %v5173, %v5184
        %v5187 = vshrl.u32 %v5042, 16
        %v5189 = vrot.slane %v5187, 7
        %v5190 = vshll.u32 %v5042, 16
        %v5192 = vor.u32 %v5189, %v5190
        %v5193 = vsel %vm2068, %v5181, %v5192
        %v5195 = vshrl.u32 %v5043, 16
        %v5197 = vrot.slane %v5195, 7
        %v5198 = vshll.u32 %v5043, 16
        %v5200 = vor.u32 %v5197, %v5198
        %v5201 = vsel %vm2068, %v5189, %v5200
        %v5203 = vshrl.u32 %v5061, 16
        %v5205 = vrot.slane %v5203, 7
        %v5206 = vshll.u32 %v5061, 16
        %v5208 = vor.u32 %v5205, %v5206
        %v5209 = vsel %vm2068, %v5197, %v5208
        %v5242 = vunpack.c.l.b16 %v5062
        %v5243 = vunpack.c.l.b16 %v5063
        %v5244 = vunpack.c.l.b16 %v5064
        %v5245 = vunpack.c.l.b16 %v5065
        %v5246 = vunpack.c.l.b16 %v5066
        %v5247 = vunpack.c.l.b16 %v5067
        %v5248 = vunpack.c.l.b16 %v5068
        %v5249 = vunpack.c.l.b16 %v5069
        %v5250 = vunpack.c.l.b16 %v5070
        %v5251 = vunpack.c.l.b16 %v5071
        %v5252 = vunpack.c.l.b16 %v5072
        %v5253 = vunpack.c.l.b16 %v5073
        %v5254 = vunpack.c.l.b16 %v5074
        %v5255 = vunpack.c.l.b16 %v5075
        %v5256 = vunpack.c.l.b16 %v5076
        %v5257 = vunpack.c.l.b16 %v5077
        %v5258 = vpack.c.b16 %v5243, %v5242
        %v5259 = vpack.c.b16 %v5245, %v5244
        %v5260 = vpack.c.b16 %v5247, %v5246
        %v5261 = vpack.c.b16 %v5249, %v5248
        %v5262 = vpack.c.b16 %v5251, %v5250
        %v5263 = vpack.c.b16 %v5253, %v5252
        %v5264 = vpack.c.b16 %v5255, %v5254
        %v5265 = vpack.c.b16 %v5257, %v5256
        %5274 = vmatprep.subr.bf16.mxu0 0
        %5275 = vmatpush1.bf16.msra.mxu0 %v5258
        %5276 = vmatprep.subr.bf16.mxu0 0
        %5277 = vmatpush1.bf16.msra.mxu0 %v5259
        %5278 = vmatprep.subr.bf16.mxu0 0
        %5279 = vmatpush1.bf16.msra.mxu0 %v5260
        %5280 = vmatprep.subr.bf16.mxu0 0
        %5281 = vmatpush1.bf16.msra.mxu0 %v5261
        %5282 = vmatprep.subr.bf16.mxu0 0
        %5283 = vmatpush1.bf16.msra.mxu0 %v5262
        %5284 = vmatprep.subr.bf16.mxu0 0
        %5285 = vmatpush1.bf16.msra.mxu0 %v5263
        %5286 = vmatprep.subr.bf16.mxu0 0
        %5287 = vmatpush1.bf16.msra.mxu0 %v5264
        %5288 = vmatprep.subr.bf16.mxu0 0
        %5289 = vmatpush1.bf16.msra.mxu0 %v5265
        %5290 = vmatprep.subr.bf16.mxu0 0
        %5291 = vmatpush1.bf16.msra.mxu0 0
        %5292 = vmatprep.subr.bf16.mxu0 0
        %5293 = vmatpush1.bf16.msra.mxu0 0
        %5294 = vmatprep.subr.bf16.mxu0 0
        %5295 = vmatpush1.bf16.msra.mxu0 0
        %5296 = vmatprep.subr.bf16.mxu0 0
        %5297 = vmatpush1.bf16.msra.mxu0 0
        %5298 = vmatprep.subr.bf16.mxu0 0
        %5299 = vmatpush1.bf16.msra.mxu0 0
        %5300 = vmatprep.subr.bf16.mxu0 0
        %5301 = vmatpush1.bf16.msra.mxu0 0
        %5302 = vmatprep.subr.bf16.mxu0 0
        %5303 = vmatpush1.bf16.msra.mxu0 0
        %5304 = vmatprep.subr.bf16.mxu0 0
        %5305 = vmatpush1.bf16.msra.mxu0 0
        %5306 = vmatprep.mubr.bf16.mxu0 0
        %5307 = vmatmul.mubr.bf16.gmra.mrb[0].mxu0 %v5089
        %v5308 = vpop.f32.mrb[0].mxu0
        %v5309 = vadd.f32 0.0, %v5308
        %v5310 = vpop.f32.mrb[0].mxu0
        %v5311 = vpop.f32.mrb[0].mxu0
        %v5312 = vadd.f32 0.0, %v5311
        %v5313 = vpop.f32.mrb[0].mxu0
        %5314 = vmatprep.mubr.bf16.mxu0 0
        %5315 = vmatmul.mubr.bf16.gmra.mrb[0].mxu0 %v5097
        %v5316 = vpop.f32.mrb[0].mxu0
        %v5317 = vadd.f32 0.0, %v5316
        %v5318 = vpop.f32.mrb[0].mxu0
        %v5319 = vpop.f32.mrb[0].mxu0
        %v5320 = vadd.f32 0.0, %v5319
        %v5321 = vpop.f32.mrb[0].mxu0
        %5322 = vmatprep.mubr.bf16.mxu0 0
        %5323 = vmatmul.mubr.bf16.gmra.mrb[0].mxu0 %v5105
        %v5324 = vpop.f32.mrb[0].mxu0
        %v5325 = vadd.f32 0.0, %v5324
        %v5326 = vpop.f32.mrb[0].mxu0
        %v5327 = vpop.f32.mrb[0].mxu0
        %v5328 = vadd.f32 0.0, %v5327
        %v5329 = vpop.f32.mrb[0].mxu0
        %5330 = vmatprep.mubr.bf16.mxu0 0
        %5331 = vmatmul.mubr.bf16.gmra.mrb[0].mxu0 %v5113
        %v5332 = vpop.f32.mrb[0].mxu0
        %v5333 = vadd.f32 0.0, %v5332
        %v5334 = vpop.f32.mrb[0].mxu0
        %v5335 = vpop.f32.mrb[0].mxu0
        %v5336 = vadd.f32 0.0, %v5335
        %v5337 = vpop.f32.mrb[0].mxu0
        %5338 = vmatprep.mubr.bf16.mxu0 0
        %5339 = vmatmul.mubr.bf16.gmra.mrb[0].mxu0 %v5121
        %v5340 = vpop.f32.mrb[0].mxu0
        %v5341 = vadd.f32 0.0, %v5340
        %v5342 = vpop.f32.mrb[0].mxu0
        %v5343 = vpop.f32.mrb[0].mxu0
        %v5344 = vadd.f32 0.0, %v5343
        %v5345 = vpop.f32.mrb[0].mxu0
        %5346 = vmatprep.mubr.bf16.mxu0 0
        %5347 = vmatmul.mubr.bf16.gmra.mrb[0].mxu0 %v5129
        %v5348 = vpop.f32.mrb[0].mxu0
        %v5349 = vadd.f32 0.0, %v5348
        %v5350 = vpop.f32.mrb[0].mxu0
        %v5351 = vpop.f32.mrb[0].mxu0
        %v5352 = vadd.f32 0.0, %v5351
        %v5353 = vpop.f32.mrb[0].mxu0
        %5354 = vmatprep.mubr.bf16.mxu0 0
        %5355 = vmatmul.mubr.bf16.gmra.mrb[0].mxu0 %v5137
        %v5356 = vpop.f32.mrb[0].mxu0
        %v5357 = vadd.f32 0.0, %v5356
        %v5358 = vpop.f32.mrb[0].mxu0
        %v5359 = vpop.f32.mrb[0].mxu0
        %v5360 = vadd.f32 0.0, %v5359
        %v5361 = vpop.f32.mrb[0].mxu0
        %5362 = vmatprep.mubr.bf16.mxu0 0
        %5363 = vmatmul.mubr.bf16.gmra.mrb[0].mxu0 %v5145
        %v5364 = vpop.f32.mrb[0].mxu0
        %v5365 = vadd.f32 0.0, %v5364
        %v5366 = vpop.f32.mrb[0].mxu0
        %v5367 = vpop.f32.mrb[0].mxu0
        %v5368 = vadd.f32 0.0, %v5367
        %v5369 = vpop.f32.mrb[0].mxu0
        %5370 = vmatprep.mubr.bf16.mxu0 0
        %5371 = vmatmul.mubr.bf16.gmra.mrb[0].mxu0 %v5153
        %v5372 = vpop.f32.mrb[0].mxu0
        %v5373 = vadd.f32 0.0, %v5372
        %v5374 = vpop.f32.mrb[0].mxu0
        %v5375 = vpop.f32.mrb[0].mxu0
        %v5376 = vadd.f32 0.0, %v5375
        %v5377 = vpop.f32.mrb[0].mxu0
        %5378 = vmatprep.mubr.bf16.mxu0 0
        %5379 = vmatmul.mubr.bf16.gmra.mrb[0].mxu0 %v5161
        %v5380 = vpop.f32.mrb[0].mxu0
        %v5381 = vadd.f32 0.0, %v5380
        %v5382 = vpop.f32.mrb[0].mxu0
        %v5383 = vpop.f32.mrb[0].mxu0
        %v5384 = vadd.f32 0.0, %v5383
        %v5385 = vpop.f32.mrb[0].mxu0
        %5386 = vmatprep.mubr.bf16.mxu0 0
        %5387 = vmatmul.mubr.bf16.gmra.mrb[0].mxu0 %v5169
        %v5388 = vpop.f32.mrb[0].mxu0
        %v5389 = vadd.f32 0.0, %v5388
        %v5390 = vpop.f32.mrb[0].mxu0
        %v5391 = vpop.f32.mrb[0].mxu0
        %v5392 = vadd.f32 0.0, %v5391
        %v5393 = vpop.f32.mrb[0].mxu0
        %5394 = vmatprep.mubr.bf16.mxu0 0
        %5395 = vmatmul.mubr.bf16.gmra.mrb[0].mxu0 %v5177
        %v5396 = vpop.f32.mrb[0].mxu0
        %v5397 = vadd.f32 0.0, %v5396
        %v5398 = vpop.f32.mrb[0].mxu0
        %v5399 = vpop.f32.mrb[0].mxu0
        %v5400 = vadd.f32 0.0, %v5399
        %v5401 = vpop.f32.mrb[0].mxu0
        %5402 = vmatprep.mubr.bf16.mxu0 0
        %5403 = vmatmul.mubr.bf16.gmra.mrb[0].mxu0 %v5185
        %v5404 = vpop.f32.mrb[0].mxu0
        %v5405 = vadd.f32 0.0, %v5404
        %v5406 = vpop.f32.mrb[0].mxu0
        %v5407 = vpop.f32.mrb[0].mxu0
        %v5408 = vadd.f32 0.0, %v5407
        %v5409 = vpop.f32.mrb[0].mxu0
        %5410 = vmatprep.mubr.bf16.mxu0 0
        %5411 = vmatmul.mubr.bf16.gmra.mrb[0].mxu0 %v5193
        %v5412 = vpop.f32.mrb[0].mxu0
        %v5413 = vadd.f32 0.0, %v5412
        %v5414 = vpop.f32.mrb[0].mxu0
        %v5415 = vpop.f32.mrb[0].mxu0
        %v5416 = vadd.f32 0.0, %v5415
        %v5417 = vpop.f32.mrb[0].mxu0
        %5418 = vmatprep.mubr.bf16.mxu0 0
        %5419 = vmatmul.mubr.bf16.gmra.mrb[0].mxu0 %v5201
        %v5420 = vpop.f32.mrb[0].mxu0
        %v5421 = vadd.f32 0.0, %v5420
        %v5422 = vpop.f32.mrb[0].mxu0
        %v5423 = vpop.f32.mrb[0].mxu0
        %v5424 = vadd.f32 0.0, %v5423
        %v5425 = vpop.f32.mrb[0].mxu0
        %5426 = vmatprep.mubr.bf16.mxu0 0
        %5427 = vmatmul.mubr.bf16.gmra.mrb[0].mxu0 %v5209
        %v5428 = vpop.f32.mrb[0].mxu0
        %v5429 = vadd.f32 0.0, %v5428
        %v5430 = vpop.f32.mrb[0].mxu0
        %v5431 = vpop.f32.mrb[0].mxu0
        %v5432 = vadd.f32 0.0, %v5431
        %v5433 = vpop.f32.mrb[0].mxu0
        %5434 = vdwg.mxu0
        %v5436 = vshrl.u32 %v5027, 16
        %v5438 = vrot.slane %v5436, 7
        %v5440 = vshrl.u32 %v5028, 16
        %v5442 = vrot.slane %v5440, 7
        %v5443 = vshll.u32 %v5028, 16
        %v5445 = vor.u32 %v5442, %v5443
        %v5446 = vsel %vm2068, %v5438, %v5445
        %v5447 = vsel %vm2068, %v5442, %v5088
        %v5466 = vunpack.c.l.b16 %v5044
        %v5467 = vunpack.c.l.b16 %v5045
        %v5468 = vunpack.c.l.b16 %v5046
        %v5469 = vunpack.c.l.b16 %v5047
        %v5470 = vunpack.c.l.b16 %v5048
        %v5471 = vunpack.c.l.b16 %v5049
        %v5472 = vunpack.c.l.b16 %v5050
        %v5473 = vunpack.c.l.b16 %v5051
        %v5474 = vunpack.c.l.b16 %v5052
        %v5475 = vunpack.c.l.b16 %v5053
        %v5476 = vunpack.c.l.b16 %v5054
        %v5477 = vunpack.c.l.b16 %v5055
        %v5478 = vunpack.c.l.b16 %v5056
        %v5479 = vunpack.c.l.b16 %v5057
        %v5480 = vunpack.c.l.b16 %v5058
        %v5481 = vunpack.c.l.b16 %v5059
        %v5482 = vpack.c.b16 %v5467, %v5466
        %v5483 = vpack.c.b16 %v5469, %v5468
        %v5484 = vpack.c.b16 %v5471, %v5470
        %v5485 = vpack.c.b16 %v5473, %v5472
        %v5486 = vpack.c.b16 %v5475, %v5474
        %v5487 = vpack.c.b16 %v5477, %v5476
        %v5488 = vpack.c.b16 %v5479, %v5478
        %v5489 = vpack.c.b16 %v5481, %v5480
        %5498 = vmatprep.subr.bf16.mxu0 0
        %5499 = vmatpush1.bf16.msra.mxu0 %v5482
        %5500 = vmatprep.subr.bf16.mxu0 0
        %5501 = vmatpush1.bf16.msra.mxu0 %v5483
        %5502 = vmatprep.subr.bf16.mxu0 0
        %5503 = vmatpush1.bf16.msra.mxu0 %v5484
        %5504 = vmatprep.subr.bf16.mxu0 0
        %5505 = vmatpush1.bf16.msra.mxu0 %v5485
        %5506 = vmatprep.subr.bf16.mxu0 0
        %5507 = vmatpush1.bf16.msra.mxu0 %v5486
        %5508 = vmatprep.subr.bf16.mxu0 0
        %5509 = vmatpush1.bf16.msra.mxu0 %v5487
        %5510 = vmatprep.subr.bf16.mxu0 0
        %5511 = vmatpush1.bf16.msra.mxu0 %v5488
        %5512 = vmatprep.subr.bf16.mxu0 0
        %5513 = vmatpush1.bf16.msra.mxu0 %v5489
        %5514 = vmatprep.subr.bf16.mxu0 0
        %5515 = vmatpush1.bf16.msra.mxu0 0
        %5516 = vmatprep.subr.bf16.mxu0 0
        %5517 = vmatpush1.bf16.msra.mxu0 0
        %5518 = vmatprep.subr.bf16.mxu0 0
        %5519 = vmatpush1.bf16.msra.mxu0 0
        %5520 = vmatprep.subr.bf16.mxu0 0
        %5521 = vmatpush1.bf16.msra.mxu0 0
        %5522 = vmatprep.subr.bf16.mxu0 0
        %5523 = vmatpush1.bf16.msra.mxu0 0
        %5524 = vmatprep.subr.bf16.mxu0 0
        %5525 = vmatpush1.bf16.msra.mxu0 0
        %5526 = vmatprep.subr.bf16.mxu0 0
        %5527 = vmatpush1.bf16.msra.mxu0 0
        %5528 = vmatprep.subr.bf16.mxu0 0
        %5529 = vmatpush1.bf16.msra.mxu0 0
        %5530 = vmatprep.mubr.bf16.mxu0 0
        %5531 = vmatmul.mubr.bf16.gmra.mrb[0].mxu0 %v5446
        %v5532 = vpop.f32.mrb[0].mxu0
        %v5533 = vadd.f32 %v5309, %v5532
        %v5534 = vpop.f32.mrb[0].mxu0
        %v5535 = vpop.f32.mrb[0].mxu0
        %v5536 = vadd.f32 %v5312, %v5535
        %v5537 = vpop.f32.mrb[0].mxu0
        %5538 = vmatprep.mubr.bf16.mxu0 0
        %5539 = vmatmul.mubr.bf16.gmra.mrb[0].mxu0 %v5447
        %v5540 = vpop.f32.mrb[0].mxu0
        %v5541 = vadd.f32 %v5317, %v5540
        %v5542 = vpop.f32.mrb[0].mxu0
        %v5543 = vpop.f32.mrb[0].mxu0
        %v5544 = vadd.f32 %v5320, %v5543
        %v5545 = vpop.f32.mrb[0].mxu0
        %5546 = vmatprep.mubr.bf16.mxu0 0
        %5547 = vmatmul.mubr.bf16.gmra.mrb[0].mxu0 %v5097
        %v5548 = vpop.f32.mrb[0].mxu0
        %v5549 = vadd.f32 %v5325, %v5548
        %v5550 = vpop.f32.mrb[0].mxu0
        %v5551 = vpop.f32.mrb[0].mxu0
        %v5552 = vadd.f32 %v5328, %v5551
        %v5553 = vpop.f32.mrb[0].mxu0
        %5554 = vmatprep.mubr.bf16.mxu0 0
        %5555 = vmatmul.mubr.bf16.gmra.mrb[0].mxu0 %v5105
        %v5556 = vpop.f32.mrb[0].mxu0
        %v5557 = vadd.f32 %v5333, %v5556
        %v5558 = vpop.f32.mrb[0].mxu0
        %v5559 = vpop.f32.mrb[0].mxu0
        %v5560 = vadd.f32 %v5336, %v5559
        %v5561 = vpop.f32.mrb[0].mxu0
        %5562 = vmatprep.mubr.bf16.mxu0 0
        %5563 = vmatmul.mubr.bf16.gmra.mrb[0].mxu0 %v5113
        %v5564 = vpop.f32.mrb[0].mxu0
        %v5565 = vadd.f32 %v5341, %v5564
        %v5566 = vpop.f32.mrb[0].mxu0
        %v5567 = vpop.f32.mrb[0].mxu0
        %v5568 = vadd.f32 %v5344, %v5567
        %v5569 = vpop.f32.mrb[0].mxu0
        %5570 = vmatprep.mubr.bf16.mxu0 0
        %5571 = vmatmul.mubr.bf16.gmra.mrb[0].mxu0 %v5121
        %v5572 = vpop.f32.mrb[0].mxu0
        %v5573 = vadd.f32 %v5349, %v5572
        %v5574 = vpop.f32.mrb[0].mxu0
        %v5575 = vpop.f32.mrb[0].mxu0
        %v5576 = vadd.f32 %v5352, %v5575
        %v5577 = vpop.f32.mrb[0].mxu0
        %5578 = vmatprep.mubr.bf16.mxu0 0
        %5579 = vmatmul.mubr.bf16.gmra.mrb[0].mxu0 %v5129
        %v5580 = vpop.f32.mrb[0].mxu0
        %v5581 = vadd.f32 %v5357, %v5580
        %v5582 = vpop.f32.mrb[0].mxu0
        %v5583 = vpop.f32.mrb[0].mxu0
        %v5584 = vadd.f32 %v5360, %v5583
        %v5585 = vpop.f32.mrb[0].mxu0
        %5586 = vmatprep.mubr.bf16.mxu0 0
        %5587 = vmatmul.mubr.bf16.gmra.mrb[0].mxu0 %v5137
        %v5588 = vpop.f32.mrb[0].mxu0
        %v5589 = vadd.f32 %v5365, %v5588
        %v5590 = vpop.f32.mrb[0].mxu0
        %v5591 = vpop.f32.mrb[0].mxu0
        %v5592 = vadd.f32 %v5368, %v5591
        %v5593 = vpop.f32.mrb[0].mxu0
        %5594 = vmatprep.mubr.bf16.mxu0 0
        %5595 = vmatmul.mubr.bf16.gmra.mrb[0].mxu0 %v5145
        %v5596 = vpop.f32.mrb[0].mxu0
        %v5597 = vadd.f32 %v5373, %v5596
        %v5598 = vpop.f32.mrb[0].mxu0
        %v5599 = vpop.f32.mrb[0].mxu0
        %v5600 = vadd.f32 %v5376, %v5599
        %v5601 = vpop.f32.mrb[0].mxu0
        %5602 = vmatprep.mubr.bf16.mxu0 0
        %5603 = vmatmul.mubr.bf16.gmra.mrb[0].mxu0 %v5153
        %v5604 = vpop.f32.mrb[0].mxu0
        %v5605 = vadd.f32 %v5381, %v5604
        %v5606 = vpop.f32.mrb[0].mxu0
        %v5607 = vpop.f32.mrb[0].mxu0
        %v5608 = vadd.f32 %v5384, %v5607
        %v5609 = vpop.f32.mrb[0].mxu0
        %5610 = vmatprep.mubr.bf16.mxu0 0
        %5611 = vmatmul.mubr.bf16.gmra.mrb[0].mxu0 %v5161
        %v5612 = vpop.f32.mrb[0].mxu0
        %v5613 = vadd.f32 %v5389, %v5612
        %v5614 = vpop.f32.mrb[0].mxu0
        %v5615 = vpop.f32.mrb[0].mxu0
        %v5616 = vadd.f32 %v5392, %v5615
        %v5617 = vpop.f32.mrb[0].mxu0
        %5618 = vmatprep.mubr.bf16.mxu0 0
        %5619 = vmatmul.mubr.bf16.gmra.mrb[0].mxu0 %v5169
        %v5620 = vpop.f32.mrb[0].mxu0
        %v5621 = vadd.f32 %v5397, %v5620
        %v5622 = vpop.f32.mrb[0].mxu0
        %v5623 = vpop.f32.mrb[0].mxu0
        %v5624 = vadd.f32 %v5400, %v5623
        %v5625 = vpop.f32.mrb[0].mxu0
        %5626 = vmatprep.mubr.bf16.mxu0 0
        %5627 = vmatmul.mubr.bf16.gmra.mrb[0].mxu0 %v5177
        %v5628 = vpop.f32.mrb[0].mxu0
        %v5629 = vadd.f32 %v5405, %v5628
        %v5630 = vpop.f32.mrb[0].mxu0
        %v5631 = vpop.f32.mrb[0].mxu0
        %v5632 = vadd.f32 %v5408, %v5631
        %v5633 = vpop.f32.mrb[0].mxu0
        %5634 = vmatprep.mubr.bf16.mxu0 0
        %5635 = vmatmul.mubr.bf16.gmra.mrb[0].mxu0 %v5185
        %v5636 = vpop.f32.mrb[0].mxu0
        %v5637 = vadd.f32 %v5413, %v5636
        %v5638 = vpop.f32.mrb[0].mxu0
        %v5639 = vpop.f32.mrb[0].mxu0
        %v5640 = vadd.f32 %v5416, %v5639
        %v5641 = vpop.f32.mrb[0].mxu0
        %5642 = vmatprep.mubr.bf16.mxu0 0
        %5643 = vmatmul.mubr.bf16.gmra.mrb[0].mxu0 %v5193
        %v5644 = vpop.f32.mrb[0].mxu0
        %v5645 = vadd.f32 %v5421, %v5644
        %v5646 = vpop.f32.mrb[0].mxu0
        %v5647 = vpop.f32.mrb[0].mxu0
        %v5648 = vadd.f32 %v5424, %v5647
        %v5649 = vpop.f32.mrb[0].mxu0
        %5650 = vmatprep.mubr.bf16.mxu0 0
        %5651 = vmatmul.mubr.bf16.gmra.mrb[0].mxu0 %v5201
        %v5652 = vpop.f32.mrb[0].mxu0
        %v5653 = vadd.f32 %v5429, %v5652
        %v5654 = vpop.f32.mrb[0].mxu0
        %v5655 = vpop.f32.mrb[0].mxu0
        %v5656 = vadd.f32 %v5432, %v5655
        %v5657 = vpop.f32.mrb[0].mxu0
        %5658 = vdwg.mxu0
        %v5659 = vld [vmem:[#allocation3 + $0x10] sm:$0x80]
        %v5660 = vld [vmem:[#allocation3 + $0x18] sm:$0xff]
        %v5661 = vld [vmem:[#allocation3 + $0x20] sm:$0xff]
        %v5662 = vld [vmem:[#allocation3 + $0x28] sm:$0xff]
        %v5663 = vld [vmem:[#allocation3 + $0x30] sm:$0xff]
        %v5664 = vld [vmem:[#allocation3 + $0x38] sm:$0xff]
        %v5665 = vld [vmem:[#allocation3 + $0x40] sm:$0xff]
        %v5666 = vld [vmem:[#allocation3 + $0x48] sm:$0xff]
        %v5667 = vld [vmem:[#allocation3 + $0x50] sm:$0xff]
        %v5668 = vld [vmem:[#allocation3 + $0x58] sm:$0xff]
        %v5669 = vld [vmem:[#allocation3 + $0x60] sm:$0xff]
        %v5670 = vld [vmem:[#allocation3 + $0x68] sm:$0xff]
        %v5671 = vld [vmem:[#allocation3 + $0x70] sm:$0xff]
        %v5672 = vld [vmem:[#allocation3 + $0x78] sm:$0xff]
        %v5673 = vld [vmem:[#allocation3 + $0x80] sm:$0xff]
        %v5674 = vld [vmem:[#allocation3 + $0x88] sm:$0xff]
        %v5675 = vld [vmem:[#allocation3 + $0x90] sm:$0xff]
        %v5676 = vld [vmem:[#allocation19 + $0x180] sm:$0xf]
        %v5677 = vld [vmem:[#allocation19 + $0x184] sm:$0xf]
        %v5678 = vld [vmem:[#allocation19 + $0x188] sm:$0xf]
        %v5679 = vld [vmem:[#allocation19 + $0x18c] sm:$0xf]
        %v5680 = vld [vmem:[#allocation19 + $0x190] sm:$0xf]
        %v5681 = vld [vmem:[#allocation19 + $0x194] sm:$0xf]
        %v5682 = vld [vmem:[#allocation19 + $0x198] sm:$0xf]
        %v5683 = vld [vmem:[#allocation19 + $0x19c] sm:$0xf]
        %v5684 = vld [vmem:[#allocation19 + $0x1a0] sm:$0xf]
        %v5685 = vld [vmem:[#allocation19 + $0x1a4] sm:$0xf]
        %v5686 = vld [vmem:[#allocation19 + $0x1a8] sm:$0xf]
        %v5687 = vld [vmem:[#allocation19 + $0x1ac] sm:$0xf]
        %v5688 = vld [vmem:[#allocation19 + $0x1b0] sm:$0xf]
        %v5689 = vld [vmem:[#allocation19 + $0x1b4] sm:$0xf]
        %v5690 = vld [vmem:[#allocation19 + $0x1b8] sm:$0xf]
        %v5691 = vld [vmem:[#allocation19 + $0x1bc] sm:$0xf]
        %v5693 = vshrl.u32 %v5659, 16
        %v5695 = vrot.slane %v5693, 7
        %v5697 = vshrl.u32 %v5660, 16
        %v5699 = vrot.slane %v5697, 7
        %v5700 = vshll.u32 %v5660, 16
        %v5702 = vor.u32 %v5699, %v5700
        %v5703 = vsel %vm2068, %v5695, %v5702
        %v5705 = vshrl.u32 %v5661, 16
        %v5707 = vrot.slane %v5705, 7
        %v5708 = vshll.u32 %v5661, 16
        %v5710 = vor.u32 %v5707, %v5708
        %v5711 = vsel %vm2068, %v5699, %v5710
        %v5713 = vshrl.u32 %v5662, 16
        %v5715 = vrot.slane %v5713, 7
        %v5716 = vshll.u32 %v5662, 16
        %v5718 = vor.u32 %v5715, %v5716
        %v5719 = vsel %vm2068, %v5707, %v5718
        %v5721 = vshrl.u32 %v5663, 16
        %v5723 = vrot.slane %v5721, 7
        %v5724 = vshll.u32 %v5663, 16
        %v5726 = vor.u32 %v5723, %v5724
        %v5727 = vsel %vm2068, %v5715, %v5726
        %v5729 = vshrl.u32 %v5664, 16
        %v5731 = vrot.slane %v5729, 7
        %v5732 = vshll.u32 %v5664, 16
        %v5734 = vor.u32 %v5731, %v5732
        %v5735 = vsel %vm2068, %v5723, %v5734
        %v5737 = vshrl.u32 %v5665, 16
        %v5739 = vrot.slane %v5737, 7
        %v5740 = vshll.u32 %v5665, 16
        %v5742 = vor.u32 %v5739, %v5740
        %v5743 = vsel %vm2068, %v5731, %v5742
        %v5745 = vshrl.u32 %v5666, 16
        %v5747 = vrot.slane %v5745, 7
        %v5748 = vshll.u32 %v5666, 16
        %v5750 = vor.u32 %v5747, %v5748
        %v5751 = vsel %vm2068, %v5739, %v5750
        %v5753 = vshrl.u32 %v5667, 16
        %v5755 = vrot.slane %v5753, 7
        %v5756 = vshll.u32 %v5667, 16
        %v5758 = vor.u32 %v5755, %v5756
        %v5759 = vsel %vm2068, %v5747, %v5758
        %v5761 = vshrl.u32 %v5668, 16
        %v5763 = vrot.slane %v5761, 7
        %v5764 = vshll.u32 %v5668, 16
        %v5766 = vor.u32 %v5763, %v5764
        %v5767 = vsel %vm2068, %v5755, %v5766
        %v5769 = vshrl.u32 %v5669, 16
        %v5771 = vrot.slane %v5769, 7
        %v5772 = vshll.u32 %v5669, 16
        %v5774 = vor.u32 %v5771, %v5772
        %v5775 = vsel %vm2068, %v5763, %v5774
        %v5777 = vshrl.u32 %v5670, 16
        %v5779 = vrot.slane %v5777, 7
        %v5780 = vshll.u32 %v5670, 16
        %v5782 = vor.u32 %v5779, %v5780
        %v5783 = vsel %vm2068, %v5771, %v5782
        %v5785 = vshrl.u32 %v5671, 16
        %v5787 = vrot.slane %v5785, 7
        %v5788 = vshll.u32 %v5671, 16
        %v5790 = vor.u32 %v5787, %v5788
        %v5791 = vsel %vm2068, %v5779, %v5790
        %v5793 = vshrl.u32 %v5672, 16
        %v5795 = vrot.slane %v5793, 7
        %v5796 = vshll.u32 %v5672, 16
        %v5798 = vor.u32 %v5795, %v5796
        %v5799 = vsel %vm2068, %v5787, %v5798
        %v5801 = vshrl.u32 %v5673, 16
        %v5803 = vrot.slane %v5801, 7
        %v5804 = vshll.u32 %v5673, 16
        %v5806 = vor.u32 %v5803, %v5804
        %v5807 = vsel %vm2068, %v5795, %v5806
        %v5809 = vshrl.u32 %v5674, 16
        %v5811 = vrot.slane %v5809, 7
        %v5812 = vshll.u32 %v5674, 16
        %v5814 = vor.u32 %v5811, %v5812
        %v5815 = vsel %vm2068, %v5803, %v5814
        %v5817 = vshrl.u32 %v5675, 16
        %v5819 = vrot.slane %v5817, 7
        %v5820 = vshll.u32 %v5675, 16
        %v5822 = vor.u32 %v5819, %v5820
        %v5823 = vsel %vm2068, %v5811, %v5822
        %v5856 = vunpack.c.l.b16 %v5676
        %v5857 = vunpack.c.l.b16 %v5677
        %v5858 = vunpack.c.l.b16 %v5678
        %v5859 = vunpack.c.l.b16 %v5679
        %v5860 = vunpack.c.l.b16 %v5680
        %v5861 = vunpack.c.l.b16 %v5681
        %v5862 = vunpack.c.l.b16 %v5682
        %v5863 = vunpack.c.l.b16 %v5683
        %v5864 = vunpack.c.l.b16 %v5684
        %v5865 = vunpack.c.l.b16 %v5685
        %v5866 = vunpack.c.l.b16 %v5686
        %v5867 = vunpack.c.l.b16 %v5687
        %v5868 = vunpack.c.l.b16 %v5688
        %v5869 = vunpack.c.l.b16 %v5689
        %v5870 = vunpack.c.l.b16 %v5690
        %v5871 = vunpack.c.l.b16 %v5691
        %v5872 = vpack.c.b16 %v5857, %v5856
        %v5873 = vpack.c.b16 %v5859, %v5858
        %v5874 = vpack.c.b16 %v5861, %v5860
        %v5875 = vpack.c.b16 %v5863, %v5862
        %v5876 = vpack.c.b16 %v5865, %v5864
        %v5877 = vpack.c.b16 %v5867, %v5866
        %v5878 = vpack.c.b16 %v5869, %v5868
        %v5879 = vpack.c.b16 %v5871, %v5870
        %5888 = vmatprep.subr.bf16.mxu0 0
        %5889 = vmatpush1.bf16.msra.mxu0 %v5872
        %5890 = vmatprep.subr.bf16.mxu0 0
        %5891 = vmatpush1.bf16.msra.mxu0 %v5873
        %5892 = vmatprep.subr.bf16.mxu0 0
        %5893 = vmatpush1.bf16.msra.mxu0 %v5874
        %5894 = vmatprep.subr.bf16.mxu0 0
        %5895 = vmatpush1.bf16.msra.mxu0 %v5875
        %5896 = vmatprep.subr.bf16.mxu0 0
        %5897 = vmatpush1.bf16.msra.mxu0 %v5876
        %5898 = vmatprep.subr.bf16.mxu0 0
        %5899 = vmatpush1.bf16.msra.mxu0 %v5877
        %5900 = vmatprep.subr.bf16.mxu0 0
        %5901 = vmatpush1.bf16.msra.mxu0 %v5878
        %5902 = vmatprep.subr.bf16.mxu0 0
        %5903 = vmatpush1.bf16.msra.mxu0 %v5879
        %5904 = vmatprep.subr.bf16.mxu0 0
        %5905 = vmatpush1.bf16.msra.mxu0 0
        %5906 = vmatprep.subr.bf16.mxu0 0
        %5907 = vmatpush1.bf16.msra.mxu0 0
        %5908 = vmatprep.subr.bf16.mxu0 0
        %5909 = vmatpush1.bf16.msra.mxu0 0
        %5910 = vmatprep.subr.bf16.mxu0 0
        %5911 = vmatpush1.bf16.msra.mxu0 0
        %5912 = vmatprep.subr.bf16.mxu0 0
        %5913 = vmatpush1.bf16.msra.mxu0 0
        %5914 = vmatprep.subr.bf16.mxu0 0
        %5915 = vmatpush1.bf16.msra.mxu0 0
        %5916 = vmatprep.subr.bf16.mxu0 0
        %5917 = vmatpush1.bf16.msra.mxu0 0
        %5918 = vmatprep.subr.bf16.mxu0 0
        %5919 = vmatpush1.bf16.msra.mxu0 0
        %5920 = vmatprep.mubr.bf16.mxu0 0
        %5921 = vmatmul.mubr.bf16.gmra.mrb[0].mxu0 %v5703
        %v5922 = vpop.f32.mrb[0].mxu0
        %v5923 = vadd.f32 0.0, %v5922
        %v5924 = vpop.f32.mrb[0].mxu0
        %v5925 = vpop.f32.mrb[0].mxu0
        %v5926 = vadd.f32 0.0, %v5925
        %v5927 = vpop.f32.mrb[0].mxu0
        %5928 = vmatprep.mubr.bf16.mxu0 0
        %5929 = vmatmul.mubr.bf16.gmra.mrb[0].mxu0 %v5711
        %v5930 = vpop.f32.mrb[0].mxu0
        %v5931 = vadd.f32 0.0, %v5930
        %v5932 = vpop.f32.mrb[0].mxu0
        %v5933 = vpop.f32.mrb[0].mxu0
        %v5934 = vadd.f32 0.0, %v5933
        %v5935 = vpop.f32.mrb[0].mxu0
        %5936 = vmatprep.mubr.bf16.mxu0 0
        %5937 = vmatmul.mubr.bf16.gmra.mrb[0].mxu0 %v5719
        %v5938 = vpop.f32.mrb[0].mxu0
        %v5939 = vadd.f32 0.0, %v5938
        %v5940 = vpop.f32.mrb[0].mxu0
        %v5941 = vpop.f32.mrb[0].mxu0
        %v5942 = vadd.f32 0.0, %v5941
        %v5943 = vpop.f32.mrb[0].mxu0
        %5944 = vmatprep.mubr.bf16.mxu0 0
        %5945 = vmatmul.mubr.bf16.gmra.mrb[0].mxu0 %v5727
        %v5946 = vpop.f32.mrb[0].mxu0
        %v5947 = vadd.f32 0.0, %v5946
        %v5948 = vpop.f32.mrb[0].mxu0
        %v5949 = vpop.f32.mrb[0].mxu0
        %v5950 = vadd.f32 0.0, %v5949
        %v5951 = vpop.f32.mrb[0].mxu0
        %5952 = vmatprep.mubr.bf16.mxu0 0
        %5953 = vmatmul.mubr.bf16.gmra.mrb[0].mxu0 %v5735
        %v5954 = vpop.f32.mrb[0].mxu0
        %v5955 = vadd.f32 0.0, %v5954
        %v5956 = vpop.f32.mrb[0].mxu0
        %v5957 = vpop.f32.mrb[0].mxu0
        %v5958 = vadd.f32 0.0, %v5957
        %v5959 = vpop.f32.mrb[0].mxu0
        %5960 = vmatprep.mubr.bf16.mxu0 0
        %5961 = vmatmul.mubr.bf16.gmra.mrb[0].mxu0 %v5743
        %v5962 = vpop.f32.mrb[0].mxu0
        %v5963 = vadd.f32 0.0, %v5962
        %v5964 = vpop.f32.mrb[0].mxu0
        %v5965 = vpop.f32.mrb[0].mxu0
        %v5966 = vadd.f32 0.0, %v5965
        %v5967 = vpop.f32.mrb[0].mxu0
        %5968 = vmatprep.mubr.bf16.mxu0 0
        %5969 = vmatmul.mubr.bf16.gmra.mrb[0].mxu0 %v5751
        %v5970 = vpop.f32.mrb[0].mxu0
        %v5971 = vadd.f32 0.0, %v5970
        %v5972 = vpop.f32.mrb[0].mxu0
        %v5973 = vpop.f32.mrb[0].mxu0
        %v5974 = vadd.f32 0.0, %v5973
        %v5975 = vpop.f32.mrb[0].mxu0
        %5976 = vmatprep.mubr.bf16.mxu0 0
        %5977 = vmatmul.mubr.bf16.gmra.mrb[0].mxu0 %v5759
        %v5978 = vpop.f32.mrb[0].mxu0
        %v5979 = vadd.f32 0.0, %v5978
        %v5980 = vpop.f32.mrb[0].mxu0
        %v5981 = vpop.f32.mrb[0].mxu0
        %v5982 = vadd.f32 0.0, %v5981
        %v5983 = vpop.f32.mrb[0].mxu0
        %5984 = vmatprep.mubr.bf16.mxu0 0
        %5985 = vmatmul.mubr.bf16.gmra.mrb[0].mxu0 %v5767
        %v5986 = vpop.f32.mrb[0].mxu0
        %v5987 = vadd.f32 0.0, %v5986
        %v5988 = vpop.f32.mrb[0].mxu0
        %v5989 = vpop.f32.mrb[0].mxu0
        %v5990 = vadd.f32 0.0, %v5989
        %v5991 = vpop.f32.mrb[0].mxu0
        %5992 = vmatprep.mubr.bf16.mxu0 0
        %5993 = vmatmul.mubr.bf16.gmra.mrb[0].mxu0 %v5775
        %v5994 = vpop.f32.mrb[0].mxu0
        %v5995 = vadd.f32 0.0, %v5994
        %v5996 = vpop.f32.mrb[0].mxu0
        %v5997 = vpop.f32.mrb[0].mxu0
        %v5998 = vadd.f32 0.0, %v5997
        %v5999 = vpop.f32.mrb[0].mxu0
        %6000 = vmatprep.mubr.bf16.mxu0 0
        %6001 = vmatmul.mubr.bf16.gmra.mrb[0].mxu0 %v5783
        %v6002 = vpop.f32.mrb[0].mxu0
        %v6003 = vadd.f32 0.0, %v6002
        %v6004 = vpop.f32.mrb[0].mxu0
        %v6005 = vpop.f32.mrb[0].mxu0
        %v6006 = vadd.f32 0.0, %v6005
        %v6007 = vpop.f32.mrb[0].mxu0
        %6008 = vmatprep.mubr.bf16.mxu0 0
        %6009 = vmatmul.mubr.bf16.gmra.mrb[0].mxu0 %v5791
        %v6010 = vpop.f32.mrb[0].mxu0
        %v6011 = vadd.f32 0.0, %v6010
        %v6012 = vpop.f32.mrb[0].mxu0
        %v6013 = vpop.f32.mrb[0].mxu0
        %v6014 = vadd.f32 0.0, %v6013
        %v6015 = vpop.f32.mrb[0].mxu0
        %6016 = vmatprep.mubr.bf16.mxu0 0
        %6017 = vmatmul.mubr.bf16.gmra.mrb[0].mxu0 %v5799
        %v6018 = vpop.f32.mrb[0].mxu0
        %v6019 = vadd.f32 0.0, %v6018
        %v6020 = vpop.f32.mrb[0].mxu0
        %v6021 = vpop.f32.mrb[0].mxu0
        %v6022 = vadd.f32 0.0, %v6021
        %v6023 = vpop.f32.mrb[0].mxu0
        %6024 = vmatprep.mubr.bf16.mxu0 0
        %6025 = vmatmul.mubr.bf16.gmra.mrb[0].mxu0 %v5807
        %v6026 = vpop.f32.mrb[0].mxu0
        %v6027 = vadd.f32 0.0, %v6026
        %v6028 = vpop.f32.mrb[0].mxu0
        %v6029 = vpop.f32.mrb[0].mxu0
        %v6030 = vadd.f32 0.0, %v6029
        %v6031 = vpop.f32.mrb[0].mxu0
        %6032 = vmatprep.mubr.bf16.mxu0 0
        %6033 = vmatmul.mubr.bf16.gmra.mrb[0].mxu0 %v5815
        %v6034 = vpop.f32.mrb[0].mxu0
        %v6035 = vadd.f32 0.0, %v6034
        %v6036 = vpop.f32.mrb[0].mxu0
        %v6037 = vpop.f32.mrb[0].mxu0
        %v6038 = vadd.f32 0.0, %v6037
        %v6039 = vpop.f32.mrb[0].mxu0
        %6040 = vmatprep.mubr.bf16.mxu0 0
        %6041 = vmatmul.mubr.bf16.gmra.mrb[0].mxu0 %v5823
        %v6042 = vpop.f32.mrb[0].mxu0
        %v6043 = vadd.f32 0.0, %v6042
        %v6044 = vpop.f32.mrb[0].mxu0
        %v6045 = vpop.f32.mrb[0].mxu0
        %v6046 = vadd.f32 0.0, %v6045
        %v6047 = vpop.f32.mrb[0].mxu0
        %6048 = vdwg.mxu0
        %v6049 = vadd.f32 %v5533, %v5923
        %v6050 = vadd.f32 %v5536, %v5926
        %v6051 = vadd.f32 %v5541, %v5931
        %v6052 = vadd.f32 %v5544, %v5934
        %v6053 = vadd.f32 %v5549, %v5939
        %v6054 = vadd.f32 %v5552, %v5942
        %v6055 = vadd.f32 %v5557, %v5947
        %v6056 = vadd.f32 %v5560, %v5950
        %v6057 = vadd.f32 %v5565, %v5955
        %v6058 = vadd.f32 %v5568, %v5958
        %v6059 = vadd.f32 %v5573, %v5963
        %v6060 = vadd.f32 %v5576, %v5966
        %v6061 = vadd.f32 %v5581, %v5971
        %v6062 = vadd.f32 %v5584, %v5974
        %v6063 = vadd.f32 %v5589, %v5979
        %v6064 = vadd.f32 %v5592, %v5982
        %v6065 = vadd.f32 %v5597, %v5987
        %v6066 = vadd.f32 %v5600, %v5990
        %v6067 = vadd.f32 %v5605, %v5995
        %v6068 = vadd.f32 %v5608, %v5998
        %v6069 = vadd.f32 %v5613, %v6003
        %v6070 = vadd.f32 %v5616, %v6006
        %v6071 = vadd.f32 %v5621, %v6011
        %v6072 = vadd.f32 %v5624, %v6014
        %v6073 = vadd.f32 %v5629, %v6019
        %v6074 = vadd.f32 %v5632, %v6022
        %v6075 = vadd.f32 %v5637, %v6027
        %v6076 = vadd.f32 %v5640, %v6030
        %v6077 = vadd.f32 %v5645, %v6035
        %v6078 = vadd.f32 %v5648, %v6038
        %v6079 = vadd.f32 %v5653, %v6043
        %v6080 = vadd.f32 %v5656, %v6046
        %v6081 = vld [vmem:[#allocation19 + $0x40] sm:$0xf]
        %v6082 = vld [vmem:[#allocation19 + $0x44] sm:$0xf]
        %v6083 = vld [vmem:[#allocation19 + $0x48] sm:$0xf]
        %v6084 = vld [vmem:[#allocation19 + $0x4c] sm:$0xf]
        %v6085 = vld [vmem:[#allocation19 + $0x50] sm:$0xf]
        %v6086 = vld [vmem:[#allocation19 + $0x54] sm:$0xf]
        %v6087 = vld [vmem:[#allocation19 + $0x58] sm:$0xf]
        %v6088 = vld [vmem:[#allocation19 + $0x5c] sm:$0xf]
        %v6089 = vld [vmem:[#allocation19 + $0x60] sm:$0xf]
        %v6090 = vld [vmem:[#allocation19 + $0x64] sm:$0xf]
        %v6091 = vld [vmem:[#allocation19 + $0x68] sm:$0xf]
        %v6092 = vld [vmem:[#allocation19 + $0x6c] sm:$0xf]
        %v6093 = vld [vmem:[#allocation19 + $0x70] sm:$0xf]
        %v6094 = vld [vmem:[#allocation19 + $0x74] sm:$0xf]
        %v6095 = vld [vmem:[#allocation19 + $0x78] sm:$0xf]
        %v6096 = vld [vmem:[#allocation19 + $0x7c] sm:$0xf]
        %v6097 = vld [vmem:[#allocation19 + $0x100] sm:$0xf]
        %v6098 = vld [vmem:[#allocation19 + $0x104] sm:$0xf]
        %v6099 = vld [vmem:[#allocation19 + $0x108] sm:$0xf]
        %v6100 = vld [vmem:[#allocation19 + $0x10c] sm:$0xf]
        %v6101 = vld [vmem:[#allocation19 + $0x110] sm:$0xf]
        %v6102 = vld [vmem:[#allocation19 + $0x114] sm:$0xf]
        %v6103 = vld [vmem:[#allocation19 + $0x118] sm:$0xf]
        %v6104 = vld [vmem:[#allocation19 + $0x11c] sm:$0xf]
        %v6105 = vld [vmem:[#allocation19 + $0x120] sm:$0xf]
        %v6106 = vld [vmem:[#allocation19 + $0x124] sm:$0xf]
        %v6107 = vld [vmem:[#allocation19 + $0x128] sm:$0xf]
        %v6108 = vld [vmem:[#allocation19 + $0x12c] sm:$0xf]
        %v6109 = vld [vmem:[#allocation19 + $0x130] sm:$0xf]
        %v6110 = vld [vmem:[#allocation19 + $0x134] sm:$0xf]
        %v6111 = vld [vmem:[#allocation19 + $0x138] sm:$0xf]
        %v6112 = vld [vmem:[#allocation19 + $0x13c] sm:$0xf]
        %v6129 = vunpack.c.l.b16 %v6097
        %v6130 = vunpack.c.l.b16 %v6098
        %v6131 = vunpack.c.l.b16 %v6099
        %v6132 = vunpack.c.l.b16 %v6100
        %v6133 = vunpack.c.l.b16 %v6101
        %v6134 = vunpack.c.l.b16 %v6102
        %v6135 = vunpack.c.l.b16 %v6103
        %v6136 = vunpack.c.l.b16 %v6104
        %v6137 = vunpack.c.l.b16 %v6105
        %v6138 = vunpack.c.l.b16 %v6106
        %v6139 = vunpack.c.l.b16 %v6107
        %v6140 = vunpack.c.l.b16 %v6108
        %v6141 = vunpack.c.l.b16 %v6109
        %v6142 = vunpack.c.l.b16 %v6110
        %v6143 = vunpack.c.l.b16 %v6111
        %v6144 = vunpack.c.l.b16 %v6112
        %v6145 = vpack.c.b16 %v6130, %v6129
        %v6146 = vpack.c.b16 %v6132, %v6131
        %v6147 = vpack.c.b16 %v6134, %v6133
        %v6148 = vpack.c.b16 %v6136, %v6135
        %v6149 = vpack.c.b16 %v6138, %v6137
        %v6150 = vpack.c.b16 %v6140, %v6139
        %v6151 = vpack.c.b16 %v6142, %v6141
        %v6152 = vpack.c.b16 %v6144, %v6143
        %6161 = vmatprep.subr.bf16.mxu0 0
        %6162 = vmatpush1.bf16.msra.mxu0 %v6145
        %6163 = vmatprep.subr.bf16.mxu0 0
        %6164 = vmatpush1.bf16.msra.mxu0 %v6146
        %6165 = vmatprep.subr.bf16.mxu0 0
        %6166 = vmatpush1.bf16.msra.mxu0 %v6147
        %6167 = vmatprep.subr.bf16.mxu0 0
        %6168 = vmatpush1.bf16.msra.mxu0 %v6148
        %6169 = vmatprep.subr.bf16.mxu0 0
        %6170 = vmatpush1.bf16.msra.mxu0 %v6149
        %6171 = vmatprep.subr.bf16.mxu0 0
        %6172 = vmatpush1.bf16.msra.mxu0 %v6150
        %6173 = vmatprep.subr.bf16.mxu0 0
        %6174 = vmatpush1.bf16.msra.mxu0 %v6151
        %6175 = vmatprep.subr.bf16.mxu0 0
        %6176 = vmatpush1.bf16.msra.mxu0 %v6152
        %6177 = vmatprep.subr.bf16.mxu0 0
        %6178 = vmatpush1.bf16.msra.mxu0 0
        %6179 = vmatprep.subr.bf16.mxu0 0
        %6180 = vmatpush1.bf16.msra.mxu0 0
        %6181 = vmatprep.subr.bf16.mxu0 0
        %6182 = vmatpush1.bf16.msra.mxu0 0
        %6183 = vmatprep.subr.bf16.mxu0 0
        %6184 = vmatpush1.bf16.msra.mxu0 0
        %6185 = vmatprep.subr.bf16.mxu0 0
        %6186 = vmatpush1.bf16.msra.mxu0 0
        %6187 = vmatprep.subr.bf16.mxu0 0
        %6188 = vmatpush1.bf16.msra.mxu0 0
        %6189 = vmatprep.subr.bf16.mxu0 0
        %6190 = vmatpush1.bf16.msra.mxu0 0
        %6191 = vmatprep.subr.bf16.mxu0 0
        %6192 = vmatpush1.bf16.msra.mxu0 0
        %6193 = vmatprep.mubr.bf16.mxu0 0
        %6194 = vmatmul.mubr.bf16.gmra.mrb[0].mxu0 %v5029
        %v6195 = vpop.f32.mrb[0].mxu0
        %v6196 = vadd.f32 0.0, %v6195
        %v6197 = vpop.f32.mrb[0].mxu0
        %v6198 = vpop.f32.mrb[0].mxu0
        %v6199 = vadd.f32 0.0, %v6198
        %v6200 = vpop.f32.mrb[0].mxu0
        %6201 = vmatprep.mubr.bf16.mxu0 0
        %6202 = vmatmul.mubr.bf16.gmra.mrb[0].mxu0 %v5030
        %v6203 = vpop.f32.mrb[0].mxu0
        %v6204 = vadd.f32 0.0, %v6203
        %v6205 = vpop.f32.mrb[0].mxu0
        %v6206 = vpop.f32.mrb[0].mxu0
        %v6207 = vadd.f32 0.0, %v6206
        %v6208 = vpop.f32.mrb[0].mxu0
        %6209 = vmatprep.mubr.bf16.mxu0 0
        %6210 = vmatmul.mubr.bf16.gmra.mrb[0].mxu0 %v5031
        %v6211 = vpop.f32.mrb[0].mxu0
        %v6212 = vadd.f32 0.0, %v6211
        %v6213 = vpop.f32.mrb[0].mxu0
        %v6214 = vpop.f32.mrb[0].mxu0
        %v6215 = vadd.f32 0.0, %v6214
        %v6216 = vpop.f32.mrb[0].mxu0
        %6217 = vmatprep.mubr.bf16.mxu0 0
        %6218 = vmatmul.mubr.bf16.gmra.mrb[0].mxu0 %v5032
        %v6219 = vpop.f32.mrb[0].mxu0
        %v6220 = vadd.f32 0.0, %v6219
        %v6221 = vpop.f32.mrb[0].mxu0
        %v6222 = vpop.f32.mrb[0].mxu0
        %v6223 = vadd.f32 0.0, %v6222
        %v6224 = vpop.f32.mrb[0].mxu0
        %6225 = vmatprep.mubr.bf16.mxu0 0
        %6226 = vmatmul.mubr.bf16.gmra.mrb[0].mxu0 %v5033
        %v6227 = vpop.f32.mrb[0].mxu0
        %v6228 = vadd.f32 0.0, %v6227
        %v6229 = vpop.f32.mrb[0].mxu0
        %v6230 = vpop.f32.mrb[0].mxu0
        %v6231 = vadd.f32 0.0, %v6230
        %v6232 = vpop.f32.mrb[0].mxu0
        %6233 = vmatprep.mubr.bf16.mxu0 0
        %6234 = vmatmul.mubr.bf16.gmra.mrb[0].mxu0 %v5034
        %v6235 = vpop.f32.mrb[0].mxu0
        %v6236 = vadd.f32 0.0, %v6235
        %v6237 = vpop.f32.mrb[0].mxu0
        %v6238 = vpop.f32.mrb[0].mxu0
        %v6239 = vadd.f32 0.0, %v6238
        %v6240 = vpop.f32.mrb[0].mxu0
        %6241 = vmatprep.mubr.bf16.mxu0 0
        %6242 = vmatmul.mubr.bf16.gmra.mrb[0].mxu0 %v5035
        %v6243 = vpop.f32.mrb[0].mxu0
        %v6244 = vadd.f32 0.0, %v6243
        %v6245 = vpop.f32.mrb[0].mxu0
        %v6246 = vpop.f32.mrb[0].mxu0
        %v6247 = vadd.f32 0.0, %v6246
        %v6248 = vpop.f32.mrb[0].mxu0
        %6249 = vmatprep.mubr.bf16.mxu0 0
        %6250 = vmatmul.mubr.bf16.gmra.mrb[0].mxu0 %v5036
        %v6251 = vpop.f32.mrb[0].mxu0
        %v6252 = vadd.f32 0.0, %v6251
        %v6253 = vpop.f32.mrb[0].mxu0
        %v6254 = vpop.f32.mrb[0].mxu0
        %v6255 = vadd.f32 0.0, %v6254
        %v6256 = vpop.f32.mrb[0].mxu0
        %6257 = vmatprep.mubr.bf16.mxu0 0
        %6258 = vmatmul.mubr.bf16.gmra.mrb[0].mxu0 %v5037
        %v6259 = vpop.f32.mrb[0].mxu0
        %v6260 = vadd.f32 0.0, %v6259
        %v6261 = vpop.f32.mrb[0].mxu0
        %v6262 = vpop.f32.mrb[0].mxu0
        %v6263 = vadd.f32 0.0, %v6262
        %v6264 = vpop.f32.mrb[0].mxu0
        %6265 = vmatprep.mubr.bf16.mxu0 0
        %6266 = vmatmul.mubr.bf16.gmra.mrb[0].mxu0 %v5038
        %v6267 = vpop.f32.mrb[0].mxu0
        %v6268 = vadd.f32 0.0, %v6267
        %v6269 = vpop.f32.mrb[0].mxu0
        %v6270 = vpop.f32.mrb[0].mxu0
        %v6271 = vadd.f32 0.0, %v6270
        %v6272 = vpop.f32.mrb[0].mxu0
        %6273 = vmatprep.mubr.bf16.mxu0 0
        %6274 = vmatmul.mubr.bf16.gmra.mrb[0].mxu0 %v5039
        %v6275 = vpop.f32.mrb[0].mxu0
        %v6276 = vadd.f32 0.0, %v6275
        %v6277 = vpop.f32.mrb[0].mxu0
        %v6278 = vpop.f32.mrb[0].mxu0
        %v6279 = vadd.f32 0.0, %v6278
        %v6280 = vpop.f32.mrb[0].mxu0
        %6281 = vmatprep.mubr.bf16.mxu0 0
        %6282 = vmatmul.mubr.bf16.gmra.mrb[0].mxu0 %v5040
        %v6283 = vpop.f32.mrb[0].mxu0
        %v6284 = vadd.f32 0.0, %v6283
        %v6285 = vpop.f32.mrb[0].mxu0
        %v6286 = vpop.f32.mrb[0].mxu0
        %v6287 = vadd.f32 0.0, %v6286
        %v6288 = vpop.f32.mrb[0].mxu0
        %6289 = vmatprep.mubr.bf16.mxu0 0
        %6290 = vmatmul.mubr.bf16.gmra.mrb[0].mxu0 %v5041
        %v6291 = vpop.f32.mrb[0].mxu0
        %v6292 = vadd.f32 0.0, %v6291
        %v6293 = vpop.f32.mrb[0].mxu0
        %v6294 = vpop.f32.mrb[0].mxu0
        %v6295 = vadd.f32 0.0, %v6294
        %v6296 = vpop.f32.mrb[0].mxu0
        %6297 = vmatprep.mubr.bf16.mxu0 0
        %6298 = vmatmul.mubr.bf16.gmra.mrb[0].mxu0 %v5042
        %v6299 = vpop.f32.mrb[0].mxu0
        %v6300 = vadd.f32 0.0, %v6299
        %v6301 = vpop.f32.mrb[0].mxu0
        %v6302 = vpop.f32.mrb[0].mxu0
        %v6303 = vadd.f32 0.0, %v6302
        %v6304 = vpop.f32.mrb[0].mxu0
        %6305 = vmatprep.mubr.bf16.mxu0 0
        %6306 = vmatmul.mubr.bf16.gmra.mrb[0].mxu0 %v5043
        %v6307 = vpop.f32.mrb[0].mxu0
        %v6308 = vadd.f32 0.0, %v6307
        %v6309 = vpop.f32.mrb[0].mxu0
        %v6310 = vpop.f32.mrb[0].mxu0
        %v6311 = vadd.f32 0.0, %v6310
        %v6312 = vpop.f32.mrb[0].mxu0
        %6313 = vmatprep.mubr.bf16.mxu0 0
        %6314 = vmatmul.mubr.bf16.gmra.mrb[0].mxu0 %v5061
        %v6315 = vpop.f32.mrb[0].mxu0
        %v6316 = vadd.f32 0.0, %v6315
        %v6317 = vpop.f32.mrb[0].mxu0
        %v6318 = vpop.f32.mrb[0].mxu0
        %v6319 = vadd.f32 0.0, %v6318
        %v6320 = vpop.f32.mrb[0].mxu0
        %6321 = vdwg.mxu0
        %v6338 = vunpack.c.l.b16 %v6081
        %v6339 = vunpack.c.l.b16 %v6082
        %v6340 = vunpack.c.l.b16 %v6083
        %v6341 = vunpack.c.l.b16 %v6084
        %v6342 = vunpack.c.l.b16 %v6085
        %v6343 = vunpack.c.l.b16 %v6086
        %v6344 = vunpack.c.l.b16 %v6087
        %v6345 = vunpack.c.l.b16 %v6088
        %v6346 = vunpack.c.l.b16 %v6089
        %v6347 = vunpack.c.l.b16 %v6090
        %v6348 = vunpack.c.l.b16 %v6091
        %v6349 = vunpack.c.l.b16 %v6092
        %v6350 = vunpack.c.l.b16 %v6093
        %v6351 = vunpack.c.l.b16 %v6094
        %v6352 = vunpack.c.l.b16 %v6095
        %v6353 = vunpack.c.l.b16 %v6096
        %v6354 = vpack.c.b16 %v6339, %v6338
        %v6355 = vpack.c.b16 %v6341, %v6340
        %v6356 = vpack.c.b16 %v6343, %v6342
        %v6357 = vpack.c.b16 %v6345, %v6344
        %v6358 = vpack.c.b16 %v6347, %v6346
        %v6359 = vpack.c.b16 %v6349, %v6348
        %v6360 = vpack.c.b16 %v6351, %v6350
        %v6361 = vpack.c.b16 %v6353, %v6352
        %6370 = vmatprep.subr.bf16.mxu0 0
        %6371 = vmatpush1.bf16.msra.mxu0 %v6354
        %6372 = vmatprep.subr.bf16.mxu0 0
        %6373 = vmatpush1.bf16.msra.mxu0 %v6355
        %6374 = vmatprep.subr.bf16.mxu0 0
        %6375 = vmatpush1.bf16.msra.mxu0 %v6356
        %6376 = vmatprep.subr.bf16.mxu0 0
        %6377 = vmatpush1.bf16.msra.mxu0 %v6357
        %6378 = vmatprep.subr.bf16.mxu0 0
        %6379 = vmatpush1.bf16.msra.mxu0 %v6358
        %6380 = vmatprep.subr.bf16.mxu0 0
        %6381 = vmatpush1.bf16.msra.mxu0 %v6359
        %6382 = vmatprep.subr.bf16.mxu0 0
        %6383 = vmatpush1.bf16.msra.mxu0 %v6360
        %6384 = vmatprep.subr.bf16.mxu0 0
        %6385 = vmatpush1.bf16.msra.mxu0 %v6361
        %6386 = vmatprep.subr.bf16.mxu0 0
        %6387 = vmatpush1.bf16.msra.mxu0 0
        %6388 = vmatprep.subr.bf16.mxu0 0
        %6389 = vmatpush1.bf16.msra.mxu0 0
        %6390 = vmatprep.subr.bf16.mxu0 0
        %6391 = vmatpush1.bf16.msra.mxu0 0
        %6392 = vmatprep.subr.bf16.mxu0 0
        %6393 = vmatpush1.bf16.msra.mxu0 0
        %6394 = vmatprep.subr.bf16.mxu0 0
        %6395 = vmatpush1.bf16.msra.mxu0 0
        %6396 = vmatprep.subr.bf16.mxu0 0
        %6397 = vmatpush1.bf16.msra.mxu0 0
        %6398 = vmatprep.subr.bf16.mxu0 0
        %6399 = vmatpush1.bf16.msra.mxu0 0
        %6400 = vmatprep.subr.bf16.mxu0 0
        %6401 = vmatpush1.bf16.msra.mxu0 0
        %6402 = vmatprep.mubr.bf16.mxu0 0
        %6403 = vmatmul.mubr.bf16.gmra.mrb[0].mxu0 %v5028
        %v6404 = vpop.f32.mrb[0].mxu0
        %v6405 = vadd.f32 %v6196, %v6404
        %v6406 = vpop.f32.mrb[0].mxu0
        %v6407 = vpop.f32.mrb[0].mxu0
        %v6408 = vadd.f32 %v6199, %v6407
        %v6409 = vpop.f32.mrb[0].mxu0
        %6410 = vmatprep.mubr.bf16.mxu0 0
        %6411 = vmatmul.mubr.bf16.gmra.mrb[0].mxu0 %v5029
        %v6412 = vpop.f32.mrb[0].mxu0
        %v6413 = vadd.f32 %v6204, %v6412
        %v6414 = vpop.f32.mrb[0].mxu0
        %v6415 = vpop.f32.mrb[0].mxu0
        %v6416 = vadd.f32 %v6207, %v6415
        %v6417 = vpop.f32.mrb[0].mxu0
        %6418 = vmatprep.mubr.bf16.mxu0 0
        %6419 = vmatmul.mubr.bf16.gmra.mrb[0].mxu0 %v5030
        %v6420 = vpop.f32.mrb[0].mxu0
        %v6421 = vadd.f32 %v6212, %v6420
        %v6422 = vpop.f32.mrb[0].mxu0
        %v6423 = vpop.f32.mrb[0].mxu0
        %v6424 = vadd.f32 %v6215, %v6423
        %v6425 = vpop.f32.mrb[0].mxu0
        %6426 = vmatprep.mubr.bf16.mxu0 0
        %6427 = vmatmul.mubr.bf16.gmra.mrb[0].mxu0 %v5031
        %v6428 = vpop.f32.mrb[0].mxu0
        %v6429 = vadd.f32 %v6220, %v6428
        %v6430 = vpop.f32.mrb[0].mxu0
        %v6431 = vpop.f32.mrb[0].mxu0
        %v6432 = vadd.f32 %v6223, %v6431
        %v6433 = vpop.f32.mrb[0].mxu0
        %6434 = vmatprep.mubr.bf16.mxu0 0
        %6435 = vmatmul.mubr.bf16.gmra.mrb[0].mxu0 %v5032
        %v6436 = vpop.f32.mrb[0].mxu0
        %v6437 = vadd.f32 %v6228, %v6436
        %v6438 = vpop.f32.mrb[0].mxu0
        %v6439 = vpop.f32.mrb[0].mxu0
        %v6440 = vadd.f32 %v6231, %v6439
        %v6441 = vpop.f32.mrb[0].mxu0
        %6442 = vmatprep.mubr.bf16.mxu0 0
        %6443 = vmatmul.mubr.bf16.gmra.mrb[0].mxu0 %v5033
        %v6444 = vpop.f32.mrb[0].mxu0
        %v6445 = vadd.f32 %v6236, %v6444
        %v6446 = vpop.f32.mrb[0].mxu0
        %v6447 = vpop.f32.mrb[0].mxu0
        %v6448 = vadd.f32 %v6239, %v6447
        %v6449 = vpop.f32.mrb[0].mxu0
        %6450 = vmatprep.mubr.bf16.mxu0 0
        %6451 = vmatmul.mubr.bf16.gmra.mrb[0].mxu0 %v5034
        %v6452 = vpop.f32.mrb[0].mxu0
        %v6453 = vadd.f32 %v6244, %v6452
        %v6454 = vpop.f32.mrb[0].mxu0
        %v6455 = vpop.f32.mrb[0].mxu0
        %v6456 = vadd.f32 %v6247, %v6455
        %v6457 = vpop.f32.mrb[0].mxu0
        %6458 = vmatprep.mubr.bf16.mxu0 0
        %6459 = vmatmul.mubr.bf16.gmra.mrb[0].mxu0 %v5035
        %v6460 = vpop.f32.mrb[0].mxu0
        %v6461 = vadd.f32 %v6252, %v6460
        %v6462 = vpop.f32.mrb[0].mxu0
        %v6463 = vpop.f32.mrb[0].mxu0
        %v6464 = vadd.f32 %v6255, %v6463
        %v6465 = vpop.f32.mrb[0].mxu0
        %6466 = vmatprep.mubr.bf16.mxu0 0
        %6467 = vmatmul.mubr.bf16.gmra.mrb[0].mxu0 %v5036
        %v6468 = vpop.f32.mrb[0].mxu0
        %v6469 = vadd.f32 %v6260, %v6468
        %v6470 = vpop.f32.mrb[0].mxu0
        %v6471 = vpop.f32.mrb[0].mxu0
        %v6472 = vadd.f32 %v6263, %v6471
        %v6473 = vpop.f32.mrb[0].mxu0
        %6474 = vmatprep.mubr.bf16.mxu0 0
        %6475 = vmatmul.mubr.bf16.gmra.mrb[0].mxu0 %v5037
        %v6476 = vpop.f32.mrb[0].mxu0
        %v6477 = vadd.f32 %v6268, %v6476
        %v6478 = vpop.f32.mrb[0].mxu0
        %v6479 = vpop.f32.mrb[0].mxu0
        %v6480 = vadd.f32 %v6271, %v6479
        %v6481 = vpop.f32.mrb[0].mxu0
        %6482 = vmatprep.mubr.bf16.mxu0 0
        %6483 = vmatmul.mubr.bf16.gmra.mrb[0].mxu0 %v5038
        %v6484 = vpop.f32.mrb[0].mxu0
        %v6485 = vadd.f32 %v6276, %v6484
        %v6486 = vpop.f32.mrb[0].mxu0
        %v6487 = vpop.f32.mrb[0].mxu0
        %v6488 = vadd.f32 %v6279, %v6487
        %v6489 = vpop.f32.mrb[0].mxu0
        %6490 = vmatprep.mubr.bf16.mxu0 0
        %6491 = vmatmul.mubr.bf16.gmra.mrb[0].mxu0 %v5039
        %v6492 = vpop.f32.mrb[0].mxu0
        %v6493 = vadd.f32 %v6284, %v6492
        %v6494 = vpop.f32.mrb[0].mxu0
        %v6495 = vpop.f32.mrb[0].mxu0
        %v6496 = vadd.f32 %v6287, %v6495
        %v6497 = vpop.f32.mrb[0].mxu0
        %6498 = vmatprep.mubr.bf16.mxu0 0
        %6499 = vmatmul.mubr.bf16.gmra.mrb[0].mxu0 %v5040
        %v6500 = vpop.f32.mrb[0].mxu0
        %v6501 = vadd.f32 %v6292, %v6500
        %v6502 = vpop.f32.mrb[0].mxu0
        %v6503 = vpop.f32.mrb[0].mxu0
        %v6504 = vadd.f32 %v6295, %v6503
        %v6505 = vpop.f32.mrb[0].mxu0
        %6506 = vmatprep.mubr.bf16.mxu0 0
        %6507 = vmatmul.mubr.bf16.gmra.mrb[0].mxu0 %v5041
        %v6508 = vpop.f32.mrb[0].mxu0
        %v6509 = vadd.f32 %v6300, %v6508
        %v6510 = vpop.f32.mrb[0].mxu0
        %v6511 = vpop.f32.mrb[0].mxu0
        %v6512 = vadd.f32 %v6303, %v6511
        %v6513 = vpop.f32.mrb[0].mxu0
        %6514 = vmatprep.mubr.bf16.mxu0 0
        %6515 = vmatmul.mubr.bf16.gmra.mrb[0].mxu0 %v5042
        %v6516 = vpop.f32.mrb[0].mxu0
        %v6517 = vadd.f32 %v6308, %v6516
        %v6518 = vpop.f32.mrb[0].mxu0
        %v6519 = vpop.f32.mrb[0].mxu0
        %v6520 = vadd.f32 %v6311, %v6519
        %v6521 = vpop.f32.mrb[0].mxu0
        %6522 = vmatprep.mubr.bf16.mxu0 0
        %6523 = vmatmul.mubr.bf16.gmra.mrb[0].mxu0 %v5043
        %v6524 = vpop.f32.mrb[0].mxu0
        %v6525 = vadd.f32 %v6316, %v6524
        %v6526 = vpop.f32.mrb[0].mxu0
        %v6527 = vpop.f32.mrb[0].mxu0
        %v6528 = vadd.f32 %v6319, %v6527
        %v6529 = vpop.f32.mrb[0].mxu0
        %6530 = vdwg.mxu0
        %v6531 = vld [vmem:[#allocation19 + $0x1c0] sm:$0xf]
        %v6532 = vld [vmem:[#allocation19 + $0x1c4] sm:$0xf]
        %v6533 = vld [vmem:[#allocation19 + $0x1c8] sm:$0xf]
        %v6534 = vld [vmem:[#allocation19 + $0x1cc] sm:$0xf]
        %v6535 = vld [vmem:[#allocation19 + $0x1d0] sm:$0xf]
        %v6536 = vld [vmem:[#allocation19 + $0x1d4] sm:$0xf]
        %v6537 = vld [vmem:[#allocation19 + $0x1d8] sm:$0xf]
        %v6538 = vld [vmem:[#allocation19 + $0x1dc] sm:$0xf]
        %v6539 = vld [vmem:[#allocation19 + $0x1e0] sm:$0xf]
        %v6540 = vld [vmem:[#allocation19 + $0x1e4] sm:$0xf]
        %v6541 = vld [vmem:[#allocation19 + $0x1e8] sm:$0xf]
        %v6542 = vld [vmem:[#allocation19 + $0x1ec] sm:$0xf]
        %v6543 = vld [vmem:[#allocation19 + $0x1f0] sm:$0xf]
        %v6544 = vld [vmem:[#allocation19 + $0x1f4] sm:$0xf]
        %v6545 = vld [vmem:[#allocation19 + $0x1f8] sm:$0xf]
        %v6546 = vld [vmem:[#allocation19 + $0x1fc] sm:$0xf]
        %v6563 = vunpack.c.l.b16 %v6531
        %v6564 = vunpack.c.l.b16 %v6532
        %v6565 = vunpack.c.l.b16 %v6533
        %v6566 = vunpack.c.l.b16 %v6534
        %v6567 = vunpack.c.l.b16 %v6535
        %v6568 = vunpack.c.l.b16 %v6536
        %v6569 = vunpack.c.l.b16 %v6537
        %v6570 = vunpack.c.l.b16 %v6538
        %v6571 = vunpack.c.l.b16 %v6539
        %v6572 = vunpack.c.l.b16 %v6540
        %v6573 = vunpack.c.l.b16 %v6541
        %v6574 = vunpack.c.l.b16 %v6542
        %v6575 = vunpack.c.l.b16 %v6543
        %v6576 = vunpack.c.l.b16 %v6544
        %v6577 = vunpack.c.l.b16 %v6545
        %v6578 = vunpack.c.l.b16 %v6546
        %v6579 = vpack.c.b16 %v6564, %v6563
        %v6580 = vpack.c.b16 %v6566, %v6565
        %v6581 = vpack.c.b16 %v6568, %v6567
        %v6582 = vpack.c.b16 %v6570, %v6569
        %v6583 = vpack.c.b16 %v6572, %v6571
        %v6584 = vpack.c.b16 %v6574, %v6573
        %v6585 = vpack.c.b16 %v6576, %v6575
        %v6586 = vpack.c.b16 %v6578, %v6577
        %6595 = vmatprep.subr.bf16.mxu0 0
        %6596 = vmatpush1.bf16.msra.mxu0 %v6579
        %6597 = vmatprep.subr.bf16.mxu0 0
        %6598 = vmatpush1.bf16.msra.mxu0 %v6580
        %6599 = vmatprep.subr.bf16.mxu0 0
        %6600 = vmatpush1.bf16.msra.mxu0 %v6581
        %6601 = vmatprep.subr.bf16.mxu0 0
        %6602 = vmatpush1.bf16.msra.mxu0 %v6582
        %6603 = vmatprep.subr.bf16.mxu0 0
        %6604 = vmatpush1.bf16.msra.mxu0 %v6583
        %6605 = vmatprep.subr.bf16.mxu0 0
        %6606 = vmatpush1.bf16.msra.mxu0 %v6584
        %6607 = vmatprep.subr.bf16.mxu0 0
        %6608 = vmatpush1.bf16.msra.mxu0 %v6585
        %6609 = vmatprep.subr.bf16.mxu0 0
        %6610 = vmatpush1.bf16.msra.mxu0 %v6586
        %6611 = vmatprep.subr.bf16.mxu0 0
        %6612 = vmatpush1.bf16.msra.mxu0 0
        %6613 = vmatprep.subr.bf16.mxu0 0
        %6614 = vmatpush1.bf16.msra.mxu0 0
        %6615 = vmatprep.subr.bf16.mxu0 0
        %6616 = vmatpush1.bf16.msra.mxu0 0
        %6617 = vmatprep.subr.bf16.mxu0 0
        %6618 = vmatpush1.bf16.msra.mxu0 0
        %6619 = vmatprep.subr.bf16.mxu0 0
        %6620 = vmatpush1.bf16.msra.mxu0 0
        %6621 = vmatprep.subr.bf16.mxu0 0
        %6622 = vmatpush1.bf16.msra.mxu0 0
        %6623 = vmatprep.subr.bf16.mxu0 0
        %6624 = vmatpush1.bf16.msra.mxu0 0
        %6625 = vmatprep.subr.bf16.mxu0 0
        %6626 = vmatpush1.bf16.msra.mxu0 0
        %6627 = vmatprep.mubr.bf16.mxu0 0
        %6628 = vmatmul.mubr.bf16.gmra.mrb[0].mxu0 %v5660
        %v6629 = vpop.f32.mrb[0].mxu0
        %v6630 = vadd.f32 0.0, %v6629
        %v6631 = vpop.f32.mrb[0].mxu0
        %v6632 = vpop.f32.mrb[0].mxu0
        %v6633 = vadd.f32 0.0, %v6632
        %v6634 = vpop.f32.mrb[0].mxu0
        %6635 = vmatprep.mubr.bf16.mxu0 0
        %6636 = vmatmul.mubr.bf16.gmra.mrb[0].mxu0 %v5661
        %v6637 = vpop.f32.mrb[0].mxu0
        %v6638 = vadd.f32 0.0, %v6637
        %v6639 = vpop.f32.mrb[0].mxu0
        %v6640 = vpop.f32.mrb[0].mxu0
        %v6641 = vadd.f32 0.0, %v6640
        %v6642 = vpop.f32.mrb[0].mxu0
        %6643 = vmatprep.mubr.bf16.mxu0 0
        %6644 = vmatmul.mubr.bf16.gmra.mrb[0].mxu0 %v5662
        %v6645 = vpop.f32.mrb[0].mxu0
        %v6646 = vadd.f32 0.0, %v6645
        %v6647 = vpop.f32.mrb[0].mxu0
        %v6648 = vpop.f32.mrb[0].mxu0
        %v6649 = vadd.f32 0.0, %v6648
        %v6650 = vpop.f32.mrb[0].mxu0
        %6651 = vmatprep.mubr.bf16.mxu0 0
        %6652 = vmatmul.mubr.bf16.gmra.mrb[0].mxu0 %v5663
        %v6653 = vpop.f32.mrb[0].mxu0
        %v6654 = vadd.f32 0.0, %v6653
        %v6655 = vpop.f32.mrb[0].mxu0
        %v6656 = vpop.f32.mrb[0].mxu0
        %v6657 = vadd.f32 0.0, %v6656
        %v6658 = vpop.f32.mrb[0].mxu0
        %6659 = vmatprep.mubr.bf16.mxu0 0
        %6660 = vmatmul.mubr.bf16.gmra.mrb[0].mxu0 %v5664
        %v6661 = vpop.f32.mrb[0].mxu0
        %v6662 = vadd.f32 0.0, %v6661
        %v6663 = vpop.f32.mrb[0].mxu0
        %v6664 = vpop.f32.mrb[0].mxu0
        %v6665 = vadd.f32 0.0, %v6664
        %v6666 = vpop.f32.mrb[0].mxu0
        %6667 = vmatprep.mubr.bf16.mxu0 0
        %6668 = vmatmul.mubr.bf16.gmra.mrb[0].mxu0 %v5665
        %v6669 = vpop.f32.mrb[0].mxu0
        %v6670 = vadd.f32 0.0, %v6669
        %v6671 = vpop.f32.mrb[0].mxu0
        %v6672 = vpop.f32.mrb[0].mxu0
        %v6673 = vadd.f32 0.0, %v6672
        %v6674 = vpop.f32.mrb[0].mxu0
        %6675 = vmatprep.mubr.bf16.mxu0 0
        %6676 = vmatmul.mubr.bf16.gmra.mrb[0].mxu0 %v5666
        %v6677 = vpop.f32.mrb[0].mxu0
        %v6678 = vadd.f32 0.0, %v6677
        %v6679 = vpop.f32.mrb[0].mxu0
        %v6680 = vpop.f32.mrb[0].mxu0
        %v6681 = vadd.f32 0.0, %v6680
        %v6682 = vpop.f32.mrb[0].mxu0
        %6683 = vmatprep.mubr.bf16.mxu0 0
        %6684 = vmatmul.mubr.bf16.gmra.mrb[0].mxu0 %v5667
        %v6685 = vpop.f32.mrb[0].mxu0
        %v6686 = vadd.f32 0.0, %v6685
        %v6687 = vpop.f32.mrb[0].mxu0
        %v6688 = vpop.f32.mrb[0].mxu0
        %v6689 = vadd.f32 0.0, %v6688
        %v6690 = vpop.f32.mrb[0].mxu0
        %6691 = vmatprep.mubr.bf16.mxu0 0
        %6692 = vmatmul.mubr.bf16.gmra.mrb[0].mxu0 %v5668
        %v6693 = vpop.f32.mrb[0].mxu0
        %v6694 = vadd.f32 0.0, %v6693
        %v6695 = vpop.f32.mrb[0].mxu0
        %v6696 = vpop.f32.mrb[0].mxu0
        %v6697 = vadd.f32 0.0, %v6696
        %v6698 = vpop.f32.mrb[0].mxu0
        %6699 = vmatprep.mubr.bf16.mxu0 0
        %6700 = vmatmul.mubr.bf16.gmra.mrb[0].mxu0 %v5669
        %v6701 = vpop.f32.mrb[0].mxu0
        %v6702 = vadd.f32 0.0, %v6701
        %v6703 = vpop.f32.mrb[0].mxu0
        %v6704 = vpop.f32.mrb[0].mxu0
        %v6705 = vadd.f32 0.0, %v6704
        %v6706 = vpop.f32.mrb[0].mxu0
        %6707 = vmatprep.mubr.bf16.mxu0 0
        %6708 = vmatmul.mubr.bf16.gmra.mrb[0].mxu0 %v5670
        %v6709 = vpop.f32.mrb[0].mxu0
        %v6710 = vadd.f32 0.0, %v6709
        %v6711 = vpop.f32.mrb[0].mxu0
        %v6712 = vpop.f32.mrb[0].mxu0
        %v6713 = vadd.f32 0.0, %v6712
        %v6714 = vpop.f32.mrb[0].mxu0
        %6715 = vmatprep.mubr.bf16.mxu0 0
        %6716 = vmatmul.mubr.bf16.gmra.mrb[0].mxu0 %v5671
        %v6717 = vpop.f32.mrb[0].mxu0
        %v6718 = vadd.f32 0.0, %v6717
        %v6719 = vpop.f32.mrb[0].mxu0
        %v6720 = vpop.f32.mrb[0].mxu0
        %v6721 = vadd.f32 0.0, %v6720
        %v6722 = vpop.f32.mrb[0].mxu0
        %6723 = vmatprep.mubr.bf16.mxu0 0
        %6724 = vmatmul.mubr.bf16.gmra.mrb[0].mxu0 %v5672
        %v6725 = vpop.f32.mrb[0].mxu0
        %v6726 = vadd.f32 0.0, %v6725
        %v6727 = vpop.f32.mrb[0].mxu0
        %v6728 = vpop.f32.mrb[0].mxu0
        %v6729 = vadd.f32 0.0, %v6728
        %v6730 = vpop.f32.mrb[0].mxu0
        %6731 = vmatprep.mubr.bf16.mxu0 0
        %6732 = vmatmul.mubr.bf16.gmra.mrb[0].mxu0 %v5673
        %v6733 = vpop.f32.mrb[0].mxu0
        %v6734 = vadd.f32 0.0, %v6733
        %v6735 = vpop.f32.mrb[0].mxu0
        %v6736 = vpop.f32.mrb[0].mxu0
        %v6737 = vadd.f32 0.0, %v6736
        %v6738 = vpop.f32.mrb[0].mxu0
        %6739 = vmatprep.mubr.bf16.mxu0 0
        %6740 = vmatmul.mubr.bf16.gmra.mrb[0].mxu0 %v5674
        %v6741 = vpop.f32.mrb[0].mxu0
        %v6742 = vadd.f32 0.0, %v6741
        %v6743 = vpop.f32.mrb[0].mxu0
        %v6744 = vpop.f32.mrb[0].mxu0
        %v6745 = vadd.f32 0.0, %v6744
        %v6746 = vpop.f32.mrb[0].mxu0
        %6747 = vmatprep.mubr.bf16.mxu0 0
        %6748 = vmatmul.mubr.bf16.gmra.mrb[0].mxu0 %v5675
        %v6749 = vpop.f32.mrb[0].mxu0
        %v6750 = vadd.f32 0.0, %v6749
        %v6751 = vpop.f32.mrb[0].mxu0
        %v6752 = vpop.f32.mrb[0].mxu0
        %v6753 = vadd.f32 0.0, %v6752
        %v6754 = vpop.f32.mrb[0].mxu0
        %6755 = vdwg.mxu0
        %v6756 = vadd.f32 %v6405, %v6630
        %v6757 = vadd.f32 %v6408, %v6633
        %v6758 = vadd.f32 %v6413, %v6638
        %v6759 = vadd.f32 %v6416, %v6641
        %v6760 = vadd.f32 %v6421, %v6646
        %v6761 = vadd.f32 %v6424, %v6649
        %v6762 = vadd.f32 %v6429, %v6654
        %v6763 = vadd.f32 %v6432, %v6657
        %v6764 = vadd.f32 %v6437, %v6662
        %v6765 = vadd.f32 %v6440, %v6665
        %v6766 = vadd.f32 %v6445, %v6670
        %v6767 = vadd.f32 %v6448, %v6673
        %v6768 = vadd.f32 %v6453, %v6678
        %v6769 = vadd.f32 %v6456, %v6681
        %v6770 = vadd.f32 %v6461, %v6686
        %v6771 = vadd.f32 %v6464, %v6689
        %v6772 = vadd.f32 %v6469, %v6694
        %v6773 = vadd.f32 %v6472, %v6697
        %v6774 = vadd.f32 %v6477, %v6702
        %v6775 = vadd.f32 %v6480, %v6705
        %v6776 = vadd.f32 %v6485, %v6710
        %v6777 = vadd.f32 %v6488, %v6713
        %v6778 = vadd.f32 %v6493, %v6718
        %v6779 = vadd.f32 %v6496, %v6721
        %v6780 = vadd.f32 %v6501, %v6726
        %v6781 = vadd.f32 %v6504, %v6729
        %v6782 = vadd.f32 %v6509, %v6734
        %v6783 = vadd.f32 %v6512, %v6737
        %v6784 = vadd.f32 %v6517, %v6742
        %v6785 = vadd.f32 %v6520, %v6745
        %v6786 = vadd.f32 %v6525, %v6750
        %v6787 = vadd.f32 %v6528, %v6753
        %v6788 = vld [vmem:[#allocation3 + $0x8] sm:$0xff]
        %v6789 = vld [vmem:[#allocation3 + $0x88] sm:$0x1]
        %v6790 = vld [vmem:[#allocation19 + $0x80] sm:$0xf]
        %v6791 = vld [vmem:[#allocation19 + $0x84] sm:$0xf]
        %v6792 = vld [vmem:[#allocation19 + $0x88] sm:$0xf]
        %v6793 = vld [vmem:[#allocation19 + $0x8c] sm:$0xf]
        %v6794 = vld [vmem:[#allocation19 + $0x90] sm:$0xf]
        %v6795 = vld [vmem:[#allocation19 + $0x94] sm:$0xf]
        %v6796 = vld [vmem:[#allocation19 + $0x98] sm:$0xf]
        %v6797 = vld [vmem:[#allocation19 + $0x9c] sm:$0xf]
        %v6798 = vld [vmem:[#allocation19 + $0xa0] sm:$0xf]
        %v6799 = vld [vmem:[#allocation19 + $0xa4] sm:$0xf]
        %v6800 = vld [vmem:[#allocation19 + $0xa8] sm:$0xf]
        %v6801 = vld [vmem:[#allocation19 + $0xac] sm:$0xf]
        %v6802 = vld [vmem:[#allocation19 + $0xb0] sm:$0xf]
        %v6803 = vld [vmem:[#allocation19 + $0xb4] sm:$0xf]
        %v6804 = vld [vmem:[#allocation19 + $0xb8] sm:$0xf]
        %v6805 = vld [vmem:[#allocation19 + $0xbc] sm:$0xf]
        %v6806 = vld [vmem:[#allocation3 + $0x10] sm:$0xff]
        %v6807 = vld [vmem:[#allocation3 + $0x90] sm:$0x1]
        %v6808 = vld [vmem:[#allocation19 + $0x140] sm:$0xf]
        %v6809 = vld [vmem:[#allocation19 + $0x144] sm:$0xf]
        %v6810 = vld [vmem:[#allocation19 + $0x148] sm:$0xf]
        %v6811 = vld [vmem:[#allocation19 + $0x14c] sm:$0xf]
        %v6812 = vld [vmem:[#allocation19 + $0x150] sm:$0xf]
        %v6813 = vld [vmem:[#allocation19 + $0x154] sm:$0xf]
        %v6814 = vld [vmem:[#allocation19 + $0x158] sm:$0xf]
        %v6815 = vld [vmem:[#allocation19 + $0x15c] sm:$0xf]
        %v6816 = vld [vmem:[#allocation19 + $0x160] sm:$0xf]
        %v6817 = vld [vmem:[#allocation19 + $0x164] sm:$0xf]
        %v6818 = vld [vmem:[#allocation19 + $0x168] sm:$0xf]
        %v6819 = vld [vmem:[#allocation19 + $0x16c] sm:$0xf]
        %v6820 = vld [vmem:[#allocation19 + $0x170] sm:$0xf]
        %v6821 = vld [vmem:[#allocation19 + $0x174] sm:$0xf]
        %v6822 = vld [vmem:[#allocation19 + $0x178] sm:$0xf]
        %v6823 = vld [vmem:[#allocation19 + $0x17c] sm:$0xf]
        %v6825 = vshrl.u32 %v6806, 16
        %v6827 = vshll.u32 %v6806, 16
        %v6829 = vrot.slane %v6827, 1
        %v6830 = vor.u32 %v6825, %v6829
        %v6831 = vrot.slane %v5700, 1
        %v6832 = vsel %vm3757, %v6830, %v6831
        %v6833 = vor.u32 %v5697, %v6831
        %v6834 = vrot.slane %v5708, 1
        %v6835 = vsel %vm3757, %v6833, %v6834
        %v6836 = vor.u32 %v5705, %v6834
        %v6837 = vrot.slane %v5716, 1
        %v6838 = vsel %vm3757, %v6836, %v6837
        %v6839 = vor.u32 %v5713, %v6837
        %v6840 = vrot.slane %v5724, 1
        %v6841 = vsel %vm3757, %v6839, %v6840
        %v6842 = vor.u32 %v5721, %v6840
        %v6843 = vrot.slane %v5732, 1
        %v6844 = vsel %vm3757, %v6842, %v6843
        %v6845 = vor.u32 %v5729, %v6843
        %v6846 = vrot.slane %v5740, 1
        %v6847 = vsel %vm3757, %v6845, %v6846
        %v6848 = vor.u32 %v5737, %v6846
        %v6849 = vrot.slane %v5748, 1
        %v6850 = vsel %vm3757, %v6848, %v6849
        %v6851 = vor.u32 %v5745, %v6849
        %v6852 = vrot.slane %v5756, 1
        %v6853 = vsel %vm3757, %v6851, %v6852
        %v6854 = vor.u32 %v5753, %v6852
        %v6855 = vrot.slane %v5764, 1
        %v6856 = vsel %vm3757, %v6854, %v6855
        %v6857 = vor.u32 %v5761, %v6855
        %v6858 = vrot.slane %v5772, 1
        %v6859 = vsel %vm3757, %v6857, %v6858
        %v6860 = vor.u32 %v5769, %v6858
        %v6861 = vrot.slane %v5780, 1
        %v6862 = vsel %vm3757, %v6860, %v6861
        %v6863 = vor.u32 %v5777, %v6861
        %v6864 = vrot.slane %v5788, 1
        %v6865 = vsel %vm3757, %v6863, %v6864
        %v6866 = vor.u32 %v5785, %v6864
        %v6867 = vrot.slane %v5796, 1
        %v6868 = vsel %vm3757, %v6866, %v6867
        %v6869 = vor.u32 %v5793, %v6867
        %v6870 = vrot.slane %v5804, 1
        %v6871 = vsel %vm3757, %v6869, %v6870
        %v6872 = vor.u32 %v5801, %v6870
        %v6873 = vrot.slane %v5812, 1
        %v6874 = vsel %vm3757, %v6872, %v6873
        %v6875 = vor.u32 %v5809, %v6873
        %v6877 = vshll.u32 %v6807, 16
        %v6879 = vrot.slane %v6877, 1
        %v6880 = vsel %vm3757, %v6875, %v6879
        %v6913 = vunpack.c.l.b16 %v6808
        %v6914 = vunpack.c.l.b16 %v6809
        %v6915 = vunpack.c.l.b16 %v6810
        %v6916 = vunpack.c.l.b16 %v6811
        %v6917 = vunpack.c.l.b16 %v6812
        %v6918 = vunpack.c.l.b16 %v6813
        %v6919 = vunpack.c.l.b16 %v6814
        %v6920 = vunpack.c.l.b16 %v6815
        %v6921 = vunpack.c.l.b16 %v6816
        %v6922 = vunpack.c.l.b16 %v6817
        %v6923 = vunpack.c.l.b16 %v6818
        %v6924 = vunpack.c.l.b16 %v6819
        %v6925 = vunpack.c.l.b16 %v6820
        %v6926 = vunpack.c.l.b16 %v6821
        %v6927 = vunpack.c.l.b16 %v6822
        %v6928 = vunpack.c.l.b16 %v6823
        %v6929 = vpack.c.b16 %v6914, %v6913
        %v6930 = vpack.c.b16 %v6916, %v6915
        %v6931 = vpack.c.b16 %v6918, %v6917
        %v6932 = vpack.c.b16 %v6920, %v6919
        %v6933 = vpack.c.b16 %v6922, %v6921
        %v6934 = vpack.c.b16 %v6924, %v6923
        %v6935 = vpack.c.b16 %v6926, %v6925
        %v6936 = vpack.c.b16 %v6928, %v6927
        %6945 = vmatprep.subr.bf16.mxu0 0
        %6946 = vmatpush1.bf16.msra.mxu0 %v6929
        %6947 = vmatprep.subr.bf16.mxu0 0
        %6948 = vmatpush1.bf16.msra.mxu0 %v6930
        %6949 = vmatprep.subr.bf16.mxu0 0
        %6950 = vmatpush1.bf16.msra.mxu0 %v6931
        %6951 = vmatprep.subr.bf16.mxu0 0
        %6952 = vmatpush1.bf16.msra.mxu0 %v6932
        %6953 = vmatprep.subr.bf16.mxu0 0
        %6954 = vmatpush1.bf16.msra.mxu0 %v6933
        %6955 = vmatprep.subr.bf16.mxu0 0
        %6956 = vmatpush1.bf16.msra.mxu0 %v6934
        %6957 = vmatprep.subr.bf16.mxu0 0
        %6958 = vmatpush1.bf16.msra.mxu0 %v6935
        %6959 = vmatprep.subr.bf16.mxu0 0
        %6960 = vmatpush1.bf16.msra.mxu0 %v6936
        %6961 = vmatprep.subr.bf16.mxu0 0
        %6962 = vmatpush1.bf16.msra.mxu0 0
        %6963 = vmatprep.subr.bf16.mxu0 0
        %6964 = vmatpush1.bf16.msra.mxu0 0
        %6965 = vmatprep.subr.bf16.mxu0 0
        %6966 = vmatpush1.bf16.msra.mxu0 0
        %6967 = vmatprep.subr.bf16.mxu0 0
        %6968 = vmatpush1.bf16.msra.mxu0 0
        %6969 = vmatprep.subr.bf16.mxu0 0
        %6970 = vmatpush1.bf16.msra.mxu0 0
        %6971 = vmatprep.subr.bf16.mxu0 0
        %6972 = vmatpush1.bf16.msra.mxu0 0
        %6973 = vmatprep.subr.bf16.mxu0 0
        %6974 = vmatpush1.bf16.msra.mxu0 0
        %6975 = vmatprep.subr.bf16.mxu0 0
        %6976 = vmatpush1.bf16.msra.mxu0 0
        %6977 = vmatprep.mubr.bf16.mxu0 0
        %6978 = vmatmul.mubr.bf16.gmra.mrb[0].mxu0 %v6832
        %v6979 = vpop.f32.mrb[0].mxu0
        %v6980 = vadd.f32 0.0, %v6979
        %v6981 = vpop.f32.mrb[0].mxu0
        %v6982 = vpop.f32.mrb[0].mxu0
        %v6983 = vadd.f32 0.0, %v6982
        %v6984 = vpop.f32.mrb[0].mxu0
        %6985 = vmatprep.mubr.bf16.mxu0 0
        %6986 = vmatmul.mubr.bf16.gmra.mrb[0].mxu0 %v6835
        %v6987 = vpop.f32.mrb[0].mxu0
        %v6988 = vadd.f32 0.0, %v6987
        %v6989 = vpop.f32.mrb[0].mxu0
        %v6990 = vpop.f32.mrb[0].mxu0
        %v6991 = vadd.f32 0.0, %v6990
        %v6992 = vpop.f32.mrb[0].mxu0
        %6993 = vmatprep.mubr.bf16.mxu0 0
        %6994 = vmatmul.mubr.bf16.gmra.mrb[0].mxu0 %v6838
        %v6995 = vpop.f32.mrb[0].mxu0
        %v6996 = vadd.f32 0.0, %v6995
        %v6997 = vpop.f32.mrb[0].mxu0
        %v6998 = vpop.f32.mrb[0].mxu0
        %v6999 = vadd.f32 0.0, %v6998
        %v7000 = vpop.f32.mrb[0].mxu0
        %7001 = vmatprep.mubr.bf16.mxu0 0
        %7002 = vmatmul.mubr.bf16.gmra.mrb[0].mxu0 %v6841
        %v7003 = vpop.f32.mrb[0].mxu0
        %v7004 = vadd.f32 0.0, %v7003
        %v7005 = vpop.f32.mrb[0].mxu0
        %v7006 = vpop.f32.mrb[0].mxu0
        %v7007 = vadd.f32 0.0, %v7006
        %v7008 = vpop.f32.mrb[0].mxu0
        %7009 = vmatprep.mubr.bf16.mxu0 0
        %7010 = vmatmul.mubr.bf16.gmra.mrb[0].mxu0 %v6844
        %v7011 = vpop.f32.mrb[0].mxu0
        %v7012 = vadd.f32 0.0, %v7011
        %v7013 = vpop.f32.mrb[0].mxu0
        %v7014 = vpop.f32.mrb[0].mxu0
        %v7015 = vadd.f32 0.0, %v7014
        %v7016 = vpop.f32.mrb[0].mxu0
        %7017 = vmatprep.mubr.bf16.mxu0 0
        %7018 = vmatmul.mubr.bf16.gmra.mrb[0].mxu0 %v6847
        %v7019 = vpop.f32.mrb[0].mxu0
        %v7020 = vadd.f32 0.0, %v7019
        %v7021 = vpop.f32.mrb[0].mxu0
        %v7022 = vpop.f32.mrb[0].mxu0
        %v7023 = vadd.f32 0.0, %v7022
        %v7024 = vpop.f32.mrb[0].mxu0
        %7025 = vmatprep.mubr.bf16.mxu0 0
        %7026 = vmatmul.mubr.bf16.gmra.mrb[0].mxu0 %v6850
        %v7027 = vpop.f32.mrb[0].mxu0
        %v7028 = vadd.f32 0.0, %v7027
        %v7029 = vpop.f32.mrb[0].mxu0
        %v7030 = vpop.f32.mrb[0].mxu0
        %v7031 = vadd.f32 0.0, %v7030
        %v7032 = vpop.f32.mrb[0].mxu0
        %7033 = vmatprep.mubr.bf16.mxu0 0
        %7034 = vmatmul.mubr.bf16.gmra.mrb[0].mxu0 %v6853
        %v7035 = vpop.f32.mrb[0].mxu0
        %v7036 = vadd.f32 0.0, %v7035
        %v7037 = vpop.f32.mrb[0].mxu0
        %v7038 = vpop.f32.mrb[0].mxu0
        %v7039 = vadd.f32 0.0, %v7038
        %v7040 = vpop.f32.mrb[0].mxu0
        %7041 = vmatprep.mubr.bf16.mxu0 0
        %7042 = vmatmul.mubr.bf16.gmra.mrb[0].mxu0 %v6856
        %v7043 = vpop.f32.mrb[0].mxu0
        %v7044 = vadd.f32 0.0, %v7043
        %v7045 = vpop.f32.mrb[0].mxu0
        %v7046 = vpop.f32.mrb[0].mxu0
        %v7047 = vadd.f32 0.0, %v7046
        %v7048 = vpop.f32.mrb[0].mxu0
        %7049 = vmatprep.mubr.bf16.mxu0 0
        %7050 = vmatmul.mubr.bf16.gmra.mrb[0].mxu0 %v6859
        %v7051 = vpop.f32.mrb[0].mxu0
        %v7052 = vadd.f32 0.0, %v7051
        %v7053 = vpop.f32.mrb[0].mxu0
        %v7054 = vpop.f32.mrb[0].mxu0
        %v7055 = vadd.f32 0.0, %v7054
        %v7056 = vpop.f32.mrb[0].mxu0
        %7057 = vmatprep.mubr.bf16.mxu0 0
        %7058 = vmatmul.mubr.bf16.gmra.mrb[0].mxu0 %v6862
        %v7059 = vpop.f32.mrb[0].mxu0
        %v7060 = vadd.f32 0.0, %v7059
        %v7061 = vpop.f32.mrb[0].mxu0
        %v7062 = vpop.f32.mrb[0].mxu0
        %v7063 = vadd.f32 0.0, %v7062
        %v7064 = vpop.f32.mrb[0].mxu0
        %7065 = vmatprep.mubr.bf16.mxu0 0
        %7066 = vmatmul.mubr.bf16.gmra.mrb[0].mxu0 %v6865
        %v7067 = vpop.f32.mrb[0].mxu0
        %v7068 = vadd.f32 0.0, %v7067
        %v7069 = vpop.f32.mrb[0].mxu0
        %v7070 = vpop.f32.mrb[0].mxu0
        %v7071 = vadd.f32 0.0, %v7070
        %v7072 = vpop.f32.mrb[0].mxu0
        %7073 = vmatprep.mubr.bf16.mxu0 0
        %7074 = vmatmul.mubr.bf16.gmra.mrb[0].mxu0 %v6868
        %v7075 = vpop.f32.mrb[0].mxu0
        %v7076 = vadd.f32 0.0, %v7075
        %v7077 = vpop.f32.mrb[0].mxu0
        %v7078 = vpop.f32.mrb[0].mxu0
        %v7079 = vadd.f32 0.0, %v7078
        %v7080 = vpop.f32.mrb[0].mxu0
        %7081 = vmatprep.mubr.bf16.mxu0 0
        %7082 = vmatmul.mubr.bf16.gmra.mrb[0].mxu0 %v6871
        %v7083 = vpop.f32.mrb[0].mxu0
        %v7084 = vadd.f32 0.0, %v7083
        %v7085 = vpop.f32.mrb[0].mxu0
        %v7086 = vpop.f32.mrb[0].mxu0
        %v7087 = vadd.f32 0.0, %v7086
        %v7088 = vpop.f32.mrb[0].mxu0
        %7089 = vmatprep.mubr.bf16.mxu0 0
        %7090 = vmatmul.mubr.bf16.gmra.mrb[0].mxu0 %v6874
        %v7091 = vpop.f32.mrb[0].mxu0
        %v7092 = vadd.f32 0.0, %v7091
        %v7093 = vpop.f32.mrb[0].mxu0
        %v7094 = vpop.f32.mrb[0].mxu0
        %v7095 = vadd.f32 0.0, %v7094
        %v7096 = vpop.f32.mrb[0].mxu0
        %7097 = vmatprep.mubr.bf16.mxu0 0
        %7098 = vmatmul.mubr.bf16.gmra.mrb[0].mxu0 %v6880
        %v7099 = vpop.f32.mrb[0].mxu0
        %v7100 = vadd.f32 0.0, %v7099
        %v7101 = vpop.f32.mrb[0].mxu0
        %v7102 = vpop.f32.mrb[0].mxu0
        %v7103 = vadd.f32 0.0, %v7102
        %v7104 = vpop.f32.mrb[0].mxu0
        %7105 = vdwg.mxu0
        %v7107 = vshrl.u32 %v6788, 16
        %v7109 = vshll.u32 %v6788, 16
        %v7111 = vrot.slane %v7109, 1
        %v7112 = vor.u32 %v7107, %v7111
        %v7113 = vrot.slane %v5086, 1
        %v7114 = vsel %vm3757, %v7112, %v7113
        %v7115 = vor.u32 %v5083, %v7113
        %v7116 = vrot.slane %v5094, 1
        %v7117 = vsel %vm3757, %v7115, %v7116
        %v7118 = vor.u32 %v5091, %v7116
        %v7119 = vrot.slane %v5102, 1
        %v7120 = vsel %vm3757, %v7118, %v7119
        %v7121 = vor.u32 %v5099, %v7119
        %v7122 = vrot.slane %v5110, 1
        %v7123 = vsel %vm3757, %v7121, %v7122
        %v7124 = vor.u32 %v5107, %v7122
        %v7125 = vrot.slane %v5118, 1
        %v7126 = vsel %vm3757, %v7124, %v7125
        %v7127 = vor.u32 %v5115, %v7125
        %v7128 = vrot.slane %v5126, 1
        %v7129 = vsel %vm3757, %v7127, %v7128
        %v7130 = vor.u32 %v5123, %v7128
        %v7131 = vrot.slane %v5134, 1
        %v7132 = vsel %vm3757, %v7130, %v7131
        %v7133 = vor.u32 %v5131, %v7131
        %v7134 = vrot.slane %v5142, 1
        %v7135 = vsel %vm3757, %v7133, %v7134
        %v7136 = vor.u32 %v5139, %v7134
        %v7137 = vrot.slane %v5150, 1
        %v7138 = vsel %vm3757, %v7136, %v7137
        %v7139 = vor.u32 %v5147, %v7137
        %v7140 = vrot.slane %v5158, 1
        %v7141 = vsel %vm3757, %v7139, %v7140
        %v7142 = vor.u32 %v5155, %v7140
        %v7143 = vrot.slane %v5166, 1
        %v7144 = vsel %vm3757, %v7142, %v7143
        %v7145 = vor.u32 %v5163, %v7143
        %v7146 = vrot.slane %v5174, 1
        %v7147 = vsel %vm3757, %v7145, %v7146
        %v7148 = vor.u32 %v5171, %v7146
        %v7149 = vrot.slane %v5182, 1
        %v7150 = vsel %vm3757, %v7148, %v7149
        %v7151 = vor.u32 %v5179, %v7149
        %v7152 = vrot.slane %v5190, 1
        %v7153 = vsel %vm3757, %v7151, %v7152
        %v7154 = vor.u32 %v5187, %v7152
        %v7155 = vrot.slane %v5198, 1
        %v7156 = vsel %vm3757, %v7154, %v7155
        %v7157 = vor.u32 %v5195, %v7155
        %v7159 = vshll.u32 %v6789, 16
        %v7161 = vrot.slane %v7159, 1
        %v7162 = vsel %vm3757, %v7157, %v7161
        %v7195 = vunpack.c.l.b16 %v6790
        %v7196 = vunpack.c.l.b16 %v6791
        %v7197 = vunpack.c.l.b16 %v6792
        %v7198 = vunpack.c.l.b16 %v6793
        %v7199 = vunpack.c.l.b16 %v6794
        %v7200 = vunpack.c.l.b16 %v6795
        %v7201 = vunpack.c.l.b16 %v6796
        %v7202 = vunpack.c.l.b16 %v6797
        %v7203 = vunpack.c.l.b16 %v6798
        %v7204 = vunpack.c.l.b16 %v6799
        %v7205 = vunpack.c.l.b16 %v6800
        %v7206 = vunpack.c.l.b16 %v6801
        %v7207 = vunpack.c.l.b16 %v6802
        %v7208 = vunpack.c.l.b16 %v6803
        %v7209 = vunpack.c.l.b16 %v6804
        %v7210 = vunpack.c.l.b16 %v6805
        %v7211 = vpack.c.b16 %v7196, %v7195
        %v7212 = vpack.c.b16 %v7198, %v7197
        %v7213 = vpack.c.b16 %v7200, %v7199
        %v7214 = vpack.c.b16 %v7202, %v7201
        %v7215 = vpack.c.b16 %v7204, %v7203
        %v7216 = vpack.c.b16 %v7206, %v7205
        %v7217 = vpack.c.b16 %v7208, %v7207
        %v7218 = vpack.c.b16 %v7210, %v7209
        %7227 = vmatprep.subr.bf16.mxu0 0
        %7228 = vmatpush1.bf16.msra.mxu0 %v7211
        %7229 = vmatprep.subr.bf16.mxu0 0
        %7230 = vmatpush1.bf16.msra.mxu0 %v7212
        %7231 = vmatprep.subr.bf16.mxu0 0
        %7232 = vmatpush1.bf16.msra.mxu0 %v7213
        %7233 = vmatprep.subr.bf16.mxu0 0
        %7234 = vmatpush1.bf16.msra.mxu0 %v7214
        %7235 = vmatprep.subr.bf16.mxu0 0
        %7236 = vmatpush1.bf16.msra.mxu0 %v7215
        %7237 = vmatprep.subr.bf16.mxu0 0
        %7238 = vmatpush1.bf16.msra.mxu0 %v7216
        %7239 = vmatprep.subr.bf16.mxu0 0
        %7240 = vmatpush1.bf16.msra.mxu0 %v7217
        %7241 = vmatprep.subr.bf16.mxu0 0
        %7242 = vmatpush1.bf16.msra.mxu0 %v7218
        %7243 = vmatprep.subr.bf16.mxu0 0
        %7244 = vmatpush1.bf16.msra.mxu0 0
        %7245 = vmatprep.subr.bf16.mxu0 0
        %7246 = vmatpush1.bf16.msra.mxu0 0
        %7247 = vmatprep.subr.bf16.mxu0 0
        %7248 = vmatpush1.bf16.msra.mxu0 0
        %7249 = vmatprep.subr.bf16.mxu0 0
        %7250 = vmatpush1.bf16.msra.mxu0 0
        %7251 = vmatprep.subr.bf16.mxu0 0
        %7252 = vmatpush1.bf16.msra.mxu0 0
        %7253 = vmatprep.subr.bf16.mxu0 0
        %7254 = vmatpush1.bf16.msra.mxu0 0
        %7255 = vmatprep.subr.bf16.mxu0 0
        %7256 = vmatpush1.bf16.msra.mxu0 0
        %7257 = vmatprep.subr.bf16.mxu0 0
        %7258 = vmatpush1.bf16.msra.mxu0 0
        %7259 = vmatprep.mubr.bf16.mxu0 0
        %7260 = vmatmul.mubr.bf16.gmra.mrb[0].mxu0 %v7114
        %v7261 = vpop.f32.mrb[0].mxu0
        %v7262 = vadd.f32 %v6980, %v7261
        %v7263 = vpop.f32.mrb[0].mxu0
        %v7264 = vpop.f32.mrb[0].mxu0
        %v7265 = vadd.f32 %v6983, %v7264
        %v7266 = vpop.f32.mrb[0].mxu0
        %7267 = vmatprep.mubr.bf16.mxu0 0
        %7268 = vmatmul.mubr.bf16.gmra.mrb[0].mxu0 %v7117
        %v7269 = vpop.f32.mrb[0].mxu0
        %v7270 = vadd.f32 %v6988, %v7269
        %v7271 = vpop.f32.mrb[0].mxu0
        %v7272 = vpop.f32.mrb[0].mxu0
        %v7273 = vadd.f32 %v6991, %v7272
        %v7274 = vpop.f32.mrb[0].mxu0
        %7275 = vmatprep.mubr.bf16.mxu0 0
        %7276 = vmatmul.mubr.bf16.gmra.mrb[0].mxu0 %v7120
        %v7277 = vpop.f32.mrb[0].mxu0
        %v7278 = vadd.f32 %v6996, %v7277
        %v7279 = vpop.f32.mrb[0].mxu0
        %v7280 = vpop.f32.mrb[0].mxu0
        %v7281 = vadd.f32 %v6999, %v7280
        %v7282 = vpop.f32.mrb[0].mxu0
        %7283 = vmatprep.mubr.bf16.mxu0 0
        %7284 = vmatmul.mubr.bf16.gmra.mrb[0].mxu0 %v7123
        %v7285 = vpop.f32.mrb[0].mxu0
        %v7286 = vadd.f32 %v7004, %v7285
        %v7287 = vpop.f32.mrb[0].mxu0
        %v7288 = vpop.f32.mrb[0].mxu0
        %v7289 = vadd.f32 %v7007, %v7288
        %v7290 = vpop.f32.mrb[0].mxu0
        %7291 = vmatprep.mubr.bf16.mxu0 0
        %7292 = vmatmul.mubr.bf16.gmra.mrb[0].mxu0 %v7126
        %v7293 = vpop.f32.mrb[0].mxu0
        %v7294 = vadd.f32 %v7012, %v7293
        %v7295 = vpop.f32.mrb[0].mxu0
        %v7296 = vpop.f32.mrb[0].mxu0
        %v7297 = vadd.f32 %v7015, %v7296
        %v7298 = vpop.f32.mrb[0].mxu0
        %7299 = vmatprep.mubr.bf16.mxu0 0
        %7300 = vmatmul.mubr.bf16.gmra.mrb[0].mxu0 %v7129
        %v7301 = vpop.f32.mrb[0].mxu0
        %v7302 = vadd.f32 %v7020, %v7301
        %v7303 = vpop.f32.mrb[0].mxu0
        %v7304 = vpop.f32.mrb[0].mxu0
        %v7305 = vadd.f32 %v7023, %v7304
        %v7306 = vpop.f32.mrb[0].mxu0
        %7307 = vmatprep.mubr.bf16.mxu0 0
        %7308 = vmatmul.mubr.bf16.gmra.mrb[0].mxu0 %v7132
        %v7309 = vpop.f32.mrb[0].mxu0
        %v7310 = vadd.f32 %v7028, %v7309
        %v7311 = vpop.f32.mrb[0].mxu0
        %v7312 = vpop.f32.mrb[0].mxu0
        %v7313 = vadd.f32 %v7031, %v7312
        %v7314 = vpop.f32.mrb[0].mxu0
        %7315 = vmatprep.mubr.bf16.mxu0 0
        %7316 = vmatmul.mubr.bf16.gmra.mrb[0].mxu0 %v7135
        %v7317 = vpop.f32.mrb[0].mxu0
        %v7318 = vadd.f32 %v7036, %v7317
        %v7319 = vpop.f32.mrb[0].mxu0
        %v7320 = vpop.f32.mrb[0].mxu0
        %v7321 = vadd.f32 %v7039, %v7320
        %v7322 = vpop.f32.mrb[0].mxu0
        %7323 = vmatprep.mubr.bf16.mxu0 0
        %7324 = vmatmul.mubr.bf16.gmra.mrb[0].mxu0 %v7138
        %v7325 = vpop.f32.mrb[0].mxu0
        %v7326 = vadd.f32 %v7044, %v7325
        %v7327 = vpop.f32.mrb[0].mxu0
        %v7328 = vpop.f32.mrb[0].mxu0
        %v7329 = vadd.f32 %v7047, %v7328
        %v7330 = vpop.f32.mrb[0].mxu0
        %7331 = vmatprep.mubr.bf16.mxu0 0
        %7332 = vmatmul.mubr.bf16.gmra.mrb[0].mxu0 %v7141
        %v7333 = vpop.f32.mrb[0].mxu0
        %v7334 = vadd.f32 %v7052, %v7333
        %v7335 = vpop.f32.mrb[0].mxu0
        %v7336 = vpop.f32.mrb[0].mxu0
        %v7337 = vadd.f32 %v7055, %v7336
        %v7338 = vpop.f32.mrb[0].mxu0
        %7339 = vmatprep.mubr.bf16.mxu0 0
        %7340 = vmatmul.mubr.bf16.gmra.mrb[0].mxu0 %v7144
        %v7341 = vpop.f32.mrb[0].mxu0
        %v7342 = vadd.f32 %v7060, %v7341
        %v7343 = vpop.f32.mrb[0].mxu0
        %v7344 = vpop.f32.mrb[0].mxu0
        %v7345 = vadd.f32 %v7063, %v7344
        %v7346 = vpop.f32.mrb[0].mxu0
        %7347 = vmatprep.mubr.bf16.mxu0 0
        %7348 = vmatmul.mubr.bf16.gmra.mrb[0].mxu0 %v7147
        %v7349 = vpop.f32.mrb[0].mxu0
        %v7350 = vadd.f32 %v7068, %v7349
        %v7351 = vpop.f32.mrb[0].mxu0
        %v7352 = vpop.f32.mrb[0].mxu0
        %v7353 = vadd.f32 %v7071, %v7352
        %v7354 = vpop.f32.mrb[0].mxu0
        %7355 = vmatprep.mubr.bf16.mxu0 0
        %7356 = vmatmul.mubr.bf16.gmra.mrb[0].mxu0 %v7150
        %v7357 = vpop.f32.mrb[0].mxu0
        %v7358 = vadd.f32 %v7076, %v7357
        %v7359 = vpop.f32.mrb[0].mxu0
        %v7360 = vpop.f32.mrb[0].mxu0
        %v7361 = vadd.f32 %v7079, %v7360
        %v7362 = vpop.f32.mrb[0].mxu0
        %7363 = vmatprep.mubr.bf16.mxu0 0
        %7364 = vmatmul.mubr.bf16.gmra.mrb[0].mxu0 %v7153
        %v7365 = vpop.f32.mrb[0].mxu0
        %v7366 = vadd.f32 %v7084, %v7365
        %v7367 = vpop.f32.mrb[0].mxu0
        %v7368 = vpop.f32.mrb[0].mxu0
        %v7369 = vadd.f32 %v7087, %v7368
        %v7370 = vpop.f32.mrb[0].mxu0
        %7371 = vmatprep.mubr.bf16.mxu0 0
        %7372 = vmatmul.mubr.bf16.gmra.mrb[0].mxu0 %v7156
        %v7373 = vpop.f32.mrb[0].mxu0
        %v7374 = vadd.f32 %v7092, %v7373
        %v7375 = vpop.f32.mrb[0].mxu0
        %v7376 = vpop.f32.mrb[0].mxu0
        %v7377 = vadd.f32 %v7095, %v7376
        %v7378 = vpop.f32.mrb[0].mxu0
        %7379 = vmatprep.mubr.bf16.mxu0 0
        %7380 = vmatmul.mubr.bf16.gmra.mrb[0].mxu0 %v7162
        %v7381 = vpop.f32.mrb[0].mxu0
        %v7382 = vadd.f32 %v7100, %v7381
        %v7383 = vpop.f32.mrb[0].mxu0
        %v7384 = vpop.f32.mrb[0].mxu0
        %v7385 = vadd.f32 %v7103, %v7384
        %v7386 = vpop.f32.mrb[0].mxu0
        %7387 = vdwg.mxu0
        %v7388 = vld [vmem:[#allocation3 + $0x18] sm:$0xff]
        %v7389 = vld [vmem:[#allocation3 + $0x20] sm:$0xff]
        %v7390 = vld [vmem:[#allocation3 + $0x28] sm:$0xff]
        %v7391 = vld [vmem:[#allocation3 + $0x30] sm:$0xff]
        %v7392 = vld [vmem:[#allocation3 + $0x38] sm:$0xff]
        %v7393 = vld [vmem:[#allocation3 + $0x40] sm:$0xff]
        %v7394 = vld [vmem:[#allocation3 + $0x48] sm:$0xff]
        %v7395 = vld [vmem:[#allocation3 + $0x50] sm:$0xff]
        %v7396 = vld [vmem:[#allocation3 + $0x58] sm:$0xff]
        %v7397 = vld [vmem:[#allocation3 + $0x60] sm:$0xff]
        %v7398 = vld [vmem:[#allocation3 + $0x68] sm:$0xff]
        %v7399 = vld [vmem:[#allocation3 + $0x70] sm:$0xff]
        %v7400 = vld [vmem:[#allocation3 + $0x78] sm:$0xff]
        %v7401 = vld [vmem:[#allocation3 + $0x80] sm:$0xff]
        %v7402 = vld [vmem:[#allocation3 + $0x88] sm:$0xff]
        %v7403 = vld [vmem:[#allocation3 + $0x90] sm:$0xff]
        %v7404 = vld [vmem:[#allocation3 + $0x98] sm:$0x1]
        %v7405 = vld [vmem:[#allocation19 + $0x200] sm:$0xf]
        %v7406 = vld [vmem:[#allocation19 + $0x204] sm:$0xf]
        %v7407 = vld [vmem:[#allocation19 + $0x208] sm:$0xf]
        %v7408 = vld [vmem:[#allocation19 + $0x20c] sm:$0xf]
        %v7409 = vld [vmem:[#allocation19 + $0x210] sm:$0xf]
        %v7410 = vld [vmem:[#allocation19 + $0x214] sm:$0xf]
        %v7411 = vld [vmem:[#allocation19 + $0x218] sm:$0xf]
        %v7412 = vld [vmem:[#allocation19 + $0x21c] sm:$0xf]
        %v7413 = vld [vmem:[#allocation19 + $0x220] sm:$0xf]
        %v7414 = vld [vmem:[#allocation19 + $0x224] sm:$0xf]
        %v7415 = vld [vmem:[#allocation19 + $0x228] sm:$0xf]
        %v7416 = vld [vmem:[#allocation19 + $0x22c] sm:$0xf]
        %v7417 = vld [vmem:[#allocation19 + $0x230] sm:$0xf]
        %v7418 = vld [vmem:[#allocation19 + $0x234] sm:$0xf]
        %v7419 = vld [vmem:[#allocation19 + $0x238] sm:$0xf]
        %v7420 = vld [vmem:[#allocation19 + $0x23c] sm:$0xf]
        %v7422 = vshrl.u32 %v7388, 16
        %v7424 = vshll.u32 %v7388, 16
        %v7426 = vrot.slane %v7424, 1
        %v7427 = vor.u32 %v7422, %v7426
        %v7429 = vshll.u32 %v7389, 16
        %v7431 = vrot.slane %v7429, 1
        %v7432 = vsel %vm3757, %v7427, %v7431
        %v7433 = vshrl.u32 %v7389, 16
        %v7435 = vor.u32 %v7433, %v7431
        %v7437 = vshll.u32 %v7390, 16
        %v7439 = vrot.slane %v7437, 1
        %v7440 = vsel %vm3757, %v7435, %v7439
        %v7441 = vshrl.u32 %v7390, 16
        %v7443 = vor.u32 %v7441, %v7439
        %v7445 = vshll.u32 %v7391, 16
        %v7447 = vrot.slane %v7445, 1
        %v7448 = vsel %vm3757, %v7443, %v7447
        %v7449 = vshrl.u32 %v7391, 16
        %v7451 = vor.u32 %v7449, %v7447
        %v7453 = vshll.u32 %v7392, 16
        %v7455 = vrot.slane %v7453, 1
        %v7456 = vsel %vm3757, %v7451, %v7455
        %v7457 = vshrl.u32 %v7392, 16
        %v7459 = vor.u32 %v7457, %v7455
        %v7461 = vshll.u32 %v7393, 16
        %v7463 = vrot.slane %v7461, 1
        %v7464 = vsel %vm3757, %v7459, %v7463
        %v7465 = vshrl.u32 %v7393, 16
        %v7467 = vor.u32 %v7465, %v7463
        %v7469 = vshll.u32 %v7394, 16
        %v7471 = vrot.slane %v7469, 1
        %v7472 = vsel %vm3757, %v7467, %v7471
        %v7473 = vshrl.u32 %v7394, 16
        %v7475 = vor.u32 %v7473, %v7471
        %v7477 = vshll.u32 %v7395, 16
        %v7479 = vrot.slane %v7477, 1
        %v7480 = vsel %vm3757, %v7475, %v7479
        %v7481 = vshrl.u32 %v7395, 16
        %v7483 = vor.u32 %v7481, %v7479
        %v7485 = vshll.u32 %v7396, 16
        %v7487 = vrot.slane %v7485, 1
        %v7488 = vsel %vm3757, %v7483, %v7487
        %v7489 = vshrl.u32 %v7396, 16
        %v7491 = vor.u32 %v7489, %v7487
        %v7493 = vshll.u32 %v7397, 16
        %v7495 = vrot.slane %v7493, 1
        %v7496 = vsel %vm3757, %v7491, %v7495
        %v7497 = vshrl.u32 %v7397, 16
        %v7499 = vor.u32 %v7497, %v7495
        %v7501 = vshll.u32 %v7398, 16
        %v7503 = vrot.slane %v7501, 1
        %v7504 = vsel %vm3757, %v7499, %v7503
        %v7505 = vshrl.u32 %v7398, 16
        %v7507 = vor.u32 %v7505, %v7503
        %v7509 = vshll.u32 %v7399, 16
        %v7511 = vrot.slane %v7509, 1
        %v7512 = vsel %vm3757, %v7507, %v7511
        %v7513 = vshrl.u32 %v7399, 16
        %v7515 = vor.u32 %v7513, %v7511
        %v7517 = vshll.u32 %v7400, 16
        %v7519 = vrot.slane %v7517, 1
        %v7520 = vsel %vm3757, %v7515, %v7519
        %v7521 = vshrl.u32 %v7400, 16
        %v7523 = vor.u32 %v7521, %v7519
        %v7525 = vshll.u32 %v7401, 16
        %v7527 = vrot.slane %v7525, 1
        %v7528 = vsel %vm3757, %v7523, %v7527
        %v7529 = vshrl.u32 %v7401, 16
        %v7531 = vor.u32 %v7529, %v7527
        %v7533 = vshll.u32 %v7402, 16
        %v7535 = vrot.slane %v7533, 1
        %v7536 = vsel %vm3757, %v7531, %v7535
        %v7537 = vshrl.u32 %v7402, 16
        %v7539 = vor.u32 %v7537, %v7535
        %v7541 = vshll.u32 %v7403, 16
        %v7543 = vrot.slane %v7541, 1
        %v7544 = vsel %vm3757, %v7539, %v7543
        %v7545 = vshrl.u32 %v7403, 16
        %v7547 = vor.u32 %v7545, %v7543
        %v7549 = vshll.u32 %v7404, 16
        %v7551 = vrot.slane %v7549, 1
        %v7552 = vsel %vm3757, %v7547, %v7551
        %v7585 = vunpack.c.l.b16 %v7405
        %v7586 = vunpack.c.l.b16 %v7406
        %v7587 = vunpack.c.l.b16 %v7407
        %v7588 = vunpack.c.l.b16 %v7408
        %v7589 = vunpack.c.l.b16 %v7409
        %v7590 = vunpack.c.l.b16 %v7410
        %v7591 = vunpack.c.l.b16 %v7411
        %v7592 = vunpack.c.l.b16 %v7412
        %v7593 = vunpack.c.l.b16 %v7413
        %v7594 = vunpack.c.l.b16 %v7414
        %v7595 = vunpack.c.l.b16 %v7415
        %v7596 = vunpack.c.l.b16 %v7416
        %v7597 = vunpack.c.l.b16 %v7417
        %v7598 = vunpack.c.l.b16 %v7418
        %v7599 = vunpack.c.l.b16 %v7419
        %v7600 = vunpack.c.l.b16 %v7420
        %v7601 = vpack.c.b16 %v7586, %v7585
        %v7602 = vpack.c.b16 %v7588, %v7587
        %v7603 = vpack.c.b16 %v7590, %v7589
        %v7604 = vpack.c.b16 %v7592, %v7591
        %v7605 = vpack.c.b16 %v7594, %v7593
        %v7606 = vpack.c.b16 %v7596, %v7595
        %v7607 = vpack.c.b16 %v7598, %v7597
        %v7608 = vpack.c.b16 %v7600, %v7599
        %7617 = vmatprep.subr.bf16.mxu0 0
        %7618 = vmatpush1.bf16.msra.mxu0 %v7601
        %7619 = vmatprep.subr.bf16.mxu0 0
        %7620 = vmatpush1.bf16.msra.mxu0 %v7602
        %7621 = vmatprep.subr.bf16.mxu0 0
        %7622 = vmatpush1.bf16.msra.mxu0 %v7603
        %7623 = vmatprep.subr.bf16.mxu0 0
        %7624 = vmatpush1.bf16.msra.mxu0 %v7604
        %7625 = vmatprep.subr.bf16.mxu0 0
        %7626 = vmatpush1.bf16.msra.mxu0 %v7605
        %7627 = vmatprep.subr.bf16.mxu0 0
        %7628 = vmatpush1.bf16.msra.mxu0 %v7606
        %7629 = vmatprep.subr.bf16.mxu0 0
        %7630 = vmatpush1.bf16.msra.mxu0 %v7607
        %7631 = vmatprep.subr.bf16.mxu0 0
        %7632 = vmatpush1.bf16.msra.mxu0 %v7608
        %7633 = vmatprep.subr.bf16.mxu0 0
        %7634 = vmatpush1.bf16.msra.mxu0 0
        %7635 = vmatprep.subr.bf16.mxu0 0
        %7636 = vmatpush1.bf16.msra.mxu0 0
        %7637 = vmatprep.subr.bf16.mxu0 0
        %7638 = vmatpush1.bf16.msra.mxu0 0
        %7639 = vmatprep.subr.bf16.mxu0 0
        %7640 = vmatpush1.bf16.msra.mxu0 0
        %7641 = vmatprep.subr.bf16.mxu0 0
        %7642 = vmatpush1.bf16.msra.mxu0 0
        %7643 = vmatprep.subr.bf16.mxu0 0
        %7644 = vmatpush1.bf16.msra.mxu0 0
        %7645 = vmatprep.subr.bf16.mxu0 0
        %7646 = vmatpush1.bf16.msra.mxu0 0
        %7647 = vmatprep.subr.bf16.mxu0 0
        %7648 = vmatpush1.bf16.msra.mxu0 0
        %7649 = vmatprep.mubr.bf16.mxu0 0
        %7650 = vmatmul.mubr.bf16.gmra.mrb[0].mxu0 %v7432
        %v7651 = vpop.f32.mrb[0].mxu0
        %v7652 = vadd.f32 0.0, %v7651
        %v7653 = vpop.f32.mrb[0].mxu0
        %v7654 = vpop.f32.mrb[0].mxu0
        %v7655 = vadd.f32 0.0, %v7654
        %v7656 = vpop.f32.mrb[0].mxu0
        %7657 = vmatprep.mubr.bf16.mxu0 0
        %7658 = vmatmul.mubr.bf16.gmra.mrb[0].mxu0 %v7440
        %v7659 = vpop.f32.mrb[0].mxu0
        %v7660 = vadd.f32 0.0, %v7659
        %v7661 = vpop.f32.mrb[0].mxu0
        %v7662 = vpop.f32.mrb[0].mxu0
        %v7663 = vadd.f32 0.0, %v7662
        %v7664 = vpop.f32.mrb[0].mxu0
        %7665 = vmatprep.mubr.bf16.mxu0 0
        %7666 = vmatmul.mubr.bf16.gmra.mrb[0].mxu0 %v7448
        %v7667 = vpop.f32.mrb[0].mxu0
        %v7668 = vadd.f32 0.0, %v7667
        %v7669 = vpop.f32.mrb[0].mxu0
        %v7670 = vpop.f32.mrb[0].mxu0
        %v7671 = vadd.f32 0.0, %v7670
        %v7672 = vpop.f32.mrb[0].mxu0
        %7673 = vmatprep.mubr.bf16.mxu0 0
        %7674 = vmatmul.mubr.bf16.gmra.mrb[0].mxu0 %v7456
        %v7675 = vpop.f32.mrb[0].mxu0
        %v7676 = vadd.f32 0.0, %v7675
        %v7677 = vpop.f32.mrb[0].mxu0
        %v7678 = vpop.f32.mrb[0].mxu0
        %v7679 = vadd.f32 0.0, %v7678
        %v7680 = vpop.f32.mrb[0].mxu0
        %7681 = vmatprep.mubr.bf16.mxu0 0
        %7682 = vmatmul.mubr.bf16.gmra.mrb[0].mxu0 %v7464
        %v7683 = vpop.f32.mrb[0].mxu0
        %v7684 = vadd.f32 0.0, %v7683
        %v7685 = vpop.f32.mrb[0].mxu0
        %v7686 = vpop.f32.mrb[0].mxu0
        %v7687 = vadd.f32 0.0, %v7686
        %v7688 = vpop.f32.mrb[0].mxu0
        %7689 = vmatprep.mubr.bf16.mxu0 0
        %7690 = vmatmul.mubr.bf16.gmra.mrb[0].mxu0 %v7472
        %v7691 = vpop.f32.mrb[0].mxu0
        %v7692 = vadd.f32 0.0, %v7691
        %v7693 = vpop.f32.mrb[0].mxu0
        %v7694 = vpop.f32.mrb[0].mxu0
        %v7695 = vadd.f32 0.0, %v7694
        %v7696 = vpop.f32.mrb[0].mxu0
        %7697 = vmatprep.mubr.bf16.mxu0 0
        %7698 = vmatmul.mubr.bf16.gmra.mrb[0].mxu0 %v7480
        %v7699 = vpop.f32.mrb[0].mxu0
        %v7700 = vadd.f32 0.0, %v7699
        %v7701 = vpop.f32.mrb[0].mxu0
        %v7702 = vpop.f32.mrb[0].mxu0
        %v7703 = vadd.f32 0.0, %v7702
        %v7704 = vpop.f32.mrb[0].mxu0
        %7705 = vmatprep.mubr.bf16.mxu0 0
        %7706 = vmatmul.mubr.bf16.gmra.mrb[0].mxu0 %v7488
        %v7707 = vpop.f32.mrb[0].mxu0
        %v7708 = vadd.f32 0.0, %v7707
        %v7709 = vpop.f32.mrb[0].mxu0
        %v7710 = vpop.f32.mrb[0].mxu0
        %v7711 = vadd.f32 0.0, %v7710
        %v7712 = vpop.f32.mrb[0].mxu0
        %7713 = vmatprep.mubr.bf16.mxu0 0
        %7714 = vmatmul.mubr.bf16.gmra.mrb[0].mxu0 %v7496
        %v7715 = vpop.f32.mrb[0].mxu0
        %v7716 = vadd.f32 0.0, %v7715
        %v7717 = vpop.f32.mrb[0].mxu0
        %v7718 = vpop.f32.mrb[0].mxu0
        %v7719 = vadd.f32 0.0, %v7718
        %v7720 = vpop.f32.mrb[0].mxu0
        %7721 = vmatprep.mubr.bf16.mxu0 0
        %7722 = vmatmul.mubr.bf16.gmra.mrb[0].mxu0 %v7504
        %v7723 = vpop.f32.mrb[0].mxu0
        %v7724 = vadd.f32 0.0, %v7723
        %v7725 = vpop.f32.mrb[0].mxu0
        %v7726 = vpop.f32.mrb[0].mxu0
        %v7727 = vadd.f32 0.0, %v7726
        %v7728 = vpop.f32.mrb[0].mxu0
        %7729 = vmatprep.mubr.bf16.mxu0 0
        %7730 = vmatmul.mubr.bf16.gmra.mrb[0].mxu0 %v7512
        %v7731 = vpop.f32.mrb[0].mxu0
        %v7732 = vadd.f32 0.0, %v7731
        %v7733 = vpop.f32.mrb[0].mxu0
        %v7734 = vpop.f32.mrb[0].mxu0
        %v7735 = vadd.f32 0.0, %v7734
        %v7736 = vpop.f32.mrb[0].mxu0
        %7737 = vmatprep.mubr.bf16.mxu0 0
        %7738 = vmatmul.mubr.bf16.gmra.mrb[0].mxu0 %v7520
        %v7739 = vpop.f32.mrb[0].mxu0
        %v7740 = vadd.f32 0.0, %v7739
        %v7741 = vpop.f32.mrb[0].mxu0
        %v7742 = vpop.f32.mrb[0].mxu0
        %v7743 = vadd.f32 0.0, %v7742
        %v7744 = vpop.f32.mrb[0].mxu0
        %7745 = vmatprep.mubr.bf16.mxu0 0
        %7746 = vmatmul.mubr.bf16.gmra.mrb[0].mxu0 %v7528
        %v7747 = vpop.f32.mrb[0].mxu0
        %v7748 = vadd.f32 0.0, %v7747
        %v7749 = vpop.f32.mrb[0].mxu0
        %v7750 = vpop.f32.mrb[0].mxu0
        %v7751 = vadd.f32 0.0, %v7750
        %v7752 = vpop.f32.mrb[0].mxu0
        %7753 = vmatprep.mubr.bf16.mxu0 0
        %7754 = vmatmul.mubr.bf16.gmra.mrb[0].mxu0 %v7536
        %v7755 = vpop.f32.mrb[0].mxu0
        %v7756 = vadd.f32 0.0, %v7755
        %v7757 = vpop.f32.mrb[0].mxu0
        %v7758 = vpop.f32.mrb[0].mxu0
        %v7759 = vadd.f32 0.0, %v7758
        %v7760 = vpop.f32.mrb[0].mxu0
        %7761 = vmatprep.mubr.bf16.mxu0 0
        %7762 = vmatmul.mubr.bf16.gmra.mrb[0].mxu0 %v7544
        %v7763 = vpop.f32.mrb[0].mxu0
        %v7764 = vadd.f32 0.0, %v7763
        %v7765 = vpop.f32.mrb[0].mxu0
        %v7766 = vpop.f32.mrb[0].mxu0
        %v7767 = vadd.f32 0.0, %v7766
        %v7768 = vpop.f32.mrb[0].mxu0
        %7769 = vmatprep.mubr.bf16.mxu0 0
        %7770 = vmatmul.mubr.bf16.gmra.mrb[0].mxu0 %v7552
        %v7771 = vpop.f32.mrb[0].mxu0
        %v7772 = vadd.f32 0.0, %v7771
        %v7773 = vpop.f32.mrb[0].mxu0
        %v7774 = vpop.f32.mrb[0].mxu0
        %v7775 = vadd.f32 0.0, %v7774
        %v7776 = vpop.f32.mrb[0].mxu0
        %7777 = vdwg.mxu0
        %v7778 = vadd.f32 %v7262, %v7652
        %v7779 = vadd.f32 %v7265, %v7655
        %v7780 = vadd.f32 %v7270, %v7660
        %v7781 = vadd.f32 %v7273, %v7663
        %v7782 = vadd.f32 %v7278, %v7668
        %v7783 = vadd.f32 %v7281, %v7671
        %v7784 = vadd.f32 %v7286, %v7676
        %v7785 = vadd.f32 %v7289, %v7679
        %v7786 = vadd.f32 %v7294, %v7684
        %v7787 = vadd.f32 %v7297, %v7687
        %v7788 = vadd.f32 %v7302, %v7692
        %v7789 = vadd.f32 %v7305, %v7695
        %v7790 = vadd.f32 %v7310, %v7700
        %v7791 = vadd.f32 %v7313, %v7703
        %v7792 = vadd.f32 %v7318, %v7708
        %v7793 = vadd.f32 %v7321, %v7711
        %v7794 = vadd.f32 %v7326, %v7716
        %v7795 = vadd.f32 %v7329, %v7719
        %v7796 = vadd.f32 %v7334, %v7724
        %v7797 = vadd.f32 %v7337, %v7727
        %v7798 = vadd.f32 %v7342, %v7732
        %v7799 = vadd.f32 %v7345, %v7735
        %v7800 = vadd.f32 %v7350, %v7740
        %v7801 = vadd.f32 %v7353, %v7743
        %v7802 = vadd.f32 %v7358, %v7748
        %v7803 = vadd.f32 %v7361, %v7751
        %v7804 = vadd.f32 %v7366, %v7756
        %v7805 = vadd.f32 %v7369, %v7759
        %v7806 = vadd.f32 %v7374, %v7764
        %v7807 = vadd.f32 %v7377, %v7767
        %v7808 = vadd.f32 %v7382, %v7772
        %v7809 = vadd.f32 %v7385, %v7775
        %v7810 = vmul.f32 %v6049, %v1072
        %v7811 = vmul.f32 %v6050, %v1073
        %v7812 = vmul.f32 %v6051, %v1074
        %v7813 = vmul.f32 %v6052, %v1075
        %v7814 = vmul.f32 %v6053, %v1076
        %v7815 = vmul.f32 %v6054, %v1077
        %v7816 = vmul.f32 %v6055, %v1078
        %v7817 = vmul.f32 %v6056, %v1079
        %v7818 = vmul.f32 %v6057, %v1080
        %v7819 = vmul.f32 %v6058, %v1081
        %v7820 = vmul.f32 %v6059, %v1082
        %v7821 = vmul.f32 %v6060, %v1083
        %v7822 = vmul.f32 %v6061, %v1084
        %v7823 = vmul.f32 %v6062, %v1085
        %v7824 = vmul.f32 %v6063, %v1086
        %v7825 = vmul.f32 %v6064, %v1087
        %v7826 = vmul.f32 %v6065, %v1088
        %v7827 = vmul.f32 %v6066, %v1089
        %v7828 = vmul.f32 %v6067, %v1090
        %v7829 = vmul.f32 %v6068, %v1091
        %v7830 = vmul.f32 %v6069, %v1092
        %v7831 = vmul.f32 %v6070, %v1093
        %v7832 = vmul.f32 %v6071, %v1094
        %v7833 = vmul.f32 %v6072, %v1095
        %v7834 = vmul.f32 %v6073, %v1096
        %v7835 = vmul.f32 %v6074, %v1097
        %v7836 = vmul.f32 %v6075, %v1098
        %v7837 = vmul.f32 %v6076, %v1099
        %v7838 = vmul.f32 %v6077, %v1100
        %v7839 = vmul.f32 %v6078, %v1101
        %v7840 = vmul.f32 %v6079, %v1102
        %v7841 = vmul.f32 %v6080, %v1103
        %v7842 = vadd.f32 %v7810, %v6756
        %v7843 = vadd.f32 %v7811, %v6757
        %v7844 = vadd.f32 %v7812, %v6758
        %v7845 = vadd.f32 %v7813, %v6759
        %v7846 = vadd.f32 %v7814, %v6760
        %v7847 = vadd.f32 %v7815, %v6761
        %v7848 = vadd.f32 %v7816, %v6762
        %v7849 = vadd.f32 %v7817, %v6763
        %v7850 = vadd.f32 %v7818, %v6764
        %v7851 = vadd.f32 %v7819, %v6765
        %v7852 = vadd.f32 %v7820, %v6766
        %v7853 = vadd.f32 %v7821, %v6767
        %v7854 = vadd.f32 %v7822, %v6768
        %v7855 = vadd.f32 %v7823, %v6769
        %v7856 = vadd.f32 %v7824, %v6770
        %v7857 = vadd.f32 %v7825, %v6771
        %v7858 = vadd.f32 %v7826, %v6772
        %v7859 = vadd.f32 %v7827, %v6773
        %v7860 = vadd.f32 %v7828, %v6774
        %v7861 = vadd.f32 %v7829, %v6775
        %v7862 = vadd.f32 %v7830, %v6776
        %v7863 = vadd.f32 %v7831, %v6777
        %v7864 = vadd.f32 %v7832, %v6778
        %v7865 = vadd.f32 %v7833, %v6779
        %v7866 = vadd.f32 %v7834, %v6780
        %v7867 = vadd.f32 %v7835, %v6781
        %v7868 = vadd.f32 %v7836, %v6782
        %v7869 = vadd.f32 %v7837, %v6783
        %v7870 = vadd.f32 %v7838, %v6784
        %v7871 = vadd.f32 %v7839, %v6785
        %v7872 = vadd.f32 %v7840, %v6786
        %v7873 = vadd.f32 %v7841, %v6787
        %v7874 = vmul.f32 %v7778, %v1168
        %v7875 = vmul.f32 %v7779, %v1169
        %v7876 = vmul.f32 %v7780, %v1170
        %v7877 = vmul.f32 %v7781, %v1171
        %v7878 = vmul.f32 %v7782, %v1172
        %v7879 = vmul.f32 %v7783, %v1173
        %v7880 = vmul.f32 %v7784, %v1174
        %v7881 = vmul.f32 %v7785, %v1175
        %v7882 = vmul.f32 %v7786, %v1176
        %v7883 = vmul.f32 %v7787, %v1177
        %v7884 = vmul.f32 %v7788, %v1178
        %v7885 = vmul.f32 %v7789, %v1179
        %v7886 = vmul.f32 %v7790, %v1180
        %v7887 = vmul.f32 %v7791, %v1181
        %v7888 = vmul.f32 %v7792, %v1182
        %v7889 = vmul.f32 %v7793, %v1183
        %v7890 = vmul.f32 %v7794, %v1184
        %v7891 = vmul.f32 %v7795, %v1185
        %v7892 = vmul.f32 %v7796, %v1186
        %v7893 = vmul.f32 %v7797, %v1187
        %v7894 = vmul.f32 %v7798, %v1188
        %v7895 = vmul.f32 %v7799, %v1189
        %v7896 = vmul.f32 %v7800, %v1190
        %v7897 = vmul.f32 %v7801, %v1191
        %v7898 = vmul.f32 %v7802, %v1192
        %v7899 = vmul.f32 %v7803, %v1193
        %v7900 = vmul.f32 %v7804, %v1194
        %v7901 = vmul.f32 %v7805, %v1195
        %v7902 = vmul.f32 %v7806, %v1196
        %v7903 = vmul.f32 %v7807, %v1197
        %v7904 = vmul.f32 %v7808, %v1198
        %v7905 = vmul.f32 %v7809, %v1199
        %v7906 = vadd.f32 %v7842, %v7874
        %v7907 = vadd.f32 %v7843, %v7875
        %v7908 = vadd.f32 %v7844, %v7876
        %v7909 = vadd.f32 %v7845, %v7877
        %v7910 = vadd.f32 %v7846, %v7878
        %v7911 = vadd.f32 %v7847, %v7879
        %v7912 = vadd.f32 %v7848, %v7880
        %v7913 = vadd.f32 %v7849, %v7881
        %v7914 = vadd.f32 %v7850, %v7882
        %v7915 = vadd.f32 %v7851, %v7883
        %v7916 = vadd.f32 %v7852, %v7884
        %v7917 = vadd.f32 %v7853, %v7885
        %v7918 = vadd.f32 %v7854, %v7886
        %v7919 = vadd.f32 %v7855, %v7887
        %v7920 = vadd.f32 %v7856, %v7888
        %v7921 = vadd.f32 %v7857, %v7889
        %v7922 = vadd.f32 %v7858, %v7890
        %v7923 = vadd.f32 %v7859, %v7891
        %v7924 = vadd.f32 %v7860, %v7892
        %v7925 = vadd.f32 %v7861, %v7893
        %v7926 = vadd.f32 %v7862, %v7894
        %v7927 = vadd.f32 %v7863, %v7895
        %v7928 = vadd.f32 %v7864, %v7896
        %v7929 = vadd.f32 %v7865, %v7897
        %v7930 = vadd.f32 %v7866, %v7898
        %v7931 = vadd.f32 %v7867, %v7899
        %v7932 = vadd.f32 %v7868, %v7900
        %v7933 = vadd.f32 %v7869, %v7901
        %v7934 = vadd.f32 %v7870, %v7902
        %v7935 = vadd.f32 %v7871, %v7903
        %v7936 = vadd.f32 %v7872, %v7904
        %v7937 = vadd.f32 %v7873, %v7905
        %v7938 = vld [vmem:[#allocation21] sm:$0x1]
        %v7940 = vlaneseq
        %v7941 = vshrl.u32 %v7940, 7
        %v7942 = vsub.s32 0, %v7941
        %v7943 = vrot.slane %v7938, %v7942
        %v7945 = vadd.f32 %v7906, %v7943
        %v7946 = vadd.f32 %v7907, %v7943
        %v7947 = vadd.f32 %v7908, %v7943
        %v7948 = vadd.f32 %v7909, %v7943
        %v7949 = vadd.f32 %v7910, %v7943
        %v7950 = vadd.f32 %v7911, %v7943
        %v7951 = vadd.f32 %v7912, %v7943
        %v7952 = vadd.f32 %v7913, %v7943
        %v7953 = vadd.f32 %v7914, %v7943
        %v7954 = vadd.f32 %v7915, %v7943
        %v7955 = vadd.f32 %v7916, %v7943
        %v7956 = vadd.f32 %v7917, %v7943
        %v7957 = vadd.f32 %v7918, %v7943
        %v7958 = vadd.f32 %v7919, %v7943
        %v7959 = vadd.f32 %v7920, %v7943
        %v7960 = vadd.f32 %v7921, %v7943
        %v7961 = vadd.f32 %v7922, %v7943
        %v7962 = vadd.f32 %v7923, %v7943
        %v7963 = vadd.f32 %v7924, %v7943
        %v7964 = vadd.f32 %v7925, %v7943
        %v7965 = vadd.f32 %v7926, %v7943
        %v7966 = vadd.f32 %v7927, %v7943
        %v7967 = vadd.f32 %v7928, %v7943
        %v7968 = vadd.f32 %v7929, %v7943
        %v7969 = vadd.f32 %v7930, %v7943
        %v7970 = vadd.f32 %v7931, %v7943
        %v7971 = vadd.f32 %v7932, %v7943
        %v7972 = vadd.f32 %v7933, %v7943
        %v7973 = vadd.f32 %v7934, %v7943
        %v7974 = vadd.f32 %v7935, %v7943
        %v7975 = vadd.f32 %v7936, %v7943
        %v7976 = vadd.f32 %v7937, %v7943
        %v7977 = vmax.f32 %v7945, 0.0
        %v7978 = vmax.f32 %v7946, 0.0
        %v7979 = vmax.f32 %v7947, 0.0
        %v7980 = vmax.f32 %v7948, 0.0
        %v7981 = vmax.f32 %v7949, 0.0
        %v7982 = vmax.f32 %v7950, 0.0
        %v7983 = vmax.f32 %v7951, 0.0
        %v7984 = vmax.f32 %v7952, 0.0
        %v7985 = vmax.f32 %v7953, 0.0
        %v7986 = vmax.f32 %v7954, 0.0
        %v7987 = vmax.f32 %v7955, 0.0
        %v7988 = vmax.f32 %v7956, 0.0
        %v7989 = vmax.f32 %v7957, 0.0
        %v7990 = vmax.f32 %v7958, 0.0
        %v7991 = vmax.f32 %v7959, 0.0
        %v7992 = vmax.f32 %v7960, 0.0
        %v7993 = vmax.f32 %v7961, 0.0
        %v7994 = vmax.f32 %v7962, 0.0
        %v7995 = vmax.f32 %v7963, 0.0
        %v7996 = vmax.f32 %v7964, 0.0
        %v7997 = vmax.f32 %v7965, 0.0
        %v7998 = vmax.f32 %v7966, 0.0
        %v7999 = vmax.f32 %v7967, 0.0
        %v8000 = vmax.f32 %v7968, 0.0
        %v8001 = vmax.f32 %v7969, 0.0
        %v8002 = vmax.f32 %v7970, 0.0
        %v8003 = vmax.f32 %v7971, 0.0
        %v8004 = vmax.f32 %v7972, 0.0
        %v8005 = vmax.f32 %v7973, 0.0
        %v8006 = vmax.f32 %v7974, 0.0
        %v8007 = vmax.f32 %v7975, 0.0
        %v8008 = vmax.f32 %v7976, 0.0
        %v8009 = vlaneseq
        %v8010 = vand.u32 %v8009, 127
        %vm8011 = vcmp.eq.s32.totalorder %v8010, 81
        %v8012 = vsel %vm8011, 1, 0
        %v8013 = vcvt.s32.f32 %v8012
        %v8014 = vld [vmem:[%s509] sm:$0xff]
        %v8015 = vld [vmem:[%s509 + $0x8] sm:$0xff]
        %v8016 = vld [vmem:[%s509 + $0x10] sm:$0xff]
        %v8017 = vld [vmem:[%s509 + $0x18] sm:$0xff]
        %v8018 = vld [vmem:[%s509 + $0x20] sm:$0xff]
        %v8019 = vld [vmem:[%s509 + $0x28] sm:$0xff]
        %v8020 = vld [vmem:[%s509 + $0x30] sm:$0xff]
        %v8021 = vld [vmem:[%s509 + $0x38] sm:$0xff]
        %v8022 = vld [vmem:[%s509 + $0x40] sm:$0xff]
        %v8023 = vld [vmem:[%s509 + $0x48] sm:$0xff]
        %v8024 = vld [vmem:[%s509 + $0x50] sm:$0xff]
        %v8025 = vld [vmem:[%s509 + $0x58] sm:$0xff]
        %v8026 = vld [vmem:[%s509 + $0x60] sm:$0xff]
        %v8027 = vld [vmem:[%s509 + $0x68] sm:$0xff]
        %v8028 = vld [vmem:[%s509 + $0x70] sm:$0xff]
        %v8029 = vld [vmem:[%s509 + $0x78] sm:$0xff]
        %v8030 = vld [vmem:[%s509 + $0x80] sm:$0xff]
        %v8031 = vld [vmem:[%s509 + $0x88] sm:$0xff]
        %v8032 = vld [vmem:[%s509 + $0x90] sm:$0xff]
        %v8033 = vld [vmem:[%s509 + $0x98] sm:$0xff]
        %v8034 = vld [vmem:[%s509 + $0xa0] sm:$0xff]
        %v8035 = vld [vmem:[%s509 + $0xa8] sm:$0xff]
        %v8036 = vld [vmem:[%s509 + $0xb0] sm:$0xff]
        %v8037 = vld [vmem:[%s509 + $0xb8] sm:$0xff]
        %v8038 = vld [vmem:[%s509 + $0xc0] sm:$0xff]
        %v8039 = vld [vmem:[%s509 + $0xc8] sm:$0xff]
        %v8040 = vld [vmem:[%s509 + $0xd0] sm:$0xff]
        %v8041 = vld [vmem:[%s509 + $0xd8] sm:$0xff]
        %v8042 = vld [vmem:[%s509 + $0xe0] sm:$0xff]
        %v8043 = vld [vmem:[%s509 + $0xe8] sm:$0xff]
        %v8044 = vld [vmem:[%s509 + $0xf0] sm:$0xff]
        %v8045 = vld [vmem:[%s509 + $0xf8] sm:$0xff]
        %8047 = vset.pattern.permute.xlu0 0
        %8048 = vperm.xlu0 %8047, %v8014
        %v8049 = vpop.permute.xlu0 %8048
        %8052 = vset.pattern.permute.xlu0 0
        %8053 = vperm.xlu0 %8052, %v8015
        %v8054 = vpop.permute.xlu0 %8053
        %8057 = vset.pattern.permute.xlu0 0
        %8058 = vperm.xlu0 %8057, %v8016
        %v8059 = vpop.permute.xlu0 %8058
        %8062 = vset.pattern.permute.xlu0 0
        %8063 = vperm.xlu0 %8062, %v8017
        %v8064 = vpop.permute.xlu0 %8063
        %8067 = vset.pattern.permute.xlu0 0
        %8068 = vperm.xlu0 %8067, %v8018
        %v8069 = vpop.permute.xlu0 %8068
        %8072 = vset.pattern.permute.xlu0 0
        %8073 = vperm.xlu0 %8072, %v8019
        %v8074 = vpop.permute.xlu0 %8073
        %8077 = vset.pattern.permute.xlu0 0
        %8078 = vperm.xlu0 %8077, %v8020
        %v8079 = vpop.permute.xlu0 %8078
        %8082 = vset.pattern.permute.xlu0 0
        %8083 = vperm.xlu0 %8082, %v8021
        %v8084 = vpop.permute.xlu0 %8083
        %8087 = vset.pattern.permute.xlu0 0
        %8088 = vperm.xlu0 %8087, %v8022
        %v8089 = vpop.permute.xlu0 %8088
        %8092 = vset.pattern.permute.xlu0 0
        %8093 = vperm.xlu0 %8092, %v8023
        %v8094 = vpop.permute.xlu0 %8093
        %8097 = vset.pattern.permute.xlu0 0
        %8098 = vperm.xlu0 %8097, %v8024
        %v8099 = vpop.permute.xlu0 %8098
        %8102 = vset.pattern.permute.xlu0 0
        %8103 = vperm.xlu0 %8102, %v8025
        %v8104 = vpop.permute.xlu0 %8103
        %8107 = vset.pattern.permute.xlu0 0
        %8108 = vperm.xlu0 %8107, %v8026
        %v8109 = vpop.permute.xlu0 %8108
        %8112 = vset.pattern.permute.xlu0 0
        %8113 = vperm.xlu0 %8112, %v8027
        %v8114 = vpop.permute.xlu0 %8113
        %8117 = vset.pattern.permute.xlu0 0
        %8118 = vperm.xlu0 %8117, %v8028
        %v8119 = vpop.permute.xlu0 %8118
        %8122 = vset.pattern.permute.xlu0 0
        %8123 = vperm.xlu0 %8122, %v8029
        %v8124 = vpop.permute.xlu0 %8123
        %8127 = vset.pattern.permute.xlu0 0
        %8128 = vperm.xlu0 %8127, %v8030
        %v8129 = vpop.permute.xlu0 %8128
        %8132 = vset.pattern.permute.xlu0 0
        %8133 = vperm.xlu0 %8132, %v8031
        %v8134 = vpop.permute.xlu0 %8133
        %8137 = vset.pattern.permute.xlu0 0
        %8138 = vperm.xlu0 %8137, %v8032
        %v8139 = vpop.permute.xlu0 %8138
        %8142 = vset.pattern.permute.xlu0 0
        %8143 = vperm.xlu0 %8142, %v8033
        %v8144 = vpop.permute.xlu0 %8143
        %8147 = vset.pattern.permute.xlu0 0
        %8148 = vperm.xlu0 %8147, %v8034
        %v8149 = vpop.permute.xlu0 %8148
        %8152 = vset.pattern.permute.xlu0 0
        %8153 = vperm.xlu0 %8152, %v8035
        %v8154 = vpop.permute.xlu0 %8153
        %8157 = vset.pattern.permute.xlu0 0
        %8158 = vperm.xlu0 %8157, %v8036
        %v8159 = vpop.permute.xlu0 %8158
        %8162 = vset.pattern.permute.xlu0 0
        %8163 = vperm.xlu0 %8162, %v8037
        %v8164 = vpop.permute.xlu0 %8163
        %8167 = vset.pattern.permute.xlu0 0
        %8168 = vperm.xlu0 %8167, %v8038
        %v8169 = vpop.permute.xlu0 %8168
        %8172 = vset.pattern.permute.xlu0 0
        %8173 = vperm.xlu0 %8172, %v8039
        %v8174 = vpop.permute.xlu0 %8173
        %8177 = vset.pattern.permute.xlu0 0
        %8178 = vperm.xlu0 %8177, %v8040
        %v8179 = vpop.permute.xlu0 %8178
        %8182 = vset.pattern.permute.xlu0 0
        %8183 = vperm.xlu0 %8182, %v8041
        %v8184 = vpop.permute.xlu0 %8183
        %8187 = vset.pattern.permute.xlu0 0
        %8188 = vperm.xlu0 %8187, %v8042
        %v8189 = vpop.permute.xlu0 %8188
        %8192 = vset.pattern.permute.xlu0 0
        %8193 = vperm.xlu0 %8192, %v8043
        %v8194 = vpop.permute.xlu0 %8193
        %8197 = vset.pattern.permute.xlu0 0
        %8198 = vperm.xlu0 %8197, %v8044
        %v8199 = vpop.permute.xlu0 %8198
        %8202 = vset.pattern.permute.xlu0 0
        %8203 = vperm.xlu0 %8202, %v8045
        %v8204 = vpop.permute.xlu0 %8203
        %v8206 = vmul.f32 %v8049, %v8013
        %v8207 = vmul.f32 %v8054, %v8013
        %v8208 = vmul.f32 %v8059, %v8013
        %v8209 = vmul.f32 %v8064, %v8013
        %v8210 = vmul.f32 %v8069, %v8013
        %v8211 = vmul.f32 %v8074, %v8013
        %v8212 = vmul.f32 %v8079, %v8013
        %v8213 = vmul.f32 %v8084, %v8013
        %v8214 = vmul.f32 %v8089, %v8013
        %v8215 = vmul.f32 %v8094, %v8013
        %v8216 = vmul.f32 %v8099, %v8013
        %v8217 = vmul.f32 %v8104, %v8013
        %v8218 = vmul.f32 %v8109, %v8013
        %v8219 = vmul.f32 %v8114, %v8013
        %v8220 = vmul.f32 %v8119, %v8013
        %v8221 = vmul.f32 %v8124, %v8013
        %v8222 = vmul.f32 %v8129, %v8013
        %v8223 = vmul.f32 %v8134, %v8013
        %v8224 = vmul.f32 %v8139, %v8013
        %v8225 = vmul.f32 %v8144, %v8013
        %v8226 = vmul.f32 %v8149, %v8013
        %v8227 = vmul.f32 %v8154, %v8013
        %v8228 = vmul.f32 %v8159, %v8013
        %v8229 = vmul.f32 %v8164, %v8013
        %v8230 = vmul.f32 %v8169, %v8013
        %v8231 = vmul.f32 %v8174, %v8013
        %v8232 = vmul.f32 %v8179, %v8013
        %v8233 = vmul.f32 %v8184, %v8013
        %v8234 = vmul.f32 %v8189, %v8013
        %v8235 = vmul.f32 %v8194, %v8013
        %v8236 = vmul.f32 %v8199, %v8013
        %v8237 = vmul.f32 %v8204, %v8013
        %v8238 = vadd.f32 %v7977, %v8206
        %v8239 = vadd.f32 %v7978, %v8207
        %v8240 = vadd.f32 %v7979, %v8208
        %v8241 = vadd.f32 %v7980, %v8209
        %v8242 = vadd.f32 %v7981, %v8210
        %v8243 = vadd.f32 %v7982, %v8211
        %v8244 = vadd.f32 %v7983, %v8212
        %v8245 = vadd.f32 %v7984, %v8213
        %v8246 = vadd.f32 %v7985, %v8214
        %v8247 = vadd.f32 %v7986, %v8215
        %v8248 = vadd.f32 %v7987, %v8216
        %v8249 = vadd.f32 %v7988, %v8217
        %v8250 = vadd.f32 %v7989, %v8218
        %v8251 = vadd.f32 %v7990, %v8219
        %v8252 = vadd.f32 %v7991, %v8220
        %v8253 = vadd.f32 %v7992, %v8221
        %v8254 = vadd.f32 %v7993, %v8222
        %v8255 = vadd.f32 %v7994, %v8223
        %v8256 = vadd.f32 %v7995, %v8224
        %v8257 = vadd.f32 %v7996, %v8225
        %v8258 = vadd.f32 %v7997, %v8226
        %v8259 = vadd.f32 %v7998, %v8227
        %v8260 = vadd.f32 %v7999, %v8228
        %v8261 = vadd.f32 %v8000, %v8229
        %v8262 = vadd.f32 %v8001, %v8230
        %v8263 = vadd.f32 %v8002, %v8231
        %v8264 = vadd.f32 %v8003, %v8232
        %v8265 = vadd.f32 %v8004, %v8233
        %v8266 = vadd.f32 %v8005, %v8234
        %v8267 = vadd.f32 %v8006, %v8235
        %v8268 = vadd.f32 %v8007, %v8236
        %v8269 = vadd.f32 %v8008, %v8237
        %8270 = vst [vmem:[%s589] sm:$0xff] %v8238
        %8271 = vst [vmem:[%s589 + $0x8] sm:$0xff] %v8239
        %8272 = vst [vmem:[%s589 + $0x10] sm:$0xff] %v8240
        %8273 = vst [vmem:[%s589 + $0x18] sm:$0xff] %v8241
        %8274 = vst [vmem:[%s589 + $0x20] sm:$0xff] %v8242
        %8275 = vst [vmem:[%s589 + $0x28] sm:$0xff] %v8243
        %8276 = vst [vmem:[%s589 + $0x30] sm:$0xff] %v8244
        %8277 = vst [vmem:[%s589 + $0x38] sm:$0xff] %v8245
        %8278 = vst [vmem:[%s589 + $0x40] sm:$0xff] %v8246
        %8279 = vst [vmem:[%s589 + $0x48] sm:$0xff] %v8247
        %8280 = vst [vmem:[%s589 + $0x50] sm:$0xff] %v8248
        %8281 = vst [vmem:[%s589 + $0x58] sm:$0xff] %v8249
        %8282 = vst [vmem:[%s589 + $0x60] sm:$0xff] %v8250
        %8283 = vst [vmem:[%s589 + $0x68] sm:$0xff] %v8251
        %8284 = vst [vmem:[%s589 + $0x70] sm:$0xff] %v8252
        %8285 = vst [vmem:[%s589 + $0x78] sm:$0xff] %v8253
        %8286 = vst [vmem:[%s589 + $0x80] sm:$0xff] %v8254
        %8287 = vst [vmem:[%s589 + $0x88] sm:$0xff] %v8255
        %8288 = vst [vmem:[%s589 + $0x90] sm:$0xff] %v8256
        %8289 = vst [vmem:[%s589 + $0x98] sm:$0xff] %v8257
        %8290 = vst [vmem:[%s589 + $0xa0] sm:$0xff] %v8258
        %8291 = vst [vmem:[%s589 + $0xa8] sm:$0xff] %v8259
        %8292 = vst [vmem:[%s589 + $0xb0] sm:$0xff] %v8260
        %8293 = vst [vmem:[%s589 + $0xb8] sm:$0xff] %v8261
        %8294 = vst [vmem:[%s589 + $0xc0] sm:$0xff] %v8262
        %8295 = vst [vmem:[%s589 + $0xc8] sm:$0xff] %v8263
        %8296 = vst [vmem:[%s589 + $0xd0] sm:$0xff] %v8264
        %8297 = vst [vmem:[%s589 + $0xd8] sm:$0xff] %v8265
        %8298 = vst [vmem:[%s589 + $0xe0] sm:$0xff] %v8266
        %8299 = vst [vmem:[%s589 + $0xe8] sm:$0xff] %v8267
        %8300 = vst [vmem:[%s589 + $0xf0] sm:$0xff] %v8268
        %8301 = vst [vmem:[%s589 + $0xf8] sm:$0xff] %v8269
        %s8302 = sand.u32 %s289, 1
        %s8303 = scalar_lea.sflag [#allocation6], %s8302
        %s8304 = sand.u32 %s289, 1
        %s8305 = smul.addr %s8304, 256
        %s8306 = scalar_lea.vmem [#allocation22], %s8305
        // Predicated region
        $region109: #{small_motion_encoder.1} parent=63 // pred_check
          %p8307 = pneg %p299
        $region110: #{small_motion_encoder.1} parent=63 // pred_check_branch
          %8309 = sbr.rel (%p8307) target = $region112
        $region111: #{small_motion_encoder.1} parent=63 // pred_region
          %s8311 = ssub.s32 4096, 4096
          %8312 = vsyncadd %s8303, %s8311
          %s8313 = smul.addr %s35, 32
          %s8314 = smul.addr %s8313, 128
          %s8315 = scalar_lea.hbm %s11, %s8314
          %s8316 = sshll.u32 %s8306, 4
          %s8317 = int_to_ptr.vmem [resolvable:$true] %s8316
          %8322 = dma.vmem_to_hbm [thread:$0]  %s8317, 4096, %s8315, %s8303, 128, 128, 8
        $region112: #{small_motion_encoder.1} parent=63 // pred_fallthru
          _
      $region64: #{small_motion_encoder.1} parent=5 // pred_fallthru
        _
      %p8323 = scmp.le.s32.totalorder 2, %s30
      // Predicated region
      $region113: #{small_motion_encoder.1} parent=5 // pred_check
        %p8324 = pneg %p8323
      $region114: #{small_motion_encoder.1} parent=5 // pred_check_branch
        %8326 = sbr.rel (%p8324) target = $region116
      $region115: #{small_motion_encoder.1} parent=5 // pred_region
        %s8327 = ssub.s32 %s30, 2
        // Predicated region
        $region117: #{small_motion_encoder.1} parent=115 // pred_check
          %p8328 = pneg %p305
        $region118: #{small_motion_encoder.1} parent=115 // pred_check_branch
          %8330 = sbr.rel (%p8328) target = $region120
        $region119: #{small_motion_encoder.1} parent=115 // pred_region
          %s8331 = sand.u32 %s290, 1
          %s8332 = scalar_lea.sflag [#allocation6], %s8331
          %s8333 = sand.u32 %s290, 1
          %s8334 = smul.addr %s8333, 256
          %s8335 = scalar_lea.vmem [#allocation22], %s8334
          %8336 = dma.done %s8332, 4096
        $region120: #{small_motion_encoder.1} parent=115 // pred_fallthru
          _
      $region116: #{small_motion_encoder.1} parent=5 // pred_fallthru
        _
    $region6: #{small_motion_encoder.1} parent=1 // loop_footer
      %s34 = sadd.s32 1, %s30
    $region7: #{small_motion_encoder.1} parent=1 // loop_footer_branch
      %29 = sbr.rel target = $region3
    $region8: #{small_motion_encoder.1} parent=1 // loop_exit
      _
    %8337 = vsyncpa [#allocation5], 1
    %s8338 = scalar_lea.sflag [#allocation5], 1
    %8339 = vsyncpa %s8338, 1
    %8340 = vsyncpa [#allocation8], 1
    %s8341 = scalar_lea.sflag [#allocation8], 1
    %8342 = vsyncpa %s8341, 1
    %8343 = vsyncpa [#allocation11], 1
    %8344 = vsyncpa [#allocation14], 1
    %8345 = vsyncpa [#allocation17], 1
    %8346 = vsyncpa [#allocation20], 1
    %8347 = vsyncpa [#allocation6], 1
    %s8348 = scalar_lea.sflag [#allocation6], 1
    %8349 = vsyncpa %s8348, 1

</llo_original>
